<compile_context>
chip_gen: v7x
topology: tpu7x:2x2x1
jax: 0.10.0
libtpu: 0.0.40
codegen_flags: <defaults>
</compile_context>

<pallas_src>
import functools
import math

import jax
import jax.numpy as jnp
from jax.experimental import pallas as pl
from jax.experimental.pallas import tpu as pltpu

_BN_EPS = 1e-5
_COMPILER_PARAMS = pltpu.CompilerParams(
    dimension_semantics=("parallel",),          # batch grid axis -> both TCs on v7x
    vmem_limit_bytes=48 * 1024 * 1024,          # fits v7x's 64 MiB/TC with headroom
)


# -----------------------------------------------------------------------------
# Kernels: one grid step == one image; 3x3 taps accumulated in-kernel on the MXU.
# -----------------------------------------------------------------------------
def _accum_taps_3x3(x_ref, w_ref, ho, wo, cout):
    """sum_{kh,kw} x_pad[kh:kh+ho, kw:kw+wo, :] @ w[kh*3+kw]  ->  (ho*wo, cout) f32."""
    acc = jnp.zeros((ho * wo, cout), jnp.float32)
    for kh in range(3):
        for kw in range(3):
            xt = x_ref[pl.ds(kh, ho), pl.ds(kw, wo), :]          # (ho, wo, cin) bf16
            cin = xt.shape[-1]
            acc = acc + jnp.dot(xt.reshape(ho * wo, cin),
                                w_ref[kh * 3 + kw],
                                preferred_element_type=jnp.float32)
    return acc


def _conv_bn_relu_kernel(x_ref, w_ref, s_ref, t_ref, o_ref, *, ho, wo, cout):
    """o = relu(bn(conv3x3(x)))   -- conv1 + bn1 + relu."""
    acc = _accum_taps_3x3(x_ref, w_ref, ho, wo, cout)
    y = jnp.maximum(acc * s_ref[...] + t_ref[...], 0.0)
    o_ref[...] = y.reshape(ho, wo, cout).astype(o_ref.dtype)


def _conv_bn_add_relu_kernel(y_ref, w_ref, s_ref, t_ref, res_ref, o_ref, *,
                             ho, wo, cout):
    """o = relu(bn(conv3x3(y1)) + residual)   -- conv2 + bn2 + add + relu."""
    acc = _accum_taps_3x3(y_ref, w_ref, ho, wo, cout)
    res = res_ref[...].reshape(ho * wo, cout).astype(jnp.float32)
    y = jnp.maximum(acc * s_ref[...] + t_ref[...] + res, 0.0)
    o_ref[...] = y.reshape(ho, wo, cout).astype(o_ref.dtype)


def _conv_bn_ds_add_relu_kernel(y_ref, w_ref, s_ref, t_ref,
                                xs_ref, wd_ref, sd_ref, td_ref, o_ref, *,
                                ho, wo, cin, cout):
    """o = relu(bn2(conv3x3(y1)) + bnd(conv1x1_strided(x)))   -- downsample path."""
    acc = _accum_taps_3x3(y_ref, w_ref, ho, wo, cout)
    rd = jnp.dot(xs_ref[...].reshape(ho * wo, cin), wd_ref[...],
                 preferred_element_type=jnp.float32)
    res = rd * sd_ref[...] + td_ref[...]
    y = jnp.maximum(acc * s_ref[...] + t_ref[...] + res, 0.0)
    o_ref[...] = y.reshape(ho, wo, cout).astype(o_ref.dtype)


# -----------------------------------------------------------------------------
# pallas_call wrapper: grid over batch, per-image blocks, resident weights.
# -----------------------------------------------------------------------------
def _batched_spec(tail):
    n = len(tail)
    return pl.BlockSpec((None,) + tuple(tail),
                        lambda b, n=n: (b,) + (0,) * n)


def _resident_spec(shape):
    n = len(shape)
    return pl.BlockSpec(tuple(shape), lambda b, n=n: (0,) * n)


def _run(kernel, inputs, out_tail, out_dtype, n, flops):
    """inputs: list of (array, batched: bool).  Grid iterates over the batch dim."""
    args, in_specs = [], []
    for arr, batched in inputs:
        args.append(arr)
        in_specs.append(_batched_spec(arr.shape[1:]) if batched
                        else _resident_spec(arr.shape))
    out_shape = jax.ShapeDtypeStruct((n,) + tuple(out_tail), out_dtype)
    bytes_accessed = (sum(a.size * a.dtype.itemsize for a in args)
                      + math.prod(out_shape.shape) * out_shape.dtype.itemsize)
    return pl.pallas_call(
        kernel,
        out_shape=out_shape,
        grid=(n,),
        in_specs=in_specs,
        out_specs=_batched_spec(out_tail),
        compiler_params=_COMPILER_PARAMS,
        cost_estimate=pl.CostEstimate(flops=int(flops), transcendentals=0,
                                      bytes_accessed=int(bytes_accessed)),
    )(*args)


# -----------------------------------------------------------------------------
# Parameters (PyTorch-equivalent), pre-laid-out for the kernels at init time.
# -----------------------------------------------------------------------------
def init_params(key, inplanes, planes, use_downsample=False):
    ks = jax.random.split(key, 6)

    def conv3x3_weight(k, cin, cout):
        # PyTorch (cout, cin, 3, 3) -> per-tap matmul layout (9, cin, cout), bf16.
        w = jax.random.normal(k, (cout, cin, 3, 3), jnp.float32) / math.sqrt(cin * 9)
        return jnp.transpose(w, (2, 3, 1, 0)).reshape(9, cin, cout).astype(jnp.bfloat16)

    def bn_params(k, c):
        kg, kb, km, kv = jax.random.split(k, 4)
        return {
            "gamma": 1.0 + 0.2 * jax.random.normal(kg, (c,), jnp.float32),
            "beta": 0.1 * jax.random.normal(kb, (c,), jnp.float32),
            "mean": 0.1 * jax.random.normal(km, (c,), jnp.float32),
            "var": 1.0 + 0.2 * jax.random.uniform(kv, (c,), jnp.float32),
        }

    params = {
        "w1": conv3x3_weight(ks[0], inplanes, planes),
        "bn1": bn_params(ks[1], planes),
        "w2": conv3x3_weight(ks[2], planes, planes),
        "bn2": bn_params(ks[3], planes),
    }
    if use_downsample:
        wd = jax.random.normal(ks[4], (inplanes, planes), jnp.float32) / math.sqrt(inplanes)
        params["wd"] = wd.astype(jnp.bfloat16)          # 1x1 conv in (Cin, Cout) layout
        params["bnd"] = bn_params(ks[5], planes)
    return params


def _fold_bn(bn):
    """Eval-mode BN -> per-channel (scale, shift), applied on the f32 accumulator."""
    scale = bn["gamma"] * jax.lax.rsqrt(bn["var"] + _BN_EPS)
    shift = bn["beta"] - bn["mean"] * scale
    return scale.reshape(1, -1), shift.reshape(1, -1)


# -----------------------------------------------------------------------------
# Forward pass: exactly two fused pallas_calls.
# -----------------------------------------------------------------------------
@functools.partial(jax.jit, static_argnames=("stride", "use_downsample"))
def basic_block_forward(params, x_nchw, *, stride=1, use_downsample=False):
    cin = params["w1"].shape[1]
    planes = params["w1"].shape[-1]
    if not use_downsample and (stride != 1 or cin != planes):
        raise ValueError("identity residual requires stride == 1 and inplanes == planes")

    x = jnp.transpose(x_nchw, (0, 2, 3, 1)).astype(jnp.bfloat16)   # NCHW -> NHWC bf16
    n, h, w, _ = x.shape
    ho, wo = -(-h // stride), -(-w // stride)

    s1, t1 = _fold_bn(params["bn1"])
    s2, t2 = _fold_bn(params["bn2"])

    # ---- conv1 (3x3, pad=1) + bn1 + relu, fused.  Stride handled by subsampling.
    x_pad = jnp.pad(x, ((0, 0), (1, 1), (1, 1), (0, 0)))
    kern1 = functools.partial(_conv_bn_relu_kernel, ho=h, wo=w, cout=planes)
    y_full = _run(kern1,
                  [(x_pad, True), (params["w1"], False), (s1, False), (t1, False)],
                  (h, w, planes), jnp.bfloat16, n,
                  flops=2 * n * h * w * 9 * cin * planes)
    y1 = y_full if stride == 1 else y_full[:, ::stride, ::stride, :]

    # ---- conv2 (3x3, stride=1, pad=1) + bn2 + residual (+ downsample) + relu, fused.
    y1_pad = jnp.pad(y1, ((0, 0), (1, 1), (1, 1), (0, 0)))
    flops2 = 2 * n * ho * wo * 9 * planes * planes
    if use_downsample:
        xs = x[:, ::stride, ::stride, :]                           # 1x1-conv input rows
        sd, td = _fold_bn(params["bnd"])
        kern2 = functools.partial(_conv_bn_ds_add_relu_kernel,
                                  ho=ho, wo=wo, cin=cin, cout=planes)
        out = _run(kern2,
                   [(y1_pad, True), (params["w2"], False), (s2, False), (t2, False),
                    (xs, True), (params["wd"], False), (sd, False), (td, False)],
                   (ho, wo, planes), jnp.float32, n,
                   flops=flops2 + 2 * n * ho * wo * cin * planes)
    else:
        kern2 = functools.partial(_conv_bn_add_relu_kernel,
                                  ho=ho, wo=wo, cout=planes)
        out = _run(kern2,
                   [(y1_pad, True), (params["w2"], False), (s2, False), (t2, False),
                    (x, True)],
                   (ho, wo, planes), jnp.float32, n, flops=flops2)

    return jnp.transpose(out, (0, 3, 1, 2))                        # back to NCHW (f32)


# -----------------------------------------------------------------------------
# Pure-JAX reference (lax.conv, eval-mode BN) modelling the same bf16 data path.
# -----------------------------------------------------------------------------
def _reference_block(params, x_nchw, stride, use_downsample):
    x = jnp.transpose(x_nchw, (0, 2, 3, 1)).astype(jnp.bfloat16).astype(jnp.float32)
    cin = params["w1"].shape[1]
    planes = params["w1"].shape[-1]

    def conv3x3(y, w9, s):
        w = w9.astype(jnp.float32).reshape(3, 3, cin if w9 is params["w1"] else planes,
                                           planes)
        return jax.lax.conv_general_dilated(
            y, w, (s, s), ((1, 1), (1, 1)),
            dimension_numbers=("NHWC", "HWIO", "NHWC"),
            precision=jax.lax.Precision.HIGHEST)

    def bn(y, p):
        return (y - p["mean"]) * jax.lax.rsqrt(p["var"] + _BN_EPS) * p["gamma"] + p["beta"]

    y1 = jax.nn.relu(bn(conv3x3(x, params["w1"], stride), params["bn1"]))
    y1 = y1.astype(jnp.bfloat16).astype(jnp.float32)       # model bf16 intermediate
    out = bn(conv3x3(y1, params["w2"], 1), params["bn2"])
    if use_downsample:
        wd = params["wd"].astype(jnp.float32).reshape(1, 1, cin, planes)
        res = jax.lax.conv_general_dilated(
            x, wd, (stride, stride), ((0, 0), (0, 0)),
            dimension_numbers=("NHWC", "HWIO", "NHWC"),
            precision=jax.lax.Precision.HIGHEST)
        res = bn(res, params["bnd"])
    else:
        res = x
    out = jax.nn.relu(out + res)
    return jnp.transpose(out, (0, 3, 1, 2))


if __name__ == "__main__":
    key = jax.random.PRNGKey(0)
    kp1, kp2, kx = jax.random.split(key, 3)
    x = jax.random.normal(kx, (2, 4, 16, 16), jnp.float32)          # NCHW like PyTorch

    # 1) Identity-residual block: BasicBlock(4, 4, stride=1, downsample=None).
    params_id = init_params(kp1, inplanes=4, planes=4, use_downsample=False)
    out_id = jax.block_until_ready(
        basic_block_forward(params_id, x, stride=1, use_downsample=False))
    assert out_id.shape == (2, 4, 16, 16)
    ref_id = _reference_block(params_id, x, 1, False)
    err_id = float(jnp.max(jnp.abs(out_id - ref_id)))
    assert err_id < 5e-3, f"identity-block mismatch: {err_id}"

    # 2) Downsample block: BasicBlock(4, 8, stride=2, downsample=conv1x1+BN).
    params_ds = init_params(kp2, inplanes=4, planes=8, use_downsample=True)
    out_ds = jax.block_until_ready(
        basic_block_forward(params_ds, x, stride=2, use_downsample=True))
    assert out_ds.shape == (2, 8, 8, 8)
    ref_ds = _reference_block(params_ds, x, 2, True)
    err_ds = float(jnp.max(jnp.abs(out_ds - ref_ds)))
    assert err_ds < 5e-3, f"downsample-block mismatch: {err_ds}"

    assert bool(jnp.all(jnp.isfinite(out_id))) and bool(jnp.all(jnp.isfinite(out_ds)))
    print("KERNEL_OK")
</pallas_src>

<mosaic_0001>
module attributes {stable_mosaic.version = 11 : i64} {
  func.func @_conv_bn_relu_kernel(%arg0: i32, %arg1: memref<1x18x18x4xbf16, #tpu.memory_space<vmem>>, %arg2: memref<9x4x4xbf16, #tpu.memory_space<vmem>>, %arg3: memref<1x4xf32, #tpu.memory_space<vmem>>, %arg4: memref<1x4xf32, #tpu.memory_space<vmem>>, %arg5: memref<1x16x16x4xbf16, #tpu.memory_space<vmem>>) attributes {dimension_semantics = [#tpu.dimension_semantics<parallel>], iteration_bounds = array<i64: 2>, scalar_prefetch = 0 : i64, scratch_operands = 0 : i64, tpu.core_type = #tpu.core_type<tc>, window_params = [{transform_indices = @transform_0, window_bounds = array<i64: 1, 18, 18, 4>}, {pipeline_mode = #tpu.pipeline_mode<synchronous>, transform_indices = @transform_1, window_bounds = array<i64: 9, 4, 4>}, {pipeline_mode = #tpu.pipeline_mode<synchronous>, transform_indices = @transform_2, window_bounds = array<i64: 1, 4>}, {pipeline_mode = #tpu.pipeline_mode<synchronous>, transform_indices = @transform_3, window_bounds = array<i64: 1, 4>}, {transform_indices = @transform_4, window_bounds = array<i64: 1, 16, 16, 4>}]} {
    %cst = arith.constant 0.000000e+00 : f32
    %0 = vector.broadcast %cst : f32 to vector<256x4xf32>
    %c0 = arith.constant 0 : index
    %c0_0 = arith.constant 0 : index
    %c0_1 = arith.constant 0 : index
    %c0_2 = arith.constant 0 : index
    %1 = vector.load %arg1[%c0, %c0_0, %c0_1, %c0_2] : memref<1x18x18x4xbf16, #tpu.memory_space<vmem>>, vector<1x16x16x4xbf16>
    %2 = vector.shape_cast %1 : vector<1x16x16x4xbf16> to vector<16x16x4xbf16>
    %3 = vector.shape_cast %2 : vector<16x16x4xbf16> to vector<256x4xbf16>
    %c0_3 = arith.constant 0 : index
    %c0_4 = arith.constant 0 : index
    %c0_5 = arith.constant 0 : index
    %4 = vector.load %arg2[%c0_3, %c0_4, %c0_5] : memref<9x4x4xbf16, #tpu.memory_space<vmem>>, vector<1x4x4xbf16>
    %5 = vector.shape_cast %4 : vector<1x4x4xbf16> to vector<4x4xbf16>
    %cst_6 = arith.constant dense<0.000000e+00> : vector<256x4xf32>
    %6 = tpu.matmul %3, %5, %cst_6 {dimension_numbers = #tpu.dot_dimension_numbers<[1], [0], [0], [1], [0, 0, 1, 1], [], []>} : vector<256x4xbf16>, vector<4x4xbf16>, vector<256x4xf32> -> vector<256x4xf32>
    %7 = arith.addf %0, %6 : vector<256x4xf32>
    %c0_7 = arith.constant 0 : index
    %c0_8 = arith.constant 0 : index
    %c1 = arith.constant 1 : index
    %c0_9 = arith.constant 0 : index
    %8 = vector.load %arg1[%c0_7, %c0_8, %c1, %c0_9] : memref<1x18x18x4xbf16, #tpu.memory_space<vmem>>, vector<1x16x16x4xbf16>
    %9 = vector.shape_cast %8 : vector<1x16x16x4xbf16> to vector<16x16x4xbf16>
    %10 = vector.shape_cast %9 : vector<16x16x4xbf16> to vector<256x4xbf16>
    %c1_10 = arith.constant 1 : index
    %c0_11 = arith.constant 0 : index
    %c0_12 = arith.constant 0 : index
    %11 = vector.load %arg2[%c1_10, %c0_11, %c0_12] : memref<9x4x4xbf16, #tpu.memory_space<vmem>>, vector<1x4x4xbf16>
    %12 = vector.shape_cast %11 : vector<1x4x4xbf16> to vector<4x4xbf16>
    %cst_13 = arith.constant dense<0.000000e+00> : vector<256x4xf32>
    %13 = tpu.matmul %10, %12, %cst_13 {dimension_numbers = #tpu.dot_dimension_numbers<[1], [0], [0], [1], [0, 0, 1, 1], [], []>} : vector<256x4xbf16>, vector<4x4xbf16>, vector<256x4xf32> -> vector<256x4xf32>
    %14 = arith.addf %7, %13 : vector<256x4xf32>
    %c0_14 = arith.constant 0 : index
    %c0_15 = arith.constant 0 : index
    %c2 = arith.constant 2 : index
    %c0_16 = arith.constant 0 : index
    %15 = vector.load %arg1[%c0_14, %c0_15, %c2, %c0_16] : memref<1x18x18x4xbf16, #tpu.memory_space<vmem>>, vector<1x16x16x4xbf16>
    %16 = vector.shape_cast %15 : vector<1x16x16x4xbf16> to vector<16x16x4xbf16>
    %17 = vector.shape_cast %16 : vector<16x16x4xbf16> to vector<256x4xbf16>
    %c2_17 = arith.constant 2 : index
    %c0_18 = arith.constant 0 : index
    %c0_19 = arith.constant 0 : index
    %18 = vector.load %arg2[%c2_17, %c0_18, %c0_19] : memref<9x4x4xbf16, #tpu.memory_space<vmem>>, vector<1x4x4xbf16>
    %19 = vector.shape_cast %18 : vector<1x4x4xbf16> to vector<4x4xbf16>
    %cst_20 = arith.constant dense<0.000000e+00> : vector<256x4xf32>
    %20 = tpu.matmul %17, %19, %cst_20 {dimension_numbers = #tpu.dot_dimension_numbers<[1], [0], [0], [1], [0, 0, 1, 1], [], []>} : vector<256x4xbf16>, vector<4x4xbf16>, vector<256x4xf32> -> vector<256x4xf32>
    %21 = arith.addf %14, %20 : vector<256x4xf32>
    %c0_21 = arith.constant 0 : index
    %c1_22 = arith.constant 1 : index
    %c0_23 = arith.constant 0 : index
    %c0_24 = arith.constant 0 : index
    %22 = vector.load %arg1[%c0_21, %c1_22, %c0_23, %c0_24] : memref<1x18x18x4xbf16, #tpu.memory_space<vmem>>, vector<1x16x16x4xbf16>
    %23 = vector.shape_cast %22 : vector<1x16x16x4xbf16> to vector<16x16x4xbf16>
    %24 = vector.shape_cast %23 : vector<16x16x4xbf16> to vector<256x4xbf16>
    %c3 = arith.constant 3 : index
    %c0_25 = arith.constant 0 : index
    %c0_26 = arith.constant 0 : index
    %25 = vector.load %arg2[%c3, %c0_25, %c0_26] : memref<9x4x4xbf16, #tpu.memory_space<vmem>>, vector<1x4x4xbf16>
    %26 = vector.shape_cast %25 : vector<1x4x4xbf16> to vector<4x4xbf16>
    %cst_27 = arith.constant dense<0.000000e+00> : vector<256x4xf32>
    %27 = tpu.matmul %24, %26, %cst_27 {dimension_numbers = #tpu.dot_dimension_numbers<[1], [0], [0], [1], [0, 0, 1, 1], [], []>} : vector<256x4xbf16>, vector<4x4xbf16>, vector<256x4xf32> -> vector<256x4xf32>
    %28 = arith.addf %21, %27 : vector<256x4xf32>
    %c0_28 = arith.constant 0 : index
    %c1_29 = arith.constant 1 : index
    %c1_30 = arith.constant 1 : index
    %c0_31 = arith.constant 0 : index
    %29 = vector.load %arg1[%c0_28, %c1_29, %c1_30, %c0_31] : memref<1x18x18x4xbf16, #tpu.memory_space<vmem>>, vector<1x16x16x4xbf16>
    %30 = vector.shape_cast %29 : vector<1x16x16x4xbf16> to vector<16x16x4xbf16>
    %31 = vector.shape_cast %30 : vector<16x16x4xbf16> to vector<256x4xbf16>
    %c4 = arith.constant 4 : index
    %c0_32 = arith.constant 0 : index
    %c0_33 = arith.constant 0 : index
    %32 = vector.load %arg2[%c4, %c0_32, %c0_33] : memref<9x4x4xbf16, #tpu.memory_space<vmem>>, vector<1x4x4xbf16>
    %33 = vector.shape_cast %32 : vector<1x4x4xbf16> to vector<4x4xbf16>
    %cst_34 = arith.constant dense<0.000000e+00> : vector<256x4xf32>
    %34 = tpu.matmul %31, %33, %cst_34 {dimension_numbers = #tpu.dot_dimension_numbers<[1], [0], [0], [1], [0, 0, 1, 1], [], []>} : vector<256x4xbf16>, vector<4x4xbf16>, vector<256x4xf32> -> vector<256x4xf32>
    %35 = arith.addf %28, %34 : vector<256x4xf32>
    %c0_35 = arith.constant 0 : index
    %c1_36 = arith.constant 1 : index
    %c2_37 = arith.constant 2 : index
    %c0_38 = arith.constant 0 : index
    %36 = vector.load %arg1[%c0_35, %c1_36, %c2_37, %c0_38] : memref<1x18x18x4xbf16, #tpu.memory_space<vmem>>, vector<1x16x16x4xbf16>
    %37 = vector.shape_cast %36 : vector<1x16x16x4xbf16> to vector<16x16x4xbf16>
    %38 = vector.shape_cast %37 : vector<16x16x4xbf16> to vector<256x4xbf16>
    %c5 = arith.constant 5 : index
    %c0_39 = arith.constant 0 : index
    %c0_40 = arith.constant 0 : index
    %39 = vector.load %arg2[%c5, %c0_39, %c0_40] : memref<9x4x4xbf16, #tpu.memory_space<vmem>>, vector<1x4x4xbf16>
    %40 = vector.shape_cast %39 : vector<1x4x4xbf16> to vector<4x4xbf16>
    %cst_41 = arith.constant dense<0.000000e+00> : vector<256x4xf32>
    %41 = tpu.matmul %38, %40, %cst_41 {dimension_numbers = #tpu.dot_dimension_numbers<[1], [0], [0], [1], [0, 0, 1, 1], [], []>} : vector<256x4xbf16>, vector<4x4xbf16>, vector<256x4xf32> -> vector<256x4xf32>
    %42 = arith.addf %35, %41 : vector<256x4xf32>
    %c0_42 = arith.constant 0 : index
    %c2_43 = arith.constant 2 : index
    %c0_44 = arith.constant 0 : index
    %c0_45 = arith.constant 0 : index
    %43 = vector.load %arg1[%c0_42, %c2_43, %c0_44, %c0_45] : memref<1x18x18x4xbf16, #tpu.memory_space<vmem>>, vector<1x16x16x4xbf16>
    %44 = vector.shape_cast %43 : vector<1x16x16x4xbf16> to vector<16x16x4xbf16>
    %45 = vector.shape_cast %44 : vector<16x16x4xbf16> to vector<256x4xbf16>
    %c6 = arith.constant 6 : index
    %c0_46 = arith.constant 0 : index
    %c0_47 = arith.constant 0 : index
    %46 = vector.load %arg2[%c6, %c0_46, %c0_47] : memref<9x4x4xbf16, #tpu.memory_space<vmem>>, vector<1x4x4xbf16>
    %47 = vector.shape_cast %46 : vector<1x4x4xbf16> to vector<4x4xbf16>
    %cst_48 = arith.constant dense<0.000000e+00> : vector<256x4xf32>
    %48 = tpu.matmul %45, %47, %cst_48 {dimension_numbers = #tpu.dot_dimension_numbers<[1], [0], [0], [1], [0, 0, 1, 1], [], []>} : vector<256x4xbf16>, vector<4x4xbf16>, vector<256x4xf32> -> vector<256x4xf32>
    %49 = arith.addf %42, %48 : vector<256x4xf32>
    %c0_49 = arith.constant 0 : index
    %c2_50 = arith.constant 2 : index
    %c1_51 = arith.constant 1 : index
    %c0_52 = arith.constant 0 : index
    %50 = vector.load %arg1[%c0_49, %c2_50, %c1_51, %c0_52] : memref<1x18x18x4xbf16, #tpu.memory_space<vmem>>, vector<1x16x16x4xbf16>
    %51 = vector.shape_cast %50 : vector<1x16x16x4xbf16> to vector<16x16x4xbf16>
    %52 = vector.shape_cast %51 : vector<16x16x4xbf16> to vector<256x4xbf16>
    %c7 = arith.constant 7 : index
    %c0_53 = arith.constant 0 : index
    %c0_54 = arith.constant 0 : index
    %53 = vector.load %arg2[%c7, %c0_53, %c0_54] : memref<9x4x4xbf16, #tpu.memory_space<vmem>>, vector<1x4x4xbf16>
    %54 = vector.shape_cast %53 : vector<1x4x4xbf16> to vector<4x4xbf16>
    %cst_55 = arith.constant dense<0.000000e+00> : vector<256x4xf32>
    %55 = tpu.matmul %52, %54, %cst_55 {dimension_numbers = #tpu.dot_dimension_numbers<[1], [0], [0], [1], [0, 0, 1, 1], [], []>} : vector<256x4xbf16>, vector<4x4xbf16>, vector<256x4xf32> -> vector<256x4xf32>
    %56 = arith.addf %49, %55 : vector<256x4xf32>
    %c0_56 = arith.constant 0 : index
    %c2_57 = arith.constant 2 : index
    %c2_58 = arith.constant 2 : index
    %c0_59 = arith.constant 0 : index
    %57 = vector.load %arg1[%c0_56, %c2_57, %c2_58, %c0_59] : memref<1x18x18x4xbf16, #tpu.memory_space<vmem>>, vector<1x16x16x4xbf16>
    %58 = vector.shape_cast %57 : vector<1x16x16x4xbf16> to vector<16x16x4xbf16>
    %59 = vector.shape_cast %58 : vector<16x16x4xbf16> to vector<256x4xbf16>
    %c8 = arith.constant 8 : index
    %c0_60 = arith.constant 0 : index
    %c0_61 = arith.constant 0 : index
    %60 = vector.load %arg2[%c8, %c0_60, %c0_61] : memref<9x4x4xbf16, #tpu.memory_space<vmem>>, vector<1x4x4xbf16>
    %61 = vector.shape_cast %60 : vector<1x4x4xbf16> to vector<4x4xbf16>
    %cst_62 = arith.constant dense<0.000000e+00> : vector<256x4xf32>
    %62 = tpu.matmul %59, %61, %cst_62 {dimension_numbers = #tpu.dot_dimension_numbers<[1], [0], [0], [1], [0, 0, 1, 1], [], []>} : vector<256x4xbf16>, vector<4x4xbf16>, vector<256x4xf32> -> vector<256x4xf32>
    %63 = arith.addf %56, %62 : vector<256x4xf32>
    %c0_63 = arith.constant 0 : index
    %c0_64 = arith.constant 0 : index
    %64 = vector.load %arg3[%c0_63, %c0_64] : memref<1x4xf32, #tpu.memory_space<vmem>>, vector<1x4xf32>
    %65 = vector.broadcast %64 : vector<1x4xf32> to vector<256x4xf32>
    %66 = arith.mulf %63, %65 : vector<256x4xf32>
    %c0_65 = arith.constant 0 : index
    %c0_66 = arith.constant 0 : index
    %67 = vector.load %arg4[%c0_65, %c0_66] : memref<1x4xf32, #tpu.memory_space<vmem>>, vector<1x4xf32>
    %68 = vector.broadcast %67 : vector<1x4xf32> to vector<256x4xf32>
    %69 = arith.addf %66, %68 : vector<256x4xf32>
    %cst_67 = arith.constant 0.000000e+00 : f32
    %70 = vector.broadcast %cst_67 : f32 to vector<256x4xf32>
    %71 = arith.maximumf %69, %70 : vector<256x4xf32>
    %72 = vector.shape_cast %71 : vector<256x4xf32> to vector<16x16x4xf32>
    %73 = arith.truncf %72 : vector<16x16x4xf32> to vector<16x16x4xbf16>
    %c0_68 = arith.constant 0 : index
    %c0_69 = arith.constant 0 : index
    %c0_70 = arith.constant 0 : index
    %c0_71 = arith.constant 0 : index
    %74 = vector.load %arg5[%c0_68, %c0_69, %c0_70, %c0_71] : memref<1x16x16x4xbf16, #tpu.memory_space<vmem>>, vector<1x16x16x4xbf16>
    %75 = vector.shape_cast %74 : vector<1x16x16x4xbf16> to vector<16x16x4xbf16>
    %76 = vector.shape_cast %73 : vector<16x16x4xbf16> to vector<1x16x16x4xbf16>
    tpu.vector_store %arg5[%c0_68, %c0_69, %c0_70, %c0_71], %76 {strides = array<i32>} : memref<1x16x16x4xbf16, #tpu.memory_space<vmem>>, vector<1x16x16x4xbf16>,
    return
  }
  func.func @transform_0(%arg0: i32) -> (i32, i32, i32, i32) {
    %c0_i32 = arith.constant 0 : i32
    %c0_i32_0 = arith.constant 0 : i32
    %c0_i32_1 = arith.constant 0 : i32
    %c0_i32_2 = arith.constant 0 : i32
    return %arg0, %c0_i32, %c0_i32_0, %c0_i32_1 : i32, i32, i32, i32
  }
  func.func @transform_1(%arg0: i32) -> (i32, i32, i32) {
    %c0_i32 = arith.constant 0 : i32
    %c0_i32_0 = arith.constant 0 : i32
    %c0_i32_1 = arith.constant 0 : i32
    %c0_i32_2 = arith.constant 0 : i32
    return %c0_i32, %c0_i32_0, %c0_i32_1 : i32, i32, i32
  }
  func.func @transform_2(%arg0: i32) -> (i32, i32) {
    %c0_i32 = arith.constant 0 : i32
    %c0_i32_0 = arith.constant 0 : i32
    %c0_i32_1 = arith.constant 0 : i32
    return %c0_i32, %c0_i32_0 : i32, i32
  }
  func.func @transform_3(%arg0: i32) -> (i32, i32) {
    %c0_i32 = arith.constant 0 : i32
    %c0_i32_0 = arith.constant 0 : i32
    %c0_i32_1 = arith.constant 0 : i32
    return %c0_i32, %c0_i32_0 : i32, i32
  }
  func.func @transform_4(%arg0: i32) -> (i32, i32, i32, i32) {
    %c0_i32 = arith.constant 0 : i32
    %c0_i32_0 = arith.constant 0 : i32
    %c0_i32_1 = arith.constant 0 : i32
    %c0_i32_2 = arith.constant 0 : i32
    return %arg0, %c0_i32, %c0_i32_0, %c0_i32_1 : i32, i32, i32, i32
  }
}

module attributes {stable_mosaic.version = 11 : i64} {
  func.func @_conv_bn_add_relu_kernel(%arg0: i32, %arg1: memref<1x18x18x4xbf16, #tpu.memory_space<vmem>>, %arg2: memref<9x4x4xbf16, #tpu.memory_space<vmem>>, %arg3: memref<1x4xf32, #tpu.memory_space<vmem>>, %arg4: memref<1x4xf32, #tpu.memory_space<vmem>>, %arg5: memref<1x16x16x4xbf16, #tpu.memory_space<vmem>>, %arg6: memref<1x16x16x4xf32, #tpu.memory_space<vmem>>) attributes {dimension_semantics = [#tpu.dimension_semantics<parallel>], iteration_bounds = array<i64: 2>, scalar_prefetch = 0 : i64, scratch_operands = 0 : i64, tpu.core_type = #tpu.core_type<tc>, window_params = [{transform_indices = @transform_0, window_bounds = array<i64: 1, 18, 18, 4>}, {pipeline_mode = #tpu.pipeline_mode<synchronous>, transform_indices = @transform_1, window_bounds = array<i64: 9, 4, 4>}, {pipeline_mode = #tpu.pipeline_mode<synchronous>, transform_indices = @transform_2, window_bounds = array<i64: 1, 4>}, {pipeline_mode = #tpu.pipeline_mode<synchronous>, transform_indices = @transform_3, window_bounds = array<i64: 1, 4>}, {transform_indices = @transform_4, window_bounds = array<i64: 1, 16, 16, 4>}, {transform_indices = @transform_5, window_bounds = array<i64: 1, 16, 16, 4>}]} {
    %cst = arith.constant 0.000000e+00 : f32
    %0 = vector.broadcast %cst : f32 to vector<256x4xf32>
    %c0 = arith.constant 0 : index
    %c0_0 = arith.constant 0 : index
    %c0_1 = arith.constant 0 : index
    %c0_2 = arith.constant 0 : index
    %1 = vector.load %arg1[%c0, %c0_0, %c0_1, %c0_2] : memref<1x18x18x4xbf16, #tpu.memory_space<vmem>>, vector<1x16x16x4xbf16>
    %2 = vector.shape_cast %1 : vector<1x16x16x4xbf16> to vector<16x16x4xbf16>
    %3 = vector.shape_cast %2 : vector<16x16x4xbf16> to vector<256x4xbf16>
    %c0_3 = arith.constant 0 : index
    %c0_4 = arith.constant 0 : index
    %c0_5 = arith.constant 0 : index
    %4 = vector.load %arg2[%c0_3, %c0_4, %c0_5] : memref<9x4x4xbf16, #tpu.memory_space<vmem>>, vector<1x4x4xbf16>
    %5 = vector.shape_cast %4 : vector<1x4x4xbf16> to vector<4x4xbf16>
    %cst_6 = arith.constant dense<0.000000e+00> : vector<256x4xf32>
    %6 = tpu.matmul %3, %5, %cst_6 {dimension_numbers = #tpu.dot_dimension_numbers<[1], [0], [0], [1], [0, 0, 1, 1], [], []>} : vector<256x4xbf16>, vector<4x4xbf16>, vector<256x4xf32> -> vector<256x4xf32>
    %7 = arith.addf %0, %6 : vector<256x4xf32>
    %c0_7 = arith.constant 0 : index
    %c0_8 = arith.constant 0 : index
    %c1 = arith.constant 1 : index
    %c0_9 = arith.constant 0 : index
    %8 = vector.load %arg1[%c0_7, %c0_8, %c1, %c0_9] : memref<1x18x18x4xbf16, #tpu.memory_space<vmem>>, vector<1x16x16x4xbf16>
    %9 = vector.shape_cast %8 : vector<1x16x16x4xbf16> to vector<16x16x4xbf16>
    %10 = vector.shape_cast %9 : vector<16x16x4xbf16> to vector<256x4xbf16>
    %c1_10 = arith.constant 1 : index
    %c0_11 = arith.constant 0 : index
    %c0_12 = arith.constant 0 : index
    %11 = vector.load %arg2[%c1_10, %c0_11, %c0_12] : memref<9x4x4xbf16, #tpu.memory_space<vmem>>, vector<1x4x4xbf16>
    %12 = vector.shape_cast %11 : vector<1x4x4xbf16> to vector<4x4xbf16>
    %cst_13 = arith.constant dense<0.000000e+00> : vector<256x4xf32>
    %13 = tpu.matmul %10, %12, %cst_13 {dimension_numbers = #tpu.dot_dimension_numbers<[1], [0], [0], [1], [0, 0, 1, 1], [], []>} : vector<256x4xbf16>, vector<4x4xbf16>, vector<256x4xf32> -> vector<256x4xf32>
    %14 = arith.addf %7, %13 : vector<256x4xf32>
    %c0_14 = arith.constant 0 : index
    %c0_15 = arith.constant 0 : index
    %c2 = arith.constant 2 : index
    %c0_16 = arith.constant 0 : index
    %15 = vector.load %arg1[%c0_14, %c0_15, %c2, %c0_16] : memref<1x18x18x4xbf16, #tpu.memory_space<vmem>>, vector<1x16x16x4xbf16>
    %16 = vector.shape_cast %15 : vector<1x16x16x4xbf16> to vector<16x16x4xbf16>
    %17 = vector.shape_cast %16 : vector<16x16x4xbf16> to vector<256x4xbf16>
    %c2_17 = arith.constant 2 : index
    %c0_18 = arith.constant 0 : index
    %c0_19 = arith.constant 0 : index
    %18 = vector.load %arg2[%c2_17, %c0_18, %c0_19] : memref<9x4x4xbf16, #tpu.memory_space<vmem>>, vector<1x4x4xbf16>
    %19 = vector.shape_cast %18 : vector<1x4x4xbf16> to vector<4x4xbf16>
    %cst_20 = arith.constant dense<0.000000e+00> : vector<256x4xf32>
    %20 = tpu.matmul %17, %19, %cst_20 {dimension_numbers = #tpu.dot_dimension_numbers<[1], [0], [0], [1], [0, 0, 1, 1], [], []>} : vector<256x4xbf16>, vector<4x4xbf16>, vector<256x4xf32> -> vector<256x4xf32>
    %21 = arith.addf %14, %20 : vector<256x4xf32>
    %c0_21 = arith.constant 0 : index
    %c1_22 = arith.constant 1 : index
    %c0_23 = arith.constant 0 : index
    %c0_24 = arith.constant 0 : index
    %22 = vector.load %arg1[%c0_21, %c1_22, %c0_23, %c0_24] : memref<1x18x18x4xbf16, #tpu.memory_space<vmem>>, vector<1x16x16x4xbf16>
    %23 = vector.shape_cast %22 : vector<1x16x16x4xbf16> to vector<16x16x4xbf16>
    %24 = vector.shape_cast %23 : vector<16x16x4xbf16> to vector<256x4xbf16>
    %c3 = arith.constant 3 : index
    %c0_25 = arith.constant 0 : index
    %c0_26 = arith.constant 0 : index
    %25 = vector.load %arg2[%c3, %c0_25, %c0_26] : memref<9x4x4xbf16, #tpu.memory_space<vmem>>, vector<1x4x4xbf16>
    %26 = vector.shape_cast %25 : vector<1x4x4xbf16> to vector<4x4xbf16>
    %cst_27 = arith.constant dense<0.000000e+00> : vector<256x4xf32>
    %27 = tpu.matmul %24, %26, %cst_27 {dimension_numbers = #tpu.dot_dimension_numbers<[1], [0], [0], [1], [0, 0, 1, 1], [], []>} : vector<256x4xbf16>, vector<4x4xbf16>, vector<256x4xf32> -> vector<256x4xf32>
    %28 = arith.addf %21, %27 : vector<256x4xf32>
    %c0_28 = arith.constant 0 : index
    %c1_29 = arith.constant 1 : index
    %c1_30 = arith.constant 1 : index
    %c0_31 = arith.constant 0 : index
    %29 = vector.load %arg1[%c0_28, %c1_29, %c1_30, %c0_31] : memref<1x18x18x4xbf16, #tpu.memory_space<vmem>>, vector<1x16x16x4xbf16>
    %30 = vector.shape_cast %29 : vector<1x16x16x4xbf16> to vector<16x16x4xbf16>
    %31 = vector.shape_cast %30 : vector<16x16x4xbf16> to vector<256x4xbf16>
    %c4 = arith.constant 4 : index
    %c0_32 = arith.constant 0 : index
    %c0_33 = arith.constant 0 : index
    %32 = vector.load %arg2[%c4, %c0_32, %c0_33] : memref<9x4x4xbf16, #tpu.memory_space<vmem>>, vector<1x4x4xbf16>
    %33 = vector.shape_cast %32 : vector<1x4x4xbf16> to vector<4x4xbf16>
    %cst_34 = arith.constant dense<0.000000e+00> : vector<256x4xf32>
    %34 = tpu.matmul %31, %33, %cst_34 {dimension_numbers = #tpu.dot_dimension_numbers<[1], [0], [0], [1], [0, 0, 1, 1], [], []>} : vector<256x4xbf16>, vector<4x4xbf16>, vector<256x4xf32> -> vector<256x4xf32>
    %35 = arith.addf %28, %34 : vector<256x4xf32>
    %c0_35 = arith.constant 0 : index
    %c1_36 = arith.constant 1 : index
    %c2_37 = arith.constant 2 : index
    %c0_38 = arith.constant 0 : index
    %36 = vector.load %arg1[%c0_35, %c1_36, %c2_37, %c0_38] : memref<1x18x18x4xbf16, #tpu.memory_space<vmem>>, vector<1x16x16x4xbf16>
    %37 = vector.shape_cast %36 : vector<1x16x16x4xbf16> to vector<16x16x4xbf16>
    %38 = vector.shape_cast %37 : vector<16x16x4xbf16> to vector<256x4xbf16>
    %c5 = arith.constant 5 : index
    %c0_39 = arith.constant 0 : index
    %c0_40 = arith.constant 0 : index
    %39 = vector.load %arg2[%c5, %c0_39, %c0_40] : memref<9x4x4xbf16, #tpu.memory_space<vmem>>, vector<1x4x4xbf16>
    %40 = vector.shape_cast %39 : vector<1x4x4xbf16> to vector<4x4xbf16>
    %cst_41 = arith.constant dense<0.000000e+00> : vector<256x4xf32>
    %41 = tpu.matmul %38, %40, %cst_41 {dimension_numbers = #tpu.dot_dimension_numbers<[1], [0], [0], [1], [0, 0, 1, 1], [], []>} : vector<256x4xbf16>, vector<4x4xbf16>, vector<256x4xf32> -> vector<256x4xf32>
    %42 = arith.addf %35, %41 : vector<256x4xf32>
    %c0_42 = arith.constant 0 : index
    %c2_43 = arith.constant 2 : index
    %c0_44 = arith.constant 0 : index
    %c0_45 = arith.constant 0 : index
    %43 = vector.load %arg1[%c0_42, %c2_43, %c0_44, %c0_45] : memref<1x18x18x4xbf16, #tpu.memory_space<vmem>>, vector<1x16x16x4xbf16>
    %44 = vector.shape_cast %43 : vector<1x16x16x4xbf16> to vector<16x16x4xbf16>
    %45 = vector.shape_cast %44 : vector<16x16x4xbf16> to vector<256x4xbf16>
    %c6 = arith.constant 6 : index
    %c0_46 = arith.constant 0 : index
    %c0_47 = arith.constant 0 : index
    %46 = vector.load %arg2[%c6, %c0_46, %c0_47] : memref<9x4x4xbf16, #tpu.memory_space<vmem>>, vector<1x4x4xbf16>
    %47 = vector.shape_cast %46 : vector<1x4x4xbf16> to vector<4x4xbf16>
    %cst_48 = arith.constant dense<0.000000e+00> : vector<256x4xf32>
    %48 = tpu.matmul %45, %47, %cst_48 {dimension_numbers = #tpu.dot_dimension_numbers<[1], [0], [0], [1], [0, 0, 1, 1], [], []>} : vector<256x4xbf16>, vector<4x4xbf16>, vector<256x4xf32> -> vector<256x4xf32>
    %49 = arith.addf %42, %48 : vector<256x4xf32>
    %c0_49 = arith.constant 0 : index
    %c2_50 = arith.constant 2 : index
    %c1_51 = arith.constant 1 : index
    %c0_52 = arith.constant 0 : index
    %50 = vector.load %arg1[%c0_49, %c2_50, %c1_51, %c0_52] : memref<1x18x18x4xbf16, #tpu.memory_space<vmem>>, vector<1x16x16x4xbf16>
    %51 = vector.shape_cast %50 : vector<1x16x16x4xbf16> to vector<16x16x4xbf16>
    %52 = vector.shape_cast %51 : vector<16x16x4xbf16> to vector<256x4xbf16>
    %c7 = arith.constant 7 : index
    %c0_53 = arith.constant 0 : index
    %c0_54 = arith.constant 0 : index
    %53 = vector.load %arg2[%c7, %c0_53, %c0_54] : memref<9x4x4xbf16, #tpu.memory_space<vmem>>, vector<1x4x4xbf16>
    %54 = vector.shape_cast %53 : vector<1x4x4xbf16> to vector<4x4xbf16>
    %cst_55 = arith.constant dense<0.000000e+00> : vector<256x4xf32>
    %55 = tpu.matmul %52, %54, %cst_55 {dimension_numbers = #tpu.dot_dimension_numbers<[1], [0], [0], [1], [0, 0, 1, 1], [], []>} : vector<256x4xbf16>, vector<4x4xbf16>, vector<256x4xf32> -> vector<256x4xf32>
    %56 = arith.addf %49, %55 : vector<256x4xf32>
    %c0_56 = arith.constant 0 : index
    %c2_57 = arith.constant 2 : index
    %c2_58 = arith.constant 2 : index
    %c0_59 = arith.constant 0 : index
    %57 = vector.load %arg1[%c0_56, %c2_57, %c2_58, %c0_59] : memref<1x18x18x4xbf16, #tpu.memory_space<vmem>>, vector<1x16x16x4xbf16>
    %58 = vector.shape_cast %57 : vector<1x16x16x4xbf16> to vector<16x16x4xbf16>
    %59 = vector.shape_cast %58 : vector<16x16x4xbf16> to vector<256x4xbf16>
    %c8 = arith.constant 8 : index
    %c0_60 = arith.constant 0 : index
    %c0_61 = arith.constant 0 : index
    %60 = vector.load %arg2[%c8, %c0_60, %c0_61] : memref<9x4x4xbf16, #tpu.memory_space<vmem>>, vector<1x4x4xbf16>
    %61 = vector.shape_cast %60 : vector<1x4x4xbf16> to vector<4x4xbf16>
    %cst_62 = arith.constant dense<0.000000e+00> : vector<256x4xf32>
    %62 = tpu.matmul %59, %61, %cst_62 {dimension_numbers = #tpu.dot_dimension_numbers<[1], [0], [0], [1], [0, 0, 1, 1], [], []>} : vector<256x4xbf16>, vector<4x4xbf16>, vector<256x4xf32> -> vector<256x4xf32>
    %63 = arith.addf %56, %62 : vector<256x4xf32>
    %c0_63 = arith.constant 0 : index
    %c0_64 = arith.constant 0 : index
    %c0_65 = arith.constant 0 : index
    %c0_66 = arith.constant 0 : index
    %64 = vector.load %arg5[%c0_63, %c0_64, %c0_65, %c0_66] : memref<1x16x16x4xbf16, #tpu.memory_space<vmem>>, vector<1x16x16x4xbf16>
    %65 = vector.shape_cast %64 : vector<1x16x16x4xbf16> to vector<16x16x4xbf16>
    %66 = vector.shape_cast %65 : vector<16x16x4xbf16> to vector<256x4xbf16>
    %67 = arith.extf %66 : vector<256x4xbf16> to vector<256x4xf32>
    %c0_67 = arith.constant 0 : index
    %c0_68 = arith.constant 0 : index
    %68 = vector.load %arg3[%c0_67, %c0_68] : memref<1x4xf32, #tpu.memory_space<vmem>>, vector<1x4xf32>
    %69 = vector.broadcast %68 : vector<1x4xf32> to vector<256x4xf32>
    %70 = arith.mulf %63, %69 : vector<256x4xf32>
    %c0_69 = arith.constant 0 : index
    %c0_70 = arith.constant 0 : index
    %71 = vector.load %arg4[%c0_69, %c0_70] : memref<1x4xf32, #tpu.memory_space<vmem>>, vector<1x4xf32>
    %72 = vector.broadcast %71 : vector<1x4xf32> to vector<256x4xf32>
    %73 = arith.addf %70, %72 : vector<256x4xf32>
    %74 = arith.addf %73, %67 : vector<256x4xf32>
    %cst_71 = arith.constant 0.000000e+00 : f32
    %75 = vector.broadcast %cst_71 : f32 to vector<256x4xf32>
    %76 = arith.maximumf %74, %75 : vector<256x4xf32>
    %77 = vector.shape_cast %76 : vector<256x4xf32> to vector<16x16x4xf32>
    %c0_72 = arith.constant 0 : index
    %c0_73 = arith.constant 0 : index
    %c0_74 = arith.constant 0 : index
    %c0_75 = arith.constant 0 : index
    %78 = vector.load %arg6[%c0_72, %c0_73, %c0_74, %c0_75] : memref<1x16x16x4xf32, #tpu.memory_space<vmem>>, vector<1x16x16x4xf32>
    %79 = vector.shape_cast %78 : vector<1x16x16x4xf32> to vector<16x16x4xf32>
    %80 = vector.shape_cast %77 : vector<16x16x4xf32> to vector<1x16x16x4xf32>
    tpu.vector_store %arg6[%c0_72, %c0_73, %c0_74, %c0_75], %80 {strides = array<i32>} : memref<1x16x16x4xf32, #tpu.memory_space<vmem>>, vector<1x16x16x4xf32>,
    return
  }
  func.func @transform_0(%arg0: i32) -> (i32, i32, i32, i32) {
    %c0_i32 = arith.constant 0 : i32
    %c0_i32_0 = arith.constant 0 : i32
    %c0_i32_1 = arith.constant 0 : i32
    %c0_i32_2 = arith.constant 0 : i32
    return %arg0, %c0_i32, %c0_i32_0, %c0_i32_1 : i32, i32, i32, i32
  }
  func.func @transform_1(%arg0: i32) -> (i32, i32, i32) {
    %c0_i32 = arith.constant 0 : i32
    %c0_i32_0 = arith.constant 0 : i32
    %c0_i32_1 = arith.constant 0 : i32
    %c0_i32_2 = arith.constant 0 : i32
    return %c0_i32, %c0_i32_0, %c0_i32_1 : i32, i32, i32
  }
  func.func @transform_2(%arg0: i32) -> (i32, i32) {
    %c0_i32 = arith.constant 0 : i32
    %c0_i32_0 = arith.constant 0 : i32
    %c0_i32_1 = arith.constant 0 : i32
    return %c0_i32, %c0_i32_0 : i32, i32
  }
  func.func @transform_3(%arg0: i32) -> (i32, i32) {
    %c0_i32 = arith.constant 0 : i32
    %c0_i32_0 = arith.constant 0 : i32
    %c0_i32_1 = arith.constant 0 : i32
    return %c0_i32, %c0_i32_0 : i32, i32
  }
  func.func @transform_4(%arg0: i32) -> (i32, i32, i32, i32) {
    %c0_i32 = arith.constant 0 : i32
    %c0_i32_0 = arith.constant 0 : i32
    %c0_i32_1 = arith.constant 0 : i32
    %c0_i32_2 = arith.constant 0 : i32
    return %arg0, %c0_i32, %c0_i32_0, %c0_i32_1 : i32, i32, i32, i32
  }
  func.func @transform_5(%arg0: i32) -> (i32, i32, i32, i32) {
    %c0_i32 = arith.constant 0 : i32
    %c0_i32_0 = arith.constant 0 : i32
    %c0_i32_1 = arith.constant 0 : i32
    %c0_i32_2 = arith.constant 0 : i32
    return %arg0, %c0_i32, %c0_i32_0, %c0_i32_1 : i32, i32, i32, i32
  }
}

</mosaic_0001>

<llo_original>
// kernel: basic_block_forward.3
$region0: #{basic_block_forward.3}
  #allocation0 [shape = 'u32[]', space=smem, size = 0x4, offset = 0x4, fixed_abs, tag = 'smem constant byte address 0x4 - core index']
  #allocation1 [shape = 'u32[144,128]{1,0:T(1,128)}', space=vmem, size = 0x12000, scoped, tag = 'internal scratch']
  %s0 = inlined_call_operand.vmem [shape: bf16[2,18,18,4], index: 0, kind: input, shape index: {}]
  %s1 = inlined_call_operand.vmem [shape: bf16[9,4,4], index: 1, kind: input, shape index: {}]
  %s2 = inlined_call_operand.vmem [shape: f32[1,4], index: 2, kind: input, shape index: {}]
  %s3 = inlined_call_operand.vmem [shape: f32[1,4], index: 3, kind: input, shape index: {}]
  %s4 = inlined_call_operand.vmem [shape: bf16[2,16,16,4], index: 4, kind: input, shape index: {}]
  %s5 = inlined_call_operand.vmem [shape: f32[2,16,16,4], index: 5, kind: output, shape index: {}]
  %s6 = sld [smem:[#allocation0]]
  $region53: #{basic_block_forward.3} parent=0
    _
  %s8 = ssub.s32 1, %s6
  %s9 = scalar_select 0, %s8, %s6
  loop: start=0, step=1, limit=4
  $region2: #{basic_block_forward.3} parent=0 // loop_pre_header
    _
  $region3: #{basic_block_forward.3} parent=0 // loop_header
    %s11 = sphi 0, %s15
    %p12 = scmp.ge.s32.totalorder %s11, 4
    %s21 = sphi 0, %s23
    %s24 = sphi 0, %s21
    %s25 = sphi 0, %s24
    %s41 = sphi 0, %s25
    %s45 = sphi 0, %s45
    %s47 = sphi 0, %s45
    %s48 = sphi 0, %s47
    %s62 = sphi 0, %s48
    %s66 = sphi 0, %s66
    %s68 = sphi 0, %s66
    %s69 = sphi 0, %s68
    %s83 = sphi 0, %s69
    %s87 = sphi 0, %s87
    %s89 = sphi 0, %s87
    %s90 = sphi 0, %s89
    %s104 = sphi 0, %s90
    %s110 = sphi 0, %s112
    %s113 = sphi 0, %s110
    %s114 = sphi 0, %s113
    %s130 = sphi 0, %s114
    %s136 = sphi 0, %s138
    %s139 = sphi 0, %s136
    %s140 = sphi 0, %s139
    %s156 = sphi 0, %s140
  $region4: #{basic_block_forward.3} parent=0 // loop_header_branch
    %14 = sbr.rel (%p12) target = $region8
  $region5: #{basic_block_forward.3} parent=0 // loop_body
    %s16 = ssub.s32 %s11, 1
    %s17 = ssub.s32 %s11, 2
    %s18 = sadd.s32 %s11, 1
    %s19 = ssub.s32 %s11, %s18
    %p20 = scmp.eq.s32.totalorder %s19, 0
    %s22 = sadd.s32 %s21, 1
    %s23 = scalar_select %p20, %s21, %s22
    %p26 = pneg %p20
    %p27 = scmp.eq.s32.totalorder %s11, 1
    %p28 = por %p26, %p27
    %p29 = scmp.ne.s32.totalorder %s21, %s24
    %p30 = scmp.eq.s32.totalorder %s11, 0
    %p31 = por %p29, %p30
    %p32 = scmp.ne.s32.totalorder %s21, %s24
    %p33 = scmp.eq.s32.totalorder %s16, 1
    %p34 = por %p32, %p33
    %p35 = scmp.ne.s32.totalorder %s24, %s25
    %p36 = scmp.eq.s32.totalorder %s16, 0
    %p37 = por %p35, %p36
    %p38 = scmp.ne.s32.totalorder %s24, %s25
    %p39 = scmp.eq.s32.totalorder %s17, 1
    %p40 = por %p38, %p39
    %p42 = scmp.ne.s32.totalorder %s25, %s41
    %p43 = scmp.eq.s32.totalorder %s17, 0
    %p44 = por %p42, %p43
    %s46 = sadd.s32 %s45, 1
    %p49 = scmp.eq.s32.totalorder %s11, 1
    %p50 = scmp.ne.s32.totalorder %s45, %s47
    %p51 = scmp.eq.s32.totalorder %s11, 0
    %p52 = por %p50, %p51
    %p53 = scmp.ne.s32.totalorder %s45, %s47
    %p54 = scmp.eq.s32.totalorder %s16, 1
    %p55 = por %p53, %p54
    %p56 = scmp.ne.s32.totalorder %s47, %s48
    %p57 = scmp.eq.s32.totalorder %s16, 0
    %p58 = por %p56, %p57
    %p59 = scmp.ne.s32.totalorder %s47, %s48
    %p60 = scmp.eq.s32.totalorder %s17, 1
    %p61 = por %p59, %p60
    %p63 = scmp.ne.s32.totalorder %s48, %s62
    %p64 = scmp.eq.s32.totalorder %s17, 0
    %p65 = por %p63, %p64
    %s67 = sadd.s32 %s66, 1
    %p70 = scmp.eq.s32.totalorder %s11, 1
    %p71 = scmp.ne.s32.totalorder %s66, %s68
    %p72 = scmp.eq.s32.totalorder %s11, 0
    %p73 = por %p71, %p72
    %p74 = scmp.ne.s32.totalorder %s66, %s68
    %p75 = scmp.eq.s32.totalorder %s16, 1
    %p76 = por %p74, %p75
    %p77 = scmp.ne.s32.totalorder %s68, %s69
    %p78 = scmp.eq.s32.totalorder %s16, 0
    %p79 = por %p77, %p78
    %p80 = scmp.ne.s32.totalorder %s68, %s69
    %p81 = scmp.eq.s32.totalorder %s17, 1
    %p82 = por %p80, %p81
    %p84 = scmp.ne.s32.totalorder %s69, %s83
    %p85 = scmp.eq.s32.totalorder %s17, 0
    %p86 = por %p84, %p85
    %s88 = sadd.s32 %s87, 1
    %p91 = scmp.eq.s32.totalorder %s11, 1
    %p92 = scmp.ne.s32.totalorder %s87, %s89
    %p93 = scmp.eq.s32.totalorder %s11, 0
    %p94 = por %p92, %p93
    %p95 = scmp.ne.s32.totalorder %s87, %s89
    %p96 = scmp.eq.s32.totalorder %s16, 1
    %p97 = por %p95, %p96
    %p98 = scmp.ne.s32.totalorder %s89, %s90
    %p99 = scmp.eq.s32.totalorder %s16, 0
    %p100 = por %p98, %p99
    %p101 = scmp.ne.s32.totalorder %s89, %s90
    %p102 = scmp.eq.s32.totalorder %s17, 1
    %p103 = por %p101, %p102
    %p105 = scmp.ne.s32.totalorder %s90, %s104
    %p106 = scmp.eq.s32.totalorder %s17, 0
    %p107 = por %p105, %p106
    %s108 = ssub.s32 %s11, %s18
    %p109 = scmp.eq.s32.totalorder %s108, 0
    %s111 = sadd.s32 %s110, 1
    %s112 = scalar_select %p109, %s110, %s111
    %p115 = pneg %p109
    %p116 = scmp.eq.s32.totalorder %s11, 1
    %p117 = por %p115, %p116
    %p118 = scmp.ne.s32.totalorder %s110, %s113
    %p119 = scmp.eq.s32.totalorder %s11, 0
    %p120 = por %p118, %p119
    %p121 = scmp.ne.s32.totalorder %s110, %s113
    %p122 = scmp.eq.s32.totalorder %s16, 1
    %p123 = por %p121, %p122
    %p124 = scmp.ne.s32.totalorder %s113, %s114
    %p125 = scmp.eq.s32.totalorder %s16, 0
    %p126 = por %p124, %p125
    %p127 = scmp.ne.s32.totalorder %s113, %s114
    %p128 = scmp.eq.s32.totalorder %s17, 1
    %p129 = por %p127, %p128
    %p131 = scmp.ne.s32.totalorder %s114, %s130
    %p132 = scmp.eq.s32.totalorder %s17, 0
    %p133 = por %p131, %p132
    %s134 = ssub.s32 %s11, %s18
    %p135 = scmp.eq.s32.totalorder %s134, 0
    %s137 = sadd.s32 %s136, 1
    %s138 = scalar_select %p135, %s136, %s137
    %p141 = pneg %p135
    %p142 = scmp.eq.s32.totalorder %s11, 1
    %p143 = por %p141, %p142
    %p144 = scmp.ne.s32.totalorder %s136, %s139
    %p145 = scmp.eq.s32.totalorder %s11, 0
    %p146 = por %p144, %p145
    %p147 = scmp.ne.s32.totalorder %s136, %s139
    %p148 = scmp.eq.s32.totalorder %s16, 1
    %p149 = por %p147, %p148
    %p150 = scmp.ne.s32.totalorder %s139, %s140
    %p151 = scmp.eq.s32.totalorder %s16, 0
    %p152 = por %p150, %p151
    %p153 = scmp.ne.s32.totalorder %s139, %s140
    %p154 = scmp.eq.s32.totalorder %s17, 1
    %p155 = por %p153, %p154
    %p157 = scmp.ne.s32.totalorder %s140, %s156
    %p158 = scmp.eq.s32.totalorder %s17, 0
    %p159 = por %p157, %p158
    %p160 = scmp.le.s32.totalorder 1, %s11
    %p161 = scmp.lt.s32.totalorder %s11, 3
    %p162 = pnand %p160, %p161
    %p163 = pneg %p162
    // Predicated region
    $region9: #{basic_block_forward.3} parent=5 // pred_check
      _
    $region10: #{basic_block_forward.3} parent=5 // pred_check_branch
      %165 = sbr.rel (%p162) target = $region12
    $region11: #{basic_block_forward.3} parent=5 // pred_region
      %s166 = ssub.s32 %s11, 1
      // Predicated region
      $region13: #{basic_block_forward.3} parent=11 // pred_check
        %p167 = pneg %p58
      $region14: #{basic_block_forward.3} parent=11 // pred_check_branch
        %169 = sbr.rel (%p167) target = $region16
      $region15: #{basic_block_forward.3} parent=11 // pred_region
        _
      $region16: #{basic_block_forward.3} parent=11 // pred_fallthru
        _
      // Predicated region
      $region17: #{basic_block_forward.3} parent=11 // pred_check
        %p170 = pneg %p79
      $region18: #{basic_block_forward.3} parent=11 // pred_check_branch
        %172 = sbr.rel (%p170) target = $region20
      $region19: #{basic_block_forward.3} parent=11 // pred_region
        _
      $region20: #{basic_block_forward.3} parent=11 // pred_fallthru
        _
      // Predicated region
      $region21: #{basic_block_forward.3} parent=11 // pred_check
        %p173 = pneg %p100
      $region22: #{basic_block_forward.3} parent=11 // pred_check_branch
        %175 = sbr.rel (%p173) target = $region24
      $region23: #{basic_block_forward.3} parent=11 // pred_region
        _
      $region24: #{basic_block_forward.3} parent=11 // pred_fallthru
        _
    $region12: #{basic_block_forward.3} parent=5 // pred_fallthru
      _
    %p176 = scmp.lt.s32.totalorder %s11, 2
    // Predicated region
    $region25: #{basic_block_forward.3} parent=5 // pred_check
      %p177 = pneg %p176
    $region26: #{basic_block_forward.3} parent=5 // pred_check_branch
      %179 = sbr.rel (%p177) target = $region28
    $region27: #{basic_block_forward.3} parent=5 // pred_region
      // Predicated region
      $region29: #{basic_block_forward.3} parent=27 // pred_check
        %p180 = pneg %p31
      $region30: #{basic_block_forward.3} parent=27 // pred_check_branch
        %182 = sbr.rel (%p180) target = $region32
      $region31: #{basic_block_forward.3} parent=27 // pred_region
        %p183 = scmp.lt.s32.totalorder %s11, 1
        %s184 = scalar_select %p183, %s11, 1
        %s185 = smul.addr %s184, 54
        %s186 = smul.addr %s185, 4
        %s187 = scalar_lea.vmem %s0, %s186
      $region32: #{basic_block_forward.3} parent=27 // pred_fallthru
        _
      // Predicated region
      $region33: #{basic_block_forward.3} parent=27 // pred_check
        %p188 = pneg %p120
      $region34: #{basic_block_forward.3} parent=27 // pred_check_branch
        %190 = sbr.rel (%p188) target = $region36
      $region35: #{basic_block_forward.3} parent=27 // pred_region
        %p191 = scmp.lt.s32.totalorder %s11, 1
        %s192 = scalar_select %p191, %s11, 1
        %s193 = smul.addr %s192, 32
        %s194 = smul.addr %s193, 4
        %s195 = scalar_lea.vmem %s4, %s194
      $region36: #{basic_block_forward.3} parent=27 // pred_fallthru
        _
    $region28: #{basic_block_forward.3} parent=5 // pred_fallthru
      _
    %p196 = scmp.le.s32.totalorder 1, %s11
    %p197 = scmp.lt.s32.totalorder %s11, 3
    %p198 = pnand %p196, %p197
    %p199 = pneg %p198
    // Predicated region
    $region37: #{basic_block_forward.3} parent=5 // pred_check
      _
    $region38: #{basic_block_forward.3} parent=5 // pred_check_branch
      %201 = sbr.rel (%p198) target = $region40
    $region39: #{basic_block_forward.3} parent=5 // pred_region
      %s202 = ssub.s32 %s11, 1
      %p203 = scmp.lt.s32.totalorder %s16, 1
      %s204 = scalar_select %p203, %s16, 1
      %s205 = smul.addr %s204, 54
      %s206 = smul.addr %s205, 4
      %s207 = scalar_lea.vmem %s0, %s206
      %p208 = pneg %p37
      %p209 = pneg %p34
      %p210 = pneg %p58
      %p211 = pneg %p55
      %p212 = pneg %p79
      %p213 = pneg %p76
      %p214 = pneg %p100
      %p215 = pneg %p97
      %p216 = scmp.lt.s32.totalorder %s16, 1
      %s217 = scalar_select %p216, %s16, 1
      %s218 = smul.addr %s217, 32
      %s219 = smul.addr %s218, 4
      %s220 = scalar_lea.vmem %s4, %s219
      %p221 = pneg %p126
      %p222 = pneg %p123
      %p223 = pneg %p152
      %p224 = pneg %p149
      %p225 = scmp.lt.s32.totalorder %s16, 1
      %s226 = scalar_select %p225, %s16, 1
      %s227 = smul.addr %s226, 32
      %s228 = smul.addr %s227, 8
      %s229 = scalar_lea.vmem %s5, %s228
      %p230 = scmp.lt.s32.totalorder %s16, 1
      %s231 = scalar_select %p230, %s16, 1
      %s232 = smul.addr %s231, 54
      %s233 = smul.addr %s232, 4
      %s234 = scalar_lea.vmem %s0, %s233
      %p235 = scmp.lt.s32.totalorder %s16, 1
      %s236 = scalar_select %p235, %s16, 1
      %s237 = smul.addr %s236, 32
      %s238 = smul.addr %s237, 4
      %s239 = scalar_lea.vmem %s4, %s238
      %p240 = scmp.lt.s32.totalorder %s16, 1
      %s241 = scalar_select %p240, %s16, 1
      %s242 = smul.addr %s241, 32
      %s243 = smul.addr %s242, 8
      %s244 = scalar_lea.vmem %s5, %s243
      %v246 = vld [vmem:[%s234] sm:$0xf]
      %v247 = vld [vmem:[%s234 + $0x4] sm:$0xf]
      %v248 = vld [vmem:[%s234 + $0xc] sm:$0xf]
      %v249 = vld [vmem:[%s234 + $0x10] sm:$0xf]
      %v250 = vld [vmem:[%s234 + $0x18] sm:$0xf]
      %v251 = vld [vmem:[%s234 + $0x1c] sm:$0xf]
      %v252 = vld [vmem:[%s234 + $0x24] sm:$0xf]
      %v253 = vld [vmem:[%s234 + $0x28] sm:$0xf]
      %v254 = vld [vmem:[%s234 + $0x30] sm:$0xf]
      %v255 = vld [vmem:[%s234 + $0x34] sm:$0xf]
      %v256 = vld [vmem:[%s234 + $0x3c] sm:$0xf]
      %v257 = vld [vmem:[%s234 + $0x40] sm:$0xf]
      %v258 = vld [vmem:[%s234 + $0x48] sm:$0xf]
      %v259 = vld [vmem:[%s234 + $0x4c] sm:$0xf]
      %v260 = vld [vmem:[%s234 + $0x54] sm:$0xf]
      %v261 = vld [vmem:[%s234 + $0x58] sm:$0xf]
      %v262 = vld [vmem:[%s234 + $0x60] sm:$0xf]
      %v263 = vld [vmem:[%s234 + $0x64] sm:$0xf]
      %v264 = vld [vmem:[%s234 + $0x6c] sm:$0xf]
      %v265 = vld [vmem:[%s234 + $0x70] sm:$0xf]
      %v266 = vld [vmem:[%s234 + $0x78] sm:$0xf]
      %v267 = vld [vmem:[%s234 + $0x7c] sm:$0xf]
      %v268 = vld [vmem:[%s234 + $0x84] sm:$0xf]
      %v269 = vld [vmem:[%s234 + $0x88] sm:$0xf]
      %v270 = vld [vmem:[%s234 + $0x90] sm:$0xf]
      %v271 = vld [vmem:[%s234 + $0x94] sm:$0xf]
      %v272 = vld [vmem:[%s234 + $0x9c] sm:$0xf]
      %v273 = vld [vmem:[%s234 + $0xa0] sm:$0xf]
      %v274 = vld [vmem:[%s234 + $0xa8] sm:$0xf]
      %v275 = vld [vmem:[%s234 + $0xac] sm:$0xf]
      %v276 = vld [vmem:[%s234 + $0xb4] sm:$0xf]
      %v277 = vld [vmem:[%s234 + $0xb8] sm:$0xf]
      %v278 = vld [vmem:[%s1] sm:$0x3]
      %v279 = vld [vmem:[%s234 + $0x8] sm:$0x1]
      %v280 = vld [vmem:[%s234 + $0x14] sm:$0x1]
      %v281 = vld [vmem:[%s234 + $0x20] sm:$0x1]
      %v282 = vld [vmem:[%s234 + $0x2c] sm:$0x1]
      %v283 = vld [vmem:[%s234 + $0x38] sm:$0x1]
      %v284 = vld [vmem:[%s234 + $0x44] sm:$0x1]
      %v285 = vld [vmem:[%s234 + $0x50] sm:$0x1]
      %v286 = vld [vmem:[%s234 + $0x5c] sm:$0x1]
      %v287 = vld [vmem:[%s234 + $0x68] sm:$0x1]
      %v288 = vld [vmem:[%s234 + $0x74] sm:$0x1]
      %v289 = vld [vmem:[%s234 + $0x80] sm:$0x1]
      %v290 = vld [vmem:[%s234 + $0x8c] sm:$0x1]
      %v291 = vld [vmem:[%s234 + $0x98] sm:$0x1]
      %v292 = vld [vmem:[%s234 + $0xa4] sm:$0x1]
      %v293 = vld [vmem:[%s234 + $0xb0] sm:$0x1]
      %v294 = vld [vmem:[%s234 + $0xbc] sm:$0x1]
      %vm295 = vsmask.f32 3328
      %vm296 = vsmask.f32 7440
      %vm297 = vmor %vm295, %vm296
      %v299 = vshrl.u32 %v246, 16
      %v301 = vrot.slane %v299, 4
      %v302 = vshll.u32 %v246, 16
      %v304 = vrot.slane %v302, 5
      %v305 = vor.u32 %v301, %v304
      %v306 = vrot.slane %v305, 4
      %v308 = vshll.u32 %v247, 16
      %v310 = vrot.slane %v308, 5
      %v311 = vsel %vm297, %v306, %v310
      %v312 = vshrl.u32 %v247, 16
      %v314 = vrot.slane %v312, 4
      %v315 = vor.u32 %v314, %v310
      %v316 = vrot.slane %v315, 4
      %v318 = vshll.u32 %v279, 16
      %v320 = vrot.slane %v318, 5
      %v321 = vsel %vm297, %v316, %v320
      %v323 = vshrl.u32 %v248, 16
      %v325 = vrot.slane %v323, 4
      %v326 = vshll.u32 %v248, 16
      %v328 = vrot.slane %v326, 5
      %v329 = vor.u32 %v325, %v328
      %v330 = vrot.slane %v329, 4
      %v332 = vshll.u32 %v249, 16
      %v334 = vrot.slane %v332, 5
      %v335 = vsel %vm297, %v330, %v334
      %v336 = vshrl.u32 %v249, 16
      %v338 = vrot.slane %v336, 4
      %v339 = vor.u32 %v338, %v334
      %v340 = vrot.slane %v339, 4
      %v342 = vshll.u32 %v280, 16
      %v344 = vrot.slane %v342, 5
      %v345 = vsel %vm297, %v340, %v344
      %v347 = vshrl.u32 %v250, 16
      %v349 = vrot.slane %v347, 4
      %v350 = vshll.u32 %v250, 16
      %v352 = vrot.slane %v350, 5
      %v353 = vor.u32 %v349, %v352
      %v354 = vrot.slane %v353, 4
      %v356 = vshll.u32 %v251, 16
      %v358 = vrot.slane %v356, 5
      %v359 = vsel %vm297, %v354, %v358
      %v360 = vshrl.u32 %v251, 16
      %v362 = vrot.slane %v360, 4
      %v363 = vor.u32 %v362, %v358
      %v364 = vrot.slane %v363, 4
      %v366 = vshll.u32 %v281, 16
      %v368 = vrot.slane %v366, 5
      %v369 = vsel %vm297, %v364, %v368
      %v371 = vshrl.u32 %v252, 16
      %v373 = vrot.slane %v371, 4
      %v374 = vshll.u32 %v252, 16
      %v376 = vrot.slane %v374, 5
      %v377 = vor.u32 %v373, %v376
      %v378 = vrot.slane %v377, 4
      %v380 = vshll.u32 %v253, 16
      %v382 = vrot.slane %v380, 5
      %v383 = vsel %vm297, %v378, %v382
      %v384 = vshrl.u32 %v253, 16
      %v386 = vrot.slane %v384, 4
      %v387 = vor.u32 %v386, %v382
      %v388 = vrot.slane %v387, 4
      %v390 = vshll.u32 %v282, 16
      %v392 = vrot.slane %v390, 5
      %v393 = vsel %vm297, %v388, %v392
      %v395 = vshrl.u32 %v254, 16
      %v397 = vrot.slane %v395, 4
      %v398 = vshll.u32 %v254, 16
      %v400 = vrot.slane %v398, 5
      %v401 = vor.u32 %v397, %v400
      %v402 = vrot.slane %v401, 4
      %v404 = vshll.u32 %v255, 16
      %v406 = vrot.slane %v404, 5
      %v407 = vsel %vm297, %v402, %v406
      %v408 = vshrl.u32 %v255, 16
      %v410 = vrot.slane %v408, 4
      %v411 = vor.u32 %v410, %v406
      %v412 = vrot.slane %v411, 4
      %v414 = vshll.u32 %v283, 16
      %v416 = vrot.slane %v414, 5
      %v417 = vsel %vm297, %v412, %v416
      %v419 = vshrl.u32 %v256, 16
      %v421 = vrot.slane %v419, 4
      %v422 = vshll.u32 %v256, 16
      %v424 = vrot.slane %v422, 5
      %v425 = vor.u32 %v421, %v424
      %v426 = vrot.slane %v425, 4
      %v428 = vshll.u32 %v257, 16
      %v430 = vrot.slane %v428, 5
      %v431 = vsel %vm297, %v426, %v430
      %v432 = vshrl.u32 %v257, 16
      %v434 = vrot.slane %v432, 4
      %v435 = vor.u32 %v434, %v430
      %v436 = vrot.slane %v435, 4
      %v438 = vshll.u32 %v284, 16
      %v440 = vrot.slane %v438, 5
      %v441 = vsel %vm297, %v436, %v440
      %v443 = vshrl.u32 %v258, 16
      %v445 = vrot.slane %v443, 4
      %v446 = vshll.u32 %v258, 16
      %v448 = vrot.slane %v446, 5
      %v449 = vor.u32 %v445, %v448
      %v450 = vrot.slane %v449, 4
      %v452 = vshll.u32 %v259, 16
      %v454 = vrot.slane %v452, 5
      %v455 = vsel %vm297, %v450, %v454
      %v456 = vshrl.u32 %v259, 16
      %v458 = vrot.slane %v456, 4
      %v459 = vor.u32 %v458, %v454
      %v460 = vrot.slane %v459, 4
      %v462 = vshll.u32 %v285, 16
      %v464 = vrot.slane %v462, 5
      %v465 = vsel %vm297, %v460, %v464
      %v467 = vshrl.u32 %v260, 16
      %v469 = vrot.slane %v467, 4
      %v470 = vshll.u32 %v260, 16
      %v472 = vrot.slane %v470, 5
      %v473 = vor.u32 %v469, %v472
      %v474 = vrot.slane %v473, 4
      %v476 = vshll.u32 %v261, 16
      %v478 = vrot.slane %v476, 5
      %v479 = vsel %vm297, %v474, %v478
      %v480 = vshrl.u32 %v261, 16
      %v482 = vrot.slane %v480, 4
      %v483 = vor.u32 %v482, %v478
      %v484 = vrot.slane %v483, 4
      %v486 = vshll.u32 %v286, 16
      %v488 = vrot.slane %v486, 5
      %v489 = vsel %vm297, %v484, %v488
      %v491 = vshrl.u32 %v262, 16
      %v493 = vrot.slane %v491, 4
      %v494 = vshll.u32 %v262, 16
      %v496 = vrot.slane %v494, 5
      %v497 = vor.u32 %v493, %v496
      %v498 = vrot.slane %v497, 4
      %v500 = vshll.u32 %v263, 16
      %v502 = vrot.slane %v500, 5
      %v503 = vsel %vm297, %v498, %v502
      %v504 = vshrl.u32 %v263, 16
      %v506 = vrot.slane %v504, 4
      %v507 = vor.u32 %v506, %v502
      %v508 = vrot.slane %v507, 4
      %v510 = vshll.u32 %v287, 16
      %v512 = vrot.slane %v510, 5
      %v513 = vsel %vm297, %v508, %v512
      %v515 = vshrl.u32 %v264, 16
      %v517 = vrot.slane %v515, 4
      %v518 = vshll.u32 %v264, 16
      %v520 = vrot.slane %v518, 5
      %v521 = vor.u32 %v517, %v520
      %v522 = vrot.slane %v521, 4
      %v524 = vshll.u32 %v265, 16
      %v526 = vrot.slane %v524, 5
      %v527 = vsel %vm297, %v522, %v526
      %v528 = vshrl.u32 %v265, 16
      %v530 = vrot.slane %v528, 4
      %v531 = vor.u32 %v530, %v526
      %v532 = vrot.slane %v531, 4
      %v534 = vshll.u32 %v288, 16
      %v536 = vrot.slane %v534, 5
      %v537 = vsel %vm297, %v532, %v536
      %v539 = vshrl.u32 %v266, 16
      %v541 = vrot.slane %v539, 4
      %v542 = vshll.u32 %v266, 16
      %v544 = vrot.slane %v542, 5
      %v545 = vor.u32 %v541, %v544
      %v546 = vrot.slane %v545, 4
      %v548 = vshll.u32 %v267, 16
      %v550 = vrot.slane %v548, 5
      %v551 = vsel %vm297, %v546, %v550
      %v552 = vshrl.u32 %v267, 16
      %v554 = vrot.slane %v552, 4
      %v555 = vor.u32 %v554, %v550
      %v556 = vrot.slane %v555, 4
      %v558 = vshll.u32 %v289, 16
      %v560 = vrot.slane %v558, 5
      %v561 = vsel %vm297, %v556, %v560
      %v563 = vshrl.u32 %v268, 16
      %v565 = vrot.slane %v563, 4
      %v566 = vshll.u32 %v268, 16
      %v568 = vrot.slane %v566, 5
      %v569 = vor.u32 %v565, %v568
      %v570 = vrot.slane %v569, 4
      %v572 = vshll.u32 %v269, 16
      %v574 = vrot.slane %v572, 5
      %v575 = vsel %vm297, %v570, %v574
      %v576 = vshrl.u32 %v269, 16
      %v578 = vrot.slane %v576, 4
      %v579 = vor.u32 %v578, %v574
      %v580 = vrot.slane %v579, 4
      %v582 = vshll.u32 %v290, 16
      %v584 = vrot.slane %v582, 5
      %v585 = vsel %vm297, %v580, %v584
      %v587 = vshrl.u32 %v270, 16
      %v589 = vrot.slane %v587, 4
      %v590 = vshll.u32 %v270, 16
      %v592 = vrot.slane %v590, 5
      %v593 = vor.u32 %v589, %v592
      %v594 = vrot.slane %v593, 4
      %v596 = vshll.u32 %v271, 16
      %v598 = vrot.slane %v596, 5
      %v599 = vsel %vm297, %v594, %v598
      %v600 = vshrl.u32 %v271, 16
      %v602 = vrot.slane %v600, 4
      %v603 = vor.u32 %v602, %v598
      %v604 = vrot.slane %v603, 4
      %v606 = vshll.u32 %v291, 16
      %v608 = vrot.slane %v606, 5
      %v609 = vsel %vm297, %v604, %v608
      %v611 = vshrl.u32 %v272, 16
      %v613 = vrot.slane %v611, 4
      %v614 = vshll.u32 %v272, 16
      %v616 = vrot.slane %v614, 5
      %v617 = vor.u32 %v613, %v616
      %v618 = vrot.slane %v617, 4
      %v620 = vshll.u32 %v273, 16
      %v622 = vrot.slane %v620, 5
      %v623 = vsel %vm297, %v618, %v622
      %v624 = vshrl.u32 %v273, 16
      %v626 = vrot.slane %v624, 4
      %v627 = vor.u32 %v626, %v622
      %v628 = vrot.slane %v627, 4
      %v630 = vshll.u32 %v292, 16
      %v632 = vrot.slane %v630, 5
      %v633 = vsel %vm297, %v628, %v632
      %v635 = vshrl.u32 %v274, 16
      %v637 = vrot.slane %v635, 4
      %v638 = vshll.u32 %v274, 16
      %v640 = vrot.slane %v638, 5
      %v641 = vor.u32 %v637, %v640
      %v642 = vrot.slane %v641, 4
      %v644 = vshll.u32 %v275, 16
      %v646 = vrot.slane %v644, 5
      %v647 = vsel %vm297, %v642, %v646
      %v648 = vshrl.u32 %v275, 16
      %v650 = vrot.slane %v648, 4
      %v651 = vor.u32 %v650, %v646
      %v652 = vrot.slane %v651, 4
      %v654 = vshll.u32 %v293, 16
      %v656 = vrot.slane %v654, 5
      %v657 = vsel %vm297, %v652, %v656
      %v659 = vshrl.u32 %v276, 16
      %v661 = vrot.slane %v659, 4
      %v662 = vshll.u32 %v276, 16
      %v664 = vrot.slane %v662, 5
      %v665 = vor.u32 %v661, %v664
      %v666 = vrot.slane %v665, 4
      %v668 = vshll.u32 %v277, 16
      %v670 = vrot.slane %v668, 5
      %v671 = vsel %vm297, %v666, %v670
      %v672 = vshrl.u32 %v277, 16
      %v674 = vrot.slane %v672, 4
      %v675 = vor.u32 %v674, %v670
      %v676 = vrot.slane %v675, 4
      %v678 = vshll.u32 %v294, 16
      %v680 = vrot.slane %v678, 5
      %v681 = vsel %vm297, %v676, %v680
      %s682 = scalar_lea.vmem %s1, 2
      %v683 = vld [vmem:[%s682] sm:$0x3]
      %v684 = vunpack.c.l.b16 %v311
      %v685 = vunpack.c.l.b16 %v321
      %v686 = vunpack.c.l.b16 %v335
      %v687 = vunpack.c.l.b16 %v345
      %v688 = vunpack.c.l.b16 %v359
      %v689 = vunpack.c.l.b16 %v369
      %v690 = vunpack.c.l.b16 %v383
      %v691 = vunpack.c.l.b16 %v393
      %v692 = vunpack.c.l.b16 %v407
      %v693 = vunpack.c.l.b16 %v417
      %v694 = vunpack.c.l.b16 %v431
      %v695 = vunpack.c.l.b16 %v441
      %v696 = vunpack.c.l.b16 %v455
      %v697 = vunpack.c.l.b16 %v465
      %v698 = vunpack.c.l.b16 %v479
      %v699 = vunpack.c.l.b16 %v489
      %v700 = vunpack.c.l.b16 %v503
      %v701 = vunpack.c.l.b16 %v513
      %v702 = vunpack.c.l.b16 %v527
      %v703 = vunpack.c.l.b16 %v537
      %v704 = vunpack.c.l.b16 %v551
      %v705 = vunpack.c.l.b16 %v561
      %v706 = vunpack.c.l.b16 %v575
      %v707 = vunpack.c.l.b16 %v585
      %v708 = vunpack.c.l.b16 %v599
      %v709 = vunpack.c.l.b16 %v609
      %v710 = vunpack.c.l.b16 %v623
      %v711 = vunpack.c.l.b16 %v633
      %v712 = vunpack.c.l.b16 %v647
      %v713 = vunpack.c.l.b16 %v657
      %v714 = vunpack.c.l.b16 %v671
      %v715 = vunpack.c.l.b16 %v681
      %v716 = vpack.c.b16 %v685, %v684
      %v717 = vpack.c.b16 %v687, %v686
      %v718 = vpack.c.b16 %v689, %v688
      %v719 = vpack.c.b16 %v691, %v690
      %v720 = vpack.c.b16 %v693, %v692
      %v721 = vpack.c.b16 %v695, %v694
      %v722 = vpack.c.b16 %v697, %v696
      %v723 = vpack.c.b16 %v699, %v698
      %v724 = vpack.c.b16 %v701, %v700
      %v725 = vpack.c.b16 %v703, %v702
      %v726 = vpack.c.b16 %v705, %v704
      %v727 = vpack.c.b16 %v707, %v706
      %v728 = vpack.c.b16 %v709, %v708
      %v729 = vpack.c.b16 %v711, %v710
      %v730 = vpack.c.b16 %v713, %v712
      %v731 = vpack.c.b16 %v715, %v714
      %vm732 = vcmask 31744
      %v734 = vsel %vm732, %v716, 0
      %v737 = vsel %vm732, %v717, 0
      %v740 = vsel %vm732, %v718, 0
      %v743 = vsel %vm732, %v719, 0
      %v746 = vsel %vm732, %v720, 0
      %v749 = vsel %vm732, %v721, 0
      %v752 = vsel %vm732, %v722, 0
      %v755 = vsel %vm732, %v723, 0
      %v758 = vsel %vm732, %v724, 0
      %v761 = vsel %vm732, %v725, 0
      %v764 = vsel %vm732, %v726, 0
      %v767 = vsel %vm732, %v727, 0
      %v770 = vsel %vm732, %v728, 0
      %v773 = vsel %vm732, %v729, 0
      %v776 = vsel %vm732, %v730, 0
      %v779 = vsel %vm732, %v731, 0
      %vm781 = vcmask 1041408
      %v783 = vsel %vm781, %v683, 0
      %785 = vmatprep.subr.bf16.mxu0 0
      %786 = vmatpush1.bf16.msra.mxu0 %v783
      %787 = vmatprep.subr.bf16.mxu0 0
      %788 = vmatpush1.bf16.msra.mxu0 0
      %789 = vmatprep.subr.bf16.mxu0 0
      %790 = vmatpush1.bf16.msra.mxu0 0
      %791 = vmatprep.subr.bf16.mxu0 0
      %792 = vmatpush1.bf16.msra.mxu0 0
      %793 = vmatprep.subr.bf16.mxu0 0
      %794 = vmatpush1.bf16.msra.mxu0 0
      %795 = vmatprep.subr.bf16.mxu0 0
      %796 = vmatpush1.bf16.msra.mxu0 0
      %797 = vmatprep.subr.bf16.mxu0 0
      %798 = vmatpush1.bf16.msra.mxu0 0
      %799 = vmatprep.subr.bf16.mxu0 0
      %800 = vmatpush1.bf16.msra.mxu0 0
      %801 = vmatprep.subr.bf16.mxu0 0
      %802 = vmatpush1.bf16.msra.mxu0 0
      %803 = vmatprep.subr.bf16.mxu0 0
      %804 = vmatpush1.bf16.msra.mxu0 0
      %805 = vmatprep.subr.bf16.mxu0 0
      %806 = vmatpush1.bf16.msra.mxu0 0
      %807 = vmatprep.subr.bf16.mxu0 0
      %808 = vmatpush1.bf16.msra.mxu0 0
      %809 = vmatprep.subr.bf16.mxu0 0
      %810 = vmatpush1.bf16.msra.mxu0 0
      %811 = vmatprep.subr.bf16.mxu0 0
      %812 = vmatpush1.bf16.msra.mxu0 0
      %813 = vmatprep.subr.bf16.mxu0 0
      %814 = vmatpush1.bf16.msra.mxu0 0
      %815 = vmatprep.subr.bf16.mxu0 0
      %816 = vmatpush1.bf16.msra.mxu0 0
      %817 = vmatprep.mubr.bf16.mxu0 0
      %818 = vmatmul.mubr.bf16.gmra.mrb[0].mxu0 %v734
      %v819 = vpop.f32.mrb[0].mxu0
      %v820 = vadd.f32 0.0, %v819
      %v821 = vpop.f32.mrb[0].mxu0
      %v822 = vpop.f32.mrb[0].mxu0
      %v823 = vadd.f32 0.0, %v822
      %v824 = vpop.f32.mrb[0].mxu0
      %825 = vmatprep.mubr.bf16.mxu0 0
      %826 = vmatmul.mubr.bf16.gmra.mrb[0].mxu0 %v737
      %v827 = vpop.f32.mrb[0].mxu0
      %v828 = vadd.f32 0.0, %v827
      %v829 = vpop.f32.mrb[0].mxu0
      %v830 = vpop.f32.mrb[0].mxu0
      %v831 = vadd.f32 0.0, %v830
      %v832 = vpop.f32.mrb[0].mxu0
      %833 = vmatprep.mubr.bf16.mxu0 0
      %834 = vmatmul.mubr.bf16.gmra.mrb[0].mxu0 %v740
      %v835 = vpop.f32.mrb[0].mxu0
      %v836 = vadd.f32 0.0, %v835
      %v837 = vpop.f32.mrb[0].mxu0
      %v838 = vpop.f32.mrb[0].mxu0
      %v839 = vadd.f32 0.0, %v838
      %v840 = vpop.f32.mrb[0].mxu0
      %841 = vmatprep.mubr.bf16.mxu0 0
      %842 = vmatmul.mubr.bf16.gmra.mrb[0].mxu0 %v743
      %v843 = vpop.f32.mrb[0].mxu0
      %v844 = vadd.f32 0.0, %v843
      %v845 = vpop.f32.mrb[0].mxu0
      %v846 = vpop.f32.mrb[0].mxu0
      %v847 = vadd.f32 0.0, %v846
      %v848 = vpop.f32.mrb[0].mxu0
      %849 = vmatprep.mubr.bf16.mxu0 0
      %850 = vmatmul.mubr.bf16.gmra.mrb[0].mxu0 %v746
      %v851 = vpop.f32.mrb[0].mxu0
      %v852 = vadd.f32 0.0, %v851
      %v853 = vpop.f32.mrb[0].mxu0
      %v854 = vpop.f32.mrb[0].mxu0
      %v855 = vadd.f32 0.0, %v854
      %v856 = vpop.f32.mrb[0].mxu0
      %857 = vmatprep.mubr.bf16.mxu0 0
      %858 = vmatmul.mubr.bf16.gmra.mrb[0].mxu0 %v749
      %v859 = vpop.f32.mrb[0].mxu0
      %v860 = vadd.f32 0.0, %v859
      %v861 = vpop.f32.mrb[0].mxu0
      %v862 = vpop.f32.mrb[0].mxu0
      %v863 = vadd.f32 0.0, %v862
      %v864 = vpop.f32.mrb[0].mxu0
      %865 = vmatprep.mubr.bf16.mxu0 0
      %866 = vmatmul.mubr.bf16.gmra.mrb[0].mxu0 %v752
      %v867 = vpop.f32.mrb[0].mxu0
      %v868 = vadd.f32 0.0, %v867
      %v869 = vpop.f32.mrb[0].mxu0
      %v870 = vpop.f32.mrb[0].mxu0
      %v871 = vadd.f32 0.0, %v870
      %v872 = vpop.f32.mrb[0].mxu0
      %873 = vmatprep.mubr.bf16.mxu0 0
      %874 = vmatmul.mubr.bf16.gmra.mrb[0].mxu0 %v755
      %v875 = vpop.f32.mrb[0].mxu0
      %v876 = vadd.f32 0.0, %v875
      %v877 = vpop.f32.mrb[0].mxu0
      %v878 = vpop.f32.mrb[0].mxu0
      %v879 = vadd.f32 0.0, %v878
      %v880 = vpop.f32.mrb[0].mxu0
      %881 = vmatprep.mubr.bf16.mxu0 0
      %882 = vmatmul.mubr.bf16.gmra.mrb[0].mxu0 %v758
      %v883 = vpop.f32.mrb[0].mxu0
      %v884 = vadd.f32 0.0, %v883
      %v885 = vpop.f32.mrb[0].mxu0
      %v886 = vpop.f32.mrb[0].mxu0
      %v887 = vadd.f32 0.0, %v886
      %v888 = vpop.f32.mrb[0].mxu0
      %889 = vmatprep.mubr.bf16.mxu0 0
      %890 = vmatmul.mubr.bf16.gmra.mrb[0].mxu0 %v761
      %v891 = vpop.f32.mrb[0].mxu0
      %v892 = vadd.f32 0.0, %v891
      %v893 = vpop.f32.mrb[0].mxu0
      %v894 = vpop.f32.mrb[0].mxu0
      %v895 = vadd.f32 0.0, %v894
      %v896 = vpop.f32.mrb[0].mxu0
      %897 = vmatprep.mubr.bf16.mxu0 0
      %898 = vmatmul.mubr.bf16.gmra.mrb[0].mxu0 %v764
      %v899 = vpop.f32.mrb[0].mxu0
      %v900 = vadd.f32 0.0, %v899
      %v901 = vpop.f32.mrb[0].mxu0
      %v902 = vpop.f32.mrb[0].mxu0
      %v903 = vadd.f32 0.0, %v902
      %v904 = vpop.f32.mrb[0].mxu0
      %905 = vmatprep.mubr.bf16.mxu0 0
      %906 = vmatmul.mubr.bf16.gmra.mrb[0].mxu0 %v767
      %v907 = vpop.f32.mrb[0].mxu0
      %v908 = vadd.f32 0.0, %v907
      %v909 = vpop.f32.mrb[0].mxu0
      %v910 = vpop.f32.mrb[0].mxu0
      %v911 = vadd.f32 0.0, %v910
      %v912 = vpop.f32.mrb[0].mxu0
      %913 = vmatprep.mubr.bf16.mxu0 0
      %914 = vmatmul.mubr.bf16.gmra.mrb[0].mxu0 %v770
      %v915 = vpop.f32.mrb[0].mxu0
      %v916 = vadd.f32 0.0, %v915
      %v917 = vpop.f32.mrb[0].mxu0
      %v918 = vpop.f32.mrb[0].mxu0
      %v919 = vadd.f32 0.0, %v918
      %v920 = vpop.f32.mrb[0].mxu0
      %921 = vmatprep.mubr.bf16.mxu0 0
      %922 = vmatmul.mubr.bf16.gmra.mrb[0].mxu0 %v773
      %v923 = vpop.f32.mrb[0].mxu0
      %v924 = vadd.f32 0.0, %v923
      %v925 = vpop.f32.mrb[0].mxu0
      %v926 = vpop.f32.mrb[0].mxu0
      %v927 = vadd.f32 0.0, %v926
      %v928 = vpop.f32.mrb[0].mxu0
      %929 = vmatprep.mubr.bf16.mxu0 0
      %930 = vmatmul.mubr.bf16.gmra.mrb[0].mxu0 %v776
      %v931 = vpop.f32.mrb[0].mxu0
      %v932 = vadd.f32 0.0, %v931
      %v933 = vpop.f32.mrb[0].mxu0
      %v934 = vpop.f32.mrb[0].mxu0
      %v935 = vadd.f32 0.0, %v934
      %v936 = vpop.f32.mrb[0].mxu0
      %937 = vmatprep.mubr.bf16.mxu0 0
      %938 = vmatmul.mubr.bf16.gmra.mrb[0].mxu0 %v779
      %v939 = vpop.f32.mrb[0].mxu0
      %v940 = vadd.f32 0.0, %v939
      %v941 = vpop.f32.mrb[0].mxu0
      %v942 = vpop.f32.mrb[0].mxu0
      %v943 = vadd.f32 0.0, %v942
      %v944 = vpop.f32.mrb[0].mxu0
      %945 = vdwg.mxu0
      %v978 = vunpack.c.l.b16 %v246
      %v979 = vunpack.c.l.b16 %v247
      %v980 = vunpack.c.l.b16 %v248
      %v981 = vunpack.c.l.b16 %v249
      %v982 = vunpack.c.l.b16 %v250
      %v983 = vunpack.c.l.b16 %v251
      %v984 = vunpack.c.l.b16 %v252
      %v985 = vunpack.c.l.b16 %v253
      %v986 = vunpack.c.l.b16 %v254
      %v987 = vunpack.c.l.b16 %v255
      %v988 = vunpack.c.l.b16 %v256
      %v989 = vunpack.c.l.b16 %v257
      %v990 = vunpack.c.l.b16 %v258
      %v991 = vunpack.c.l.b16 %v259
      %v992 = vunpack.c.l.b16 %v260
      %v993 = vunpack.c.l.b16 %v261
      %v994 = vunpack.c.l.b16 %v262
      %v995 = vunpack.c.l.b16 %v263
      %v996 = vunpack.c.l.b16 %v264
      %v997 = vunpack.c.l.b16 %v265
      %v998 = vunpack.c.l.b16 %v266
      %v999 = vunpack.c.l.b16 %v267
      %v1000 = vunpack.c.l.b16 %v268
      %v1001 = vunpack.c.l.b16 %v269
      %v1002 = vunpack.c.l.b16 %v270
      %v1003 = vunpack.c.l.b16 %v271
      %v1004 = vunpack.c.l.b16 %v272
      %v1005 = vunpack.c.l.b16 %v273
      %v1006 = vunpack.c.l.b16 %v274
      %v1007 = vunpack.c.l.b16 %v275
      %v1008 = vunpack.c.l.b16 %v276
      %v1009 = vunpack.c.l.b16 %v277
      %v1010 = vpack.c.b16 %v979, %v978
      %v1011 = vpack.c.b16 %v981, %v980
      %v1012 = vpack.c.b16 %v983, %v982
      %v1013 = vpack.c.b16 %v985, %v984
      %v1014 = vpack.c.b16 %v987, %v986
      %v1015 = vpack.c.b16 %v989, %v988
      %v1016 = vpack.c.b16 %v991, %v990
      %v1017 = vpack.c.b16 %v993, %v992
      %v1018 = vpack.c.b16 %v995, %v994
      %v1019 = vpack.c.b16 %v997, %v996
      %v1020 = vpack.c.b16 %v999, %v998
      %v1021 = vpack.c.b16 %v1001, %v1000
      %v1022 = vpack.c.b16 %v1003, %v1002
      %v1023 = vpack.c.b16 %v1005, %v1004
      %v1024 = vpack.c.b16 %v1007, %v1006
      %v1025 = vpack.c.b16 %v1009, %v1008
      %v1027 = vsel %vm732, %v1010, 0
      %v1030 = vsel %vm732, %v1011, 0
      %v1033 = vsel %vm732, %v1012, 0
      %v1036 = vsel %vm732, %v1013, 0
      %v1039 = vsel %vm732, %v1014, 0
      %v1042 = vsel %vm732, %v1015, 0
      %v1045 = vsel %vm732, %v1016, 0
      %v1048 = vsel %vm732, %v1017, 0
      %v1051 = vsel %vm732, %v1018, 0
      %v1054 = vsel %vm732, %v1019, 0
      %v1057 = vsel %vm732, %v1020, 0
      %v1060 = vsel %vm732, %v1021, 0
      %v1063 = vsel %vm732, %v1022, 0
      %v1066 = vsel %vm732, %v1023, 0
      %v1069 = vsel %vm732, %v1024, 0
      %v1072 = vsel %vm732, %v1025, 0
      %v1075 = vsel %vm781, %v278, 0
      %1077 = vmatprep.subr.bf16.mxu0 0
      %1078 = vmatpush1.bf16.msra.mxu0 %v1075
      %1079 = vmatprep.subr.bf16.mxu0 0
      %1080 = vmatpush1.bf16.msra.mxu0 0
      %1081 = vmatprep.subr.bf16.mxu0 0
      %1082 = vmatpush1.bf16.msra.mxu0 0
      %1083 = vmatprep.subr.bf16.mxu0 0
      %1084 = vmatpush1.bf16.msra.mxu0 0
      %1085 = vmatprep.subr.bf16.mxu0 0
      %1086 = vmatpush1.bf16.msra.mxu0 0
      %1087 = vmatprep.subr.bf16.mxu0 0
      %1088 = vmatpush1.bf16.msra.mxu0 0
      %1089 = vmatprep.subr.bf16.mxu0 0
      %1090 = vmatpush1.bf16.msra.mxu0 0
      %1091 = vmatprep.subr.bf16.mxu0 0
      %1092 = vmatpush1.bf16.msra.mxu0 0
      %1093 = vmatprep.subr.bf16.mxu0 0
      %1094 = vmatpush1.bf16.msra.mxu0 0
      %1095 = vmatprep.subr.bf16.mxu0 0
      %1096 = vmatpush1.bf16.msra.mxu0 0
      %1097 = vmatprep.subr.bf16.mxu0 0
      %1098 = vmatpush1.bf16.msra.mxu0 0
      %1099 = vmatprep.subr.bf16.mxu0 0
      %1100 = vmatpush1.bf16.msra.mxu0 0
      %1101 = vmatprep.subr.bf16.mxu0 0
      %1102 = vmatpush1.bf16.msra.mxu0 0
      %1103 = vmatprep.subr.bf16.mxu0 0
      %1104 = vmatpush1.bf16.msra.mxu0 0
      %1105 = vmatprep.subr.bf16.mxu0 0
      %1106 = vmatpush1.bf16.msra.mxu0 0
      %1107 = vmatprep.subr.bf16.mxu0 0
      %1108 = vmatpush1.bf16.msra.mxu0 0
      %1109 = vmatprep.mubr.bf16.mxu0 0
      %1110 = vmatmul.mubr.bf16.gmra.mrb[0].mxu0 %v1027
      %v1111 = vpop.f32.mrb[0].mxu0
      %v1112 = vadd.f32 %v820, %v1111
      %v1113 = vpop.f32.mrb[0].mxu0
      %v1114 = vpop.f32.mrb[0].mxu0
      %v1115 = vadd.f32 %v823, %v1114
      %v1116 = vpop.f32.mrb[0].mxu0
      %1117 = vmatprep.mubr.bf16.mxu0 0
      %1118 = vmatmul.mubr.bf16.gmra.mrb[0].mxu0 %v1030
      %v1119 = vpop.f32.mrb[0].mxu0
      %v1120 = vadd.f32 %v828, %v1119
      %v1121 = vpop.f32.mrb[0].mxu0
      %v1122 = vpop.f32.mrb[0].mxu0
      %v1123 = vadd.f32 %v831, %v1122
      %v1124 = vpop.f32.mrb[0].mxu0
      %1125 = vmatprep.mubr.bf16.mxu0 0
      %1126 = vmatmul.mubr.bf16.gmra.mrb[0].mxu0 %v1033
      %v1127 = vpop.f32.mrb[0].mxu0
      %v1128 = vadd.f32 %v836, %v1127
      %v1129 = vpop.f32.mrb[0].mxu0
      %v1130 = vpop.f32.mrb[0].mxu0
      %v1131 = vadd.f32 %v839, %v1130
      %v1132 = vpop.f32.mrb[0].mxu0
      %1133 = vmatprep.mubr.bf16.mxu0 0
      %1134 = vmatmul.mubr.bf16.gmra.mrb[0].mxu0 %v1036
      %v1135 = vpop.f32.mrb[0].mxu0
      %v1136 = vadd.f32 %v844, %v1135
      %v1137 = vpop.f32.mrb[0].mxu0
      %v1138 = vpop.f32.mrb[0].mxu0
      %v1139 = vadd.f32 %v847, %v1138
      %v1140 = vpop.f32.mrb[0].mxu0
      %1141 = vmatprep.mubr.bf16.mxu0 0
      %1142 = vmatmul.mubr.bf16.gmra.mrb[0].mxu0 %v1039
      %v1143 = vpop.f32.mrb[0].mxu0
      %v1144 = vadd.f32 %v852, %v1143
      %v1145 = vpop.f32.mrb[0].mxu0
      %v1146 = vpop.f32.mrb[0].mxu0
      %v1147 = vadd.f32 %v855, %v1146
      %v1148 = vpop.f32.mrb[0].mxu0
      %1149 = vmatprep.mubr.bf16.mxu0 0
      %1150 = vmatmul.mubr.bf16.gmra.mrb[0].mxu0 %v1042
      %v1151 = vpop.f32.mrb[0].mxu0
      %v1152 = vadd.f32 %v860, %v1151
      %v1153 = vpop.f32.mrb[0].mxu0
      %v1154 = vpop.f32.mrb[0].mxu0
      %v1155 = vadd.f32 %v863, %v1154
      %v1156 = vpop.f32.mrb[0].mxu0
      %1157 = vmatprep.mubr.bf16.mxu0 0
      %1158 = vmatmul.mubr.bf16.gmra.mrb[0].mxu0 %v1045
      %v1159 = vpop.f32.mrb[0].mxu0
      %v1160 = vadd.f32 %v868, %v1159
      %v1161 = vpop.f32.mrb[0].mxu0
      %v1162 = vpop.f32.mrb[0].mxu0
      %v1163 = vadd.f32 %v871, %v1162
      %v1164 = vpop.f32.mrb[0].mxu0
      %1165 = vmatprep.mubr.bf16.mxu0 0
      %1166 = vmatmul.mubr.bf16.gmra.mrb[0].mxu0 %v1048
      %v1167 = vpop.f32.mrb[0].mxu0
      %v1168 = vadd.f32 %v876, %v1167
      %v1169 = vpop.f32.mrb[0].mxu0
      %v1170 = vpop.f32.mrb[0].mxu0
      %v1171 = vadd.f32 %v879, %v1170
      %v1172 = vpop.f32.mrb[0].mxu0
      %1173 = vmatprep.mubr.bf16.mxu0 0
      %1174 = vmatmul.mubr.bf16.gmra.mrb[0].mxu0 %v1051
      %v1175 = vpop.f32.mrb[0].mxu0
      %v1176 = vadd.f32 %v884, %v1175
      %v1177 = vpop.f32.mrb[0].mxu0
      %v1178 = vpop.f32.mrb[0].mxu0
      %v1179 = vadd.f32 %v887, %v1178
      %v1180 = vpop.f32.mrb[0].mxu0
      %1181 = vmatprep.mubr.bf16.mxu0 0
      %1182 = vmatmul.mubr.bf16.gmra.mrb[0].mxu0 %v1054
      %v1183 = vpop.f32.mrb[0].mxu0
      %v1184 = vadd.f32 %v892, %v1183
      %v1185 = vpop.f32.mrb[0].mxu0
      %v1186 = vpop.f32.mrb[0].mxu0
      %v1187 = vadd.f32 %v895, %v1186
      %v1188 = vpop.f32.mrb[0].mxu0
      %1189 = vmatprep.mubr.bf16.mxu0 0
      %1190 = vmatmul.mubr.bf16.gmra.mrb[0].mxu0 %v1057
      %v1191 = vpop.f32.mrb[0].mxu0
      %v1192 = vadd.f32 %v900, %v1191
      %v1193 = vpop.f32.mrb[0].mxu0
      %v1194 = vpop.f32.mrb[0].mxu0
      %v1195 = vadd.f32 %v903, %v1194
      %v1196 = vpop.f32.mrb[0].mxu0
      %1197 = vmatprep.mubr.bf16.mxu0 0
      %1198 = vmatmul.mubr.bf16.gmra.mrb[0].mxu0 %v1060
      %v1199 = vpop.f32.mrb[0].mxu0
      %v1200 = vadd.f32 %v908, %v1199
      %v1201 = vpop.f32.mrb[0].mxu0
      %v1202 = vpop.f32.mrb[0].mxu0
      %v1203 = vadd.f32 %v911, %v1202
      %v1204 = vpop.f32.mrb[0].mxu0
      %1205 = vmatprep.mubr.bf16.mxu0 0
      %1206 = vmatmul.mubr.bf16.gmra.mrb[0].mxu0 %v1063
      %v1207 = vpop.f32.mrb[0].mxu0
      %v1208 = vadd.f32 %v916, %v1207
      %v1209 = vpop.f32.mrb[0].mxu0
      %v1210 = vpop.f32.mrb[0].mxu0
      %v1211 = vadd.f32 %v919, %v1210
      %v1212 = vpop.f32.mrb[0].mxu0
      %1213 = vmatprep.mubr.bf16.mxu0 0
      %1214 = vmatmul.mubr.bf16.gmra.mrb[0].mxu0 %v1066
      %v1215 = vpop.f32.mrb[0].mxu0
      %v1216 = vadd.f32 %v924, %v1215
      %v1217 = vpop.f32.mrb[0].mxu0
      %v1218 = vpop.f32.mrb[0].mxu0
      %v1219 = vadd.f32 %v927, %v1218
      %v1220 = vpop.f32.mrb[0].mxu0
      %1221 = vmatprep.mubr.bf16.mxu0 0
      %1222 = vmatmul.mubr.bf16.gmra.mrb[0].mxu0 %v1069
      %v1223 = vpop.f32.mrb[0].mxu0
      %v1224 = vadd.f32 %v932, %v1223
      %v1225 = vpop.f32.mrb[0].mxu0
      %v1226 = vpop.f32.mrb[0].mxu0
      %v1227 = vadd.f32 %v935, %v1226
      %v1228 = vpop.f32.mrb[0].mxu0
      %1229 = vmatprep.mubr.bf16.mxu0 0
      %1230 = vmatmul.mubr.bf16.gmra.mrb[0].mxu0 %v1072
      %v1231 = vpop.f32.mrb[0].mxu0
      %v1232 = vadd.f32 %v940, %v1231
      %v1233 = vpop.f32.mrb[0].mxu0
      %v1234 = vpop.f32.mrb[0].mxu0
      %v1235 = vadd.f32 %v943, %v1234
      %v1236 = vpop.f32.mrb[0].mxu0
      %1237 = vdwg.mxu0
      %v1238 = vld [vmem:[%s234] sm:$0xe]
      %v1239 = vld [vmem:[%s234 + $0xc] sm:$0xe]
      %v1240 = vld [vmem:[%s234 + $0x18] sm:$0xe]
      %v1241 = vld [vmem:[%s234 + $0x24] sm:$0xe]
      %v1242 = vld [vmem:[%s234 + $0x30] sm:$0xe]
      %v1243 = vld [vmem:[%s234 + $0x3c] sm:$0xe]
      %v1244 = vld [vmem:[%s234 + $0x48] sm:$0xe]
      %v1245 = vld [vmem:[%s234 + $0x54] sm:$0xe]
      %v1246 = vld [vmem:[%s234 + $0x60] sm:$0xe]
      %v1247 = vld [vmem:[%s234 + $0x6c] sm:$0xe]
      %v1248 = vld [vmem:[%s234 + $0x78] sm:$0xe]
      %v1249 = vld [vmem:[%s234 + $0x84] sm:$0xe]
      %v1250 = vld [vmem:[%s234 + $0x90] sm:$0xe]
      %v1251 = vld [vmem:[%s234 + $0x9c] sm:$0xe]
      %v1252 = vld [vmem:[%s234 + $0xa8] sm:$0xe]
      %v1253 = vld [vmem:[%s234 + $0xb4] sm:$0xe]
      %vm1286 = vcmask 1042432
      %vm1287 = vcmask 1046532
      %vm1288 = vmor %vm1286, %vm1287
      %v1289 = vrot.slane %v1238, 5
      %v1290 = vrot.slane %v1289, 4
      %v1291 = vrot.slane %v247, 5
      %v1292 = vsel %vm1288, %v1290, %v1291
      %v1293 = vrot.slane %v1291, 4
      %v1294 = vrot.slane %v279, 5
      %v1295 = vsel %vm1288, %v1293, %v1294
      %v1296 = vrot.slane %v1239, 5
      %v1297 = vrot.slane %v1296, 4
      %v1298 = vrot.slane %v249, 5
      %v1299 = vsel %vm1288, %v1297, %v1298
      %v1300 = vrot.slane %v1298, 4
      %v1301 = vrot.slane %v280, 5
      %v1302 = vsel %vm1288, %v1300, %v1301
      %v1303 = vrot.slane %v1240, 5
      %v1304 = vrot.slane %v1303, 4
      %v1305 = vrot.slane %v251, 5
      %v1306 = vsel %vm1288, %v1304, %v1305
      %v1307 = vrot.slane %v1305, 4
      %v1308 = vrot.slane %v281, 5
      %v1309 = vsel %vm1288, %v1307, %v1308
      %v1310 = vrot.slane %v1241, 5
      %v1311 = vrot.slane %v1310, 4
      %v1312 = vrot.slane %v253, 5
      %v1313 = vsel %vm1288, %v1311, %v1312
      %v1314 = vrot.slane %v1312, 4
      %v1315 = vrot.slane %v282, 5
      %v1316 = vsel %vm1288, %v1314, %v1315
      %v1317 = vrot.slane %v1242, 5
      %v1318 = vrot.slane %v1317, 4
      %v1319 = vrot.slane %v255, 5
      %v1320 = vsel %vm1288, %v1318, %v1319
      %v1321 = vrot.slane %v1319, 4
      %v1322 = vrot.slane %v283, 5
      %v1323 = vsel %vm1288, %v1321, %v1322
      %v1324 = vrot.slane %v1243, 5
      %v1325 = vrot.slane %v1324, 4
      %v1326 = vrot.slane %v257, 5
      %v1327 = vsel %vm1288, %v1325, %v1326
      %v1328 = vrot.slane %v1326, 4
      %v1329 = vrot.slane %v284, 5
      %v1330 = vsel %vm1288, %v1328, %v1329
      %v1331 = vrot.slane %v1244, 5
      %v1332 = vrot.slane %v1331, 4
      %v1333 = vrot.slane %v259, 5
      %v1334 = vsel %vm1288, %v1332, %v1333
      %v1335 = vrot.slane %v1333, 4
      %v1336 = vrot.slane %v285, 5
      %v1337 = vsel %vm1288, %v1335, %v1336
      %v1338 = vrot.slane %v1245, 5
      %v1339 = vrot.slane %v1338, 4
      %v1340 = vrot.slane %v261, 5
      %v1341 = vsel %vm1288, %v1339, %v1340
      %v1342 = vrot.slane %v1340, 4
      %v1343 = vrot.slane %v286, 5
      %v1344 = vsel %vm1288, %v1342, %v1343
      %v1345 = vrot.slane %v1246, 5
      %v1346 = vrot.slane %v1345, 4
      %v1347 = vrot.slane %v263, 5
      %v1348 = vsel %vm1288, %v1346, %v1347
      %v1349 = vrot.slane %v1347, 4
      %v1350 = vrot.slane %v287, 5
      %v1351 = vsel %vm1288, %v1349, %v1350
      %v1352 = vrot.slane %v1247, 5
      %v1353 = vrot.slane %v1352, 4
      %v1354 = vrot.slane %v265, 5
      %v1355 = vsel %vm1288, %v1353, %v1354
      %v1356 = vrot.slane %v1354, 4
      %v1357 = vrot.slane %v288, 5
      %v1358 = vsel %vm1288, %v1356, %v1357
      %v1359 = vrot.slane %v1248, 5
      %v1360 = vrot.slane %v1359, 4
      %v1361 = vrot.slane %v267, 5
      %v1362 = vsel %vm1288, %v1360, %v1361
      %v1363 = vrot.slane %v1361, 4
      %v1364 = vrot.slane %v289, 5
      %v1365 = vsel %vm1288, %v1363, %v1364
      %v1366 = vrot.slane %v1249, 5
      %v1367 = vrot.slane %v1366, 4
      %v1368 = vrot.slane %v269, 5
      %v1369 = vsel %vm1288, %v1367, %v1368
      %v1370 = vrot.slane %v1368, 4
      %v1371 = vrot.slane %v290, 5
      %v1372 = vsel %vm1288, %v1370, %v1371
      %v1373 = vrot.slane %v1250, 5
      %v1374 = vrot.slane %v1373, 4
      %v1375 = vrot.slane %v271, 5
      %v1376 = vsel %vm1288, %v1374, %v1375
      %v1377 = vrot.slane %v1375, 4
      %v1378 = vrot.slane %v291, 5
      %v1379 = vsel %vm1288, %v1377, %v1378
      %v1380 = vrot.slane %v1251, 5
      %v1381 = vrot.slane %v1380, 4
      %v1382 = vrot.slane %v273, 5
      %v1383 = vsel %vm1288, %v1381, %v1382
      %v1384 = vrot.slane %v1382, 4
      %v1385 = vrot.slane %v292, 5
      %v1386 = vsel %vm1288, %v1384, %v1385
      %v1387 = vrot.slane %v1252, 5
      %v1388 = vrot.slane %v1387, 4
      %v1389 = vrot.slane %v275, 5
      %v1390 = vsel %vm1288, %v1388, %v1389
      %v1391 = vrot.slane %v1389, 4
      %v1392 = vrot.slane %v293, 5
      %v1393 = vsel %vm1288, %v1391, %v1392
      %v1394 = vrot.slane %v1253, 5
      %v1395 = vrot.slane %v1394, 4
      %v1396 = vrot.slane %v277, 5
      %v1397 = vsel %vm1288, %v1395, %v1396
      %v1398 = vrot.slane %v1396, 4
      %v1399 = vrot.slane %v294, 5
      %v1400 = vsel %vm1288, %v1398, %v1399
      %s1401 = scalar_lea.vmem %s1, 4
      %v1402 = vld [vmem:[%s1401] sm:$0x3]
      %v1403 = vunpack.c.l.b16 %v1292
      %v1404 = vunpack.c.l.b16 %v1295
      %v1405 = vunpack.c.l.b16 %v1299
      %v1406 = vunpack.c.l.b16 %v1302
      %v1407 = vunpack.c.l.b16 %v1306
      %v1408 = vunpack.c.l.b16 %v1309
      %v1409 = vunpack.c.l.b16 %v1313
      %v1410 = vunpack.c.l.b16 %v1316
      %v1411 = vunpack.c.l.b16 %v1320
      %v1412 = vunpack.c.l.b16 %v1323
      %v1413 = vunpack.c.l.b16 %v1327
      %v1414 = vunpack.c.l.b16 %v1330
      %v1415 = vunpack.c.l.b16 %v1334
      %v1416 = vunpack.c.l.b16 %v1337
      %v1417 = vunpack.c.l.b16 %v1341
      %v1418 = vunpack.c.l.b16 %v1344
      %v1419 = vunpack.c.l.b16 %v1348
      %v1420 = vunpack.c.l.b16 %v1351
      %v1421 = vunpack.c.l.b16 %v1355
      %v1422 = vunpack.c.l.b16 %v1358
      %v1423 = vunpack.c.l.b16 %v1362
      %v1424 = vunpack.c.l.b16 %v1365
      %v1425 = vunpack.c.l.b16 %v1369
      %v1426 = vunpack.c.l.b16 %v1372
      %v1427 = vunpack.c.l.b16 %v1376
      %v1428 = vunpack.c.l.b16 %v1379
      %v1429 = vunpack.c.l.b16 %v1383
      %v1430 = vunpack.c.l.b16 %v1386
      %v1431 = vunpack.c.l.b16 %v1390
      %v1432 = vunpack.c.l.b16 %v1393
      %v1433 = vunpack.c.l.b16 %v1397
      %v1434 = vunpack.c.l.b16 %v1400
      %v1435 = vpack.c.b16 %v1404, %v1403
      %v1436 = vpack.c.b16 %v1406, %v1405
      %v1437 = vpack.c.b16 %v1408, %v1407
      %v1438 = vpack.c.b16 %v1410, %v1409
      %v1439 = vpack.c.b16 %v1412, %v1411
      %v1440 = vpack.c.b16 %v1414, %v1413
      %v1441 = vpack.c.b16 %v1416, %v1415
      %v1442 = vpack.c.b16 %v1418, %v1417
      %v1443 = vpack.c.b16 %v1420, %v1419
      %v1444 = vpack.c.b16 %v1422, %v1421
      %v1445 = vpack.c.b16 %v1424, %v1423
      %v1446 = vpack.c.b16 %v1426, %v1425
      %v1447 = vpack.c.b16 %v1428, %v1427
      %v1448 = vpack.c.b16 %v1430, %v1429
      %v1449 = vpack.c.b16 %v1432, %v1431
      %v1450 = vpack.c.b16 %v1434, %v1433
      %v1452 = vsel %vm732, %v1435, 0
      %v1455 = vsel %vm732, %v1436, 0
      %v1458 = vsel %vm732, %v1437, 0
      %v1461 = vsel %vm732, %v1438, 0
      %v1464 = vsel %vm732, %v1439, 0
      %v1467 = vsel %vm732, %v1440, 0
      %v1470 = vsel %vm732, %v1441, 0
      %v1473 = vsel %vm732, %v1442, 0
      %v1476 = vsel %vm732, %v1443, 0
      %v1479 = vsel %vm732, %v1444, 0
      %v1482 = vsel %vm732, %v1445, 0
      %v1485 = vsel %vm732, %v1446, 0
      %v1488 = vsel %vm732, %v1447, 0
      %v1491 = vsel %vm732, %v1448, 0
      %v1494 = vsel %vm732, %v1449, 0
      %v1497 = vsel %vm732, %v1450, 0
      %v1500 = vsel %vm781, %v1402, 0
      %1502 = vmatprep.subr.bf16.mxu0 0
      %1503 = vmatpush1.bf16.msra.mxu0 %v1500
      %1504 = vmatprep.subr.bf16.mxu0 0
      %1505 = vmatpush1.bf16.msra.mxu0 0
      %1506 = vmatprep.subr.bf16.mxu0 0
      %1507 = vmatpush1.bf16.msra.mxu0 0
      %1508 = vmatprep.subr.bf16.mxu0 0
      %1509 = vmatpush1.bf16.msra.mxu0 0
      %1510 = vmatprep.subr.bf16.mxu0 0
      %1511 = vmatpush1.bf16.msra.mxu0 0
      %1512 = vmatprep.subr.bf16.mxu0 0
      %1513 = vmatpush1.bf16.msra.mxu0 0
      %1514 = vmatprep.subr.bf16.mxu0 0
      %1515 = vmatpush1.bf16.msra.mxu0 0
      %1516 = vmatprep.subr.bf16.mxu0 0
      %1517 = vmatpush1.bf16.msra.mxu0 0
      %1518 = vmatprep.subr.bf16.mxu0 0
      %1519 = vmatpush1.bf16.msra.mxu0 0
      %1520 = vmatprep.subr.bf16.mxu0 0
      %1521 = vmatpush1.bf16.msra.mxu0 0
      %1522 = vmatprep.subr.bf16.mxu0 0
      %1523 = vmatpush1.bf16.msra.mxu0 0
      %1524 = vmatprep.subr.bf16.mxu0 0
      %1525 = vmatpush1.bf16.msra.mxu0 0
      %1526 = vmatprep.subr.bf16.mxu0 0
      %1527 = vmatpush1.bf16.msra.mxu0 0
      %1528 = vmatprep.subr.bf16.mxu0 0
      %1529 = vmatpush1.bf16.msra.mxu0 0
      %1530 = vmatprep.subr.bf16.mxu0 0
      %1531 = vmatpush1.bf16.msra.mxu0 0
      %1532 = vmatprep.subr.bf16.mxu0 0
      %1533 = vmatpush1.bf16.msra.mxu0 0
      %1534 = vmatprep.mubr.bf16.mxu0 0
      %1535 = vmatmul.mubr.bf16.gmra.mrb[0].mxu0 %v1452
      %v1536 = vpop.f32.mrb[0].mxu0
      %v1537 = vadd.f32 0.0, %v1536
      %v1538 = vpop.f32.mrb[0].mxu0
      %v1539 = vpop.f32.mrb[0].mxu0
      %v1540 = vadd.f32 0.0, %v1539
      %v1541 = vpop.f32.mrb[0].mxu0
      %1542 = vmatprep.mubr.bf16.mxu0 0
      %1543 = vmatmul.mubr.bf16.gmra.mrb[0].mxu0 %v1455
      %v1544 = vpop.f32.mrb[0].mxu0
      %v1545 = vadd.f32 0.0, %v1544
      %v1546 = vpop.f32.mrb[0].mxu0
      %v1547 = vpop.f32.mrb[0].mxu0
      %v1548 = vadd.f32 0.0, %v1547
      %v1549 = vpop.f32.mrb[0].mxu0
      %1550 = vmatprep.mubr.bf16.mxu0 0
      %1551 = vmatmul.mubr.bf16.gmra.mrb[0].mxu0 %v1458
      %v1552 = vpop.f32.mrb[0].mxu0
      %v1553 = vadd.f32 0.0, %v1552
      %v1554 = vpop.f32.mrb[0].mxu0
      %v1555 = vpop.f32.mrb[0].mxu0
      %v1556 = vadd.f32 0.0, %v1555
      %v1557 = vpop.f32.mrb[0].mxu0
      %1558 = vmatprep.mubr.bf16.mxu0 0
      %1559 = vmatmul.mubr.bf16.gmra.mrb[0].mxu0 %v1461
      %v1560 = vpop.f32.mrb[0].mxu0
      %v1561 = vadd.f32 0.0, %v1560
      %v1562 = vpop.f32.mrb[0].mxu0
      %v1563 = vpop.f32.mrb[0].mxu0
      %v1564 = vadd.f32 0.0, %v1563
      %v1565 = vpop.f32.mrb[0].mxu0
      %1566 = vmatprep.mubr.bf16.mxu0 0
      %1567 = vmatmul.mubr.bf16.gmra.mrb[0].mxu0 %v1464
      %v1568 = vpop.f32.mrb[0].mxu0
      %v1569 = vadd.f32 0.0, %v1568
      %v1570 = vpop.f32.mrb[0].mxu0
      %v1571 = vpop.f32.mrb[0].mxu0
      %v1572 = vadd.f32 0.0, %v1571
      %v1573 = vpop.f32.mrb[0].mxu0
      %1574 = vmatprep.mubr.bf16.mxu0 0
      %1575 = vmatmul.mubr.bf16.gmra.mrb[0].mxu0 %v1467
      %v1576 = vpop.f32.mrb[0].mxu0
      %v1577 = vadd.f32 0.0, %v1576
      %v1578 = vpop.f32.mrb[0].mxu0
      %v1579 = vpop.f32.mrb[0].mxu0
      %v1580 = vadd.f32 0.0, %v1579
      %v1581 = vpop.f32.mrb[0].mxu0
      %1582 = vmatprep.mubr.bf16.mxu0 0
      %1583 = vmatmul.mubr.bf16.gmra.mrb[0].mxu0 %v1470
      %v1584 = vpop.f32.mrb[0].mxu0
      %v1585 = vadd.f32 0.0, %v1584
      %v1586 = vpop.f32.mrb[0].mxu0
      %v1587 = vpop.f32.mrb[0].mxu0
      %v1588 = vadd.f32 0.0, %v1587
      %v1589 = vpop.f32.mrb[0].mxu0
      %1590 = vmatprep.mubr.bf16.mxu0 0
      %1591 = vmatmul.mubr.bf16.gmra.mrb[0].mxu0 %v1473
      %v1592 = vpop.f32.mrb[0].mxu0
      %v1593 = vadd.f32 0.0, %v1592
      %v1594 = vpop.f32.mrb[0].mxu0
      %v1595 = vpop.f32.mrb[0].mxu0
      %v1596 = vadd.f32 0.0, %v1595
      %v1597 = vpop.f32.mrb[0].mxu0
      %1598 = vmatprep.mubr.bf16.mxu0 0
      %1599 = vmatmul.mubr.bf16.gmra.mrb[0].mxu0 %v1476
      %v1600 = vpop.f32.mrb[0].mxu0
      %v1601 = vadd.f32 0.0, %v1600
      %v1602 = vpop.f32.mrb[0].mxu0
      %v1603 = vpop.f32.mrb[0].mxu0
      %v1604 = vadd.f32 0.0, %v1603
      %v1605 = vpop.f32.mrb[0].mxu0
      %1606 = vmatprep.mubr.bf16.mxu0 0
      %1607 = vmatmul.mubr.bf16.gmra.mrb[0].mxu0 %v1479
      %v1608 = vpop.f32.mrb[0].mxu0
      %v1609 = vadd.f32 0.0, %v1608
      %v1610 = vpop.f32.mrb[0].mxu0
      %v1611 = vpop.f32.mrb[0].mxu0
      %v1612 = vadd.f32 0.0, %v1611
      %v1613 = vpop.f32.mrb[0].mxu0
      %1614 = vmatprep.mubr.bf16.mxu0 0
      %1615 = vmatmul.mubr.bf16.gmra.mrb[0].mxu0 %v1482
      %v1616 = vpop.f32.mrb[0].mxu0
      %v1617 = vadd.f32 0.0, %v1616
      %v1618 = vpop.f32.mrb[0].mxu0
      %v1619 = vpop.f32.mrb[0].mxu0
      %v1620 = vadd.f32 0.0, %v1619
      %v1621 = vpop.f32.mrb[0].mxu0
      %1622 = vmatprep.mubr.bf16.mxu0 0
      %1623 = vmatmul.mubr.bf16.gmra.mrb[0].mxu0 %v1485
      %v1624 = vpop.f32.mrb[0].mxu0
      %v1625 = vadd.f32 0.0, %v1624
      %v1626 = vpop.f32.mrb[0].mxu0
      %v1627 = vpop.f32.mrb[0].mxu0
      %v1628 = vadd.f32 0.0, %v1627
      %v1629 = vpop.f32.mrb[0].mxu0
      %1630 = vmatprep.mubr.bf16.mxu0 0
      %1631 = vmatmul.mubr.bf16.gmra.mrb[0].mxu0 %v1488
      %v1632 = vpop.f32.mrb[0].mxu0
      %v1633 = vadd.f32 0.0, %v1632
      %v1634 = vpop.f32.mrb[0].mxu0
      %v1635 = vpop.f32.mrb[0].mxu0
      %v1636 = vadd.f32 0.0, %v1635
      %v1637 = vpop.f32.mrb[0].mxu0
      %1638 = vmatprep.mubr.bf16.mxu0 0
      %1639 = vmatmul.mubr.bf16.gmra.mrb[0].mxu0 %v1491
      %v1640 = vpop.f32.mrb[0].mxu0
      %v1641 = vadd.f32 0.0, %v1640
      %v1642 = vpop.f32.mrb[0].mxu0
      %v1643 = vpop.f32.mrb[0].mxu0
      %v1644 = vadd.f32 0.0, %v1643
      %v1645 = vpop.f32.mrb[0].mxu0
      %1646 = vmatprep.mubr.bf16.mxu0 0
      %1647 = vmatmul.mubr.bf16.gmra.mrb[0].mxu0 %v1494
      %v1648 = vpop.f32.mrb[0].mxu0
      %v1649 = vadd.f32 0.0, %v1648
      %v1650 = vpop.f32.mrb[0].mxu0
      %v1651 = vpop.f32.mrb[0].mxu0
      %v1652 = vadd.f32 0.0, %v1651
      %v1653 = vpop.f32.mrb[0].mxu0
      %1654 = vmatprep.mubr.bf16.mxu0 0
      %1655 = vmatmul.mubr.bf16.gmra.mrb[0].mxu0 %v1497
      %v1656 = vpop.f32.mrb[0].mxu0
      %v1657 = vadd.f32 0.0, %v1656
      %v1658 = vpop.f32.mrb[0].mxu0
      %v1659 = vpop.f32.mrb[0].mxu0
      %v1660 = vadd.f32 0.0, %v1659
      %v1661 = vpop.f32.mrb[0].mxu0
      %1662 = vdwg.mxu0
      %v1663 = vadd.f32 %v1112, %v1537
      %v1664 = vadd.f32 %v1115, %v1540
      %v1665 = vadd.f32 %v1120, %v1545
      %v1666 = vadd.f32 %v1123, %v1548
      %v1667 = vadd.f32 %v1128, %v1553
      %v1668 = vadd.f32 %v1131, %v1556
      %v1669 = vadd.f32 %v1136, %v1561
      %v1670 = vadd.f32 %v1139, %v1564
      %v1671 = vadd.f32 %v1144, %v1569
      %v1672 = vadd.f32 %v1147, %v1572
      %v1673 = vadd.f32 %v1152, %v1577
      %v1674 = vadd.f32 %v1155, %v1580
      %v1675 = vadd.f32 %v1160, %v1585
      %v1676 = vadd.f32 %v1163, %v1588
      %v1677 = vadd.f32 %v1168, %v1593
      %v1678 = vadd.f32 %v1171, %v1596
      %v1679 = vadd.f32 %v1176, %v1601
      %v1680 = vadd.f32 %v1179, %v1604
      %v1681 = vadd.f32 %v1184, %v1609
      %v1682 = vadd.f32 %v1187, %v1612
      %v1683 = vadd.f32 %v1192, %v1617
      %v1684 = vadd.f32 %v1195, %v1620
      %v1685 = vadd.f32 %v1200, %v1625
      %v1686 = vadd.f32 %v1203, %v1628
      %v1687 = vadd.f32 %v1208, %v1633
      %v1688 = vadd.f32 %v1211, %v1636
      %v1689 = vadd.f32 %v1216, %v1641
      %v1690 = vadd.f32 %v1219, %v1644
      %v1691 = vadd.f32 %v1224, %v1649
      %v1692 = vadd.f32 %v1227, %v1652
      %v1693 = vadd.f32 %v1232, %v1657
      %v1694 = vadd.f32 %v1235, %v1660
      %s1695 = scalar_lea.vmem %s234, 12
      %v1696 = vld [vmem:[%s1695] sm:$0xf]
      %v1697 = vld [vmem:[%s1695 + $0x4] sm:$0xf]
      %v1698 = vld [vmem:[%s1695 + $0xc] sm:$0xf]
      %v1699 = vld [vmem:[%s1695 + $0x10] sm:$0xf]
      %v1700 = vld [vmem:[%s1695 + $0x18] sm:$0xf]
      %v1701 = vld [vmem:[%s1695 + $0x1c] sm:$0xf]
      %v1702 = vld [vmem:[%s1695 + $0x24] sm:$0xf]
      %v1703 = vld [vmem:[%s1695 + $0x28] sm:$0xf]
      %v1704 = vld [vmem:[%s1695 + $0x30] sm:$0xf]
      %v1705 = vld [vmem:[%s1695 + $0x34] sm:$0xf]
      %v1706 = vld [vmem:[%s1695 + $0x3c] sm:$0xf]
      %v1707 = vld [vmem:[%s1695 + $0x40] sm:$0xf]
      %v1708 = vld [vmem:[%s1695 + $0x48] sm:$0xf]
      %v1709 = vld [vmem:[%s1695 + $0x4c] sm:$0xf]
      %v1710 = vld [vmem:[%s1695 + $0x54] sm:$0xf]
      %v1711 = vld [vmem:[%s1695 + $0x58] sm:$0xf]
      %v1712 = vld [vmem:[%s1695 + $0x60] sm:$0xf]
      %v1713 = vld [vmem:[%s1695 + $0x64] sm:$0xf]
      %v1714 = vld [vmem:[%s1695 + $0x6c] sm:$0xf]
      %v1715 = vld [vmem:[%s1695 + $0x70] sm:$0xf]
      %v1716 = vld [vmem:[%s1695 + $0x78] sm:$0xf]
      %v1717 = vld [vmem:[%s1695 + $0x7c] sm:$0xf]
      %v1718 = vld [vmem:[%s1695 + $0x84] sm:$0xf]
      %v1719 = vld [vmem:[%s1695 + $0x88] sm:$0xf]
      %v1720 = vld [vmem:[%s1695 + $0x90] sm:$0xf]
      %v1721 = vld [vmem:[%s1695 + $0x94] sm:$0xf]
      %v1722 = vld [vmem:[%s1695 + $0x9c] sm:$0xf]
      %v1723 = vld [vmem:[%s1695 + $0xa0] sm:$0xf]
      %v1724 = vld [vmem:[%s1695 + $0xa8] sm:$0xf]
      %v1725 = vld [vmem:[%s1695 + $0xac] sm:$0xf]
      %v1726 = vld [vmem:[%s1695 + $0xb4] sm:$0xf]
      %v1727 = vld [vmem:[%s1695 + $0xb8] sm:$0xf]
      %s1728 = scalar_lea.vmem %s1, 6
      %v1729 = vld [vmem:[%s1728] sm:$0x3]
      %v1762 = vunpack.c.l.b16 %v1696
      %v1763 = vunpack.c.l.b16 %v1697
      %v1764 = vunpack.c.l.b16 %v1698
      %v1765 = vunpack.c.l.b16 %v1699
      %v1766 = vunpack.c.l.b16 %v1700
      %v1767 = vunpack.c.l.b16 %v1701
      %v1768 = vunpack.c.l.b16 %v1702
      %v1769 = vunpack.c.l.b16 %v1703
      %v1770 = vunpack.c.l.b16 %v1704
      %v1771 = vunpack.c.l.b16 %v1705
      %v1772 = vunpack.c.l.b16 %v1706
      %v1773 = vunpack.c.l.b16 %v1707
      %v1774 = vunpack.c.l.b16 %v1708
      %v1775 = vunpack.c.l.b16 %v1709
      %v1776 = vunpack.c.l.b16 %v1710
      %v1777 = vunpack.c.l.b16 %v1711
      %v1778 = vunpack.c.l.b16 %v1712
      %v1779 = vunpack.c.l.b16 %v1713
      %v1780 = vunpack.c.l.b16 %v1714
      %v1781 = vunpack.c.l.b16 %v1715
      %v1782 = vunpack.c.l.b16 %v1716
      %v1783 = vunpack.c.l.b16 %v1717
      %v1784 = vunpack.c.l.b16 %v1718
      %v1785 = vunpack.c.l.b16 %v1719
      %v1786 = vunpack.c.l.b16 %v1720
      %v1787 = vunpack.c.l.b16 %v1721
      %v1788 = vunpack.c.l.b16 %v1722
      %v1789 = vunpack.c.l.b16 %v1723
      %v1790 = vunpack.c.l.b16 %v1724
      %v1791 = vunpack.c.l.b16 %v1725
      %v1792 = vunpack.c.l.b16 %v1726
      %v1793 = vunpack.c.l.b16 %v1727
      %v1794 = vpack.c.b16 %v1763, %v1762
      %v1795 = vpack.c.b16 %v1765, %v1764
      %v1796 = vpack.c.b16 %v1767, %v1766
      %v1797 = vpack.c.b16 %v1769, %v1768
      %v1798 = vpack.c.b16 %v1771, %v1770
      %v1799 = vpack.c.b16 %v1773, %v1772
      %v1800 = vpack.c.b16 %v1775, %v1774
      %v1801 = vpack.c.b16 %v1777, %v1776
      %v1802 = vpack.c.b16 %v1779, %v1778
      %v1803 = vpack.c.b16 %v1781, %v1780
      %v1804 = vpack.c.b16 %v1783, %v1782
      %v1805 = vpack.c.b16 %v1785, %v1784
      %v1806 = vpack.c.b16 %v1787, %v1786
      %v1807 = vpack.c.b16 %v1789, %v1788
      %v1808 = vpack.c.b16 %v1791, %v1790
      %v1809 = vpack.c.b16 %v1793, %v1792
      %v1811 = vsel %vm732, %v1794, 0
      %v1814 = vsel %vm732, %v1795, 0
      %v1817 = vsel %vm732, %v1796, 0
      %v1820 = vsel %vm732, %v1797, 0
      %v1823 = vsel %vm732, %v1798, 0
      %v1826 = vsel %vm732, %v1799, 0
      %v1829 = vsel %vm732, %v1800, 0
      %v1832 = vsel %vm732, %v1801, 0
      %v1835 = vsel %vm732, %v1802, 0
      %v1838 = vsel %vm732, %v1803, 0
      %v1841 = vsel %vm732, %v1804, 0
      %v1844 = vsel %vm732, %v1805, 0
      %v1847 = vsel %vm732, %v1806, 0
      %v1850 = vsel %vm732, %v1807, 0
      %v1853 = vsel %vm732, %v1808, 0
      %v1856 = vsel %vm732, %v1809, 0
      %v1859 = vsel %vm781, %v1729, 0
      %1861 = vmatprep.subr.bf16.mxu0 0
      %1862 = vmatpush1.bf16.msra.mxu0 %v1859
      %1863 = vmatprep.subr.bf16.mxu0 0
      %1864 = vmatpush1.bf16.msra.mxu0 0
      %1865 = vmatprep.subr.bf16.mxu0 0
      %1866 = vmatpush1.bf16.msra.mxu0 0
      %1867 = vmatprep.subr.bf16.mxu0 0
      %1868 = vmatpush1.bf16.msra.mxu0 0
      %1869 = vmatprep.subr.bf16.mxu0 0
      %1870 = vmatpush1.bf16.msra.mxu0 0
      %1871 = vmatprep.subr.bf16.mxu0 0
      %1872 = vmatpush1.bf16.msra.mxu0 0
      %1873 = vmatprep.subr.bf16.mxu0 0
      %1874 = vmatpush1.bf16.msra.mxu0 0
      %1875 = vmatprep.subr.bf16.mxu0 0
      %1876 = vmatpush1.bf16.msra.mxu0 0
      %1877 = vmatprep.subr.bf16.mxu0 0
      %1878 = vmatpush1.bf16.msra.mxu0 0
      %1879 = vmatprep.subr.bf16.mxu0 0
      %1880 = vmatpush1.bf16.msra.mxu0 0
      %1881 = vmatprep.subr.bf16.mxu0 0
      %1882 = vmatpush1.bf16.msra.mxu0 0
      %1883 = vmatprep.subr.bf16.mxu0 0
      %1884 = vmatpush1.bf16.msra.mxu0 0
      %1885 = vmatprep.subr.bf16.mxu0 0
      %1886 = vmatpush1.bf16.msra.mxu0 0
      %1887 = vmatprep.subr.bf16.mxu0 0
      %1888 = vmatpush1.bf16.msra.mxu0 0
      %1889 = vmatprep.subr.bf16.mxu0 0
      %1890 = vmatpush1.bf16.msra.mxu0 0
      %1891 = vmatprep.subr.bf16.mxu0 0
      %1892 = vmatpush1.bf16.msra.mxu0 0
      %1893 = vmatprep.mubr.bf16.mxu0 0
      %1894 = vmatmul.mubr.bf16.gmra.mrb[0].mxu0 %v1811
      %v1895 = vpop.f32.mrb[0].mxu0
      %v1896 = vadd.f32 0.0, %v1895
      %v1897 = vpop.f32.mrb[0].mxu0
      %v1898 = vpop.f32.mrb[0].mxu0
      %v1899 = vadd.f32 0.0, %v1898
      %v1900 = vpop.f32.mrb[0].mxu0
      %1901 = vmatprep.mubr.bf16.mxu0 0
      %1902 = vmatmul.mubr.bf16.gmra.mrb[0].mxu0 %v1814
      %v1903 = vpop.f32.mrb[0].mxu0
      %v1904 = vadd.f32 0.0, %v1903
      %v1905 = vpop.f32.mrb[0].mxu0
      %v1906 = vpop.f32.mrb[0].mxu0
      %v1907 = vadd.f32 0.0, %v1906
      %v1908 = vpop.f32.mrb[0].mxu0
      %1909 = vmatprep.mubr.bf16.mxu0 0
      %1910 = vmatmul.mubr.bf16.gmra.mrb[0].mxu0 %v1817
      %v1911 = vpop.f32.mrb[0].mxu0
      %v1912 = vadd.f32 0.0, %v1911
      %v1913 = vpop.f32.mrb[0].mxu0
      %v1914 = vpop.f32.mrb[0].mxu0
      %v1915 = vadd.f32 0.0, %v1914
      %v1916 = vpop.f32.mrb[0].mxu0
      %1917 = vmatprep.mubr.bf16.mxu0 0
      %1918 = vmatmul.mubr.bf16.gmra.mrb[0].mxu0 %v1820
      %v1919 = vpop.f32.mrb[0].mxu0
      %v1920 = vadd.f32 0.0, %v1919
      %v1921 = vpop.f32.mrb[0].mxu0
      %v1922 = vpop.f32.mrb[0].mxu0
      %v1923 = vadd.f32 0.0, %v1922
      %v1924 = vpop.f32.mrb[0].mxu0
      %1925 = vmatprep.mubr.bf16.mxu0 0
      %1926 = vmatmul.mubr.bf16.gmra.mrb[0].mxu0 %v1823
      %v1927 = vpop.f32.mrb[0].mxu0
      %v1928 = vadd.f32 0.0, %v1927
      %v1929 = vpop.f32.mrb[0].mxu0
      %v1930 = vpop.f32.mrb[0].mxu0
      %v1931 = vadd.f32 0.0, %v1930
      %v1932 = vpop.f32.mrb[0].mxu0
      %1933 = vmatprep.mubr.bf16.mxu0 0
      %1934 = vmatmul.mubr.bf16.gmra.mrb[0].mxu0 %v1826
      %v1935 = vpop.f32.mrb[0].mxu0
      %v1936 = vadd.f32 0.0, %v1935
      %v1937 = vpop.f32.mrb[0].mxu0
      %v1938 = vpop.f32.mrb[0].mxu0
      %v1939 = vadd.f32 0.0, %v1938
      %v1940 = vpop.f32.mrb[0].mxu0
      %1941 = vmatprep.mubr.bf16.mxu0 0
      %1942 = vmatmul.mubr.bf16.gmra.mrb[0].mxu0 %v1829
      %v1943 = vpop.f32.mrb[0].mxu0
      %v1944 = vadd.f32 0.0, %v1943
      %v1945 = vpop.f32.mrb[0].mxu0
      %v1946 = vpop.f32.mrb[0].mxu0
      %v1947 = vadd.f32 0.0, %v1946
      %v1948 = vpop.f32.mrb[0].mxu0
      %1949 = vmatprep.mubr.bf16.mxu0 0
      %1950 = vmatmul.mubr.bf16.gmra.mrb[0].mxu0 %v1832
      %v1951 = vpop.f32.mrb[0].mxu0
      %v1952 = vadd.f32 0.0, %v1951
      %v1953 = vpop.f32.mrb[0].mxu0
      %v1954 = vpop.f32.mrb[0].mxu0
      %v1955 = vadd.f32 0.0, %v1954
      %v1956 = vpop.f32.mrb[0].mxu0
      %1957 = vmatprep.mubr.bf16.mxu0 0
      %1958 = vmatmul.mubr.bf16.gmra.mrb[0].mxu0 %v1835
      %v1959 = vpop.f32.mrb[0].mxu0
      %v1960 = vadd.f32 0.0, %v1959
      %v1961 = vpop.f32.mrb[0].mxu0
      %v1962 = vpop.f32.mrb[0].mxu0
      %v1963 = vadd.f32 0.0, %v1962
      %v1964 = vpop.f32.mrb[0].mxu0
      %1965 = vmatprep.mubr.bf16.mxu0 0
      %1966 = vmatmul.mubr.bf16.gmra.mrb[0].mxu0 %v1838
      %v1967 = vpop.f32.mrb[0].mxu0
      %v1968 = vadd.f32 0.0, %v1967
      %v1969 = vpop.f32.mrb[0].mxu0
      %v1970 = vpop.f32.mrb[0].mxu0
      %v1971 = vadd.f32 0.0, %v1970
      %v1972 = vpop.f32.mrb[0].mxu0
      %1973 = vmatprep.mubr.bf16.mxu0 0
      %1974 = vmatmul.mubr.bf16.gmra.mrb[0].mxu0 %v1841
      %v1975 = vpop.f32.mrb[0].mxu0
      %v1976 = vadd.f32 0.0, %v1975
      %v1977 = vpop.f32.mrb[0].mxu0
      %v1978 = vpop.f32.mrb[0].mxu0
      %v1979 = vadd.f32 0.0, %v1978
      %v1980 = vpop.f32.mrb[0].mxu0
      %1981 = vmatprep.mubr.bf16.mxu0 0
      %1982 = vmatmul.mubr.bf16.gmra.mrb[0].mxu0 %v1844
      %v1983 = vpop.f32.mrb[0].mxu0
      %v1984 = vadd.f32 0.0, %v1983
      %v1985 = vpop.f32.mrb[0].mxu0
      %v1986 = vpop.f32.mrb[0].mxu0
      %v1987 = vadd.f32 0.0, %v1986
      %v1988 = vpop.f32.mrb[0].mxu0
      %1989 = vmatprep.mubr.bf16.mxu0 0
      %1990 = vmatmul.mubr.bf16.gmra.mrb[0].mxu0 %v1847
      %v1991 = vpop.f32.mrb[0].mxu0
      %v1992 = vadd.f32 0.0, %v1991
      %v1993 = vpop.f32.mrb[0].mxu0
      %v1994 = vpop.f32.mrb[0].mxu0
      %v1995 = vadd.f32 0.0, %v1994
      %v1996 = vpop.f32.mrb[0].mxu0
      %1997 = vmatprep.mubr.bf16.mxu0 0
      %1998 = vmatmul.mubr.bf16.gmra.mrb[0].mxu0 %v1850
      %v1999 = vpop.f32.mrb[0].mxu0
      %v2000 = vadd.f32 0.0, %v1999
      %v2001 = vpop.f32.mrb[0].mxu0
      %v2002 = vpop.f32.mrb[0].mxu0
      %v2003 = vadd.f32 0.0, %v2002
      %v2004 = vpop.f32.mrb[0].mxu0
      %2005 = vmatprep.mubr.bf16.mxu0 0
      %2006 = vmatmul.mubr.bf16.gmra.mrb[0].mxu0 %v1853
      %v2007 = vpop.f32.mrb[0].mxu0
      %v2008 = vadd.f32 0.0, %v2007
      %v2009 = vpop.f32.mrb[0].mxu0
      %v2010 = vpop.f32.mrb[0].mxu0
      %v2011 = vadd.f32 0.0, %v2010
      %v2012 = vpop.f32.mrb[0].mxu0
      %2013 = vmatprep.mubr.bf16.mxu0 0
      %2014 = vmatmul.mubr.bf16.gmra.mrb[0].mxu0 %v1856
      %v2015 = vpop.f32.mrb[0].mxu0
      %v2016 = vadd.f32 0.0, %v2015
      %v2017 = vpop.f32.mrb[0].mxu0
      %v2018 = vpop.f32.mrb[0].mxu0
      %v2019 = vadd.f32 0.0, %v2018
      %v2020 = vpop.f32.mrb[0].mxu0
      %2021 = vdwg.mxu0
      %v2022 = vadd.f32 %v1663, %v1896
      %v2023 = vadd.f32 %v1664, %v1899
      %v2024 = vadd.f32 %v1665, %v1904
      %v2025 = vadd.f32 %v1666, %v1907
      %v2026 = vadd.f32 %v1667, %v1912
      %v2027 = vadd.f32 %v1668, %v1915
      %v2028 = vadd.f32 %v1669, %v1920
      %v2029 = vadd.f32 %v1670, %v1923
      %v2030 = vadd.f32 %v1671, %v1928
      %v2031 = vadd.f32 %v1672, %v1931
      %v2032 = vadd.f32 %v1673, %v1936
      %v2033 = vadd.f32 %v1674, %v1939
      %v2034 = vadd.f32 %v1675, %v1944
      %v2035 = vadd.f32 %v1676, %v1947
      %v2036 = vadd.f32 %v1677, %v1952
      %v2037 = vadd.f32 %v1678, %v1955
      %v2038 = vadd.f32 %v1679, %v1960
      %v2039 = vadd.f32 %v1680, %v1963
      %v2040 = vadd.f32 %v1681, %v1968
      %v2041 = vadd.f32 %v1682, %v1971
      %v2042 = vadd.f32 %v1683, %v1976
      %v2043 = vadd.f32 %v1684, %v1979
      %v2044 = vadd.f32 %v1685, %v1984
      %v2045 = vadd.f32 %v1686, %v1987
      %v2046 = vadd.f32 %v1687, %v1992
      %v2047 = vadd.f32 %v1688, %v1995
      %v2048 = vadd.f32 %v1689, %v2000
      %v2049 = vadd.f32 %v1690, %v2003
      %v2050 = vadd.f32 %v1691, %v2008
      %v2051 = vadd.f32 %v1692, %v2011
      %v2052 = vadd.f32 %v1693, %v2016
      %v2053 = vadd.f32 %v1694, %v2019
      %v2054 = vld [vmem:[%s1695] sm:$0xf]
      %v2055 = vld [vmem:[%s1695 + $0x4] sm:$0xf]
      %v2056 = vld [vmem:[%s1695 + $0x8] sm:$0x1]
      %v2057 = vld [vmem:[%s1695 + $0xc] sm:$0xf]
      %v2058 = vld [vmem:[%s1695 + $0x10] sm:$0xf]
      %v2059 = vld [vmem:[%s1695 + $0x14] sm:$0x1]
      %v2060 = vld [vmem:[%s1695 + $0x18] sm:$0xf]
      %v2061 = vld [vmem:[%s1695 + $0x1c] sm:$0xf]
      %v2062 = vld [vmem:[%s1695 + $0x20] sm:$0x1]
      %v2063 = vld [vmem:[%s1695 + $0x24] sm:$0xf]
      %v2064 = vld [vmem:[%s1695 + $0x28] sm:$0xf]
      %v2065 = vld [vmem:[%s1695 + $0x2c] sm:$0x1]
      %v2066 = vld [vmem:[%s1695 + $0x30] sm:$0xf]
      %v2067 = vld [vmem:[%s1695 + $0x34] sm:$0xf]
      %v2068 = vld [vmem:[%s1695 + $0x38] sm:$0x1]
      %v2069 = vld [vmem:[%s1695 + $0x3c] sm:$0xf]
      %v2070 = vld [vmem:[%s1695 + $0x40] sm:$0xf]
      %v2071 = vld [vmem:[%s1695 + $0x44] sm:$0x1]
      %v2072 = vld [vmem:[%s1695 + $0x48] sm:$0xf]
      %v2073 = vld [vmem:[%s1695 + $0x4c] sm:$0xf]
      %v2074 = vld [vmem:[%s1695 + $0x50] sm:$0x1]
      %v2075 = vld [vmem:[%s1695 + $0x54] sm:$0xf]
      %v2076 = vld [vmem:[%s1695 + $0x58] sm:$0xf]
      %v2077 = vld [vmem:[%s1695 + $0x5c] sm:$0x1]
      %v2078 = vld [vmem:[%s1695 + $0x60] sm:$0xf]
      %v2079 = vld [vmem:[%s1695 + $0x64] sm:$0xf]
      %v2080 = vld [vmem:[%s1695 + $0x68] sm:$0x1]
      %v2081 = vld [vmem:[%s1695 + $0x6c] sm:$0xf]
      %v2082 = vld [vmem:[%s1695 + $0x70] sm:$0xf]
      %v2083 = vld [vmem:[%s1695 + $0x74] sm:$0x1]
      %v2084 = vld [vmem:[%s1695 + $0x78] sm:$0xf]
      %v2085 = vld [vmem:[%s1695 + $0x7c] sm:$0xf]
      %v2086 = vld [vmem:[%s1695 + $0x80] sm:$0x1]
      %v2087 = vld [vmem:[%s1695 + $0x84] sm:$0xf]
      %v2088 = vld [vmem:[%s1695 + $0x88] sm:$0xf]
      %v2089 = vld [vmem:[%s1695 + $0x8c] sm:$0x1]
      %v2090 = vld [vmem:[%s1695 + $0x90] sm:$0xf]
      %v2091 = vld [vmem:[%s1695 + $0x94] sm:$0xf]
      %v2092 = vld [vmem:[%s1695 + $0x98] sm:$0x1]
      %v2093 = vld [vmem:[%s1695 + $0x9c] sm:$0xf]
      %v2094 = vld [vmem:[%s1695 + $0xa0] sm:$0xf]
      %v2095 = vld [vmem:[%s1695 + $0xa4] sm:$0x1]
      %v2096 = vld [vmem:[%s1695 + $0xa8] sm:$0xf]
      %v2097 = vld [vmem:[%s1695 + $0xac] sm:$0xf]
      %v2098 = vld [vmem:[%s1695 + $0xb0] sm:$0x1]
      %v2099 = vld [vmem:[%s1695 + $0xb4] sm:$0xf]
      %v2100 = vld [vmem:[%s1695 + $0xb8] sm:$0xf]
      %v2101 = vld [vmem:[%s1695 + $0xbc] sm:$0x1]
      %v2103 = vshrl.u32 %v2054, 16
      %v2105 = vrot.slane %v2103, 4
      %v2106 = vshll.u32 %v2054, 16
      %v2108 = vrot.slane %v2106, 5
      %v2109 = vor.u32 %v2105, %v2108
      %v2110 = vrot.slane %v2109, 4
      %v2112 = vshll.u32 %v2055, 16
      %v2114 = vrot.slane %v2112, 5
      %v2115 = vsel %vm297, %v2110, %v2114
      %v2116 = vshrl.u32 %v2055, 16
      %v2118 = vrot.slane %v2116, 4
      %v2119 = vor.u32 %v2118, %v2114
      %v2120 = vrot.slane %v2119, 4
      %v2122 = vshll.u32 %v2056, 16
      %v2124 = vrot.slane %v2122, 5
      %v2125 = vsel %vm297, %v2120, %v2124
      %v2127 = vshrl.u32 %v2057, 16
      %v2129 = vrot.slane %v2127, 4
      %v2130 = vshll.u32 %v2057, 16
      %v2132 = vrot.slane %v2130, 5
      %v2133 = vor.u32 %v2129, %v2132
      %v2134 = vrot.slane %v2133, 4
      %v2136 = vshll.u32 %v2058, 16
      %v2138 = vrot.slane %v2136, 5
      %v2139 = vsel %vm297, %v2134, %v2138
      %v2140 = vshrl.u32 %v2058, 16
      %v2142 = vrot.slane %v2140, 4
      %v2143 = vor.u32 %v2142, %v2138
      %v2144 = vrot.slane %v2143, 4
      %v2146 = vshll.u32 %v2059, 16
      %v2148 = vrot.slane %v2146, 5
      %v2149 = vsel %vm297, %v2144, %v2148
      %v2151 = vshrl.u32 %v2060, 16
      %v2153 = vrot.slane %v2151, 4
      %v2154 = vshll.u32 %v2060, 16
      %v2156 = vrot.slane %v2154, 5
      %v2157 = vor.u32 %v2153, %v2156
      %v2158 = vrot.slane %v2157, 4
      %v2160 = vshll.u32 %v2061, 16
      %v2162 = vrot.slane %v2160, 5
      %v2163 = vsel %vm297, %v2158, %v2162
      %v2164 = vshrl.u32 %v2061, 16
      %v2166 = vrot.slane %v2164, 4
      %v2167 = vor.u32 %v2166, %v2162
      %v2168 = vrot.slane %v2167, 4
      %v2170 = vshll.u32 %v2062, 16
      %v2172 = vrot.slane %v2170, 5
      %v2173 = vsel %vm297, %v2168, %v2172
      %v2175 = vshrl.u32 %v2063, 16
      %v2177 = vrot.slane %v2175, 4
      %v2178 = vshll.u32 %v2063, 16
      %v2180 = vrot.slane %v2178, 5
      %v2181 = vor.u32 %v2177, %v2180
      %v2182 = vrot.slane %v2181, 4
      %v2184 = vshll.u32 %v2064, 16
      %v2186 = vrot.slane %v2184, 5
      %v2187 = vsel %vm297, %v2182, %v2186
      %v2188 = vshrl.u32 %v2064, 16
      %v2190 = vrot.slane %v2188, 4
      %v2191 = vor.u32 %v2190, %v2186
      %v2192 = vrot.slane %v2191, 4
      %v2194 = vshll.u32 %v2065, 16
      %v2196 = vrot.slane %v2194, 5
      %v2197 = vsel %vm297, %v2192, %v2196
      %v2199 = vshrl.u32 %v2066, 16
      %v2201 = vrot.slane %v2199, 4
      %v2202 = vshll.u32 %v2066, 16
      %v2204 = vrot.slane %v2202, 5
      %v2205 = vor.u32 %v2201, %v2204
      %v2206 = vrot.slane %v2205, 4
      %v2208 = vshll.u32 %v2067, 16
      %v2210 = vrot.slane %v2208, 5
      %v2211 = vsel %vm297, %v2206, %v2210
      %v2212 = vshrl.u32 %v2067, 16
      %v2214 = vrot.slane %v2212, 4
      %v2215 = vor.u32 %v2214, %v2210
      %v2216 = vrot.slane %v2215, 4
      %v2218 = vshll.u32 %v2068, 16
      %v2220 = vrot.slane %v2218, 5
      %v2221 = vsel %vm297, %v2216, %v2220
      %v2223 = vshrl.u32 %v2069, 16
      %v2225 = vrot.slane %v2223, 4
      %v2226 = vshll.u32 %v2069, 16
      %v2228 = vrot.slane %v2226, 5
      %v2229 = vor.u32 %v2225, %v2228
      %v2230 = vrot.slane %v2229, 4
      %v2232 = vshll.u32 %v2070, 16
      %v2234 = vrot.slane %v2232, 5
      %v2235 = vsel %vm297, %v2230, %v2234
      %v2236 = vshrl.u32 %v2070, 16
      %v2238 = vrot.slane %v2236, 4
      %v2239 = vor.u32 %v2238, %v2234
      %v2240 = vrot.slane %v2239, 4
      %v2242 = vshll.u32 %v2071, 16
      %v2244 = vrot.slane %v2242, 5
      %v2245 = vsel %vm297, %v2240, %v2244
      %v2247 = vshrl.u32 %v2072, 16
      %v2249 = vrot.slane %v2247, 4
      %v2250 = vshll.u32 %v2072, 16
      %v2252 = vrot.slane %v2250, 5
      %v2253 = vor.u32 %v2249, %v2252
      %v2254 = vrot.slane %v2253, 4
      %v2256 = vshll.u32 %v2073, 16
      %v2258 = vrot.slane %v2256, 5
      %v2259 = vsel %vm297, %v2254, %v2258
      %v2260 = vshrl.u32 %v2073, 16
      %v2262 = vrot.slane %v2260, 4
      %v2263 = vor.u32 %v2262, %v2258
      %v2264 = vrot.slane %v2263, 4
      %v2266 = vshll.u32 %v2074, 16
      %v2268 = vrot.slane %v2266, 5
      %v2269 = vsel %vm297, %v2264, %v2268
      %v2271 = vshrl.u32 %v2075, 16
      %v2273 = vrot.slane %v2271, 4
      %v2274 = vshll.u32 %v2075, 16
      %v2276 = vrot.slane %v2274, 5
      %v2277 = vor.u32 %v2273, %v2276
      %v2278 = vrot.slane %v2277, 4
      %v2280 = vshll.u32 %v2076, 16
      %v2282 = vrot.slane %v2280, 5
      %v2283 = vsel %vm297, %v2278, %v2282
      %v2284 = vshrl.u32 %v2076, 16
      %v2286 = vrot.slane %v2284, 4
      %v2287 = vor.u32 %v2286, %v2282
      %v2288 = vrot.slane %v2287, 4
      %v2290 = vshll.u32 %v2077, 16
      %v2292 = vrot.slane %v2290, 5
      %v2293 = vsel %vm297, %v2288, %v2292
      %v2295 = vshrl.u32 %v2078, 16
      %v2297 = vrot.slane %v2295, 4
      %v2298 = vshll.u32 %v2078, 16
      %v2300 = vrot.slane %v2298, 5
      %v2301 = vor.u32 %v2297, %v2300
      %v2302 = vrot.slane %v2301, 4
      %v2304 = vshll.u32 %v2079, 16
      %v2306 = vrot.slane %v2304, 5
      %v2307 = vsel %vm297, %v2302, %v2306
      %v2308 = vshrl.u32 %v2079, 16
      %v2310 = vrot.slane %v2308, 4
      %v2311 = vor.u32 %v2310, %v2306
      %v2312 = vrot.slane %v2311, 4
      %v2314 = vshll.u32 %v2080, 16
      %v2316 = vrot.slane %v2314, 5
      %v2317 = vsel %vm297, %v2312, %v2316
      %v2319 = vshrl.u32 %v2081, 16
      %v2321 = vrot.slane %v2319, 4
      %v2322 = vshll.u32 %v2081, 16
      %v2324 = vrot.slane %v2322, 5
      %v2325 = vor.u32 %v2321, %v2324
      %v2326 = vrot.slane %v2325, 4
      %v2328 = vshll.u32 %v2082, 16
      %v2330 = vrot.slane %v2328, 5
      %v2331 = vsel %vm297, %v2326, %v2330
      %v2332 = vshrl.u32 %v2082, 16
      %v2334 = vrot.slane %v2332, 4
      %v2335 = vor.u32 %v2334, %v2330
      %v2336 = vrot.slane %v2335, 4
      %v2338 = vshll.u32 %v2083, 16
      %v2340 = vrot.slane %v2338, 5
      %v2341 = vsel %vm297, %v2336, %v2340
      %v2343 = vshrl.u32 %v2084, 16
      %v2345 = vrot.slane %v2343, 4
      %v2346 = vshll.u32 %v2084, 16
      %v2348 = vrot.slane %v2346, 5
      %v2349 = vor.u32 %v2345, %v2348
      %v2350 = vrot.slane %v2349, 4
      %v2352 = vshll.u32 %v2085, 16
      %v2354 = vrot.slane %v2352, 5
      %v2355 = vsel %vm297, %v2350, %v2354
      %v2356 = vshrl.u32 %v2085, 16
      %v2358 = vrot.slane %v2356, 4
      %v2359 = vor.u32 %v2358, %v2354
      %v2360 = vrot.slane %v2359, 4
      %v2362 = vshll.u32 %v2086, 16
      %v2364 = vrot.slane %v2362, 5
      %v2365 = vsel %vm297, %v2360, %v2364
      %v2367 = vshrl.u32 %v2087, 16
      %v2369 = vrot.slane %v2367, 4
      %v2370 = vshll.u32 %v2087, 16
      %v2372 = vrot.slane %v2370, 5
      %v2373 = vor.u32 %v2369, %v2372
      %v2374 = vrot.slane %v2373, 4
      %v2376 = vshll.u32 %v2088, 16
      %v2378 = vrot.slane %v2376, 5
      %v2379 = vsel %vm297, %v2374, %v2378
      %v2380 = vshrl.u32 %v2088, 16
      %v2382 = vrot.slane %v2380, 4
      %v2383 = vor.u32 %v2382, %v2378
      %v2384 = vrot.slane %v2383, 4
      %v2386 = vshll.u32 %v2089, 16
      %v2388 = vrot.slane %v2386, 5
      %v2389 = vsel %vm297, %v2384, %v2388
      %v2391 = vshrl.u32 %v2090, 16
      %v2393 = vrot.slane %v2391, 4
      %v2394 = vshll.u32 %v2090, 16
      %v2396 = vrot.slane %v2394, 5
      %v2397 = vor.u32 %v2393, %v2396
      %v2398 = vrot.slane %v2397, 4
      %v2400 = vshll.u32 %v2091, 16
      %v2402 = vrot.slane %v2400, 5
      %v2403 = vsel %vm297, %v2398, %v2402
      %v2404 = vshrl.u32 %v2091, 16
      %v2406 = vrot.slane %v2404, 4
      %v2407 = vor.u32 %v2406, %v2402
      %v2408 = vrot.slane %v2407, 4
      %v2410 = vshll.u32 %v2092, 16
      %v2412 = vrot.slane %v2410, 5
      %v2413 = vsel %vm297, %v2408, %v2412
      %v2415 = vshrl.u32 %v2093, 16
      %v2417 = vrot.slane %v2415, 4
      %v2418 = vshll.u32 %v2093, 16
      %v2420 = vrot.slane %v2418, 5
      %v2421 = vor.u32 %v2417, %v2420
      %v2422 = vrot.slane %v2421, 4
      %v2424 = vshll.u32 %v2094, 16
      %v2426 = vrot.slane %v2424, 5
      %v2427 = vsel %vm297, %v2422, %v2426
      %v2428 = vshrl.u32 %v2094, 16
      %v2430 = vrot.slane %v2428, 4
      %v2431 = vor.u32 %v2430, %v2426
      %v2432 = vrot.slane %v2431, 4
      %v2434 = vshll.u32 %v2095, 16
      %v2436 = vrot.slane %v2434, 5
      %v2437 = vsel %vm297, %v2432, %v2436
      %v2439 = vshrl.u32 %v2096, 16
      %v2441 = vrot.slane %v2439, 4
      %v2442 = vshll.u32 %v2096, 16
      %v2444 = vrot.slane %v2442, 5
      %v2445 = vor.u32 %v2441, %v2444
      %v2446 = vrot.slane %v2445, 4
      %v2448 = vshll.u32 %v2097, 16
      %v2450 = vrot.slane %v2448, 5
      %v2451 = vsel %vm297, %v2446, %v2450
      %v2452 = vshrl.u32 %v2097, 16
      %v2454 = vrot.slane %v2452, 4
      %v2455 = vor.u32 %v2454, %v2450
      %v2456 = vrot.slane %v2455, 4
      %v2458 = vshll.u32 %v2098, 16
      %v2460 = vrot.slane %v2458, 5
      %v2461 = vsel %vm297, %v2456, %v2460
      %v2463 = vshrl.u32 %v2099, 16
      %v2465 = vrot.slane %v2463, 4
      %v2466 = vshll.u32 %v2099, 16
      %v2468 = vrot.slane %v2466, 5
      %v2469 = vor.u32 %v2465, %v2468
      %v2470 = vrot.slane %v2469, 4
      %v2472 = vshll.u32 %v2100, 16
      %v2474 = vrot.slane %v2472, 5
      %v2475 = vsel %vm297, %v2470, %v2474
      %v2476 = vshrl.u32 %v2100, 16
      %v2478 = vrot.slane %v2476, 4
      %v2479 = vor.u32 %v2478, %v2474
      %v2480 = vrot.slane %v2479, 4
      %v2482 = vshll.u32 %v2101, 16
      %v2484 = vrot.slane %v2482, 5
      %v2485 = vsel %vm297, %v2480, %v2484
      %s2486 = scalar_lea.vmem %s1, 8
      %v2487 = vld [vmem:[%s2486] sm:$0x3]
      %v2488 = vunpack.c.l.b16 %v2115
      %v2489 = vunpack.c.l.b16 %v2125
      %v2490 = vunpack.c.l.b16 %v2139
      %v2491 = vunpack.c.l.b16 %v2149
      %v2492 = vunpack.c.l.b16 %v2163
      %v2493 = vunpack.c.l.b16 %v2173
      %v2494 = vunpack.c.l.b16 %v2187
      %v2495 = vunpack.c.l.b16 %v2197
      %v2496 = vunpack.c.l.b16 %v2211
      %v2497 = vunpack.c.l.b16 %v2221
      %v2498 = vunpack.c.l.b16 %v2235
      %v2499 = vunpack.c.l.b16 %v2245
      %v2500 = vunpack.c.l.b16 %v2259
      %v2501 = vunpack.c.l.b16 %v2269
      %v2502 = vunpack.c.l.b16 %v2283
      %v2503 = vunpack.c.l.b16 %v2293
      %v2504 = vunpack.c.l.b16 %v2307
      %v2505 = vunpack.c.l.b16 %v2317
      %v2506 = vunpack.c.l.b16 %v2331
      %v2507 = vunpack.c.l.b16 %v2341
      %v2508 = vunpack.c.l.b16 %v2355
      %v2509 = vunpack.c.l.b16 %v2365
      %v2510 = vunpack.c.l.b16 %v2379
      %v2511 = vunpack.c.l.b16 %v2389
      %v2512 = vunpack.c.l.b16 %v2403
      %v2513 = vunpack.c.l.b16 %v2413
      %v2514 = vunpack.c.l.b16 %v2427
      %v2515 = vunpack.c.l.b16 %v2437
      %v2516 = vunpack.c.l.b16 %v2451
      %v2517 = vunpack.c.l.b16 %v2461
      %v2518 = vunpack.c.l.b16 %v2475
      %v2519 = vunpack.c.l.b16 %v2485
      %v2520 = vpack.c.b16 %v2489, %v2488
      %v2521 = vpack.c.b16 %v2491, %v2490
      %v2522 = vpack.c.b16 %v2493, %v2492
      %v2523 = vpack.c.b16 %v2495, %v2494
      %v2524 = vpack.c.b16 %v2497, %v2496
      %v2525 = vpack.c.b16 %v2499, %v2498
      %v2526 = vpack.c.b16 %v2501, %v2500
      %v2527 = vpack.c.b16 %v2503, %v2502
      %v2528 = vpack.c.b16 %v2505, %v2504
      %v2529 = vpack.c.b16 %v2507, %v2506
      %v2530 = vpack.c.b16 %v2509, %v2508
      %v2531 = vpack.c.b16 %v2511, %v2510
      %v2532 = vpack.c.b16 %v2513, %v2512
      %v2533 = vpack.c.b16 %v2515, %v2514
      %v2534 = vpack.c.b16 %v2517, %v2516
      %v2535 = vpack.c.b16 %v2519, %v2518
      %v2537 = vsel %vm732, %v2520, 0
      %v2540 = vsel %vm732, %v2521, 0
      %v2543 = vsel %vm732, %v2522, 0
      %v2546 = vsel %vm732, %v2523, 0
      %v2549 = vsel %vm732, %v2524, 0
      %v2552 = vsel %vm732, %v2525, 0
      %v2555 = vsel %vm732, %v2526, 0
      %v2558 = vsel %vm732, %v2527, 0
      %v2561 = vsel %vm732, %v2528, 0
      %v2564 = vsel %vm732, %v2529, 0
      %v2567 = vsel %vm732, %v2530, 0
      %v2570 = vsel %vm732, %v2531, 0
      %v2573 = vsel %vm732, %v2532, 0
      %v2576 = vsel %vm732, %v2533, 0
      %v2579 = vsel %vm732, %v2534, 0
      %v2582 = vsel %vm732, %v2535, 0
      %v2585 = vsel %vm781, %v2487, 0
      %2587 = vmatprep.subr.bf16.mxu0 0
      %2588 = vmatpush1.bf16.msra.mxu0 %v2585
      %2589 = vmatprep.subr.bf16.mxu0 0
      %2590 = vmatpush1.bf16.msra.mxu0 0
      %2591 = vmatprep.subr.bf16.mxu0 0
      %2592 = vmatpush1.bf16.msra.mxu0 0
      %2593 = vmatprep.subr.bf16.mxu0 0
      %2594 = vmatpush1.bf16.msra.mxu0 0
      %2595 = vmatprep.subr.bf16.mxu0 0
      %2596 = vmatpush1.bf16.msra.mxu0 0
      %2597 = vmatprep.subr.bf16.mxu0 0
      %2598 = vmatpush1.bf16.msra.mxu0 0
      %2599 = vmatprep.subr.bf16.mxu0 0
      %2600 = vmatpush1.bf16.msra.mxu0 0
      %2601 = vmatprep.subr.bf16.mxu0 0
      %2602 = vmatpush1.bf16.msra.mxu0 0
      %2603 = vmatprep.subr.bf16.mxu0 0
      %2604 = vmatpush1.bf16.msra.mxu0 0
      %2605 = vmatprep.subr.bf16.mxu0 0
      %2606 = vmatpush1.bf16.msra.mxu0 0
      %2607 = vmatprep.subr.bf16.mxu0 0
      %2608 = vmatpush1.bf16.msra.mxu0 0
      %2609 = vmatprep.subr.bf16.mxu0 0
      %2610 = vmatpush1.bf16.msra.mxu0 0
      %2611 = vmatprep.subr.bf16.mxu0 0
      %2612 = vmatpush1.bf16.msra.mxu0 0
      %2613 = vmatprep.subr.bf16.mxu0 0
      %2614 = vmatpush1.bf16.msra.mxu0 0
      %2615 = vmatprep.subr.bf16.mxu0 0
      %2616 = vmatpush1.bf16.msra.mxu0 0
      %2617 = vmatprep.subr.bf16.mxu0 0
      %2618 = vmatpush1.bf16.msra.mxu0 0
      %2619 = vmatprep.mubr.bf16.mxu0 0
      %2620 = vmatmul.mubr.bf16.gmra.mrb[0].mxu0 %v2537
      %v2621 = vpop.f32.mrb[0].mxu0
      %v2622 = vadd.f32 0.0, %v2621
      %v2623 = vpop.f32.mrb[0].mxu0
      %v2624 = vpop.f32.mrb[0].mxu0
      %v2625 = vadd.f32 0.0, %v2624
      %v2626 = vpop.f32.mrb[0].mxu0
      %2627 = vmatprep.mubr.bf16.mxu0 0
      %2628 = vmatmul.mubr.bf16.gmra.mrb[0].mxu0 %v2540
      %v2629 = vpop.f32.mrb[0].mxu0
      %v2630 = vadd.f32 0.0, %v2629
      %v2631 = vpop.f32.mrb[0].mxu0
      %v2632 = vpop.f32.mrb[0].mxu0
      %v2633 = vadd.f32 0.0, %v2632
      %v2634 = vpop.f32.mrb[0].mxu0
      %2635 = vmatprep.mubr.bf16.mxu0 0
      %2636 = vmatmul.mubr.bf16.gmra.mrb[0].mxu0 %v2543
      %v2637 = vpop.f32.mrb[0].mxu0
      %v2638 = vadd.f32 0.0, %v2637
      %v2639 = vpop.f32.mrb[0].mxu0
      %v2640 = vpop.f32.mrb[0].mxu0
      %v2641 = vadd.f32 0.0, %v2640
      %v2642 = vpop.f32.mrb[0].mxu0
      %2643 = vmatprep.mubr.bf16.mxu0 0
      %2644 = vmatmul.mubr.bf16.gmra.mrb[0].mxu0 %v2546
      %v2645 = vpop.f32.mrb[0].mxu0
      %v2646 = vadd.f32 0.0, %v2645
      %v2647 = vpop.f32.mrb[0].mxu0
      %v2648 = vpop.f32.mrb[0].mxu0
      %v2649 = vadd.f32 0.0, %v2648
      %v2650 = vpop.f32.mrb[0].mxu0
      %2651 = vmatprep.mubr.bf16.mxu0 0
      %2652 = vmatmul.mubr.bf16.gmra.mrb[0].mxu0 %v2549
      %v2653 = vpop.f32.mrb[0].mxu0
      %v2654 = vadd.f32 0.0, %v2653
      %v2655 = vpop.f32.mrb[0].mxu0
      %v2656 = vpop.f32.mrb[0].mxu0
      %v2657 = vadd.f32 0.0, %v2656
      %v2658 = vpop.f32.mrb[0].mxu0
      %2659 = vmatprep.mubr.bf16.mxu0 0
      %2660 = vmatmul.mubr.bf16.gmra.mrb[0].mxu0 %v2552
      %v2661 = vpop.f32.mrb[0].mxu0
      %v2662 = vadd.f32 0.0, %v2661
      %v2663 = vpop.f32.mrb[0].mxu0
      %v2664 = vpop.f32.mrb[0].mxu0
      %v2665 = vadd.f32 0.0, %v2664
      %v2666 = vpop.f32.mrb[0].mxu0
      %2667 = vmatprep.mubr.bf16.mxu0 0
      %2668 = vmatmul.mubr.bf16.gmra.mrb[0].mxu0 %v2555
      %v2669 = vpop.f32.mrb[0].mxu0
      %v2670 = vadd.f32 0.0, %v2669
      %v2671 = vpop.f32.mrb[0].mxu0
      %v2672 = vpop.f32.mrb[0].mxu0
      %v2673 = vadd.f32 0.0, %v2672
      %v2674 = vpop.f32.mrb[0].mxu0
      %2675 = vmatprep.mubr.bf16.mxu0 0
      %2676 = vmatmul.mubr.bf16.gmra.mrb[0].mxu0 %v2558
      %v2677 = vpop.f32.mrb[0].mxu0
      %v2678 = vadd.f32 0.0, %v2677
      %v2679 = vpop.f32.mrb[0].mxu0
      %v2680 = vpop.f32.mrb[0].mxu0
      %v2681 = vadd.f32 0.0, %v2680
      %v2682 = vpop.f32.mrb[0].mxu0
      %2683 = vmatprep.mubr.bf16.mxu0 0
      %2684 = vmatmul.mubr.bf16.gmra.mrb[0].mxu0 %v2561
      %v2685 = vpop.f32.mrb[0].mxu0
      %v2686 = vadd.f32 0.0, %v2685
      %v2687 = vpop.f32.mrb[0].mxu0
      %v2688 = vpop.f32.mrb[0].mxu0
      %v2689 = vadd.f32 0.0, %v2688
      %v2690 = vpop.f32.mrb[0].mxu0
      %2691 = vmatprep.mubr.bf16.mxu0 0
      %2692 = vmatmul.mubr.bf16.gmra.mrb[0].mxu0 %v2564
      %v2693 = vpop.f32.mrb[0].mxu0
      %v2694 = vadd.f32 0.0, %v2693
      %v2695 = vpop.f32.mrb[0].mxu0
      %v2696 = vpop.f32.mrb[0].mxu0
      %v2697 = vadd.f32 0.0, %v2696
      %v2698 = vpop.f32.mrb[0].mxu0
      %2699 = vmatprep.mubr.bf16.mxu0 0
      %2700 = vmatmul.mubr.bf16.gmra.mrb[0].mxu0 %v2567
      %v2701 = vpop.f32.mrb[0].mxu0
      %v2702 = vadd.f32 0.0, %v2701
      %v2703 = vpop.f32.mrb[0].mxu0
      %v2704 = vpop.f32.mrb[0].mxu0
      %v2705 = vadd.f32 0.0, %v2704
      %v2706 = vpop.f32.mrb[0].mxu0
      %2707 = vmatprep.mubr.bf16.mxu0 0
      %2708 = vmatmul.mubr.bf16.gmra.mrb[0].mxu0 %v2570
      %v2709 = vpop.f32.mrb[0].mxu0
      %v2710 = vadd.f32 0.0, %v2709
      %v2711 = vpop.f32.mrb[0].mxu0
      %v2712 = vpop.f32.mrb[0].mxu0
      %v2713 = vadd.f32 0.0, %v2712
      %v2714 = vpop.f32.mrb[0].mxu0
      %2715 = vmatprep.mubr.bf16.mxu0 0
      %2716 = vmatmul.mubr.bf16.gmra.mrb[0].mxu0 %v2573
      %v2717 = vpop.f32.mrb[0].mxu0
      %v2718 = vadd.f32 0.0, %v2717
      %v2719 = vpop.f32.mrb[0].mxu0
      %v2720 = vpop.f32.mrb[0].mxu0
      %v2721 = vadd.f32 0.0, %v2720
      %v2722 = vpop.f32.mrb[0].mxu0
      %2723 = vmatprep.mubr.bf16.mxu0 0
      %2724 = vmatmul.mubr.bf16.gmra.mrb[0].mxu0 %v2576
      %v2725 = vpop.f32.mrb[0].mxu0
      %v2726 = vadd.f32 0.0, %v2725
      %v2727 = vpop.f32.mrb[0].mxu0
      %v2728 = vpop.f32.mrb[0].mxu0
      %v2729 = vadd.f32 0.0, %v2728
      %v2730 = vpop.f32.mrb[0].mxu0
      %2731 = vmatprep.mubr.bf16.mxu0 0
      %2732 = vmatmul.mubr.bf16.gmra.mrb[0].mxu0 %v2579
      %v2733 = vpop.f32.mrb[0].mxu0
      %v2734 = vadd.f32 0.0, %v2733
      %v2735 = vpop.f32.mrb[0].mxu0
      %v2736 = vpop.f32.mrb[0].mxu0
      %v2737 = vadd.f32 0.0, %v2736
      %v2738 = vpop.f32.mrb[0].mxu0
      %2739 = vmatprep.mubr.bf16.mxu0 0
      %2740 = vmatmul.mubr.bf16.gmra.mrb[0].mxu0 %v2582
      %v2741 = vpop.f32.mrb[0].mxu0
      %v2742 = vadd.f32 0.0, %v2741
      %v2743 = vpop.f32.mrb[0].mxu0
      %v2744 = vpop.f32.mrb[0].mxu0
      %v2745 = vadd.f32 0.0, %v2744
      %v2746 = vpop.f32.mrb[0].mxu0
      %2747 = vdwg.mxu0
      %v2748 = vadd.f32 %v2022, %v2622
      %v2749 = vadd.f32 %v2023, %v2625
      %v2750 = vadd.f32 %v2024, %v2630
      %v2751 = vadd.f32 %v2025, %v2633
      %v2752 = vadd.f32 %v2026, %v2638
      %v2753 = vadd.f32 %v2027, %v2641
      %v2754 = vadd.f32 %v2028, %v2646
      %v2755 = vadd.f32 %v2029, %v2649
      %v2756 = vadd.f32 %v2030, %v2654
      %v2757 = vadd.f32 %v2031, %v2657
      %v2758 = vadd.f32 %v2032, %v2662
      %v2759 = vadd.f32 %v2033, %v2665
      %v2760 = vadd.f32 %v2034, %v2670
      %v2761 = vadd.f32 %v2035, %v2673
      %v2762 = vadd.f32 %v2036, %v2678
      %v2763 = vadd.f32 %v2037, %v2681
      %v2764 = vadd.f32 %v2038, %v2686
      %v2765 = vadd.f32 %v2039, %v2689
      %v2766 = vadd.f32 %v2040, %v2694
      %v2767 = vadd.f32 %v2041, %v2697
      %v2768 = vadd.f32 %v2042, %v2702
      %v2769 = vadd.f32 %v2043, %v2705
      %v2770 = vadd.f32 %v2044, %v2710
      %v2771 = vadd.f32 %v2045, %v2713
      %v2772 = vadd.f32 %v2046, %v2718
      %v2773 = vadd.f32 %v2047, %v2721
      %v2774 = vadd.f32 %v2048, %v2726
      %v2775 = vadd.f32 %v2049, %v2729
      %v2776 = vadd.f32 %v2050, %v2734
      %v2777 = vadd.f32 %v2051, %v2737
      %v2778 = vadd.f32 %v2052, %v2742
      %v2779 = vadd.f32 %v2053, %v2745
      %v2780 = vld [vmem:[%s1695] sm:$0xe]
      %v2781 = vld [vmem:[%s1695 + $0xc] sm:$0xe]
      %v2782 = vld [vmem:[%s1695 + $0x18] sm:$0xe]
      %v2783 = vld [vmem:[%s1695 + $0x24] sm:$0xe]
      %v2784 = vld [vmem:[%s1695 + $0x30] sm:$0xe]
      %v2785 = vld [vmem:[%s1695 + $0x3c] sm:$0xe]
      %v2786 = vld [vmem:[%s1695 + $0x48] sm:$0xe]
      %v2787 = vld [vmem:[%s1695 + $0x54] sm:$0xe]
      %v2788 = vld [vmem:[%s1695 + $0x60] sm:$0xe]
      %v2789 = vld [vmem:[%s1695 + $0x6c] sm:$0xe]
      %v2790 = vld [vmem:[%s1695 + $0x78] sm:$0xe]
      %v2791 = vld [vmem:[%s1695 + $0x84] sm:$0xe]
      %v2792 = vld [vmem:[%s1695 + $0x90] sm:$0xe]
      %v2793 = vld [vmem:[%s1695 + $0x9c] sm:$0xe]
      %v2794 = vld [vmem:[%s1695 + $0xa8] sm:$0xe]
      %v2795 = vld [vmem:[%s1695 + $0xb4] sm:$0xe]
      %v2844 = vrot.slane %v2780, 5
      %v2845 = vrot.slane %v2844, 4
      %v2846 = vrot.slane %v2055, 5
      %v2847 = vsel %vm1288, %v2845, %v2846
      %v2848 = vrot.slane %v2846, 4
      %v2849 = vrot.slane %v2056, 5
      %v2850 = vsel %vm1288, %v2848, %v2849
      %v2851 = vrot.slane %v2781, 5
      %v2852 = vrot.slane %v2851, 4
      %v2853 = vrot.slane %v2058, 5
      %v2854 = vsel %vm1288, %v2852, %v2853
      %v2855 = vrot.slane %v2853, 4
      %v2856 = vrot.slane %v2059, 5
      %v2857 = vsel %vm1288, %v2855, %v2856
      %v2858 = vrot.slane %v2782, 5
      %v2859 = vrot.slane %v2858, 4
      %v2860 = vrot.slane %v2061, 5
      %v2861 = vsel %vm1288, %v2859, %v2860
      %v2862 = vrot.slane %v2860, 4
      %v2863 = vrot.slane %v2062, 5
      %v2864 = vsel %vm1288, %v2862, %v2863
      %v2865 = vrot.slane %v2783, 5
      %v2866 = vrot.slane %v2865, 4
      %v2867 = vrot.slane %v2064, 5
      %v2868 = vsel %vm1288, %v2866, %v2867
      %v2869 = vrot.slane %v2867, 4
      %v2870 = vrot.slane %v2065, 5
      %v2871 = vsel %vm1288, %v2869, %v2870
      %v2872 = vrot.slane %v2784, 5
      %v2873 = vrot.slane %v2872, 4
      %v2874 = vrot.slane %v2067, 5
      %v2875 = vsel %vm1288, %v2873, %v2874
      %v2876 = vrot.slane %v2874, 4
      %v2877 = vrot.slane %v2068, 5
      %v2878 = vsel %vm1288, %v2876, %v2877
      %v2879 = vrot.slane %v2785, 5
      %v2880 = vrot.slane %v2879, 4
      %v2881 = vrot.slane %v2070, 5
      %v2882 = vsel %vm1288, %v2880, %v2881
      %v2883 = vrot.slane %v2881, 4
      %v2884 = vrot.slane %v2071, 5
      %v2885 = vsel %vm1288, %v2883, %v2884
      %v2886 = vrot.slane %v2786, 5
      %v2887 = vrot.slane %v2886, 4
      %v2888 = vrot.slane %v2073, 5
      %v2889 = vsel %vm1288, %v2887, %v2888
      %v2890 = vrot.slane %v2888, 4
      %v2891 = vrot.slane %v2074, 5
      %v2892 = vsel %vm1288, %v2890, %v2891
      %v2893 = vrot.slane %v2787, 5
      %v2894 = vrot.slane %v2893, 4
      %v2895 = vrot.slane %v2076, 5
      %v2896 = vsel %vm1288, %v2894, %v2895
      %v2897 = vrot.slane %v2895, 4
      %v2898 = vrot.slane %v2077, 5
      %v2899 = vsel %vm1288, %v2897, %v2898
      %v2900 = vrot.slane %v2788, 5
      %v2901 = vrot.slane %v2900, 4
      %v2902 = vrot.slane %v2079, 5
      %v2903 = vsel %vm1288, %v2901, %v2902
      %v2904 = vrot.slane %v2902, 4
      %v2905 = vrot.slane %v2080, 5
      %v2906 = vsel %vm1288, %v2904, %v2905
      %v2907 = vrot.slane %v2789, 5
      %v2908 = vrot.slane %v2907, 4
      %v2909 = vrot.slane %v2082, 5
      %v2910 = vsel %vm1288, %v2908, %v2909
      %v2911 = vrot.slane %v2909, 4
      %v2912 = vrot.slane %v2083, 5
      %v2913 = vsel %vm1288, %v2911, %v2912
      %v2914 = vrot.slane %v2790, 5
      %v2915 = vrot.slane %v2914, 4
      %v2916 = vrot.slane %v2085, 5
      %v2917 = vsel %vm1288, %v2915, %v2916
      %v2918 = vrot.slane %v2916, 4
      %v2919 = vrot.slane %v2086, 5
      %v2920 = vsel %vm1288, %v2918, %v2919
      %v2921 = vrot.slane %v2791, 5
      %v2922 = vrot.slane %v2921, 4
      %v2923 = vrot.slane %v2088, 5
      %v2924 = vsel %vm1288, %v2922, %v2923
      %v2925 = vrot.slane %v2923, 4
      %v2926 = vrot.slane %v2089, 5
      %v2927 = vsel %vm1288, %v2925, %v2926
      %v2928 = vrot.slane %v2792, 5
      %v2929 = vrot.slane %v2928, 4
      %v2930 = vrot.slane %v2091, 5
      %v2931 = vsel %vm1288, %v2929, %v2930
      %v2932 = vrot.slane %v2930, 4
      %v2933 = vrot.slane %v2092, 5
      %v2934 = vsel %vm1288, %v2932, %v2933
      %v2935 = vrot.slane %v2793, 5
      %v2936 = vrot.slane %v2935, 4
      %v2937 = vrot.slane %v2094, 5
      %v2938 = vsel %vm1288, %v2936, %v2937
      %v2939 = vrot.slane %v2937, 4
      %v2940 = vrot.slane %v2095, 5
      %v2941 = vsel %vm1288, %v2939, %v2940
      %v2942 = vrot.slane %v2794, 5
      %v2943 = vrot.slane %v2942, 4
      %v2944 = vrot.slane %v2097, 5
      %v2945 = vsel %vm1288, %v2943, %v2944
      %v2946 = vrot.slane %v2944, 4
      %v2947 = vrot.slane %v2098, 5
      %v2948 = vsel %vm1288, %v2946, %v2947
      %v2949 = vrot.slane %v2795, 5
      %v2950 = vrot.slane %v2949, 4
      %v2951 = vrot.slane %v2100, 5
      %v2952 = vsel %vm1288, %v2950, %v2951
      %v2953 = vrot.slane %v2951, 4
      %v2954 = vrot.slane %v2101, 5
      %v2955 = vsel %vm1288, %v2953, %v2954
      %s2956 = scalar_lea.vmem %s1, 10
      %v2957 = vld [vmem:[%s2956] sm:$0x3]
      %v2958 = vunpack.c.l.b16 %v2847
      %v2959 = vunpack.c.l.b16 %v2850
      %v2960 = vunpack.c.l.b16 %v2854
      %v2961 = vunpack.c.l.b16 %v2857
      %v2962 = vunpack.c.l.b16 %v2861
      %v2963 = vunpack.c.l.b16 %v2864
      %v2964 = vunpack.c.l.b16 %v2868
      %v2965 = vunpack.c.l.b16 %v2871
      %v2966 = vunpack.c.l.b16 %v2875
      %v2967 = vunpack.c.l.b16 %v2878
      %v2968 = vunpack.c.l.b16 %v2882
      %v2969 = vunpack.c.l.b16 %v2885
      %v2970 = vunpack.c.l.b16 %v2889
      %v2971 = vunpack.c.l.b16 %v2892
      %v2972 = vunpack.c.l.b16 %v2896
      %v2973 = vunpack.c.l.b16 %v2899
      %v2974 = vunpack.c.l.b16 %v2903
      %v2975 = vunpack.c.l.b16 %v2906
      %v2976 = vunpack.c.l.b16 %v2910
      %v2977 = vunpack.c.l.b16 %v2913
      %v2978 = vunpack.c.l.b16 %v2917
      %v2979 = vunpack.c.l.b16 %v2920
      %v2980 = vunpack.c.l.b16 %v2924
      %v2981 = vunpack.c.l.b16 %v2927
      %v2982 = vunpack.c.l.b16 %v2931
      %v2983 = vunpack.c.l.b16 %v2934
      %v2984 = vunpack.c.l.b16 %v2938
      %v2985 = vunpack.c.l.b16 %v2941
      %v2986 = vunpack.c.l.b16 %v2945
      %v2987 = vunpack.c.l.b16 %v2948
      %v2988 = vunpack.c.l.b16 %v2952
      %v2989 = vunpack.c.l.b16 %v2955
      %v2990 = vpack.c.b16 %v2959, %v2958
      %v2991 = vpack.c.b16 %v2961, %v2960
      %v2992 = vpack.c.b16 %v2963, %v2962
      %v2993 = vpack.c.b16 %v2965, %v2964
      %v2994 = vpack.c.b16 %v2967, %v2966
      %v2995 = vpack.c.b16 %v2969, %v2968
      %v2996 = vpack.c.b16 %v2971, %v2970
      %v2997 = vpack.c.b16 %v2973, %v2972
      %v2998 = vpack.c.b16 %v2975, %v2974
      %v2999 = vpack.c.b16 %v2977, %v2976
      %v3000 = vpack.c.b16 %v2979, %v2978
      %v3001 = vpack.c.b16 %v2981, %v2980
      %v3002 = vpack.c.b16 %v2983, %v2982
      %v3003 = vpack.c.b16 %v2985, %v2984
      %v3004 = vpack.c.b16 %v2987, %v2986
      %v3005 = vpack.c.b16 %v2989, %v2988
      %v3007 = vsel %vm732, %v2990, 0
      %v3010 = vsel %vm732, %v2991, 0
      %v3013 = vsel %vm732, %v2992, 0
      %v3016 = vsel %vm732, %v2993, 0
      %v3019 = vsel %vm732, %v2994, 0
      %v3022 = vsel %vm732, %v2995, 0
      %v3025 = vsel %vm732, %v2996, 0
      %v3028 = vsel %vm732, %v2997, 0
      %v3031 = vsel %vm732, %v2998, 0
      %v3034 = vsel %vm732, %v2999, 0
      %v3037 = vsel %vm732, %v3000, 0
      %v3040 = vsel %vm732, %v3001, 0
      %v3043 = vsel %vm732, %v3002, 0
      %v3046 = vsel %vm732, %v3003, 0
      %v3049 = vsel %vm732, %v3004, 0
      %v3052 = vsel %vm732, %v3005, 0
      %v3055 = vsel %vm781, %v2957, 0
      %3057 = vmatprep.subr.bf16.mxu0 0
      %3058 = vmatpush1.bf16.msra.mxu0 %v3055
      %3059 = vmatprep.subr.bf16.mxu0 0
      %3060 = vmatpush1.bf16.msra.mxu0 0
      %3061 = vmatprep.subr.bf16.mxu0 0
      %3062 = vmatpush1.bf16.msra.mxu0 0
      %3063 = vmatprep.subr.bf16.mxu0 0
      %3064 = vmatpush1.bf16.msra.mxu0 0
      %3065 = vmatprep.subr.bf16.mxu0 0
      %3066 = vmatpush1.bf16.msra.mxu0 0
      %3067 = vmatprep.subr.bf16.mxu0 0
      %3068 = vmatpush1.bf16.msra.mxu0 0
      %3069 = vmatprep.subr.bf16.mxu0 0
      %3070 = vmatpush1.bf16.msra.mxu0 0
      %3071 = vmatprep.subr.bf16.mxu0 0
      %3072 = vmatpush1.bf16.msra.mxu0 0
      %3073 = vmatprep.subr.bf16.mxu0 0
      %3074 = vmatpush1.bf16.msra.mxu0 0
      %3075 = vmatprep.subr.bf16.mxu0 0
      %3076 = vmatpush1.bf16.msra.mxu0 0
      %3077 = vmatprep.subr.bf16.mxu0 0
      %3078 = vmatpush1.bf16.msra.mxu0 0
      %3079 = vmatprep.subr.bf16.mxu0 0
      %3080 = vmatpush1.bf16.msra.mxu0 0
      %3081 = vmatprep.subr.bf16.mxu0 0
      %3082 = vmatpush1.bf16.msra.mxu0 0
      %3083 = vmatprep.subr.bf16.mxu0 0
      %3084 = vmatpush1.bf16.msra.mxu0 0
      %3085 = vmatprep.subr.bf16.mxu0 0
      %3086 = vmatpush1.bf16.msra.mxu0 0
      %3087 = vmatprep.subr.bf16.mxu0 0
      %3088 = vmatpush1.bf16.msra.mxu0 0
      %3089 = vmatprep.mubr.bf16.mxu0 0
      %3090 = vmatmul.mubr.bf16.gmra.mrb[0].mxu0 %v3007
      %v3091 = vpop.f32.mrb[0].mxu0
      %v3092 = vadd.f32 0.0, %v3091
      %v3093 = vpop.f32.mrb[0].mxu0
      %v3094 = vpop.f32.mrb[0].mxu0
      %v3095 = vadd.f32 0.0, %v3094
      %v3096 = vpop.f32.mrb[0].mxu0
      %3097 = vmatprep.mubr.bf16.mxu0 0
      %3098 = vmatmul.mubr.bf16.gmra.mrb[0].mxu0 %v3010
      %v3099 = vpop.f32.mrb[0].mxu0
      %v3100 = vadd.f32 0.0, %v3099
      %v3101 = vpop.f32.mrb[0].mxu0
      %v3102 = vpop.f32.mrb[0].mxu0
      %v3103 = vadd.f32 0.0, %v3102
      %v3104 = vpop.f32.mrb[0].mxu0
      %3105 = vmatprep.mubr.bf16.mxu0 0
      %3106 = vmatmul.mubr.bf16.gmra.mrb[0].mxu0 %v3013
      %v3107 = vpop.f32.mrb[0].mxu0
      %v3108 = vadd.f32 0.0, %v3107
      %v3109 = vpop.f32.mrb[0].mxu0
      %v3110 = vpop.f32.mrb[0].mxu0
      %v3111 = vadd.f32 0.0, %v3110
      %v3112 = vpop.f32.mrb[0].mxu0
      %3113 = vmatprep.mubr.bf16.mxu0 0
      %3114 = vmatmul.mubr.bf16.gmra.mrb[0].mxu0 %v3016
      %v3115 = vpop.f32.mrb[0].mxu0
      %v3116 = vadd.f32 0.0, %v3115
      %v3117 = vpop.f32.mrb[0].mxu0
      %v3118 = vpop.f32.mrb[0].mxu0
      %v3119 = vadd.f32 0.0, %v3118
      %v3120 = vpop.f32.mrb[0].mxu0
      %3121 = vmatprep.mubr.bf16.mxu0 0
      %3122 = vmatmul.mubr.bf16.gmra.mrb[0].mxu0 %v3019
      %v3123 = vpop.f32.mrb[0].mxu0
      %v3124 = vadd.f32 0.0, %v3123
      %v3125 = vpop.f32.mrb[0].mxu0
      %v3126 = vpop.f32.mrb[0].mxu0
      %v3127 = vadd.f32 0.0, %v3126
      %v3128 = vpop.f32.mrb[0].mxu0
      %3129 = vmatprep.mubr.bf16.mxu0 0
      %3130 = vmatmul.mubr.bf16.gmra.mrb[0].mxu0 %v3022
      %v3131 = vpop.f32.mrb[0].mxu0
      %v3132 = vadd.f32 0.0, %v3131
      %v3133 = vpop.f32.mrb[0].mxu0
      %v3134 = vpop.f32.mrb[0].mxu0
      %v3135 = vadd.f32 0.0, %v3134
      %v3136 = vpop.f32.mrb[0].mxu0
      %3137 = vmatprep.mubr.bf16.mxu0 0
      %3138 = vmatmul.mubr.bf16.gmra.mrb[0].mxu0 %v3025
      %v3139 = vpop.f32.mrb[0].mxu0
      %v3140 = vadd.f32 0.0, %v3139
      %v3141 = vpop.f32.mrb[0].mxu0
      %v3142 = vpop.f32.mrb[0].mxu0
      %v3143 = vadd.f32 0.0, %v3142
      %v3144 = vpop.f32.mrb[0].mxu0
      %3145 = vmatprep.mubr.bf16.mxu0 0
      %3146 = vmatmul.mubr.bf16.gmra.mrb[0].mxu0 %v3028
      %v3147 = vpop.f32.mrb[0].mxu0
      %v3148 = vadd.f32 0.0, %v3147
      %v3149 = vpop.f32.mrb[0].mxu0
      %v3150 = vpop.f32.mrb[0].mxu0
      %v3151 = vadd.f32 0.0, %v3150
      %v3152 = vpop.f32.mrb[0].mxu0
      %3153 = vmatprep.mubr.bf16.mxu0 0
      %3154 = vmatmul.mubr.bf16.gmra.mrb[0].mxu0 %v3031
      %v3155 = vpop.f32.mrb[0].mxu0
      %v3156 = vadd.f32 0.0, %v3155
      %v3157 = vpop.f32.mrb[0].mxu0
      %v3158 = vpop.f32.mrb[0].mxu0
      %v3159 = vadd.f32 0.0, %v3158
      %v3160 = vpop.f32.mrb[0].mxu0
      %3161 = vmatprep.mubr.bf16.mxu0 0
      %3162 = vmatmul.mubr.bf16.gmra.mrb[0].mxu0 %v3034
      %v3163 = vpop.f32.mrb[0].mxu0
      %v3164 = vadd.f32 0.0, %v3163
      %v3165 = vpop.f32.mrb[0].mxu0
      %v3166 = vpop.f32.mrb[0].mxu0
      %v3167 = vadd.f32 0.0, %v3166
      %v3168 = vpop.f32.mrb[0].mxu0
      %3169 = vmatprep.mubr.bf16.mxu0 0
      %3170 = vmatmul.mubr.bf16.gmra.mrb[0].mxu0 %v3037
      %v3171 = vpop.f32.mrb[0].mxu0
      %v3172 = vadd.f32 0.0, %v3171
      %v3173 = vpop.f32.mrb[0].mxu0
      %v3174 = vpop.f32.mrb[0].mxu0
      %v3175 = vadd.f32 0.0, %v3174
      %v3176 = vpop.f32.mrb[0].mxu0
      %3177 = vmatprep.mubr.bf16.mxu0 0
      %3178 = vmatmul.mubr.bf16.gmra.mrb[0].mxu0 %v3040
      %v3179 = vpop.f32.mrb[0].mxu0
      %v3180 = vadd.f32 0.0, %v3179
      %v3181 = vpop.f32.mrb[0].mxu0
      %v3182 = vpop.f32.mrb[0].mxu0
      %v3183 = vadd.f32 0.0, %v3182
      %v3184 = vpop.f32.mrb[0].mxu0
      %3185 = vmatprep.mubr.bf16.mxu0 0
      %3186 = vmatmul.mubr.bf16.gmra.mrb[0].mxu0 %v3043
      %v3187 = vpop.f32.mrb[0].mxu0
      %v3188 = vadd.f32 0.0, %v3187
      %v3189 = vpop.f32.mrb[0].mxu0
      %v3190 = vpop.f32.mrb[0].mxu0
      %v3191 = vadd.f32 0.0, %v3190
      %v3192 = vpop.f32.mrb[0].mxu0
      %3193 = vmatprep.mubr.bf16.mxu0 0
      %3194 = vmatmul.mubr.bf16.gmra.mrb[0].mxu0 %v3046
      %v3195 = vpop.f32.mrb[0].mxu0
      %v3196 = vadd.f32 0.0, %v3195
      %v3197 = vpop.f32.mrb[0].mxu0
      %v3198 = vpop.f32.mrb[0].mxu0
      %v3199 = vadd.f32 0.0, %v3198
      %v3200 = vpop.f32.mrb[0].mxu0
      %3201 = vmatprep.mubr.bf16.mxu0 0
      %3202 = vmatmul.mubr.bf16.gmra.mrb[0].mxu0 %v3049
      %v3203 = vpop.f32.mrb[0].mxu0
      %v3204 = vadd.f32 0.0, %v3203
      %v3205 = vpop.f32.mrb[0].mxu0
      %v3206 = vpop.f32.mrb[0].mxu0
      %v3207 = vadd.f32 0.0, %v3206
      %v3208 = vpop.f32.mrb[0].mxu0
      %3209 = vmatprep.mubr.bf16.mxu0 0
      %3210 = vmatmul.mubr.bf16.gmra.mrb[0].mxu0 %v3052
      %v3211 = vpop.f32.mrb[0].mxu0
      %v3212 = vadd.f32 0.0, %v3211
      %v3213 = vpop.f32.mrb[0].mxu0
      %v3214 = vpop.f32.mrb[0].mxu0
      %v3215 = vadd.f32 0.0, %v3214
      %v3216 = vpop.f32.mrb[0].mxu0
      %3217 = vdwg.mxu0
      %v3218 = vadd.f32 %v2748, %v3092
      %v3219 = vadd.f32 %v2749, %v3095
      %v3220 = vadd.f32 %v2750, %v3100
      %v3221 = vadd.f32 %v2751, %v3103
      %v3222 = vadd.f32 %v2752, %v3108
      %v3223 = vadd.f32 %v2753, %v3111
      %v3224 = vadd.f32 %v2754, %v3116
      %v3225 = vadd.f32 %v2755, %v3119
      %v3226 = vadd.f32 %v2756, %v3124
      %v3227 = vadd.f32 %v2757, %v3127
      %v3228 = vadd.f32 %v2758, %v3132
      %v3229 = vadd.f32 %v2759, %v3135
      %v3230 = vadd.f32 %v2760, %v3140
      %v3231 = vadd.f32 %v2761, %v3143
      %v3232 = vadd.f32 %v2762, %v3148
      %v3233 = vadd.f32 %v2763, %v3151
      %v3234 = vadd.f32 %v2764, %v3156
      %v3235 = vadd.f32 %v2765, %v3159
      %v3236 = vadd.f32 %v2766, %v3164
      %v3237 = vadd.f32 %v2767, %v3167
      %v3238 = vadd.f32 %v2768, %v3172
      %v3239 = vadd.f32 %v2769, %v3175
      %v3240 = vadd.f32 %v2770, %v3180
      %v3241 = vadd.f32 %v2771, %v3183
      %v3242 = vadd.f32 %v2772, %v3188
      %v3243 = vadd.f32 %v2773, %v3191
      %v3244 = vadd.f32 %v2774, %v3196
      %v3245 = vadd.f32 %v2775, %v3199
      %v3246 = vadd.f32 %v2776, %v3204
      %v3247 = vadd.f32 %v2777, %v3207
      %v3248 = vadd.f32 %v2778, %v3212
      %v3249 = vadd.f32 %v2779, %v3215
      %s3250 = scalar_lea.vmem %s234, 24
      %v3251 = vld [vmem:[%s3250] sm:$0xf]
      %v3252 = vld [vmem:[%s3250 + $0x4] sm:$0xf]
      %v3253 = vld [vmem:[%s3250 + $0xc] sm:$0xf]
      %v3254 = vld [vmem:[%s3250 + $0x10] sm:$0xf]
      %v3255 = vld [vmem:[%s3250 + $0x18] sm:$0xf]
      %v3256 = vld [vmem:[%s3250 + $0x1c] sm:$0xf]
      %v3257 = vld [vmem:[%s3250 + $0x24] sm:$0xf]
      %v3258 = vld [vmem:[%s3250 + $0x28] sm:$0xf]
      %v3259 = vld [vmem:[%s3250 + $0x30] sm:$0xf]
      %v3260 = vld [vmem:[%s3250 + $0x34] sm:$0xf]
      %v3261 = vld [vmem:[%s3250 + $0x3c] sm:$0xf]
      %v3262 = vld [vmem:[%s3250 + $0x40] sm:$0xf]
      %v3263 = vld [vmem:[%s3250 + $0x48] sm:$0xf]
      %v3264 = vld [vmem:[%s3250 + $0x4c] sm:$0xf]
      %v3265 = vld [vmem:[%s3250 + $0x54] sm:$0xf]
      %v3266 = vld [vmem:[%s3250 + $0x58] sm:$0xf]
      %v3267 = vld [vmem:[%s3250 + $0x60] sm:$0xf]
      %v3268 = vld [vmem:[%s3250 + $0x64] sm:$0xf]
      %v3269 = vld [vmem:[%s3250 + $0x6c] sm:$0xf]
      %v3270 = vld [vmem:[%s3250 + $0x70] sm:$0xf]
      %v3271 = vld [vmem:[%s3250 + $0x78] sm:$0xf]
      %v3272 = vld [vmem:[%s3250 + $0x7c] sm:$0xf]
      %v3273 = vld [vmem:[%s3250 + $0x84] sm:$0xf]
      %v3274 = vld [vmem:[%s3250 + $0x88] sm:$0xf]
      %v3275 = vld [vmem:[%s3250 + $0x90] sm:$0xf]
      %v3276 = vld [vmem:[%s3250 + $0x94] sm:$0xf]
      %v3277 = vld [vmem:[%s3250 + $0x9c] sm:$0xf]
      %v3278 = vld [vmem:[%s3250 + $0xa0] sm:$0xf]
      %v3279 = vld [vmem:[%s3250 + $0xa8] sm:$0xf]
      %v3280 = vld [vmem:[%s3250 + $0xac] sm:$0xf]
      %v3281 = vld [vmem:[%s3250 + $0xb4] sm:$0xf]
      %v3282 = vld [vmem:[%s3250 + $0xb8] sm:$0xf]
      %s3283 = scalar_lea.vmem %s1, 12
      %v3284 = vld [vmem:[%s3283] sm:$0x3]
      %v3317 = vunpack.c.l.b16 %v3251
      %v3318 = vunpack.c.l.b16 %v3252
      %v3319 = vunpack.c.l.b16 %v3253
      %v3320 = vunpack.c.l.b16 %v3254
      %v3321 = vunpack.c.l.b16 %v3255
      %v3322 = vunpack.c.l.b16 %v3256
      %v3323 = vunpack.c.l.b16 %v3257
      %v3324 = vunpack.c.l.b16 %v3258
      %v3325 = vunpack.c.l.b16 %v3259
      %v3326 = vunpack.c.l.b16 %v3260
      %v3327 = vunpack.c.l.b16 %v3261
      %v3328 = vunpack.c.l.b16 %v3262
      %v3329 = vunpack.c.l.b16 %v3263
      %v3330 = vunpack.c.l.b16 %v3264
      %v3331 = vunpack.c.l.b16 %v3265
      %v3332 = vunpack.c.l.b16 %v3266
      %v3333 = vunpack.c.l.b16 %v3267
      %v3334 = vunpack.c.l.b16 %v3268
      %v3335 = vunpack.c.l.b16 %v3269
      %v3336 = vunpack.c.l.b16 %v3270
      %v3337 = vunpack.c.l.b16 %v3271
      %v3338 = vunpack.c.l.b16 %v3272
      %v3339 = vunpack.c.l.b16 %v3273
      %v3340 = vunpack.c.l.b16 %v3274
      %v3341 = vunpack.c.l.b16 %v3275
      %v3342 = vunpack.c.l.b16 %v3276
      %v3343 = vunpack.c.l.b16 %v3277
      %v3344 = vunpack.c.l.b16 %v3278
      %v3345 = vunpack.c.l.b16 %v3279
      %v3346 = vunpack.c.l.b16 %v3280
      %v3347 = vunpack.c.l.b16 %v3281
      %v3348 = vunpack.c.l.b16 %v3282
      %v3349 = vpack.c.b16 %v3318, %v3317
      %v3350 = vpack.c.b16 %v3320, %v3319
      %v3351 = vpack.c.b16 %v3322, %v3321
      %v3352 = vpack.c.b16 %v3324, %v3323
      %v3353 = vpack.c.b16 %v3326, %v3325
      %v3354 = vpack.c.b16 %v3328, %v3327
      %v3355 = vpack.c.b16 %v3330, %v3329
      %v3356 = vpack.c.b16 %v3332, %v3331
      %v3357 = vpack.c.b16 %v3334, %v3333
      %v3358 = vpack.c.b16 %v3336, %v3335
      %v3359 = vpack.c.b16 %v3338, %v3337
      %v3360 = vpack.c.b16 %v3340, %v3339
      %v3361 = vpack.c.b16 %v3342, %v3341
      %v3362 = vpack.c.b16 %v3344, %v3343
      %v3363 = vpack.c.b16 %v3346, %v3345
      %v3364 = vpack.c.b16 %v3348, %v3347
      %v3366 = vsel %vm732, %v3349, 0
      %v3369 = vsel %vm732, %v3350, 0
      %v3372 = vsel %vm732, %v3351, 0
      %v3375 = vsel %vm732, %v3352, 0
      %v3378 = vsel %vm732, %v3353, 0
      %v3381 = vsel %vm732, %v3354, 0
      %v3384 = vsel %vm732, %v3355, 0
      %v3387 = vsel %vm732, %v3356, 0
      %v3390 = vsel %vm732, %v3357, 0
      %v3393 = vsel %vm732, %v3358, 0
      %v3396 = vsel %vm732, %v3359, 0
      %v3399 = vsel %vm732, %v3360, 0
      %v3402 = vsel %vm732, %v3361, 0
      %v3405 = vsel %vm732, %v3362, 0
      %v3408 = vsel %vm732, %v3363, 0
      %v3411 = vsel %vm732, %v3364, 0
      %v3414 = vsel %vm781, %v3284, 0
      %3416 = vmatprep.subr.bf16.mxu0 0
      %3417 = vmatpush1.bf16.msra.mxu0 %v3414
      %3418 = vmatprep.subr.bf16.mxu0 0
      %3419 = vmatpush1.bf16.msra.mxu0 0
      %3420 = vmatprep.subr.bf16.mxu0 0
      %3421 = vmatpush1.bf16.msra.mxu0 0
      %3422 = vmatprep.subr.bf16.mxu0 0
      %3423 = vmatpush1.bf16.msra.mxu0 0
      %3424 = vmatprep.subr.bf16.mxu0 0
      %3425 = vmatpush1.bf16.msra.mxu0 0
      %3426 = vmatprep.subr.bf16.mxu0 0
      %3427 = vmatpush1.bf16.msra.mxu0 0
      %3428 = vmatprep.subr.bf16.mxu0 0
      %3429 = vmatpush1.bf16.msra.mxu0 0
      %3430 = vmatprep.subr.bf16.mxu0 0
      %3431 = vmatpush1.bf16.msra.mxu0 0
      %3432 = vmatprep.subr.bf16.mxu0 0
      %3433 = vmatpush1.bf16.msra.mxu0 0
      %3434 = vmatprep.subr.bf16.mxu0 0
      %3435 = vmatpush1.bf16.msra.mxu0 0
      %3436 = vmatprep.subr.bf16.mxu0 0
      %3437 = vmatpush1.bf16.msra.mxu0 0
      %3438 = vmatprep.subr.bf16.mxu0 0
      %3439 = vmatpush1.bf16.msra.mxu0 0
      %3440 = vmatprep.subr.bf16.mxu0 0
      %3441 = vmatpush1.bf16.msra.mxu0 0
      %3442 = vmatprep.subr.bf16.mxu0 0
      %3443 = vmatpush1.bf16.msra.mxu0 0
      %3444 = vmatprep.subr.bf16.mxu0 0
      %3445 = vmatpush1.bf16.msra.mxu0 0
      %3446 = vmatprep.subr.bf16.mxu0 0
      %3447 = vmatpush1.bf16.msra.mxu0 0
      %3448 = vmatprep.mubr.bf16.mxu0 0
      %3449 = vmatmul.mubr.bf16.gmra.mrb[0].mxu0 %v3366
      %v3450 = vpop.f32.mrb[0].mxu0
      %v3451 = vadd.f32 0.0, %v3450
      %v3452 = vpop.f32.mrb[0].mxu0
      %v3453 = vpop.f32.mrb[0].mxu0
      %v3454 = vadd.f32 0.0, %v3453
      %v3455 = vpop.f32.mrb[0].mxu0
      %3456 = vmatprep.mubr.bf16.mxu0 0
      %3457 = vmatmul.mubr.bf16.gmra.mrb[0].mxu0 %v3369
      %v3458 = vpop.f32.mrb[0].mxu0
      %v3459 = vadd.f32 0.0, %v3458
      %v3460 = vpop.f32.mrb[0].mxu0
      %v3461 = vpop.f32.mrb[0].mxu0
      %v3462 = vadd.f32 0.0, %v3461
      %v3463 = vpop.f32.mrb[0].mxu0
      %3464 = vmatprep.mubr.bf16.mxu0 0
      %3465 = vmatmul.mubr.bf16.gmra.mrb[0].mxu0 %v3372
      %v3466 = vpop.f32.mrb[0].mxu0
      %v3467 = vadd.f32 0.0, %v3466
      %v3468 = vpop.f32.mrb[0].mxu0
      %v3469 = vpop.f32.mrb[0].mxu0
      %v3470 = vadd.f32 0.0, %v3469
      %v3471 = vpop.f32.mrb[0].mxu0
      %3472 = vmatprep.mubr.bf16.mxu0 0
      %3473 = vmatmul.mubr.bf16.gmra.mrb[0].mxu0 %v3375
      %v3474 = vpop.f32.mrb[0].mxu0
      %v3475 = vadd.f32 0.0, %v3474
      %v3476 = vpop.f32.mrb[0].mxu0
      %v3477 = vpop.f32.mrb[0].mxu0
      %v3478 = vadd.f32 0.0, %v3477
      %v3479 = vpop.f32.mrb[0].mxu0
      %3480 = vmatprep.mubr.bf16.mxu0 0
      %3481 = vmatmul.mubr.bf16.gmra.mrb[0].mxu0 %v3378
      %v3482 = vpop.f32.mrb[0].mxu0
      %v3483 = vadd.f32 0.0, %v3482
      %v3484 = vpop.f32.mrb[0].mxu0
      %v3485 = vpop.f32.mrb[0].mxu0
      %v3486 = vadd.f32 0.0, %v3485
      %v3487 = vpop.f32.mrb[0].mxu0
      %3488 = vmatprep.mubr.bf16.mxu0 0
      %3489 = vmatmul.mubr.bf16.gmra.mrb[0].mxu0 %v3381
      %v3490 = vpop.f32.mrb[0].mxu0
      %v3491 = vadd.f32 0.0, %v3490
      %v3492 = vpop.f32.mrb[0].mxu0
      %v3493 = vpop.f32.mrb[0].mxu0
      %v3494 = vadd.f32 0.0, %v3493
      %v3495 = vpop.f32.mrb[0].mxu0
      %3496 = vmatprep.mubr.bf16.mxu0 0
      %3497 = vmatmul.mubr.bf16.gmra.mrb[0].mxu0 %v3384
      %v3498 = vpop.f32.mrb[0].mxu0
      %v3499 = vadd.f32 0.0, %v3498
      %v3500 = vpop.f32.mrb[0].mxu0
      %v3501 = vpop.f32.mrb[0].mxu0
      %v3502 = vadd.f32 0.0, %v3501
      %v3503 = vpop.f32.mrb[0].mxu0
      %3504 = vmatprep.mubr.bf16.mxu0 0
      %3505 = vmatmul.mubr.bf16.gmra.mrb[0].mxu0 %v3387
      %v3506 = vpop.f32.mrb[0].mxu0
      %v3507 = vadd.f32 0.0, %v3506
      %v3508 = vpop.f32.mrb[0].mxu0
      %v3509 = vpop.f32.mrb[0].mxu0
      %v3510 = vadd.f32 0.0, %v3509
      %v3511 = vpop.f32.mrb[0].mxu0
      %3512 = vmatprep.mubr.bf16.mxu0 0
      %3513 = vmatmul.mubr.bf16.gmra.mrb[0].mxu0 %v3390
      %v3514 = vpop.f32.mrb[0].mxu0
      %v3515 = vadd.f32 0.0, %v3514
      %v3516 = vpop.f32.mrb[0].mxu0
      %v3517 = vpop.f32.mrb[0].mxu0
      %v3518 = vadd.f32 0.0, %v3517
      %v3519 = vpop.f32.mrb[0].mxu0
      %3520 = vmatprep.mubr.bf16.mxu0 0
      %3521 = vmatmul.mubr.bf16.gmra.mrb[0].mxu0 %v3393
      %v3522 = vpop.f32.mrb[0].mxu0
      %v3523 = vadd.f32 0.0, %v3522
      %v3524 = vpop.f32.mrb[0].mxu0
      %v3525 = vpop.f32.mrb[0].mxu0
      %v3526 = vadd.f32 0.0, %v3525
      %v3527 = vpop.f32.mrb[0].mxu0
      %3528 = vmatprep.mubr.bf16.mxu0 0
      %3529 = vmatmul.mubr.bf16.gmra.mrb[0].mxu0 %v3396
      %v3530 = vpop.f32.mrb[0].mxu0
      %v3531 = vadd.f32 0.0, %v3530
      %v3532 = vpop.f32.mrb[0].mxu0
      %v3533 = vpop.f32.mrb[0].mxu0
      %v3534 = vadd.f32 0.0, %v3533
      %v3535 = vpop.f32.mrb[0].mxu0
      %3536 = vmatprep.mubr.bf16.mxu0 0
      %3537 = vmatmul.mubr.bf16.gmra.mrb[0].mxu0 %v3399
      %v3538 = vpop.f32.mrb[0].mxu0
      %v3539 = vadd.f32 0.0, %v3538
      %v3540 = vpop.f32.mrb[0].mxu0
      %v3541 = vpop.f32.mrb[0].mxu0
      %v3542 = vadd.f32 0.0, %v3541
      %v3543 = vpop.f32.mrb[0].mxu0
      %3544 = vmatprep.mubr.bf16.mxu0 0
      %3545 = vmatmul.mubr.bf16.gmra.mrb[0].mxu0 %v3402
      %v3546 = vpop.f32.mrb[0].mxu0
      %v3547 = vadd.f32 0.0, %v3546
      %v3548 = vpop.f32.mrb[0].mxu0
      %v3549 = vpop.f32.mrb[0].mxu0
      %v3550 = vadd.f32 0.0, %v3549
      %v3551 = vpop.f32.mrb[0].mxu0
      %3552 = vmatprep.mubr.bf16.mxu0 0
      %3553 = vmatmul.mubr.bf16.gmra.mrb[0].mxu0 %v3405
      %v3554 = vpop.f32.mrb[0].mxu0
      %v3555 = vadd.f32 0.0, %v3554
      %v3556 = vpop.f32.mrb[0].mxu0
      %v3557 = vpop.f32.mrb[0].mxu0
      %v3558 = vadd.f32 0.0, %v3557
      %v3559 = vpop.f32.mrb[0].mxu0
      %3560 = vmatprep.mubr.bf16.mxu0 0
      %3561 = vmatmul.mubr.bf16.gmra.mrb[0].mxu0 %v3408
      %v3562 = vpop.f32.mrb[0].mxu0
      %v3563 = vadd.f32 0.0, %v3562
      %v3564 = vpop.f32.mrb[0].mxu0
      %v3565 = vpop.f32.mrb[0].mxu0
      %v3566 = vadd.f32 0.0, %v3565
      %v3567 = vpop.f32.mrb[0].mxu0
      %3568 = vmatprep.mubr.bf16.mxu0 0
      %3569 = vmatmul.mubr.bf16.gmra.mrb[0].mxu0 %v3411
      %v3570 = vpop.f32.mrb[0].mxu0
      %v3571 = vadd.f32 0.0, %v3570
      %v3572 = vpop.f32.mrb[0].mxu0
      %v3573 = vpop.f32.mrb[0].mxu0
      %v3574 = vadd.f32 0.0, %v3573
      %v3575 = vpop.f32.mrb[0].mxu0
      %3576 = vdwg.mxu0
      %v3577 = vadd.f32 %v3218, %v3451
      %v3578 = vadd.f32 %v3219, %v3454
      %v3579 = vadd.f32 %v3220, %v3459
      %v3580 = vadd.f32 %v3221, %v3462
      %v3581 = vadd.f32 %v3222, %v3467
      %v3582 = vadd.f32 %v3223, %v3470
      %v3583 = vadd.f32 %v3224, %v3475
      %v3584 = vadd.f32 %v3225, %v3478
      %v3585 = vadd.f32 %v3226, %v3483
      %v3586 = vadd.f32 %v3227, %v3486
      %v3587 = vadd.f32 %v3228, %v3491
      %v3588 = vadd.f32 %v3229, %v3494
      %v3589 = vadd.f32 %v3230, %v3499
      %v3590 = vadd.f32 %v3231, %v3502
      %v3591 = vadd.f32 %v3232, %v3507
      %v3592 = vadd.f32 %v3233, %v3510
      %v3593 = vadd.f32 %v3234, %v3515
      %v3594 = vadd.f32 %v3235, %v3518
      %v3595 = vadd.f32 %v3236, %v3523
      %v3596 = vadd.f32 %v3237, %v3526
      %v3597 = vadd.f32 %v3238, %v3531
      %v3598 = vadd.f32 %v3239, %v3534
      %v3599 = vadd.f32 %v3240, %v3539
      %v3600 = vadd.f32 %v3241, %v3542
      %v3601 = vadd.f32 %v3242, %v3547
      %v3602 = vadd.f32 %v3243, %v3550
      %v3603 = vadd.f32 %v3244, %v3555
      %v3604 = vadd.f32 %v3245, %v3558
      %v3605 = vadd.f32 %v3246, %v3563
      %v3606 = vadd.f32 %v3247, %v3566
      %v3607 = vadd.f32 %v3248, %v3571
      %v3608 = vadd.f32 %v3249, %v3574
      %v3609 = vld [vmem:[%s3250] sm:$0xf]
      %v3610 = vld [vmem:[%s3250 + $0x4] sm:$0xf]
      %v3611 = vld [vmem:[%s3250 + $0x8] sm:$0x1]
      %v3612 = vld [vmem:[%s3250 + $0xc] sm:$0xf]
      %v3613 = vld [vmem:[%s3250 + $0x10] sm:$0xf]
      %v3614 = vld [vmem:[%s3250 + $0x14] sm:$0x1]
      %v3615 = vld [vmem:[%s3250 + $0x18] sm:$0xf]
      %v3616 = vld [vmem:[%s3250 + $0x1c] sm:$0xf]
      %v3617 = vld [vmem:[%s3250 + $0x20] sm:$0x1]
      %v3618 = vld [vmem:[%s3250 + $0x24] sm:$0xf]
      %v3619 = vld [vmem:[%s3250 + $0x28] sm:$0xf]
      %v3620 = vld [vmem:[%s3250 + $0x2c] sm:$0x1]
      %v3621 = vld [vmem:[%s3250 + $0x30] sm:$0xf]
      %v3622 = vld [vmem:[%s3250 + $0x34] sm:$0xf]
      %v3623 = vld [vmem:[%s3250 + $0x38] sm:$0x1]
      %v3624 = vld [vmem:[%s3250 + $0x3c] sm:$0xf]
      %v3625 = vld [vmem:[%s3250 + $0x40] sm:$0xf]
      %v3626 = vld [vmem:[%s3250 + $0x44] sm:$0x1]
      %v3627 = vld [vmem:[%s3250 + $0x48] sm:$0xf]
      %v3628 = vld [vmem:[%s3250 + $0x4c] sm:$0xf]
      %v3629 = vld [vmem:[%s3250 + $0x50] sm:$0x1]
      %v3630 = vld [vmem:[%s3250 + $0x54] sm:$0xf]
      %v3631 = vld [vmem:[%s3250 + $0x58] sm:$0xf]
      %v3632 = vld [vmem:[%s3250 + $0x5c] sm:$0x1]
      %v3633 = vld [vmem:[%s3250 + $0x60] sm:$0xf]
      %v3634 = vld [vmem:[%s3250 + $0x64] sm:$0xf]
      %v3635 = vld [vmem:[%s3250 + $0x68] sm:$0x1]
      %v3636 = vld [vmem:[%s3250 + $0x6c] sm:$0xf]
      %v3637 = vld [vmem:[%s3250 + $0x70] sm:$0xf]
      %v3638 = vld [vmem:[%s3250 + $0x74] sm:$0x1]
      %v3639 = vld [vmem:[%s3250 + $0x78] sm:$0xf]
      %v3640 = vld [vmem:[%s3250 + $0x7c] sm:$0xf]
      %v3641 = vld [vmem:[%s3250 + $0x80] sm:$0x1]
      %v3642 = vld [vmem:[%s3250 + $0x84] sm:$0xf]
      %v3643 = vld [vmem:[%s3250 + $0x88] sm:$0xf]
      %v3644 = vld [vmem:[%s3250 + $0x8c] sm:$0x1]
      %v3645 = vld [vmem:[%s3250 + $0x90] sm:$0xf]
      %v3646 = vld [vmem:[%s3250 + $0x94] sm:$0xf]
      %v3647 = vld [vmem:[%s3250 + $0x98] sm:$0x1]
      %v3648 = vld [vmem:[%s3250 + $0x9c] sm:$0xf]
      %v3649 = vld [vmem:[%s3250 + $0xa0] sm:$0xf]
      %v3650 = vld [vmem:[%s3250 + $0xa4] sm:$0x1]
      %v3651 = vld [vmem:[%s3250 + $0xa8] sm:$0xf]
      %v3652 = vld [vmem:[%s3250 + $0xac] sm:$0xf]
      %v3653 = vld [vmem:[%s3250 + $0xb0] sm:$0x1]
      %v3654 = vld [vmem:[%s3250 + $0xb4] sm:$0xf]
      %v3655 = vld [vmem:[%s3250 + $0xb8] sm:$0xf]
      %v3656 = vld [vmem:[%s3250 + $0xbc] sm:$0x1]
      %v3658 = vshrl.u32 %v3609, 16
      %v3660 = vrot.slane %v3658, 4
      %v3661 = vshll.u32 %v3609, 16
      %v3663 = vrot.slane %v3661, 5
      %v3664 = vor.u32 %v3660, %v3663
      %v3665 = vrot.slane %v3664, 4
      %v3667 = vshll.u32 %v3610, 16
      %v3669 = vrot.slane %v3667, 5
      %v3670 = vsel %vm297, %v3665, %v3669
      %v3671 = vshrl.u32 %v3610, 16
      %v3673 = vrot.slane %v3671, 4
      %v3674 = vor.u32 %v3673, %v3669
      %v3675 = vrot.slane %v3674, 4
      %v3677 = vshll.u32 %v3611, 16
      %v3679 = vrot.slane %v3677, 5
      %v3680 = vsel %vm297, %v3675, %v3679
      %v3682 = vshrl.u32 %v3612, 16
      %v3684 = vrot.slane %v3682, 4
      %v3685 = vshll.u32 %v3612, 16
      %v3687 = vrot.slane %v3685, 5
      %v3688 = vor.u32 %v3684, %v3687
      %v3689 = vrot.slane %v3688, 4
      %v3691 = vshll.u32 %v3613, 16
      %v3693 = vrot.slane %v3691, 5
      %v3694 = vsel %vm297, %v3689, %v3693
      %v3695 = vshrl.u32 %v3613, 16
      %v3697 = vrot.slane %v3695, 4
      %v3698 = vor.u32 %v3697, %v3693
      %v3699 = vrot.slane %v3698, 4
      %v3701 = vshll.u32 %v3614, 16
      %v3703 = vrot.slane %v3701, 5
      %v3704 = vsel %vm297, %v3699, %v3703
      %v3706 = vshrl.u32 %v3615, 16
      %v3708 = vrot.slane %v3706, 4
      %v3709 = vshll.u32 %v3615, 16
      %v3711 = vrot.slane %v3709, 5
      %v3712 = vor.u32 %v3708, %v3711
      %v3713 = vrot.slane %v3712, 4
      %v3715 = vshll.u32 %v3616, 16
      %v3717 = vrot.slane %v3715, 5
      %v3718 = vsel %vm297, %v3713, %v3717
      %v3719 = vshrl.u32 %v3616, 16
      %v3721 = vrot.slane %v3719, 4
      %v3722 = vor.u32 %v3721, %v3717
      %v3723 = vrot.slane %v3722, 4
      %v3725 = vshll.u32 %v3617, 16
      %v3727 = vrot.slane %v3725, 5
      %v3728 = vsel %vm297, %v3723, %v3727
      %v3730 = vshrl.u32 %v3618, 16
      %v3732 = vrot.slane %v3730, 4
      %v3733 = vshll.u32 %v3618, 16
      %v3735 = vrot.slane %v3733, 5
      %v3736 = vor.u32 %v3732, %v3735
      %v3737 = vrot.slane %v3736, 4
      %v3739 = vshll.u32 %v3619, 16
      %v3741 = vrot.slane %v3739, 5
      %v3742 = vsel %vm297, %v3737, %v3741
      %v3743 = vshrl.u32 %v3619, 16
      %v3745 = vrot.slane %v3743, 4
      %v3746 = vor.u32 %v3745, %v3741
      %v3747 = vrot.slane %v3746, 4
      %v3749 = vshll.u32 %v3620, 16
      %v3751 = vrot.slane %v3749, 5
      %v3752 = vsel %vm297, %v3747, %v3751
      %v3754 = vshrl.u32 %v3621, 16
      %v3756 = vrot.slane %v3754, 4
      %v3757 = vshll.u32 %v3621, 16
      %v3759 = vrot.slane %v3757, 5
      %v3760 = vor.u32 %v3756, %v3759
      %v3761 = vrot.slane %v3760, 4
      %v3763 = vshll.u32 %v3622, 16
      %v3765 = vrot.slane %v3763, 5
      %v3766 = vsel %vm297, %v3761, %v3765
      %v3767 = vshrl.u32 %v3622, 16
      %v3769 = vrot.slane %v3767, 4
      %v3770 = vor.u32 %v3769, %v3765
      %v3771 = vrot.slane %v3770, 4
      %v3773 = vshll.u32 %v3623, 16
      %v3775 = vrot.slane %v3773, 5
      %v3776 = vsel %vm297, %v3771, %v3775
      %v3778 = vshrl.u32 %v3624, 16
      %v3780 = vrot.slane %v3778, 4
      %v3781 = vshll.u32 %v3624, 16
      %v3783 = vrot.slane %v3781, 5
      %v3784 = vor.u32 %v3780, %v3783
      %v3785 = vrot.slane %v3784, 4
      %v3787 = vshll.u32 %v3625, 16
      %v3789 = vrot.slane %v3787, 5
      %v3790 = vsel %vm297, %v3785, %v3789
      %v3791 = vshrl.u32 %v3625, 16
      %v3793 = vrot.slane %v3791, 4
      %v3794 = vor.u32 %v3793, %v3789
      %v3795 = vrot.slane %v3794, 4
      %v3797 = vshll.u32 %v3626, 16
      %v3799 = vrot.slane %v3797, 5
      %v3800 = vsel %vm297, %v3795, %v3799
      %v3802 = vshrl.u32 %v3627, 16
      %v3804 = vrot.slane %v3802, 4
      %v3805 = vshll.u32 %v3627, 16
      %v3807 = vrot.slane %v3805, 5
      %v3808 = vor.u32 %v3804, %v3807
      %v3809 = vrot.slane %v3808, 4
      %v3811 = vshll.u32 %v3628, 16
      %v3813 = vrot.slane %v3811, 5
      %v3814 = vsel %vm297, %v3809, %v3813
      %v3815 = vshrl.u32 %v3628, 16
      %v3817 = vrot.slane %v3815, 4
      %v3818 = vor.u32 %v3817, %v3813
      %v3819 = vrot.slane %v3818, 4
      %v3821 = vshll.u32 %v3629, 16
      %v3823 = vrot.slane %v3821, 5
      %v3824 = vsel %vm297, %v3819, %v3823
      %v3826 = vshrl.u32 %v3630, 16
      %v3828 = vrot.slane %v3826, 4
      %v3829 = vshll.u32 %v3630, 16
      %v3831 = vrot.slane %v3829, 5
      %v3832 = vor.u32 %v3828, %v3831
      %v3833 = vrot.slane %v3832, 4
      %v3835 = vshll.u32 %v3631, 16
      %v3837 = vrot.slane %v3835, 5
      %v3838 = vsel %vm297, %v3833, %v3837
      %v3839 = vshrl.u32 %v3631, 16
      %v3841 = vrot.slane %v3839, 4
      %v3842 = vor.u32 %v3841, %v3837
      %v3843 = vrot.slane %v3842, 4
      %v3845 = vshll.u32 %v3632, 16
      %v3847 = vrot.slane %v3845, 5
      %v3848 = vsel %vm297, %v3843, %v3847
      %v3850 = vshrl.u32 %v3633, 16
      %v3852 = vrot.slane %v3850, 4
      %v3853 = vshll.u32 %v3633, 16
      %v3855 = vrot.slane %v3853, 5
      %v3856 = vor.u32 %v3852, %v3855
      %v3857 = vrot.slane %v3856, 4
      %v3859 = vshll.u32 %v3634, 16
      %v3861 = vrot.slane %v3859, 5
      %v3862 = vsel %vm297, %v3857, %v3861
      %v3863 = vshrl.u32 %v3634, 16
      %v3865 = vrot.slane %v3863, 4
      %v3866 = vor.u32 %v3865, %v3861
      %v3867 = vrot.slane %v3866, 4
      %v3869 = vshll.u32 %v3635, 16
      %v3871 = vrot.slane %v3869, 5
      %v3872 = vsel %vm297, %v3867, %v3871
      %v3874 = vshrl.u32 %v3636, 16
      %v3876 = vrot.slane %v3874, 4
      %v3877 = vshll.u32 %v3636, 16
      %v3879 = vrot.slane %v3877, 5
      %v3880 = vor.u32 %v3876, %v3879
      %v3881 = vrot.slane %v3880, 4
      %v3883 = vshll.u32 %v3637, 16
      %v3885 = vrot.slane %v3883, 5
      %v3886 = vsel %vm297, %v3881, %v3885
      %v3887 = vshrl.u32 %v3637, 16
      %v3889 = vrot.slane %v3887, 4
      %v3890 = vor.u32 %v3889, %v3885
      %v3891 = vrot.slane %v3890, 4
      %v3893 = vshll.u32 %v3638, 16
      %v3895 = vrot.slane %v3893, 5
      %v3896 = vsel %vm297, %v3891, %v3895
      %v3898 = vshrl.u32 %v3639, 16
      %v3900 = vrot.slane %v3898, 4
      %v3901 = vshll.u32 %v3639, 16
      %v3903 = vrot.slane %v3901, 5
      %v3904 = vor.u32 %v3900, %v3903
      %v3905 = vrot.slane %v3904, 4
      %v3907 = vshll.u32 %v3640, 16
      %v3909 = vrot.slane %v3907, 5
      %v3910 = vsel %vm297, %v3905, %v3909
      %v3911 = vshrl.u32 %v3640, 16
      %v3913 = vrot.slane %v3911, 4
      %v3914 = vor.u32 %v3913, %v3909
      %v3915 = vrot.slane %v3914, 4
      %v3917 = vshll.u32 %v3641, 16
      %v3919 = vrot.slane %v3917, 5
      %v3920 = vsel %vm297, %v3915, %v3919
      %v3922 = vshrl.u32 %v3642, 16
      %v3924 = vrot.slane %v3922, 4
      %v3925 = vshll.u32 %v3642, 16
      %v3927 = vrot.slane %v3925, 5
      %v3928 = vor.u32 %v3924, %v3927
      %v3929 = vrot.slane %v3928, 4
      %v3931 = vshll.u32 %v3643, 16
      %v3933 = vrot.slane %v3931, 5
      %v3934 = vsel %vm297, %v3929, %v3933
      %v3935 = vshrl.u32 %v3643, 16
      %v3937 = vrot.slane %v3935, 4
      %v3938 = vor.u32 %v3937, %v3933
      %v3939 = vrot.slane %v3938, 4
      %v3941 = vshll.u32 %v3644, 16
      %v3943 = vrot.slane %v3941, 5
      %v3944 = vsel %vm297, %v3939, %v3943
      %v3946 = vshrl.u32 %v3645, 16
      %v3948 = vrot.slane %v3946, 4
      %v3949 = vshll.u32 %v3645, 16
      %v3951 = vrot.slane %v3949, 5
      %v3952 = vor.u32 %v3948, %v3951
      %v3953 = vrot.slane %v3952, 4
      %v3955 = vshll.u32 %v3646, 16
      %v3957 = vrot.slane %v3955, 5
      %v3958 = vsel %vm297, %v3953, %v3957
      %v3959 = vshrl.u32 %v3646, 16
      %v3961 = vrot.slane %v3959, 4
      %v3962 = vor.u32 %v3961, %v3957
      %v3963 = vrot.slane %v3962, 4
      %v3965 = vshll.u32 %v3647, 16
      %v3967 = vrot.slane %v3965, 5
      %v3968 = vsel %vm297, %v3963, %v3967
      %v3970 = vshrl.u32 %v3648, 16
      %v3972 = vrot.slane %v3970, 4
      %v3973 = vshll.u32 %v3648, 16
      %v3975 = vrot.slane %v3973, 5
      %v3976 = vor.u32 %v3972, %v3975
      %v3977 = vrot.slane %v3976, 4
      %v3979 = vshll.u32 %v3649, 16
      %v3981 = vrot.slane %v3979, 5
      %v3982 = vsel %vm297, %v3977, %v3981
      %v3983 = vshrl.u32 %v3649, 16
      %v3985 = vrot.slane %v3983, 4
      %v3986 = vor.u32 %v3985, %v3981
      %v3987 = vrot.slane %v3986, 4
      %v3989 = vshll.u32 %v3650, 16
      %v3991 = vrot.slane %v3989, 5
      %v3992 = vsel %vm297, %v3987, %v3991
      %v3994 = vshrl.u32 %v3651, 16
      %v3996 = vrot.slane %v3994, 4
      %v3997 = vshll.u32 %v3651, 16
      %v3999 = vrot.slane %v3997, 5
      %v4000 = vor.u32 %v3996, %v3999
      %v4001 = vrot.slane %v4000, 4
      %v4003 = vshll.u32 %v3652, 16
      %v4005 = vrot.slane %v4003, 5
      %v4006 = vsel %vm297, %v4001, %v4005
      %v4007 = vshrl.u32 %v3652, 16
      %v4009 = vrot.slane %v4007, 4
      %v4010 = vor.u32 %v4009, %v4005
      %v4011 = vrot.slane %v4010, 4
      %v4013 = vshll.u32 %v3653, 16
      %v4015 = vrot.slane %v4013, 5
      %v4016 = vsel %vm297, %v4011, %v4015
      %v4018 = vshrl.u32 %v3654, 16
      %v4020 = vrot.slane %v4018, 4
      %v4021 = vshll.u32 %v3654, 16
      %v4023 = vrot.slane %v4021, 5
      %v4024 = vor.u32 %v4020, %v4023
      %v4025 = vrot.slane %v4024, 4
      %v4027 = vshll.u32 %v3655, 16
      %v4029 = vrot.slane %v4027, 5
      %v4030 = vsel %vm297, %v4025, %v4029
      %v4031 = vshrl.u32 %v3655, 16
      %v4033 = vrot.slane %v4031, 4
      %v4034 = vor.u32 %v4033, %v4029
      %v4035 = vrot.slane %v4034, 4
      %v4037 = vshll.u32 %v3656, 16
      %v4039 = vrot.slane %v4037, 5
      %v4040 = vsel %vm297, %v4035, %v4039
      %s4041 = scalar_lea.vmem %s1, 14
      %v4042 = vld [vmem:[%s4041] sm:$0x3]
      %v4043 = vunpack.c.l.b16 %v3670
      %v4044 = vunpack.c.l.b16 %v3680
      %v4045 = vunpack.c.l.b16 %v3694
      %v4046 = vunpack.c.l.b16 %v3704
      %v4047 = vunpack.c.l.b16 %v3718
      %v4048 = vunpack.c.l.b16 %v3728
      %v4049 = vunpack.c.l.b16 %v3742
      %v4050 = vunpack.c.l.b16 %v3752
      %v4051 = vunpack.c.l.b16 %v3766
      %v4052 = vunpack.c.l.b16 %v3776
      %v4053 = vunpack.c.l.b16 %v3790
      %v4054 = vunpack.c.l.b16 %v3800
      %v4055 = vunpack.c.l.b16 %v3814
      %v4056 = vunpack.c.l.b16 %v3824
      %v4057 = vunpack.c.l.b16 %v3838
      %v4058 = vunpack.c.l.b16 %v3848
      %v4059 = vunpack.c.l.b16 %v3862
      %v4060 = vunpack.c.l.b16 %v3872
      %v4061 = vunpack.c.l.b16 %v3886
      %v4062 = vunpack.c.l.b16 %v3896
      %v4063 = vunpack.c.l.b16 %v3910
      %v4064 = vunpack.c.l.b16 %v3920
      %v4065 = vunpack.c.l.b16 %v3934
      %v4066 = vunpack.c.l.b16 %v3944
      %v4067 = vunpack.c.l.b16 %v3958
      %v4068 = vunpack.c.l.b16 %v3968
      %v4069 = vunpack.c.l.b16 %v3982
      %v4070 = vunpack.c.l.b16 %v3992
      %v4071 = vunpack.c.l.b16 %v4006
      %v4072 = vunpack.c.l.b16 %v4016
      %v4073 = vunpack.c.l.b16 %v4030
      %v4074 = vunpack.c.l.b16 %v4040
      %v4075 = vpack.c.b16 %v4044, %v4043
      %v4076 = vpack.c.b16 %v4046, %v4045
      %v4077 = vpack.c.b16 %v4048, %v4047
      %v4078 = vpack.c.b16 %v4050, %v4049
      %v4079 = vpack.c.b16 %v4052, %v4051
      %v4080 = vpack.c.b16 %v4054, %v4053
      %v4081 = vpack.c.b16 %v4056, %v4055
      %v4082 = vpack.c.b16 %v4058, %v4057
      %v4083 = vpack.c.b16 %v4060, %v4059
      %v4084 = vpack.c.b16 %v4062, %v4061
      %v4085 = vpack.c.b16 %v4064, %v4063
      %v4086 = vpack.c.b16 %v4066, %v4065
      %v4087 = vpack.c.b16 %v4068, %v4067
      %v4088 = vpack.c.b16 %v4070, %v4069
      %v4089 = vpack.c.b16 %v4072, %v4071
      %v4090 = vpack.c.b16 %v4074, %v4073
      %v4092 = vsel %vm732, %v4075, 0
      %v4095 = vsel %vm732, %v4076, 0
      %v4098 = vsel %vm732, %v4077, 0
      %v4101 = vsel %vm732, %v4078, 0
      %v4104 = vsel %vm732, %v4079, 0
      %v4107 = vsel %vm732, %v4080, 0
      %v4110 = vsel %vm732, %v4081, 0
      %v4113 = vsel %vm732, %v4082, 0
      %v4116 = vsel %vm732, %v4083, 0
      %v4119 = vsel %vm732, %v4084, 0
      %v4122 = vsel %vm732, %v4085, 0
      %v4125 = vsel %vm732, %v4086, 0
      %v4128 = vsel %vm732, %v4087, 0
      %v4131 = vsel %vm732, %v4088, 0
      %v4134 = vsel %vm732, %v4089, 0
      %v4137 = vsel %vm732, %v4090, 0
      %v4140 = vsel %vm781, %v4042, 0
      %4142 = vmatprep.subr.bf16.mxu0 0
      %4143 = vmatpush1.bf16.msra.mxu0 %v4140
      %4144 = vmatprep.subr.bf16.mxu0 0
      %4145 = vmatpush1.bf16.msra.mxu0 0
      %4146 = vmatprep.subr.bf16.mxu0 0
      %4147 = vmatpush1.bf16.msra.mxu0 0
      %4148 = vmatprep.subr.bf16.mxu0 0
      %4149 = vmatpush1.bf16.msra.mxu0 0
      %4150 = vmatprep.subr.bf16.mxu0 0
      %4151 = vmatpush1.bf16.msra.mxu0 0
      %4152 = vmatprep.subr.bf16.mxu0 0
      %4153 = vmatpush1.bf16.msra.mxu0 0
      %4154 = vmatprep.subr.bf16.mxu0 0
      %4155 = vmatpush1.bf16.msra.mxu0 0
      %4156 = vmatprep.subr.bf16.mxu0 0
      %4157 = vmatpush1.bf16.msra.mxu0 0
      %4158 = vmatprep.subr.bf16.mxu0 0
      %4159 = vmatpush1.bf16.msra.mxu0 0
      %4160 = vmatprep.subr.bf16.mxu0 0
      %4161 = vmatpush1.bf16.msra.mxu0 0
      %4162 = vmatprep.subr.bf16.mxu0 0
      %4163 = vmatpush1.bf16.msra.mxu0 0
      %4164 = vmatprep.subr.bf16.mxu0 0
      %4165 = vmatpush1.bf16.msra.mxu0 0
      %4166 = vmatprep.subr.bf16.mxu0 0
      %4167 = vmatpush1.bf16.msra.mxu0 0
      %4168 = vmatprep.subr.bf16.mxu0 0
      %4169 = vmatpush1.bf16.msra.mxu0 0
      %4170 = vmatprep.subr.bf16.mxu0 0
      %4171 = vmatpush1.bf16.msra.mxu0 0
      %4172 = vmatprep.subr.bf16.mxu0 0
      %4173 = vmatpush1.bf16.msra.mxu0 0
      %4174 = vmatprep.mubr.bf16.mxu0 0
      %4175 = vmatmul.mubr.bf16.gmra.mrb[0].mxu0 %v4092
      %v4176 = vpop.f32.mrb[0].mxu0
      %v4177 = vadd.f32 0.0, %v4176
      %v4178 = vpop.f32.mrb[0].mxu0
      %v4179 = vpop.f32.mrb[0].mxu0
      %v4180 = vadd.f32 0.0, %v4179
      %v4181 = vpop.f32.mrb[0].mxu0
      %4182 = vmatprep.mubr.bf16.mxu0 0
      %4183 = vmatmul.mubr.bf16.gmra.mrb[0].mxu0 %v4095
      %v4184 = vpop.f32.mrb[0].mxu0
      %v4185 = vadd.f32 0.0, %v4184
      %v4186 = vpop.f32.mrb[0].mxu0
      %v4187 = vpop.f32.mrb[0].mxu0
      %v4188 = vadd.f32 0.0, %v4187
      %v4189 = vpop.f32.mrb[0].mxu0
      %4190 = vmatprep.mubr.bf16.mxu0 0
      %4191 = vmatmul.mubr.bf16.gmra.mrb[0].mxu0 %v4098
      %v4192 = vpop.f32.mrb[0].mxu0
      %v4193 = vadd.f32 0.0, %v4192
      %v4194 = vpop.f32.mrb[0].mxu0
      %v4195 = vpop.f32.mrb[0].mxu0
      %v4196 = vadd.f32 0.0, %v4195
      %v4197 = vpop.f32.mrb[0].mxu0
      %4198 = vmatprep.mubr.bf16.mxu0 0
      %4199 = vmatmul.mubr.bf16.gmra.mrb[0].mxu0 %v4101
      %v4200 = vpop.f32.mrb[0].mxu0
      %v4201 = vadd.f32 0.0, %v4200
      %v4202 = vpop.f32.mrb[0].mxu0
      %v4203 = vpop.f32.mrb[0].mxu0
      %v4204 = vadd.f32 0.0, %v4203
      %v4205 = vpop.f32.mrb[0].mxu0
      %4206 = vmatprep.mubr.bf16.mxu0 0
      %4207 = vmatmul.mubr.bf16.gmra.mrb[0].mxu0 %v4104
      %v4208 = vpop.f32.mrb[0].mxu0
      %v4209 = vadd.f32 0.0, %v4208
      %v4210 = vpop.f32.mrb[0].mxu0
      %v4211 = vpop.f32.mrb[0].mxu0
      %v4212 = vadd.f32 0.0, %v4211
      %v4213 = vpop.f32.mrb[0].mxu0
      %4214 = vmatprep.mubr.bf16.mxu0 0
      %4215 = vmatmul.mubr.bf16.gmra.mrb[0].mxu0 %v4107
      %v4216 = vpop.f32.mrb[0].mxu0
      %v4217 = vadd.f32 0.0, %v4216
      %v4218 = vpop.f32.mrb[0].mxu0
      %v4219 = vpop.f32.mrb[0].mxu0
      %v4220 = vadd.f32 0.0, %v4219
      %v4221 = vpop.f32.mrb[0].mxu0
      %4222 = vmatprep.mubr.bf16.mxu0 0
      %4223 = vmatmul.mubr.bf16.gmra.mrb[0].mxu0 %v4110
      %v4224 = vpop.f32.mrb[0].mxu0
      %v4225 = vadd.f32 0.0, %v4224
      %v4226 = vpop.f32.mrb[0].mxu0
      %v4227 = vpop.f32.mrb[0].mxu0
      %v4228 = vadd.f32 0.0, %v4227
      %v4229 = vpop.f32.mrb[0].mxu0
      %4230 = vmatprep.mubr.bf16.mxu0 0
      %4231 = vmatmul.mubr.bf16.gmra.mrb[0].mxu0 %v4113
      %v4232 = vpop.f32.mrb[0].mxu0
      %v4233 = vadd.f32 0.0, %v4232
      %v4234 = vpop.f32.mrb[0].mxu0
      %v4235 = vpop.f32.mrb[0].mxu0
      %v4236 = vadd.f32 0.0, %v4235
      %v4237 = vpop.f32.mrb[0].mxu0
      %4238 = vmatprep.mubr.bf16.mxu0 0
      %4239 = vmatmul.mubr.bf16.gmra.mrb[0].mxu0 %v4116
      %v4240 = vpop.f32.mrb[0].mxu0
      %v4241 = vadd.f32 0.0, %v4240
      %v4242 = vpop.f32.mrb[0].mxu0
      %v4243 = vpop.f32.mrb[0].mxu0
      %v4244 = vadd.f32 0.0, %v4243
      %v4245 = vpop.f32.mrb[0].mxu0
      %4246 = vmatprep.mubr.bf16.mxu0 0
      %4247 = vmatmul.mubr.bf16.gmra.mrb[0].mxu0 %v4119
      %v4248 = vpop.f32.mrb[0].mxu0
      %v4249 = vadd.f32 0.0, %v4248
      %v4250 = vpop.f32.mrb[0].mxu0
      %v4251 = vpop.f32.mrb[0].mxu0
      %v4252 = vadd.f32 0.0, %v4251
      %v4253 = vpop.f32.mrb[0].mxu0
      %4254 = vmatprep.mubr.bf16.mxu0 0
      %4255 = vmatmul.mubr.bf16.gmra.mrb[0].mxu0 %v4122
      %v4256 = vpop.f32.mrb[0].mxu0
      %v4257 = vadd.f32 0.0, %v4256
      %v4258 = vpop.f32.mrb[0].mxu0
      %v4259 = vpop.f32.mrb[0].mxu0
      %v4260 = vadd.f32 0.0, %v4259
      %v4261 = vpop.f32.mrb[0].mxu0
      %4262 = vmatprep.mubr.bf16.mxu0 0
      %4263 = vmatmul.mubr.bf16.gmra.mrb[0].mxu0 %v4125
      %v4264 = vpop.f32.mrb[0].mxu0
      %v4265 = vadd.f32 0.0, %v4264
      %v4266 = vpop.f32.mrb[0].mxu0
      %v4267 = vpop.f32.mrb[0].mxu0
      %v4268 = vadd.f32 0.0, %v4267
      %v4269 = vpop.f32.mrb[0].mxu0
      %4270 = vmatprep.mubr.bf16.mxu0 0
      %4271 = vmatmul.mubr.bf16.gmra.mrb[0].mxu0 %v4128
      %v4272 = vpop.f32.mrb[0].mxu0
      %v4273 = vadd.f32 0.0, %v4272
      %v4274 = vpop.f32.mrb[0].mxu0
      %v4275 = vpop.f32.mrb[0].mxu0
      %v4276 = vadd.f32 0.0, %v4275
      %v4277 = vpop.f32.mrb[0].mxu0
      %4278 = vmatprep.mubr.bf16.mxu0 0
      %4279 = vmatmul.mubr.bf16.gmra.mrb[0].mxu0 %v4131
      %v4280 = vpop.f32.mrb[0].mxu0
      %v4281 = vadd.f32 0.0, %v4280
      %v4282 = vpop.f32.mrb[0].mxu0
      %v4283 = vpop.f32.mrb[0].mxu0
      %v4284 = vadd.f32 0.0, %v4283
      %v4285 = vpop.f32.mrb[0].mxu0
      %4286 = vmatprep.mubr.bf16.mxu0 0
      %4287 = vmatmul.mubr.bf16.gmra.mrb[0].mxu0 %v4134
      %v4288 = vpop.f32.mrb[0].mxu0
      %v4289 = vadd.f32 0.0, %v4288
      %v4290 = vpop.f32.mrb[0].mxu0
      %v4291 = vpop.f32.mrb[0].mxu0
      %v4292 = vadd.f32 0.0, %v4291
      %v4293 = vpop.f32.mrb[0].mxu0
      %4294 = vmatprep.mubr.bf16.mxu0 0
      %4295 = vmatmul.mubr.bf16.gmra.mrb[0].mxu0 %v4137
      %v4296 = vpop.f32.mrb[0].mxu0
      %v4297 = vadd.f32 0.0, %v4296
      %v4298 = vpop.f32.mrb[0].mxu0
      %v4299 = vpop.f32.mrb[0].mxu0
      %v4300 = vadd.f32 0.0, %v4299
      %v4301 = vpop.f32.mrb[0].mxu0
      %4302 = vdwg.mxu0
      %v4303 = vadd.f32 %v3577, %v4177
      %v4304 = vadd.f32 %v3578, %v4180
      %v4305 = vadd.f32 %v3579, %v4185
      %v4306 = vadd.f32 %v3580, %v4188
      %v4307 = vadd.f32 %v3581, %v4193
      %v4308 = vadd.f32 %v3582, %v4196
      %v4309 = vadd.f32 %v3583, %v4201
      %v4310 = vadd.f32 %v3584, %v4204
      %v4311 = vadd.f32 %v3585, %v4209
      %v4312 = vadd.f32 %v3586, %v4212
      %v4313 = vadd.f32 %v3587, %v4217
      %v4314 = vadd.f32 %v3588, %v4220
      %v4315 = vadd.f32 %v3589, %v4225
      %v4316 = vadd.f32 %v3590, %v4228
      %v4317 = vadd.f32 %v3591, %v4233
      %v4318 = vadd.f32 %v3592, %v4236
      %v4319 = vadd.f32 %v3593, %v4241
      %v4320 = vadd.f32 %v3594, %v4244
      %v4321 = vadd.f32 %v3595, %v4249
      %v4322 = vadd.f32 %v3596, %v4252
      %v4323 = vadd.f32 %v3597, %v4257
      %v4324 = vadd.f32 %v3598, %v4260
      %v4325 = vadd.f32 %v3599, %v4265
      %v4326 = vadd.f32 %v3600, %v4268
      %v4327 = vadd.f32 %v3601, %v4273
      %v4328 = vadd.f32 %v3602, %v4276
      %v4329 = vadd.f32 %v3603, %v4281
      %v4330 = vadd.f32 %v3604, %v4284
      %v4331 = vadd.f32 %v3605, %v4289
      %v4332 = vadd.f32 %v3606, %v4292
      %v4333 = vadd.f32 %v3607, %v4297
      %v4334 = vadd.f32 %v3608, %v4300
      %v4335 = vld [vmem:[%s3250] sm:$0xe]
      %v4336 = vld [vmem:[%s3250 + $0xc] sm:$0xe]
      %v4337 = vld [vmem:[%s3250 + $0x18] sm:$0xe]
      %v4338 = vld [vmem:[%s3250 + $0x24] sm:$0xe]
      %v4339 = vld [vmem:[%s3250 + $0x30] sm:$0xe]
      %v4340 = vld [vmem:[%s3250 + $0x3c] sm:$0xe]
      %v4341 = vld [vmem:[%s3250 + $0x48] sm:$0xe]
      %v4342 = vld [vmem:[%s3250 + $0x54] sm:$0xe]
      %v4343 = vld [vmem:[%s3250 + $0x60] sm:$0xe]
      %v4344 = vld [vmem:[%s3250 + $0x6c] sm:$0xe]
      %v4345 = vld [vmem:[%s3250 + $0x78] sm:$0xe]
      %v4346 = vld [vmem:[%s3250 + $0x84] sm:$0xe]
      %v4347 = vld [vmem:[%s3250 + $0x90] sm:$0xe]
      %v4348 = vld [vmem:[%s3250 + $0x9c] sm:$0xe]
      %v4349 = vld [vmem:[%s3250 + $0xa8] sm:$0xe]
      %v4350 = vld [vmem:[%s3250 + $0xb4] sm:$0xe]
      %v4399 = vrot.slane %v4335, 5
      %v4400 = vrot.slane %v4399, 4
      %v4401 = vrot.slane %v3610, 5
      %v4402 = vsel %vm1288, %v4400, %v4401
      %v4403 = vrot.slane %v4401, 4
      %v4404 = vrot.slane %v3611, 5
      %v4405 = vsel %vm1288, %v4403, %v4404
      %v4406 = vrot.slane %v4336, 5
      %v4407 = vrot.slane %v4406, 4
      %v4408 = vrot.slane %v3613, 5
      %v4409 = vsel %vm1288, %v4407, %v4408
      %v4410 = vrot.slane %v4408, 4
      %v4411 = vrot.slane %v3614, 5
      %v4412 = vsel %vm1288, %v4410, %v4411
      %v4413 = vrot.slane %v4337, 5
      %v4414 = vrot.slane %v4413, 4
      %v4415 = vrot.slane %v3616, 5
      %v4416 = vsel %vm1288, %v4414, %v4415
      %v4417 = vrot.slane %v4415, 4
      %v4418 = vrot.slane %v3617, 5
      %v4419 = vsel %vm1288, %v4417, %v4418
      %v4420 = vrot.slane %v4338, 5
      %v4421 = vrot.slane %v4420, 4
      %v4422 = vrot.slane %v3619, 5
      %v4423 = vsel %vm1288, %v4421, %v4422
      %v4424 = vrot.slane %v4422, 4
      %v4425 = vrot.slane %v3620, 5
      %v4426 = vsel %vm1288, %v4424, %v4425
      %v4427 = vrot.slane %v4339, 5
      %v4428 = vrot.slane %v4427, 4
      %v4429 = vrot.slane %v3622, 5
      %v4430 = vsel %vm1288, %v4428, %v4429
      %v4431 = vrot.slane %v4429, 4
      %v4432 = vrot.slane %v3623, 5
      %v4433 = vsel %vm1288, %v4431, %v4432
      %v4434 = vrot.slane %v4340, 5
      %v4435 = vrot.slane %v4434, 4
      %v4436 = vrot.slane %v3625, 5
      %v4437 = vsel %vm1288, %v4435, %v4436
      %v4438 = vrot.slane %v4436, 4
      %v4439 = vrot.slane %v3626, 5
      %v4440 = vsel %vm1288, %v4438, %v4439
      %v4441 = vrot.slane %v4341, 5
      %v4442 = vrot.slane %v4441, 4
      %v4443 = vrot.slane %v3628, 5
      %v4444 = vsel %vm1288, %v4442, %v4443
      %v4445 = vrot.slane %v4443, 4
      %v4446 = vrot.slane %v3629, 5
      %v4447 = vsel %vm1288, %v4445, %v4446
      %v4448 = vrot.slane %v4342, 5
      %v4449 = vrot.slane %v4448, 4
      %v4450 = vrot.slane %v3631, 5
      %v4451 = vsel %vm1288, %v4449, %v4450
      %v4452 = vrot.slane %v4450, 4
      %v4453 = vrot.slane %v3632, 5
      %v4454 = vsel %vm1288, %v4452, %v4453
      %v4455 = vrot.slane %v4343, 5
      %v4456 = vrot.slane %v4455, 4
      %v4457 = vrot.slane %v3634, 5
      %v4458 = vsel %vm1288, %v4456, %v4457
      %v4459 = vrot.slane %v4457, 4
      %v4460 = vrot.slane %v3635, 5
      %v4461 = vsel %vm1288, %v4459, %v4460
      %v4462 = vrot.slane %v4344, 5
      %v4463 = vrot.slane %v4462, 4
      %v4464 = vrot.slane %v3637, 5
      %v4465 = vsel %vm1288, %v4463, %v4464
      %v4466 = vrot.slane %v4464, 4
      %v4467 = vrot.slane %v3638, 5
      %v4468 = vsel %vm1288, %v4466, %v4467
      %v4469 = vrot.slane %v4345, 5
      %v4470 = vrot.slane %v4469, 4
      %v4471 = vrot.slane %v3640, 5
      %v4472 = vsel %vm1288, %v4470, %v4471
      %v4473 = vrot.slane %v4471, 4
      %v4474 = vrot.slane %v3641, 5
      %v4475 = vsel %vm1288, %v4473, %v4474
      %v4476 = vrot.slane %v4346, 5
      %v4477 = vrot.slane %v4476, 4
      %v4478 = vrot.slane %v3643, 5
      %v4479 = vsel %vm1288, %v4477, %v4478
      %v4480 = vrot.slane %v4478, 4
      %v4481 = vrot.slane %v3644, 5
      %v4482 = vsel %vm1288, %v4480, %v4481
      %v4483 = vrot.slane %v4347, 5
      %v4484 = vrot.slane %v4483, 4
      %v4485 = vrot.slane %v3646, 5
      %v4486 = vsel %vm1288, %v4484, %v4485
      %v4487 = vrot.slane %v4485, 4
      %v4488 = vrot.slane %v3647, 5
      %v4489 = vsel %vm1288, %v4487, %v4488
      %v4490 = vrot.slane %v4348, 5
      %v4491 = vrot.slane %v4490, 4
      %v4492 = vrot.slane %v3649, 5
      %v4493 = vsel %vm1288, %v4491, %v4492
      %v4494 = vrot.slane %v4492, 4
      %v4495 = vrot.slane %v3650, 5
      %v4496 = vsel %vm1288, %v4494, %v4495
      %v4497 = vrot.slane %v4349, 5
      %v4498 = vrot.slane %v4497, 4
      %v4499 = vrot.slane %v3652, 5
      %v4500 = vsel %vm1288, %v4498, %v4499
      %v4501 = vrot.slane %v4499, 4
      %v4502 = vrot.slane %v3653, 5
      %v4503 = vsel %vm1288, %v4501, %v4502
      %v4504 = vrot.slane %v4350, 5
      %v4505 = vrot.slane %v4504, 4
      %v4506 = vrot.slane %v3655, 5
      %v4507 = vsel %vm1288, %v4505, %v4506
      %v4508 = vrot.slane %v4506, 4
      %v4509 = vrot.slane %v3656, 5
      %v4510 = vsel %vm1288, %v4508, %v4509
      %s4511 = scalar_lea.vmem %s1, 16
      %v4512 = vld [vmem:[%s4511] sm:$0x3]
      %v4513 = vunpack.c.l.b16 %v4402
      %v4514 = vunpack.c.l.b16 %v4405
      %v4515 = vunpack.c.l.b16 %v4409
      %v4516 = vunpack.c.l.b16 %v4412
      %v4517 = vunpack.c.l.b16 %v4416
      %v4518 = vunpack.c.l.b16 %v4419
      %v4519 = vunpack.c.l.b16 %v4423
      %v4520 = vunpack.c.l.b16 %v4426
      %v4521 = vunpack.c.l.b16 %v4430
      %v4522 = vunpack.c.l.b16 %v4433
      %v4523 = vunpack.c.l.b16 %v4437
      %v4524 = vunpack.c.l.b16 %v4440
      %v4525 = vunpack.c.l.b16 %v4444
      %v4526 = vunpack.c.l.b16 %v4447
      %v4527 = vunpack.c.l.b16 %v4451
      %v4528 = vunpack.c.l.b16 %v4454
      %v4529 = vunpack.c.l.b16 %v4458
      %v4530 = vunpack.c.l.b16 %v4461
      %v4531 = vunpack.c.l.b16 %v4465
      %v4532 = vunpack.c.l.b16 %v4468
      %v4533 = vunpack.c.l.b16 %v4472
      %v4534 = vunpack.c.l.b16 %v4475
      %v4535 = vunpack.c.l.b16 %v4479
      %v4536 = vunpack.c.l.b16 %v4482
      %v4537 = vunpack.c.l.b16 %v4486
      %v4538 = vunpack.c.l.b16 %v4489
      %v4539 = vunpack.c.l.b16 %v4493
      %v4540 = vunpack.c.l.b16 %v4496
      %v4541 = vunpack.c.l.b16 %v4500
      %v4542 = vunpack.c.l.b16 %v4503
      %v4543 = vunpack.c.l.b16 %v4507
      %v4544 = vunpack.c.l.b16 %v4510
      %v4545 = vpack.c.b16 %v4514, %v4513
      %v4546 = vpack.c.b16 %v4516, %v4515
      %v4547 = vpack.c.b16 %v4518, %v4517
      %v4548 = vpack.c.b16 %v4520, %v4519
      %v4549 = vpack.c.b16 %v4522, %v4521
      %v4550 = vpack.c.b16 %v4524, %v4523
      %v4551 = vpack.c.b16 %v4526, %v4525
      %v4552 = vpack.c.b16 %v4528, %v4527
      %v4553 = vpack.c.b16 %v4530, %v4529
      %v4554 = vpack.c.b16 %v4532, %v4531
      %v4555 = vpack.c.b16 %v4534, %v4533
      %v4556 = vpack.c.b16 %v4536, %v4535
      %v4557 = vpack.c.b16 %v4538, %v4537
      %v4558 = vpack.c.b16 %v4540, %v4539
      %v4559 = vpack.c.b16 %v4542, %v4541
      %v4560 = vpack.c.b16 %v4544, %v4543
      %v4562 = vsel %vm732, %v4545, 0
      %v4565 = vsel %vm732, %v4546, 0
      %v4568 = vsel %vm732, %v4547, 0
      %v4571 = vsel %vm732, %v4548, 0
      %v4574 = vsel %vm732, %v4549, 0
      %v4577 = vsel %vm732, %v4550, 0
      %v4580 = vsel %vm732, %v4551, 0
      %v4583 = vsel %vm732, %v4552, 0
      %v4586 = vsel %vm732, %v4553, 0
      %v4589 = vsel %vm732, %v4554, 0
      %v4592 = vsel %vm732, %v4555, 0
      %v4595 = vsel %vm732, %v4556, 0
      %v4598 = vsel %vm732, %v4557, 0
      %v4601 = vsel %vm732, %v4558, 0
      %v4604 = vsel %vm732, %v4559, 0
      %v4607 = vsel %vm732, %v4560, 0
      %v4610 = vsel %vm781, %v4512, 0
      %4612 = vmatprep.subr.bf16.mxu0 0
      %4613 = vmatpush1.bf16.msra.mxu0 %v4610
      %4614 = vmatprep.subr.bf16.mxu0 0
      %4615 = vmatpush1.bf16.msra.mxu0 0
      %4616 = vmatprep.subr.bf16.mxu0 0
      %4617 = vmatpush1.bf16.msra.mxu0 0
      %4618 = vmatprep.subr.bf16.mxu0 0
      %4619 = vmatpush1.bf16.msra.mxu0 0
      %4620 = vmatprep.subr.bf16.mxu0 0
      %4621 = vmatpush1.bf16.msra.mxu0 0
      %4622 = vmatprep.subr.bf16.mxu0 0
      %4623 = vmatpush1.bf16.msra.mxu0 0
      %4624 = vmatprep.subr.bf16.mxu0 0
      %4625 = vmatpush1.bf16.msra.mxu0 0
      %4626 = vmatprep.subr.bf16.mxu0 0
      %4627 = vmatpush1.bf16.msra.mxu0 0
      %4628 = vmatprep.subr.bf16.mxu0 0
      %4629 = vmatpush1.bf16.msra.mxu0 0
      %4630 = vmatprep.subr.bf16.mxu0 0
      %4631 = vmatpush1.bf16.msra.mxu0 0
      %4632 = vmatprep.subr.bf16.mxu0 0
      %4633 = vmatpush1.bf16.msra.mxu0 0
      %4634 = vmatprep.subr.bf16.mxu0 0
      %4635 = vmatpush1.bf16.msra.mxu0 0
      %4636 = vmatprep.subr.bf16.mxu0 0
      %4637 = vmatpush1.bf16.msra.mxu0 0
      %4638 = vmatprep.subr.bf16.mxu0 0
      %4639 = vmatpush1.bf16.msra.mxu0 0
      %4640 = vmatprep.subr.bf16.mxu0 0
      %4641 = vmatpush1.bf16.msra.mxu0 0
      %4642 = vmatprep.subr.bf16.mxu0 0
      %4643 = vmatpush1.bf16.msra.mxu0 0
      %4644 = vmatprep.mubr.bf16.mxu0 0
      %4645 = vmatmul.mubr.bf16.gmra.mrb[0].mxu0 %v4562
      %v4646 = vpop.f32.mrb[0].mxu0
      %v4647 = vadd.f32 0.0, %v4646
      %v4648 = vpop.f32.mrb[0].mxu0
      %v4649 = vpop.f32.mrb[0].mxu0
      %v4650 = vadd.f32 0.0, %v4649
      %v4651 = vpop.f32.mrb[0].mxu0
      %4652 = vmatprep.mubr.bf16.mxu0 0
      %4653 = vmatmul.mubr.bf16.gmra.mrb[0].mxu0 %v4565
      %v4654 = vpop.f32.mrb[0].mxu0
      %v4655 = vadd.f32 0.0, %v4654
      %v4656 = vpop.f32.mrb[0].mxu0
      %v4657 = vpop.f32.mrb[0].mxu0
      %v4658 = vadd.f32 0.0, %v4657
      %v4659 = vpop.f32.mrb[0].mxu0
      %4660 = vmatprep.mubr.bf16.mxu0 0
      %4661 = vmatmul.mubr.bf16.gmra.mrb[0].mxu0 %v4568
      %v4662 = vpop.f32.mrb[0].mxu0
      %v4663 = vadd.f32 0.0, %v4662
      %v4664 = vpop.f32.mrb[0].mxu0
      %v4665 = vpop.f32.mrb[0].mxu0
      %v4666 = vadd.f32 0.0, %v4665
      %v4667 = vpop.f32.mrb[0].mxu0
      %4668 = vmatprep.mubr.bf16.mxu0 0
      %4669 = vmatmul.mubr.bf16.gmra.mrb[0].mxu0 %v4571
      %v4670 = vpop.f32.mrb[0].mxu0
      %v4671 = vadd.f32 0.0, %v4670
      %v4672 = vpop.f32.mrb[0].mxu0
      %v4673 = vpop.f32.mrb[0].mxu0
      %v4674 = vadd.f32 0.0, %v4673
      %v4675 = vpop.f32.mrb[0].mxu0
      %4676 = vmatprep.mubr.bf16.mxu0 0
      %4677 = vmatmul.mubr.bf16.gmra.mrb[0].mxu0 %v4574
      %v4678 = vpop.f32.mrb[0].mxu0
      %v4679 = vadd.f32 0.0, %v4678
      %v4680 = vpop.f32.mrb[0].mxu0
      %v4681 = vpop.f32.mrb[0].mxu0
      %v4682 = vadd.f32 0.0, %v4681
      %v4683 = vpop.f32.mrb[0].mxu0
      %4684 = vmatprep.mubr.bf16.mxu0 0
      %4685 = vmatmul.mubr.bf16.gmra.mrb[0].mxu0 %v4577
      %v4686 = vpop.f32.mrb[0].mxu0
      %v4687 = vadd.f32 0.0, %v4686
      %v4688 = vpop.f32.mrb[0].mxu0
      %v4689 = vpop.f32.mrb[0].mxu0
      %v4690 = vadd.f32 0.0, %v4689
      %v4691 = vpop.f32.mrb[0].mxu0
      %4692 = vmatprep.mubr.bf16.mxu0 0
      %4693 = vmatmul.mubr.bf16.gmra.mrb[0].mxu0 %v4580
      %v4694 = vpop.f32.mrb[0].mxu0
      %v4695 = vadd.f32 0.0, %v4694
      %v4696 = vpop.f32.mrb[0].mxu0
      %v4697 = vpop.f32.mrb[0].mxu0
      %v4698 = vadd.f32 0.0, %v4697
      %v4699 = vpop.f32.mrb[0].mxu0
      %4700 = vmatprep.mubr.bf16.mxu0 0
      %4701 = vmatmul.mubr.bf16.gmra.mrb[0].mxu0 %v4583
      %v4702 = vpop.f32.mrb[0].mxu0
      %v4703 = vadd.f32 0.0, %v4702
      %v4704 = vpop.f32.mrb[0].mxu0
      %v4705 = vpop.f32.mrb[0].mxu0
      %v4706 = vadd.f32 0.0, %v4705
      %v4707 = vpop.f32.mrb[0].mxu0
      %4708 = vmatprep.mubr.bf16.mxu0 0
      %4709 = vmatmul.mubr.bf16.gmra.mrb[0].mxu0 %v4586
      %v4710 = vpop.f32.mrb[0].mxu0
      %v4711 = vadd.f32 0.0, %v4710
      %v4712 = vpop.f32.mrb[0].mxu0
      %v4713 = vpop.f32.mrb[0].mxu0
      %v4714 = vadd.f32 0.0, %v4713
      %v4715 = vpop.f32.mrb[0].mxu0
      %4716 = vmatprep.mubr.bf16.mxu0 0
      %4717 = vmatmul.mubr.bf16.gmra.mrb[0].mxu0 %v4589
      %v4718 = vpop.f32.mrb[0].mxu0
      %v4719 = vadd.f32 0.0, %v4718
      %v4720 = vpop.f32.mrb[0].mxu0
      %v4721 = vpop.f32.mrb[0].mxu0
      %v4722 = vadd.f32 0.0, %v4721
      %v4723 = vpop.f32.mrb[0].mxu0
      %4724 = vmatprep.mubr.bf16.mxu0 0
      %4725 = vmatmul.mubr.bf16.gmra.mrb[0].mxu0 %v4592
      %v4726 = vpop.f32.mrb[0].mxu0
      %v4727 = vadd.f32 0.0, %v4726
      %v4728 = vpop.f32.mrb[0].mxu0
      %v4729 = vpop.f32.mrb[0].mxu0
      %v4730 = vadd.f32 0.0, %v4729
      %v4731 = vpop.f32.mrb[0].mxu0
      %4732 = vmatprep.mubr.bf16.mxu0 0
      %4733 = vmatmul.mubr.bf16.gmra.mrb[0].mxu0 %v4595
      %v4734 = vpop.f32.mrb[0].mxu0
      %v4735 = vadd.f32 0.0, %v4734
      %v4736 = vpop.f32.mrb[0].mxu0
      %v4737 = vpop.f32.mrb[0].mxu0
      %v4738 = vadd.f32 0.0, %v4737
      %v4739 = vpop.f32.mrb[0].mxu0
      %4740 = vmatprep.mubr.bf16.mxu0 0
      %4741 = vmatmul.mubr.bf16.gmra.mrb[0].mxu0 %v4598
      %v4742 = vpop.f32.mrb[0].mxu0
      %v4743 = vadd.f32 0.0, %v4742
      %v4744 = vpop.f32.mrb[0].mxu0
      %v4745 = vpop.f32.mrb[0].mxu0
      %v4746 = vadd.f32 0.0, %v4745
      %v4747 = vpop.f32.mrb[0].mxu0
      %4748 = vmatprep.mubr.bf16.mxu0 0
      %4749 = vmatmul.mubr.bf16.gmra.mrb[0].mxu0 %v4601
      %v4750 = vpop.f32.mrb[0].mxu0
      %v4751 = vadd.f32 0.0, %v4750
      %v4752 = vpop.f32.mrb[0].mxu0
      %v4753 = vpop.f32.mrb[0].mxu0
      %v4754 = vadd.f32 0.0, %v4753
      %v4755 = vpop.f32.mrb[0].mxu0
      %4756 = vmatprep.mubr.bf16.mxu0 0
      %4757 = vmatmul.mubr.bf16.gmra.mrb[0].mxu0 %v4604
      %v4758 = vpop.f32.mrb[0].mxu0
      %v4759 = vadd.f32 0.0, %v4758
      %v4760 = vpop.f32.mrb[0].mxu0
      %v4761 = vpop.f32.mrb[0].mxu0
      %v4762 = vadd.f32 0.0, %v4761
      %v4763 = vpop.f32.mrb[0].mxu0
      %4764 = vmatprep.mubr.bf16.mxu0 0
      %4765 = vmatmul.mubr.bf16.gmra.mrb[0].mxu0 %v4607
      %v4766 = vpop.f32.mrb[0].mxu0
      %v4767 = vadd.f32 0.0, %v4766
      %v4768 = vpop.f32.mrb[0].mxu0
      %v4769 = vpop.f32.mrb[0].mxu0
      %v4770 = vadd.f32 0.0, %v4769
      %v4771 = vpop.f32.mrb[0].mxu0
      %4772 = vdwg.mxu0
      %v4773 = vadd.f32 %v4303, %v4647
      %v4774 = vadd.f32 %v4304, %v4650
      %v4775 = vadd.f32 %v4305, %v4655
      %v4776 = vadd.f32 %v4306, %v4658
      %v4777 = vadd.f32 %v4307, %v4663
      %v4778 = vadd.f32 %v4308, %v4666
      %v4779 = vadd.f32 %v4309, %v4671
      %v4780 = vadd.f32 %v4310, %v4674
      %v4781 = vadd.f32 %v4311, %v4679
      %v4782 = vadd.f32 %v4312, %v4682
      %v4783 = vadd.f32 %v4313, %v4687
      %v4784 = vadd.f32 %v4314, %v4690
      %v4785 = vadd.f32 %v4315, %v4695
      %v4786 = vadd.f32 %v4316, %v4698
      %v4787 = vadd.f32 %v4317, %v4703
      %v4788 = vadd.f32 %v4318, %v4706
      %v4789 = vadd.f32 %v4319, %v4711
      %v4790 = vadd.f32 %v4320, %v4714
      %v4791 = vadd.f32 %v4321, %v4719
      %v4792 = vadd.f32 %v4322, %v4722
      %v4793 = vadd.f32 %v4323, %v4727
      %v4794 = vadd.f32 %v4324, %v4730
      %v4795 = vadd.f32 %v4325, %v4735
      %v4796 = vadd.f32 %v4326, %v4738
      %v4797 = vadd.f32 %v4327, %v4743
      %v4798 = vadd.f32 %v4328, %v4746
      %v4799 = vadd.f32 %v4329, %v4751
      %v4800 = vadd.f32 %v4330, %v4754
      %v4801 = vadd.f32 %v4331, %v4759
      %v4802 = vadd.f32 %v4332, %v4762
      %v4803 = vadd.f32 %v4333, %v4767
      %v4804 = vadd.f32 %v4334, %v4770
      %v4805 = vld [vmem:[%s239] sm:$0xf]
      %v4806 = vld [vmem:[%s239 + $0x4] sm:$0xf]
      %v4807 = vld [vmem:[%s239 + $0x8] sm:$0xf]
      %v4808 = vld [vmem:[%s239 + $0xc] sm:$0xf]
      %v4809 = vld [vmem:[%s239 + $0x10] sm:$0xf]
      %v4810 = vld [vmem:[%s239 + $0x14] sm:$0xf]
      %v4811 = vld [vmem:[%s239 + $0x18] sm:$0xf]
      %v4812 = vld [vmem:[%s239 + $0x1c] sm:$0xf]
      %v4813 = vld [vmem:[%s239 + $0x20] sm:$0xf]
      %v4814 = vld [vmem:[%s239 + $0x24] sm:$0xf]
      %v4815 = vld [vmem:[%s239 + $0x28] sm:$0xf]
      %v4816 = vld [vmem:[%s239 + $0x2c] sm:$0xf]
      %v4817 = vld [vmem:[%s239 + $0x30] sm:$0xf]
      %v4818 = vld [vmem:[%s239 + $0x34] sm:$0xf]
      %v4819 = vld [vmem:[%s239 + $0x38] sm:$0xf]
      %v4820 = vld [vmem:[%s239 + $0x3c] sm:$0xf]
      %v4821 = vld [vmem:[%s239 + $0x40] sm:$0xf]
      %v4822 = vld [vmem:[%s239 + $0x44] sm:$0xf]
      %v4823 = vld [vmem:[%s239 + $0x48] sm:$0xf]
      %v4824 = vld [vmem:[%s239 + $0x4c] sm:$0xf]
      %v4825 = vld [vmem:[%s239 + $0x50] sm:$0xf]
      %v4826 = vld [vmem:[%s239 + $0x54] sm:$0xf]
      %v4827 = vld [vmem:[%s239 + $0x58] sm:$0xf]
      %v4828 = vld [vmem:[%s239 + $0x5c] sm:$0xf]
      %v4829 = vld [vmem:[%s239 + $0x60] sm:$0xf]
      %v4830 = vld [vmem:[%s239 + $0x64] sm:$0xf]
      %v4831 = vld [vmem:[%s239 + $0x68] sm:$0xf]
      %v4832 = vld [vmem:[%s239 + $0x6c] sm:$0xf]
      %v4833 = vld [vmem:[%s239 + $0x70] sm:$0xf]
      %v4834 = vld [vmem:[%s239 + $0x74] sm:$0xf]
      %v4835 = vld [vmem:[%s239 + $0x78] sm:$0xf]
      %v4836 = vld [vmem:[%s239 + $0x7c] sm:$0xf]
      %v4837 = vunpack.c.l.bf16 %v4805
      %v4838 = vunpack.c.l.bf16 %v4806
      %v4839 = vunpack.c.l.bf16 %v4807
      %v4840 = vunpack.c.l.bf16 %v4808
      %v4841 = vunpack.c.l.bf16 %v4809
      %v4842 = vunpack.c.l.bf16 %v4810
      %v4843 = vunpack.c.l.bf16 %v4811
      %v4844 = vunpack.c.l.bf16 %v4812
      %v4845 = vunpack.c.l.bf16 %v4813
      %v4846 = vunpack.c.l.bf16 %v4814
      %v4847 = vunpack.c.l.bf16 %v4815
      %v4848 = vunpack.c.l.bf16 %v4816
      %v4849 = vunpack.c.l.bf16 %v4817
      %v4850 = vunpack.c.l.bf16 %v4818
      %v4851 = vunpack.c.l.bf16 %v4819
      %v4852 = vunpack.c.l.bf16 %v4820
      %v4853 = vunpack.c.l.bf16 %v4821
      %v4854 = vunpack.c.l.bf16 %v4822
      %v4855 = vunpack.c.l.bf16 %v4823
      %v4856 = vunpack.c.l.bf16 %v4824
      %v4857 = vunpack.c.l.bf16 %v4825
      %v4858 = vunpack.c.l.bf16 %v4826
      %v4859 = vunpack.c.l.bf16 %v4827
      %v4860 = vunpack.c.l.bf16 %v4828
      %v4861 = vunpack.c.l.bf16 %v4829
      %v4862 = vunpack.c.l.bf16 %v4830
      %v4863 = vunpack.c.l.bf16 %v4831
      %v4864 = vunpack.c.l.bf16 %v4832
      %v4865 = vunpack.c.l.bf16 %v4833
      %v4866 = vunpack.c.l.bf16 %v4834
      %v4867 = vunpack.c.l.bf16 %v4835
      %v4868 = vunpack.c.l.bf16 %v4836
      %v4869 = vld [vmem:[%s2] sm:$0x1]
      %v4871 = vlaneseq
      %v4872 = vshrl.u32 %v4871, 7
      %v4873 = vsub.s32 0, %v4872
      %v4874 = vrot.slane %v4869, %v4873
      %v4876 = vmul.f32 %v4773, %v4874
      %v4877 = vmul.f32 %v4774, %v4874
      %v4878 = vmul.f32 %v4775, %v4874
      %v4879 = vmul.f32 %v4776, %v4874
      %v4880 = vmul.f32 %v4777, %v4874
      %v4881 = vmul.f32 %v4778, %v4874
      %v4882 = vmul.f32 %v4779, %v4874
      %v4883 = vmul.f32 %v4780, %v4874
      %v4884 = vmul.f32 %v4781, %v4874
      %v4885 = vmul.f32 %v4782, %v4874
      %v4886 = vmul.f32 %v4783, %v4874
      %v4887 = vmul.f32 %v4784, %v4874
      %v4888 = vmul.f32 %v4785, %v4874
      %v4889 = vmul.f32 %v4786, %v4874
      %v4890 = vmul.f32 %v4787, %v4874
      %v4891 = vmul.f32 %v4788, %v4874
      %v4892 = vmul.f32 %v4789, %v4874
      %v4893 = vmul.f32 %v4790, %v4874
      %v4894 = vmul.f32 %v4791, %v4874
      %v4895 = vmul.f32 %v4792, %v4874
      %v4896 = vmul.f32 %v4793, %v4874
      %v4897 = vmul.f32 %v4794, %v4874
      %v4898 = vmul.f32 %v4795, %v4874
      %v4899 = vmul.f32 %v4796, %v4874
      %v4900 = vmul.f32 %v4797, %v4874
      %v4901 = vmul.f32 %v4798, %v4874
      %v4902 = vmul.f32 %v4799, %v4874
      %v4903 = vmul.f32 %v4800, %v4874
      %v4904 = vmul.f32 %v4801, %v4874
      %v4905 = vmul.f32 %v4802, %v4874
      %v4906 = vmul.f32 %v4803, %v4874
      %v4907 = vmul.f32 %v4804, %v4874
      %v4908 = vld [vmem:[%s3] sm:$0x1]
      %v4910 = vlaneseq
      %v4911 = vshrl.u32 %v4910, 7
      %v4912 = vsub.s32 0, %v4911
      %v4913 = vrot.slane %v4908, %v4912
      %v4915 = vadd.f32 %v4876, %v4913
      %v4916 = vadd.f32 %v4877, %v4913
      %v4917 = vadd.f32 %v4878, %v4913
      %v4918 = vadd.f32 %v4879, %v4913
      %v4919 = vadd.f32 %v4880, %v4913
      %v4920 = vadd.f32 %v4881, %v4913
      %v4921 = vadd.f32 %v4882, %v4913
      %v4922 = vadd.f32 %v4883, %v4913
      %v4923 = vadd.f32 %v4884, %v4913
      %v4924 = vadd.f32 %v4885, %v4913
      %v4925 = vadd.f32 %v4886, %v4913
      %v4926 = vadd.f32 %v4887, %v4913
      %v4927 = vadd.f32 %v4888, %v4913
      %v4928 = vadd.f32 %v4889, %v4913
      %v4929 = vadd.f32 %v4890, %v4913
      %v4930 = vadd.f32 %v4891, %v4913
      %v4931 = vadd.f32 %v4892, %v4913
      %v4932 = vadd.f32 %v4893, %v4913
      %v4933 = vadd.f32 %v4894, %v4913
      %v4934 = vadd.f32 %v4895, %v4913
      %v4935 = vadd.f32 %v4896, %v4913
      %v4936 = vadd.f32 %v4897, %v4913
      %v4937 = vadd.f32 %v4898, %v4913
      %v4938 = vadd.f32 %v4899, %v4913
      %v4939 = vadd.f32 %v4900, %v4913
      %v4940 = vadd.f32 %v4901, %v4913
      %v4941 = vadd.f32 %v4902, %v4913
      %v4942 = vadd.f32 %v4903, %v4913
      %v4943 = vadd.f32 %v4904, %v4913
      %v4944 = vadd.f32 %v4905, %v4913
      %v4945 = vadd.f32 %v4906, %v4913
      %v4946 = vadd.f32 %v4907, %v4913
      %v4947 = vadd.f32 %v4915, %v4837
      %v4948 = vadd.f32 %v4916, %v4838
      %v4949 = vadd.f32 %v4917, %v4839
      %v4950 = vadd.f32 %v4918, %v4840
      %v4951 = vadd.f32 %v4919, %v4841
      %v4952 = vadd.f32 %v4920, %v4842
      %v4953 = vadd.f32 %v4921, %v4843
      %v4954 = vadd.f32 %v4922, %v4844
      %v4955 = vadd.f32 %v4923, %v4845
      %v4956 = vadd.f32 %v4924, %v4846
      %v4957 = vadd.f32 %v4925, %v4847
      %v4958 = vadd.f32 %v4926, %v4848
      %v4959 = vadd.f32 %v4927, %v4849
      %v4960 = vadd.f32 %v4928, %v4850
      %v4961 = vadd.f32 %v4929, %v4851
      %v4962 = vadd.f32 %v4930, %v4852
      %v4963 = vadd.f32 %v4931, %v4853
      %v4964 = vadd.f32 %v4932, %v4854
      %v4965 = vadd.f32 %v4933, %v4855
      %v4966 = vadd.f32 %v4934, %v4856
      %v4967 = vadd.f32 %v4935, %v4857
      %v4968 = vadd.f32 %v4936, %v4858
      %v4969 = vadd.f32 %v4937, %v4859
      %v4970 = vadd.f32 %v4938, %v4860
      %v4971 = vadd.f32 %v4939, %v4861
      %v4972 = vadd.f32 %v4940, %v4862
      %v4973 = vadd.f32 %v4941, %v4863
      %v4974 = vadd.f32 %v4942, %v4864
      %v4975 = vadd.f32 %v4943, %v4865
      %v4976 = vadd.f32 %v4944, %v4866
      %v4977 = vadd.f32 %v4945, %v4867
      %v4978 = vadd.f32 %v4946, %v4868
      %v4979 = vmax.f32 %v4947, 0.0
      %v4980 = vmax.f32 %v4948, 0.0
      %v4981 = vmax.f32 %v4949, 0.0
      %v4982 = vmax.f32 %v4950, 0.0
      %v4983 = vmax.f32 %v4951, 0.0
      %v4984 = vmax.f32 %v4952, 0.0
      %v4985 = vmax.f32 %v4953, 0.0
      %v4986 = vmax.f32 %v4954, 0.0
      %v4987 = vmax.f32 %v4955, 0.0
      %v4988 = vmax.f32 %v4956, 0.0
      %v4989 = vmax.f32 %v4957, 0.0
      %v4990 = vmax.f32 %v4958, 0.0
      %v4991 = vmax.f32 %v4959, 0.0
      %v4992 = vmax.f32 %v4960, 0.0
      %v4993 = vmax.f32 %v4961, 0.0
      %v4994 = vmax.f32 %v4962, 0.0
      %v4995 = vmax.f32 %v4963, 0.0
      %v4996 = vmax.f32 %v4964, 0.0
      %v4997 = vmax.f32 %v4965, 0.0
      %v4998 = vmax.f32 %v4966, 0.0
      %v4999 = vmax.f32 %v4967, 0.0
      %v5000 = vmax.f32 %v4968, 0.0
      %v5001 = vmax.f32 %v4969, 0.0
      %v5002 = vmax.f32 %v4970, 0.0
      %v5003 = vmax.f32 %v4971, 0.0
      %v5004 = vmax.f32 %v4972, 0.0
      %v5005 = vmax.f32 %v4973, 0.0
      %v5006 = vmax.f32 %v4974, 0.0
      %v5007 = vmax.f32 %v4975, 0.0
      %v5008 = vmax.f32 %v4976, 0.0
      %v5009 = vmax.f32 %v4977, 0.0
      %v5010 = vmax.f32 %v4978, 0.0
      %5011 = vst.msk [vmem:[%s244] sm:$0xff] %vm732, %v4979
      %5012 = vst.msk [vmem:[%s244 + $0x8] sm:$0xff] %vm732, %v4980
      %5013 = vst.msk [vmem:[%s244 + $0x10] sm:$0xff] %vm732, %v4981
      %5014 = vst.msk [vmem:[%s244 + $0x18] sm:$0xff] %vm732, %v4982
      %5015 = vst.msk [vmem:[%s244 + $0x20] sm:$0xff] %vm732, %v4983
      %5016 = vst.msk [vmem:[%s244 + $0x28] sm:$0xff] %vm732, %v4984
      %5017 = vst.msk [vmem:[%s244 + $0x30] sm:$0xff] %vm732, %v4985
      %5018 = vst.msk [vmem:[%s244 + $0x38] sm:$0xff] %vm732, %v4986
      %5019 = vst.msk [vmem:[%s244 + $0x40] sm:$0xff] %vm732, %v4987
      %5020 = vst.msk [vmem:[%s244 + $0x48] sm:$0xff] %vm732, %v4988
      %5021 = vst.msk [vmem:[%s244 + $0x50] sm:$0xff] %vm732, %v4989
      %5022 = vst.msk [vmem:[%s244 + $0x58] sm:$0xff] %vm732, %v4990
      %5023 = vst.msk [vmem:[%s244 + $0x60] sm:$0xff] %vm732, %v4991
      %5024 = vst.msk [vmem:[%s244 + $0x68] sm:$0xff] %vm732, %v4992
      %5025 = vst.msk [vmem:[%s244 + $0x70] sm:$0xff] %vm732, %v4993
      %5026 = vst.msk [vmem:[%s244 + $0x78] sm:$0xff] %vm732, %v4994
      %5027 = vst.msk [vmem:[%s244 + $0x80] sm:$0xff] %vm732, %v4995
      %5028 = vst.msk [vmem:[%s244 + $0x88] sm:$0xff] %vm732, %v4996
      %5029 = vst.msk [vmem:[%s244 + $0x90] sm:$0xff] %vm732, %v4997
      %5030 = vst.msk [vmem:[%s244 + $0x98] sm:$0xff] %vm732, %v4998
      %5031 = vst.msk [vmem:[%s244 + $0xa0] sm:$0xff] %vm732, %v4999
      %5032 = vst.msk [vmem:[%s244 + $0xa8] sm:$0xff] %vm732, %v5000
      %5033 = vst.msk [vmem:[%s244 + $0xb0] sm:$0xff] %vm732, %v5001
      %5034 = vst.msk [vmem:[%s244 + $0xb8] sm:$0xff] %vm732, %v5002
      %5035 = vst.msk [vmem:[%s244 + $0xc0] sm:$0xff] %vm732, %v5003
      %5036 = vst.msk [vmem:[%s244 + $0xc8] sm:$0xff] %vm732, %v5004
      %5037 = vst.msk [vmem:[%s244 + $0xd0] sm:$0xff] %vm732, %v5005
      %5038 = vst.msk [vmem:[%s244 + $0xd8] sm:$0xff] %vm732, %v5006
      %5039 = vst.msk [vmem:[%s244 + $0xe0] sm:$0xff] %vm732, %v5007
      %5040 = vst.msk [vmem:[%s244 + $0xe8] sm:$0xff] %vm732, %v5008
      %5041 = vst.msk [vmem:[%s244 + $0xf0] sm:$0xff] %vm732, %v5009
      %5042 = vst.msk [vmem:[%s244 + $0xf8] sm:$0xff] %vm732, %v5010
      %p5043 = scmp.lt.s32.totalorder %s16, 1
      %s5044 = scalar_select %p5043, %s16, 1
      %s5045 = smul.addr %s5044, 32
      %s5046 = smul.addr %s5045, 8
      %s5047 = scalar_lea.vmem %s5, %s5046
      // Predicated region
      $region41: #{basic_block_forward.3} parent=39 // pred_check
        %p5048 = pneg %p149
      $region42: #{basic_block_forward.3} parent=39 // pred_check_branch
        %5050 = sbr.rel (%p5048) target = $region44
      $region43: #{basic_block_forward.3} parent=39 // pred_region
        _
      $region44: #{basic_block_forward.3} parent=39 // pred_fallthru
        _
    $region40: #{basic_block_forward.3} parent=5 // pred_fallthru
      _
    %p5051 = scmp.le.s32.totalorder 2, %s11
    // Predicated region
    $region45: #{basic_block_forward.3} parent=5 // pred_check
      %p5052 = pneg %p5051
    $region46: #{basic_block_forward.3} parent=5 // pred_check_branch
      %5054 = sbr.rel (%p5052) target = $region48
    $region47: #{basic_block_forward.3} parent=5 // pred_region
      %s5055 = ssub.s32 %s11, 2
      // Predicated region
      $region49: #{basic_block_forward.3} parent=47 // pred_check
        %p5056 = pneg %p155
      $region50: #{basic_block_forward.3} parent=47 // pred_check_branch
        %5058 = sbr.rel (%p5056) target = $region52
      $region51: #{basic_block_forward.3} parent=47 // pred_region
        %p5059 = scmp.lt.s32.totalorder %s17, 1
        %s5060 = scalar_select %p5059, %s17, 1
        %s5061 = smul.addr %s5060, 32
        %s5062 = smul.addr %s5061, 8
        %s5063 = scalar_lea.vmem %s5, %s5062
      $region52: #{basic_block_forward.3} parent=47 // pred_fallthru
        _
    $region48: #{basic_block_forward.3} parent=5 // pred_fallthru
      _
  $region6: #{basic_block_forward.3} parent=0 // loop_footer
    %s15 = sadd.s32 1, %s11
  $region7: #{basic_block_forward.3} parent=0 // loop_footer_branch
    %10 = sbr.rel target = $region3
  $region8: #{basic_block_forward.3} parent=0 // loop_exit
    _

// kernel: basic_block_forward.2
$region0: #{basic_block_forward.2}
  #allocation0 [shape = 'u32[]', space=smem, size = 0x4, offset = 0x4, fixed_abs, tag = 'smem constant byte address 0x4 - core index']
  #allocation1 [shape = 'u32[144,128]{1,0:T(1,128)}', space=vmem, size = 0x12000, scoped, tag = 'internal scratch']
  %s0 = inlined_call_operand.vmem [shape: bf16[2,18,18,4], index: 0, kind: input, shape index: {}]
  %s1 = inlined_call_operand.vmem [shape: bf16[9,4,4], index: 1, kind: input, shape index: {}]
  %s2 = inlined_call_operand.vmem [shape: f32[1,4], index: 2, kind: input, shape index: {}]
  %s3 = inlined_call_operand.vmem [shape: f32[1,4], index: 3, kind: input, shape index: {}]
  %s4 = inlined_call_operand.vmem [shape: bf16[2,16,16,4], index: 4, kind: output, shape index: {}]
  %s5 = sld [smem:[#allocation0]]
  $region49: #{basic_block_forward.2} parent=0
    _
  %s7 = ssub.s32 1, %s5
  %s8 = scalar_select 0, %s7, %s5
  loop: start=0, step=1, limit=4
  $region2: #{basic_block_forward.2} parent=0 // loop_pre_header
    _
  $region3: #{basic_block_forward.2} parent=0 // loop_header
    %s10 = sphi 0, %s14
    %p11 = scmp.ge.s32.totalorder %s10, 4
    %s20 = sphi 0, %s22
    %s23 = sphi 0, %s20
    %s24 = sphi 0, %s23
    %s40 = sphi 0, %s24
    %s44 = sphi 0, %s44
    %s46 = sphi 0, %s44
    %s47 = sphi 0, %s46
    %s61 = sphi 0, %s47
    %s65 = sphi 0, %s65
    %s67 = sphi 0, %s65
    %s68 = sphi 0, %s67
    %s82 = sphi 0, %s68
    %s86 = sphi 0, %s86
    %s88 = sphi 0, %s86
    %s89 = sphi 0, %s88
    %s103 = sphi 0, %s89
    %s109 = sphi 0, %s111
    %s112 = sphi 0, %s109
    %s113 = sphi 0, %s112
    %s129 = sphi 0, %s113
  $region4: #{basic_block_forward.2} parent=0 // loop_header_branch
    %13 = sbr.rel (%p11) target = $region8
  $region5: #{basic_block_forward.2} parent=0 // loop_body
    %s15 = ssub.s32 %s10, 1
    %s16 = ssub.s32 %s10, 2
    %s17 = sadd.s32 %s10, 1
    %s18 = ssub.s32 %s10, %s17
    %p19 = scmp.eq.s32.totalorder %s18, 0
    %s21 = sadd.s32 %s20, 1
    %s22 = scalar_select %p19, %s20, %s21
    %p25 = pneg %p19
    %p26 = scmp.eq.s32.totalorder %s10, 1
    %p27 = por %p25, %p26
    %p28 = scmp.ne.s32.totalorder %s20, %s23
    %p29 = scmp.eq.s32.totalorder %s10, 0
    %p30 = por %p28, %p29
    %p31 = scmp.ne.s32.totalorder %s20, %s23
    %p32 = scmp.eq.s32.totalorder %s15, 1
    %p33 = por %p31, %p32
    %p34 = scmp.ne.s32.totalorder %s23, %s24
    %p35 = scmp.eq.s32.totalorder %s15, 0
    %p36 = por %p34, %p35
    %p37 = scmp.ne.s32.totalorder %s23, %s24
    %p38 = scmp.eq.s32.totalorder %s16, 1
    %p39 = por %p37, %p38
    %p41 = scmp.ne.s32.totalorder %s24, %s40
    %p42 = scmp.eq.s32.totalorder %s16, 0
    %p43 = por %p41, %p42
    %s45 = sadd.s32 %s44, 1
    %p48 = scmp.eq.s32.totalorder %s10, 1
    %p49 = scmp.ne.s32.totalorder %s44, %s46
    %p50 = scmp.eq.s32.totalorder %s10, 0
    %p51 = por %p49, %p50
    %p52 = scmp.ne.s32.totalorder %s44, %s46
    %p53 = scmp.eq.s32.totalorder %s15, 1
    %p54 = por %p52, %p53
    %p55 = scmp.ne.s32.totalorder %s46, %s47
    %p56 = scmp.eq.s32.totalorder %s15, 0
    %p57 = por %p55, %p56
    %p58 = scmp.ne.s32.totalorder %s46, %s47
    %p59 = scmp.eq.s32.totalorder %s16, 1
    %p60 = por %p58, %p59
    %p62 = scmp.ne.s32.totalorder %s47, %s61
    %p63 = scmp.eq.s32.totalorder %s16, 0
    %p64 = por %p62, %p63
    %s66 = sadd.s32 %s65, 1
    %p69 = scmp.eq.s32.totalorder %s10, 1
    %p70 = scmp.ne.s32.totalorder %s65, %s67
    %p71 = scmp.eq.s32.totalorder %s10, 0
    %p72 = por %p70, %p71
    %p73 = scmp.ne.s32.totalorder %s65, %s67
    %p74 = scmp.eq.s32.totalorder %s15, 1
    %p75 = por %p73, %p74
    %p76 = scmp.ne.s32.totalorder %s67, %s68
    %p77 = scmp.eq.s32.totalorder %s15, 0
    %p78 = por %p76, %p77
    %p79 = scmp.ne.s32.totalorder %s67, %s68
    %p80 = scmp.eq.s32.totalorder %s16, 1
    %p81 = por %p79, %p80
    %p83 = scmp.ne.s32.totalorder %s68, %s82
    %p84 = scmp.eq.s32.totalorder %s16, 0
    %p85 = por %p83, %p84
    %s87 = sadd.s32 %s86, 1
    %p90 = scmp.eq.s32.totalorder %s10, 1
    %p91 = scmp.ne.s32.totalorder %s86, %s88
    %p92 = scmp.eq.s32.totalorder %s10, 0
    %p93 = por %p91, %p92
    %p94 = scmp.ne.s32.totalorder %s86, %s88
    %p95 = scmp.eq.s32.totalorder %s15, 1
    %p96 = por %p94, %p95
    %p97 = scmp.ne.s32.totalorder %s88, %s89
    %p98 = scmp.eq.s32.totalorder %s15, 0
    %p99 = por %p97, %p98
    %p100 = scmp.ne.s32.totalorder %s88, %s89
    %p101 = scmp.eq.s32.totalorder %s16, 1
    %p102 = por %p100, %p101
    %p104 = scmp.ne.s32.totalorder %s89, %s103
    %p105 = scmp.eq.s32.totalorder %s16, 0
    %p106 = por %p104, %p105
    %s107 = ssub.s32 %s10, %s17
    %p108 = scmp.eq.s32.totalorder %s107, 0
    %s110 = sadd.s32 %s109, 1
    %s111 = scalar_select %p108, %s109, %s110
    %p114 = pneg %p108
    %p115 = scmp.eq.s32.totalorder %s10, 1
    %p116 = por %p114, %p115
    %p117 = scmp.ne.s32.totalorder %s109, %s112
    %p118 = scmp.eq.s32.totalorder %s10, 0
    %p119 = por %p117, %p118
    %p120 = scmp.ne.s32.totalorder %s109, %s112
    %p121 = scmp.eq.s32.totalorder %s15, 1
    %p122 = por %p120, %p121
    %p123 = scmp.ne.s32.totalorder %s112, %s113
    %p124 = scmp.eq.s32.totalorder %s15, 0
    %p125 = por %p123, %p124
    %p126 = scmp.ne.s32.totalorder %s112, %s113
    %p127 = scmp.eq.s32.totalorder %s16, 1
    %p128 = por %p126, %p127
    %p130 = scmp.ne.s32.totalorder %s113, %s129
    %p131 = scmp.eq.s32.totalorder %s16, 0
    %p132 = por %p130, %p131
    %p133 = scmp.le.s32.totalorder 1, %s10
    %p134 = scmp.lt.s32.totalorder %s10, 3
    %p135 = pnand %p133, %p134
    %p136 = pneg %p135
    // Predicated region
    $region9: #{basic_block_forward.2} parent=5 // pred_check
      _
    $region10: #{basic_block_forward.2} parent=5 // pred_check_branch
      %138 = sbr.rel (%p135) target = $region12
    $region11: #{basic_block_forward.2} parent=5 // pred_region
      %s139 = ssub.s32 %s10, 1
      // Predicated region
      $region13: #{basic_block_forward.2} parent=11 // pred_check
        %p140 = pneg %p57
      $region14: #{basic_block_forward.2} parent=11 // pred_check_branch
        %142 = sbr.rel (%p140) target = $region16
      $region15: #{basic_block_forward.2} parent=11 // pred_region
        _
      $region16: #{basic_block_forward.2} parent=11 // pred_fallthru
        _
      // Predicated region
      $region17: #{basic_block_forward.2} parent=11 // pred_check
        %p143 = pneg %p78
      $region18: #{basic_block_forward.2} parent=11 // pred_check_branch
        %145 = sbr.rel (%p143) target = $region20
      $region19: #{basic_block_forward.2} parent=11 // pred_region
        _
      $region20: #{basic_block_forward.2} parent=11 // pred_fallthru
        _
      // Predicated region
      $region21: #{basic_block_forward.2} parent=11 // pred_check
        %p146 = pneg %p99
      $region22: #{basic_block_forward.2} parent=11 // pred_check_branch
        %148 = sbr.rel (%p146) target = $region24
      $region23: #{basic_block_forward.2} parent=11 // pred_region
        _
      $region24: #{basic_block_forward.2} parent=11 // pred_fallthru
        _
    $region12: #{basic_block_forward.2} parent=5 // pred_fallthru
      _
    %p149 = scmp.lt.s32.totalorder %s10, 2
    // Predicated region
    $region25: #{basic_block_forward.2} parent=5 // pred_check
      %p150 = pneg %p149
    $region26: #{basic_block_forward.2} parent=5 // pred_check_branch
      %152 = sbr.rel (%p150) target = $region28
    $region27: #{basic_block_forward.2} parent=5 // pred_region
      // Predicated region
      $region29: #{basic_block_forward.2} parent=27 // pred_check
        %p153 = pneg %p30
      $region30: #{basic_block_forward.2} parent=27 // pred_check_branch
        %155 = sbr.rel (%p153) target = $region32
      $region31: #{basic_block_forward.2} parent=27 // pred_region
        %p156 = scmp.lt.s32.totalorder %s10, 1
        %s157 = scalar_select %p156, %s10, 1
        %s158 = smul.addr %s157, 54
        %s159 = smul.addr %s158, 4
        %s160 = scalar_lea.vmem %s0, %s159
      $region32: #{basic_block_forward.2} parent=27 // pred_fallthru
        _
    $region28: #{basic_block_forward.2} parent=5 // pred_fallthru
      _
    %p161 = scmp.le.s32.totalorder 1, %s10
    %p162 = scmp.lt.s32.totalorder %s10, 3
    %p163 = pnand %p161, %p162
    %p164 = pneg %p163
    // Predicated region
    $region33: #{basic_block_forward.2} parent=5 // pred_check
      _
    $region34: #{basic_block_forward.2} parent=5 // pred_check_branch
      %166 = sbr.rel (%p163) target = $region36
    $region35: #{basic_block_forward.2} parent=5 // pred_region
      %s167 = ssub.s32 %s10, 1
      %p168 = scmp.lt.s32.totalorder %s15, 1
      %s169 = scalar_select %p168, %s15, 1
      %s170 = smul.addr %s169, 54
      %s171 = smul.addr %s170, 4
      %s172 = scalar_lea.vmem %s0, %s171
      %p173 = pneg %p36
      %p174 = pneg %p33
      %p175 = pneg %p57
      %p176 = pneg %p54
      %p177 = pneg %p78
      %p178 = pneg %p75
      %p179 = pneg %p99
      %p180 = pneg %p96
      %p181 = pneg %p125
      %p182 = pneg %p122
      %p183 = scmp.lt.s32.totalorder %s15, 1
      %s184 = scalar_select %p183, %s15, 1
      %s185 = smul.addr %s184, 32
      %s186 = smul.addr %s185, 4
      %s187 = scalar_lea.vmem %s4, %s186
      %p188 = scmp.lt.s32.totalorder %s15, 1
      %s189 = scalar_select %p188, %s15, 1
      %s190 = smul.addr %s189, 54
      %s191 = smul.addr %s190, 4
      %s192 = scalar_lea.vmem %s0, %s191
      %p193 = scmp.lt.s32.totalorder %s15, 1
      %s194 = scalar_select %p193, %s15, 1
      %s195 = smul.addr %s194, 32
      %s196 = smul.addr %s195, 4
      %s197 = scalar_lea.vmem %s4, %s196
      %v199 = vld [vmem:[%s192] sm:$0xf]
      %v200 = vld [vmem:[%s192 + $0x4] sm:$0xf]
      %v201 = vld [vmem:[%s192 + $0xc] sm:$0xf]
      %v202 = vld [vmem:[%s192 + $0x10] sm:$0xf]
      %v203 = vld [vmem:[%s192 + $0x18] sm:$0xf]
      %v204 = vld [vmem:[%s192 + $0x1c] sm:$0xf]
      %v205 = vld [vmem:[%s192 + $0x24] sm:$0xf]
      %v206 = vld [vmem:[%s192 + $0x28] sm:$0xf]
      %v207 = vld [vmem:[%s192 + $0x30] sm:$0xf]
      %v208 = vld [vmem:[%s192 + $0x34] sm:$0xf]
      %v209 = vld [vmem:[%s192 + $0x3c] sm:$0xf]
      %v210 = vld [vmem:[%s192 + $0x40] sm:$0xf]
      %v211 = vld [vmem:[%s192 + $0x48] sm:$0xf]
      %v212 = vld [vmem:[%s192 + $0x4c] sm:$0xf]
      %v213 = vld [vmem:[%s192 + $0x54] sm:$0xf]
      %v214 = vld [vmem:[%s192 + $0x58] sm:$0xf]
      %v215 = vld [vmem:[%s192 + $0x60] sm:$0xf]
      %v216 = vld [vmem:[%s192 + $0x64] sm:$0xf]
      %v217 = vld [vmem:[%s192 + $0x6c] sm:$0xf]
      %v218 = vld [vmem:[%s192 + $0x70] sm:$0xf]
      %v219 = vld [vmem:[%s192 + $0x78] sm:$0xf]
      %v220 = vld [vmem:[%s192 + $0x7c] sm:$0xf]
      %v221 = vld [vmem:[%s192 + $0x84] sm:$0xf]
      %v222 = vld [vmem:[%s192 + $0x88] sm:$0xf]
      %v223 = vld [vmem:[%s192 + $0x90] sm:$0xf]
      %v224 = vld [vmem:[%s192 + $0x94] sm:$0xf]
      %v225 = vld [vmem:[%s192 + $0x9c] sm:$0xf]
      %v226 = vld [vmem:[%s192 + $0xa0] sm:$0xf]
      %v227 = vld [vmem:[%s192 + $0xa8] sm:$0xf]
      %v228 = vld [vmem:[%s192 + $0xac] sm:$0xf]
      %v229 = vld [vmem:[%s192 + $0xb4] sm:$0xf]
      %v230 = vld [vmem:[%s192 + $0xb8] sm:$0xf]
      %v231 = vld [vmem:[%s1] sm:$0x3]
      %v232 = vld [vmem:[%s192 + $0x8] sm:$0x1]
      %v233 = vld [vmem:[%s192 + $0x14] sm:$0x1]
      %v234 = vld [vmem:[%s192 + $0x20] sm:$0x1]
      %v235 = vld [vmem:[%s192 + $0x2c] sm:$0x1]
      %v236 = vld [vmem:[%s192 + $0x38] sm:$0x1]
      %v237 = vld [vmem:[%s192 + $0x44] sm:$0x1]
      %v238 = vld [vmem:[%s192 + $0x50] sm:$0x1]
      %v239 = vld [vmem:[%s192 + $0x5c] sm:$0x1]
      %v240 = vld [vmem:[%s192 + $0x68] sm:$0x1]
      %v241 = vld [vmem:[%s192 + $0x74] sm:$0x1]
      %v242 = vld [vmem:[%s192 + $0x80] sm:$0x1]
      %v243 = vld [vmem:[%s192 + $0x8c] sm:$0x1]
      %v244 = vld [vmem:[%s192 + $0x98] sm:$0x1]
      %v245 = vld [vmem:[%s192 + $0xa4] sm:$0x1]
      %v246 = vld [vmem:[%s192 + $0xb0] sm:$0x1]
      %v247 = vld [vmem:[%s192 + $0xbc] sm:$0x1]
      %vm248 = vsmask.f32 3328
      %vm249 = vsmask.f32 7440
      %vm250 = vmor %vm248, %vm249
      %v252 = vshrl.u32 %v199, 16
      %v254 = vrot.slane %v252, 4
      %v255 = vshll.u32 %v199, 16
      %v257 = vrot.slane %v255, 5
      %v258 = vor.u32 %v254, %v257
      %v259 = vrot.slane %v258, 4
      %v261 = vshll.u32 %v200, 16
      %v263 = vrot.slane %v261, 5
      %v264 = vsel %vm250, %v259, %v263
      %v265 = vshrl.u32 %v200, 16
      %v267 = vrot.slane %v265, 4
      %v268 = vor.u32 %v267, %v263
      %v269 = vrot.slane %v268, 4
      %v271 = vshll.u32 %v232, 16
      %v273 = vrot.slane %v271, 5
      %v274 = vsel %vm250, %v269, %v273
      %v276 = vshrl.u32 %v201, 16
      %v278 = vrot.slane %v276, 4
      %v279 = vshll.u32 %v201, 16
      %v281 = vrot.slane %v279, 5
      %v282 = vor.u32 %v278, %v281
      %v283 = vrot.slane %v282, 4
      %v285 = vshll.u32 %v202, 16
      %v287 = vrot.slane %v285, 5
      %v288 = vsel %vm250, %v283, %v287
      %v289 = vshrl.u32 %v202, 16
      %v291 = vrot.slane %v289, 4
      %v292 = vor.u32 %v291, %v287
      %v293 = vrot.slane %v292, 4
      %v295 = vshll.u32 %v233, 16
      %v297 = vrot.slane %v295, 5
      %v298 = vsel %vm250, %v293, %v297
      %v300 = vshrl.u32 %v203, 16
      %v302 = vrot.slane %v300, 4
      %v303 = vshll.u32 %v203, 16
      %v305 = vrot.slane %v303, 5
      %v306 = vor.u32 %v302, %v305
      %v307 = vrot.slane %v306, 4
      %v309 = vshll.u32 %v204, 16
      %v311 = vrot.slane %v309, 5
      %v312 = vsel %vm250, %v307, %v311
      %v313 = vshrl.u32 %v204, 16
      %v315 = vrot.slane %v313, 4
      %v316 = vor.u32 %v315, %v311
      %v317 = vrot.slane %v316, 4
      %v319 = vshll.u32 %v234, 16
      %v321 = vrot.slane %v319, 5
      %v322 = vsel %vm250, %v317, %v321
      %v324 = vshrl.u32 %v205, 16
      %v326 = vrot.slane %v324, 4
      %v327 = vshll.u32 %v205, 16
      %v329 = vrot.slane %v327, 5
      %v330 = vor.u32 %v326, %v329
      %v331 = vrot.slane %v330, 4
      %v333 = vshll.u32 %v206, 16
      %v335 = vrot.slane %v333, 5
      %v336 = vsel %vm250, %v331, %v335
      %v337 = vshrl.u32 %v206, 16
      %v339 = vrot.slane %v337, 4
      %v340 = vor.u32 %v339, %v335
      %v341 = vrot.slane %v340, 4
      %v343 = vshll.u32 %v235, 16
      %v345 = vrot.slane %v343, 5
      %v346 = vsel %vm250, %v341, %v345
      %v348 = vshrl.u32 %v207, 16
      %v350 = vrot.slane %v348, 4
      %v351 = vshll.u32 %v207, 16
      %v353 = vrot.slane %v351, 5
      %v354 = vor.u32 %v350, %v353
      %v355 = vrot.slane %v354, 4
      %v357 = vshll.u32 %v208, 16
      %v359 = vrot.slane %v357, 5
      %v360 = vsel %vm250, %v355, %v359
      %v361 = vshrl.u32 %v208, 16
      %v363 = vrot.slane %v361, 4
      %v364 = vor.u32 %v363, %v359
      %v365 = vrot.slane %v364, 4
      %v367 = vshll.u32 %v236, 16
      %v369 = vrot.slane %v367, 5
      %v370 = vsel %vm250, %v365, %v369
      %v372 = vshrl.u32 %v209, 16
      %v374 = vrot.slane %v372, 4
      %v375 = vshll.u32 %v209, 16
      %v377 = vrot.slane %v375, 5
      %v378 = vor.u32 %v374, %v377
      %v379 = vrot.slane %v378, 4
      %v381 = vshll.u32 %v210, 16
      %v383 = vrot.slane %v381, 5
      %v384 = vsel %vm250, %v379, %v383
      %v385 = vshrl.u32 %v210, 16
      %v387 = vrot.slane %v385, 4
      %v388 = vor.u32 %v387, %v383
      %v389 = vrot.slane %v388, 4
      %v391 = vshll.u32 %v237, 16
      %v393 = vrot.slane %v391, 5
      %v394 = vsel %vm250, %v389, %v393
      %v396 = vshrl.u32 %v211, 16
      %v398 = vrot.slane %v396, 4
      %v399 = vshll.u32 %v211, 16
      %v401 = vrot.slane %v399, 5
      %v402 = vor.u32 %v398, %v401
      %v403 = vrot.slane %v402, 4
      %v405 = vshll.u32 %v212, 16
      %v407 = vrot.slane %v405, 5
      %v408 = vsel %vm250, %v403, %v407
      %v409 = vshrl.u32 %v212, 16
      %v411 = vrot.slane %v409, 4
      %v412 = vor.u32 %v411, %v407
      %v413 = vrot.slane %v412, 4
      %v415 = vshll.u32 %v238, 16
      %v417 = vrot.slane %v415, 5
      %v418 = vsel %vm250, %v413, %v417
      %v420 = vshrl.u32 %v213, 16
      %v422 = vrot.slane %v420, 4
      %v423 = vshll.u32 %v213, 16
      %v425 = vrot.slane %v423, 5
      %v426 = vor.u32 %v422, %v425
      %v427 = vrot.slane %v426, 4
      %v429 = vshll.u32 %v214, 16
      %v431 = vrot.slane %v429, 5
      %v432 = vsel %vm250, %v427, %v431
      %v433 = vshrl.u32 %v214, 16
      %v435 = vrot.slane %v433, 4
      %v436 = vor.u32 %v435, %v431
      %v437 = vrot.slane %v436, 4
      %v439 = vshll.u32 %v239, 16
      %v441 = vrot.slane %v439, 5
      %v442 = vsel %vm250, %v437, %v441
      %v444 = vshrl.u32 %v215, 16
      %v446 = vrot.slane %v444, 4
      %v447 = vshll.u32 %v215, 16
      %v449 = vrot.slane %v447, 5
      %v450 = vor.u32 %v446, %v449
      %v451 = vrot.slane %v450, 4
      %v453 = vshll.u32 %v216, 16
      %v455 = vrot.slane %v453, 5
      %v456 = vsel %vm250, %v451, %v455
      %v457 = vshrl.u32 %v216, 16
      %v459 = vrot.slane %v457, 4
      %v460 = vor.u32 %v459, %v455
      %v461 = vrot.slane %v460, 4
      %v463 = vshll.u32 %v240, 16
      %v465 = vrot.slane %v463, 5
      %v466 = vsel %vm250, %v461, %v465
      %v468 = vshrl.u32 %v217, 16
      %v470 = vrot.slane %v468, 4
      %v471 = vshll.u32 %v217, 16
      %v473 = vrot.slane %v471, 5
      %v474 = vor.u32 %v470, %v473
      %v475 = vrot.slane %v474, 4
      %v477 = vshll.u32 %v218, 16
      %v479 = vrot.slane %v477, 5
      %v480 = vsel %vm250, %v475, %v479
      %v481 = vshrl.u32 %v218, 16
      %v483 = vrot.slane %v481, 4
      %v484 = vor.u32 %v483, %v479
      %v485 = vrot.slane %v484, 4
      %v487 = vshll.u32 %v241, 16
      %v489 = vrot.slane %v487, 5
      %v490 = vsel %vm250, %v485, %v489
      %v492 = vshrl.u32 %v219, 16
      %v494 = vrot.slane %v492, 4
      %v495 = vshll.u32 %v219, 16
      %v497 = vrot.slane %v495, 5
      %v498 = vor.u32 %v494, %v497
      %v499 = vrot.slane %v498, 4
      %v501 = vshll.u32 %v220, 16
      %v503 = vrot.slane %v501, 5
      %v504 = vsel %vm250, %v499, %v503
      %v505 = vshrl.u32 %v220, 16
      %v507 = vrot.slane %v505, 4
      %v508 = vor.u32 %v507, %v503
      %v509 = vrot.slane %v508, 4
      %v511 = vshll.u32 %v242, 16
      %v513 = vrot.slane %v511, 5
      %v514 = vsel %vm250, %v509, %v513
      %v516 = vshrl.u32 %v221, 16
      %v518 = vrot.slane %v516, 4
      %v519 = vshll.u32 %v221, 16
      %v521 = vrot.slane %v519, 5
      %v522 = vor.u32 %v518, %v521
      %v523 = vrot.slane %v522, 4
      %v525 = vshll.u32 %v222, 16
      %v527 = vrot.slane %v525, 5
      %v528 = vsel %vm250, %v523, %v527
      %v529 = vshrl.u32 %v222, 16
      %v531 = vrot.slane %v529, 4
      %v532 = vor.u32 %v531, %v527
      %v533 = vrot.slane %v532, 4
      %v535 = vshll.u32 %v243, 16
      %v537 = vrot.slane %v535, 5
      %v538 = vsel %vm250, %v533, %v537
      %v540 = vshrl.u32 %v223, 16
      %v542 = vrot.slane %v540, 4
      %v543 = vshll.u32 %v223, 16
      %v545 = vrot.slane %v543, 5
      %v546 = vor.u32 %v542, %v545
      %v547 = vrot.slane %v546, 4
      %v549 = vshll.u32 %v224, 16
      %v551 = vrot.slane %v549, 5
      %v552 = vsel %vm250, %v547, %v551
      %v553 = vshrl.u32 %v224, 16
      %v555 = vrot.slane %v553, 4
      %v556 = vor.u32 %v555, %v551
      %v557 = vrot.slane %v556, 4
      %v559 = vshll.u32 %v244, 16
      %v561 = vrot.slane %v559, 5
      %v562 = vsel %vm250, %v557, %v561
      %v564 = vshrl.u32 %v225, 16
      %v566 = vrot.slane %v564, 4
      %v567 = vshll.u32 %v225, 16
      %v569 = vrot.slane %v567, 5
      %v570 = vor.u32 %v566, %v569
      %v571 = vrot.slane %v570, 4
      %v573 = vshll.u32 %v226, 16
      %v575 = vrot.slane %v573, 5
      %v576 = vsel %vm250, %v571, %v575
      %v577 = vshrl.u32 %v226, 16
      %v579 = vrot.slane %v577, 4
      %v580 = vor.u32 %v579, %v575
      %v581 = vrot.slane %v580, 4
      %v583 = vshll.u32 %v245, 16
      %v585 = vrot.slane %v583, 5
      %v586 = vsel %vm250, %v581, %v585
      %v588 = vshrl.u32 %v227, 16
      %v590 = vrot.slane %v588, 4
      %v591 = vshll.u32 %v227, 16
      %v593 = vrot.slane %v591, 5
      %v594 = vor.u32 %v590, %v593
      %v595 = vrot.slane %v594, 4
      %v597 = vshll.u32 %v228, 16
      %v599 = vrot.slane %v597, 5
      %v600 = vsel %vm250, %v595, %v599
      %v601 = vshrl.u32 %v228, 16
      %v603 = vrot.slane %v601, 4
      %v604 = vor.u32 %v603, %v599
      %v605 = vrot.slane %v604, 4
      %v607 = vshll.u32 %v246, 16
      %v609 = vrot.slane %v607, 5
      %v610 = vsel %vm250, %v605, %v609
      %v612 = vshrl.u32 %v229, 16
      %v614 = vrot.slane %v612, 4
      %v615 = vshll.u32 %v229, 16
      %v617 = vrot.slane %v615, 5
      %v618 = vor.u32 %v614, %v617
      %v619 = vrot.slane %v618, 4
      %v621 = vshll.u32 %v230, 16
      %v623 = vrot.slane %v621, 5
      %v624 = vsel %vm250, %v619, %v623
      %v625 = vshrl.u32 %v230, 16
      %v627 = vrot.slane %v625, 4
      %v628 = vor.u32 %v627, %v623
      %v629 = vrot.slane %v628, 4
      %v631 = vshll.u32 %v247, 16
      %v633 = vrot.slane %v631, 5
      %v634 = vsel %vm250, %v629, %v633
      %s635 = scalar_lea.vmem %s1, 2
      %v636 = vld [vmem:[%s635] sm:$0x3]
      %v637 = vunpack.c.l.b16 %v264
      %v638 = vunpack.c.l.b16 %v274
      %v639 = vunpack.c.l.b16 %v288
      %v640 = vunpack.c.l.b16 %v298
      %v641 = vunpack.c.l.b16 %v312
      %v642 = vunpack.c.l.b16 %v322
      %v643 = vunpack.c.l.b16 %v336
      %v644 = vunpack.c.l.b16 %v346
      %v645 = vunpack.c.l.b16 %v360
      %v646 = vunpack.c.l.b16 %v370
      %v647 = vunpack.c.l.b16 %v384
      %v648 = vunpack.c.l.b16 %v394
      %v649 = vunpack.c.l.b16 %v408
      %v650 = vunpack.c.l.b16 %v418
      %v651 = vunpack.c.l.b16 %v432
      %v652 = vunpack.c.l.b16 %v442
      %v653 = vunpack.c.l.b16 %v456
      %v654 = vunpack.c.l.b16 %v466
      %v655 = vunpack.c.l.b16 %v480
      %v656 = vunpack.c.l.b16 %v490
      %v657 = vunpack.c.l.b16 %v504
      %v658 = vunpack.c.l.b16 %v514
      %v659 = vunpack.c.l.b16 %v528
      %v660 = vunpack.c.l.b16 %v538
      %v661 = vunpack.c.l.b16 %v552
      %v662 = vunpack.c.l.b16 %v562
      %v663 = vunpack.c.l.b16 %v576
      %v664 = vunpack.c.l.b16 %v586
      %v665 = vunpack.c.l.b16 %v600
      %v666 = vunpack.c.l.b16 %v610
      %v667 = vunpack.c.l.b16 %v624
      %v668 = vunpack.c.l.b16 %v634
      %v669 = vpack.c.b16 %v638, %v637
      %v670 = vpack.c.b16 %v640, %v639
      %v671 = vpack.c.b16 %v642, %v641
      %v672 = vpack.c.b16 %v644, %v643
      %v673 = vpack.c.b16 %v646, %v645
      %v674 = vpack.c.b16 %v648, %v647
      %v675 = vpack.c.b16 %v650, %v649
      %v676 = vpack.c.b16 %v652, %v651
      %v677 = vpack.c.b16 %v654, %v653
      %v678 = vpack.c.b16 %v656, %v655
      %v679 = vpack.c.b16 %v658, %v657
      %v680 = vpack.c.b16 %v660, %v659
      %v681 = vpack.c.b16 %v662, %v661
      %v682 = vpack.c.b16 %v664, %v663
      %v683 = vpack.c.b16 %v666, %v665
      %v684 = vpack.c.b16 %v668, %v667
      %vm685 = vcmask 31744
      %v687 = vsel %vm685, %v669, 0
      %v690 = vsel %vm685, %v670, 0
      %v693 = vsel %vm685, %v671, 0
      %v696 = vsel %vm685, %v672, 0
      %v699 = vsel %vm685, %v673, 0
      %v702 = vsel %vm685, %v674, 0
      %v705 = vsel %vm685, %v675, 0
      %v708 = vsel %vm685, %v676, 0
      %v711 = vsel %vm685, %v677, 0
      %v714 = vsel %vm685, %v678, 0
      %v717 = vsel %vm685, %v679, 0
      %v720 = vsel %vm685, %v680, 0
      %v723 = vsel %vm685, %v681, 0
      %v726 = vsel %vm685, %v682, 0
      %v729 = vsel %vm685, %v683, 0
      %v732 = vsel %vm685, %v684, 0
      %vm734 = vcmask 1041408
      %v736 = vsel %vm734, %v636, 0
      %738 = vmatprep.subr.bf16.mxu0 0
      %739 = vmatpush1.bf16.msra.mxu0 %v736
      %740 = vmatprep.subr.bf16.mxu0 0
      %741 = vmatpush1.bf16.msra.mxu0 0
      %742 = vmatprep.subr.bf16.mxu0 0
      %743 = vmatpush1.bf16.msra.mxu0 0
      %744 = vmatprep.subr.bf16.mxu0 0
      %745 = vmatpush1.bf16.msra.mxu0 0
      %746 = vmatprep.subr.bf16.mxu0 0
      %747 = vmatpush1.bf16.msra.mxu0 0
      %748 = vmatprep.subr.bf16.mxu0 0
      %749 = vmatpush1.bf16.msra.mxu0 0
      %750 = vmatprep.subr.bf16.mxu0 0
      %751 = vmatpush1.bf16.msra.mxu0 0
      %752 = vmatprep.subr.bf16.mxu0 0
      %753 = vmatpush1.bf16.msra.mxu0 0
      %754 = vmatprep.subr.bf16.mxu0 0
      %755 = vmatpush1.bf16.msra.mxu0 0
      %756 = vmatprep.subr.bf16.mxu0 0
      %757 = vmatpush1.bf16.msra.mxu0 0
      %758 = vmatprep.subr.bf16.mxu0 0
      %759 = vmatpush1.bf16.msra.mxu0 0
      %760 = vmatprep.subr.bf16.mxu0 0
      %761 = vmatpush1.bf16.msra.mxu0 0
      %762 = vmatprep.subr.bf16.mxu0 0
      %763 = vmatpush1.bf16.msra.mxu0 0
      %764 = vmatprep.subr.bf16.mxu0 0
      %765 = vmatpush1.bf16.msra.mxu0 0
      %766 = vmatprep.subr.bf16.mxu0 0
      %767 = vmatpush1.bf16.msra.mxu0 0
      %768 = vmatprep.subr.bf16.mxu0 0
      %769 = vmatpush1.bf16.msra.mxu0 0
      %770 = vmatprep.mubr.bf16.mxu0 0
      %771 = vmatmul.mubr.bf16.gmra.mrb[0].mxu0 %v687
      %v772 = vpop.f32.mrb[0].mxu0
      %v773 = vadd.f32 0.0, %v772
      %v774 = vpop.f32.mrb[0].mxu0
      %v775 = vpop.f32.mrb[0].mxu0
      %v776 = vadd.f32 0.0, %v775
      %v777 = vpop.f32.mrb[0].mxu0
      %778 = vmatprep.mubr.bf16.mxu0 0
      %779 = vmatmul.mubr.bf16.gmra.mrb[0].mxu0 %v690
      %v780 = vpop.f32.mrb[0].mxu0
      %v781 = vadd.f32 0.0, %v780
      %v782 = vpop.f32.mrb[0].mxu0
      %v783 = vpop.f32.mrb[0].mxu0
      %v784 = vadd.f32 0.0, %v783
      %v785 = vpop.f32.mrb[0].mxu0
      %786 = vmatprep.mubr.bf16.mxu0 0
      %787 = vmatmul.mubr.bf16.gmra.mrb[0].mxu0 %v693
      %v788 = vpop.f32.mrb[0].mxu0
      %v789 = vadd.f32 0.0, %v788
      %v790 = vpop.f32.mrb[0].mxu0
      %v791 = vpop.f32.mrb[0].mxu0
      %v792 = vadd.f32 0.0, %v791
      %v793 = vpop.f32.mrb[0].mxu0
      %794 = vmatprep.mubr.bf16.mxu0 0
      %795 = vmatmul.mubr.bf16.gmra.mrb[0].mxu0 %v696
      %v796 = vpop.f32.mrb[0].mxu0
      %v797 = vadd.f32 0.0, %v796
      %v798 = vpop.f32.mrb[0].mxu0
      %v799 = vpop.f32.mrb[0].mxu0
      %v800 = vadd.f32 0.0, %v799
      %v801 = vpop.f32.mrb[0].mxu0
      %802 = vmatprep.mubr.bf16.mxu0 0
      %803 = vmatmul.mubr.bf16.gmra.mrb[0].mxu0 %v699
      %v804 = vpop.f32.mrb[0].mxu0
      %v805 = vadd.f32 0.0, %v804
      %v806 = vpop.f32.mrb[0].mxu0
      %v807 = vpop.f32.mrb[0].mxu0
      %v808 = vadd.f32 0.0, %v807
      %v809 = vpop.f32.mrb[0].mxu0
      %810 = vmatprep.mubr.bf16.mxu0 0
      %811 = vmatmul.mubr.bf16.gmra.mrb[0].mxu0 %v702
      %v812 = vpop.f32.mrb[0].mxu0
      %v813 = vadd.f32 0.0, %v812
      %v814 = vpop.f32.mrb[0].mxu0
      %v815 = vpop.f32.mrb[0].mxu0
      %v816 = vadd.f32 0.0, %v815
      %v817 = vpop.f32.mrb[0].mxu0
      %818 = vmatprep.mubr.bf16.mxu0 0
      %819 = vmatmul.mubr.bf16.gmra.mrb[0].mxu0 %v705
      %v820 = vpop.f32.mrb[0].mxu0
      %v821 = vadd.f32 0.0, %v820
      %v822 = vpop.f32.mrb[0].mxu0
      %v823 = vpop.f32.mrb[0].mxu0
      %v824 = vadd.f32 0.0, %v823
      %v825 = vpop.f32.mrb[0].mxu0
      %826 = vmatprep.mubr.bf16.mxu0 0
      %827 = vmatmul.mubr.bf16.gmra.mrb[0].mxu0 %v708
      %v828 = vpop.f32.mrb[0].mxu0
      %v829 = vadd.f32 0.0, %v828
      %v830 = vpop.f32.mrb[0].mxu0
      %v831 = vpop.f32.mrb[0].mxu0
      %v832 = vadd.f32 0.0, %v831
      %v833 = vpop.f32.mrb[0].mxu0
      %834 = vmatprep.mubr.bf16.mxu0 0
      %835 = vmatmul.mubr.bf16.gmra.mrb[0].mxu0 %v711
      %v836 = vpop.f32.mrb[0].mxu0
      %v837 = vadd.f32 0.0, %v836
      %v838 = vpop.f32.mrb[0].mxu0
      %v839 = vpop.f32.mrb[0].mxu0
      %v840 = vadd.f32 0.0, %v839
      %v841 = vpop.f32.mrb[0].mxu0
      %842 = vmatprep.mubr.bf16.mxu0 0
      %843 = vmatmul.mubr.bf16.gmra.mrb[0].mxu0 %v714
      %v844 = vpop.f32.mrb[0].mxu0
      %v845 = vadd.f32 0.0, %v844
      %v846 = vpop.f32.mrb[0].mxu0
      %v847 = vpop.f32.mrb[0].mxu0
      %v848 = vadd.f32 0.0, %v847
      %v849 = vpop.f32.mrb[0].mxu0
      %850 = vmatprep.mubr.bf16.mxu0 0
      %851 = vmatmul.mubr.bf16.gmra.mrb[0].mxu0 %v717
      %v852 = vpop.f32.mrb[0].mxu0
      %v853 = vadd.f32 0.0, %v852
      %v854 = vpop.f32.mrb[0].mxu0
      %v855 = vpop.f32.mrb[0].mxu0
      %v856 = vadd.f32 0.0, %v855
      %v857 = vpop.f32.mrb[0].mxu0
      %858 = vmatprep.mubr.bf16.mxu0 0
      %859 = vmatmul.mubr.bf16.gmra.mrb[0].mxu0 %v720
      %v860 = vpop.f32.mrb[0].mxu0
      %v861 = vadd.f32 0.0, %v860
      %v862 = vpop.f32.mrb[0].mxu0
      %v863 = vpop.f32.mrb[0].mxu0
      %v864 = vadd.f32 0.0, %v863
      %v865 = vpop.f32.mrb[0].mxu0
      %866 = vmatprep.mubr.bf16.mxu0 0
      %867 = vmatmul.mubr.bf16.gmra.mrb[0].mxu0 %v723
      %v868 = vpop.f32.mrb[0].mxu0
      %v869 = vadd.f32 0.0, %v868
      %v870 = vpop.f32.mrb[0].mxu0
      %v871 = vpop.f32.mrb[0].mxu0
      %v872 = vadd.f32 0.0, %v871
      %v873 = vpop.f32.mrb[0].mxu0
      %874 = vmatprep.mubr.bf16.mxu0 0
      %875 = vmatmul.mubr.bf16.gmra.mrb[0].mxu0 %v726
      %v876 = vpop.f32.mrb[0].mxu0
      %v877 = vadd.f32 0.0, %v876
      %v878 = vpop.f32.mrb[0].mxu0
      %v879 = vpop.f32.mrb[0].mxu0
      %v880 = vadd.f32 0.0, %v879
      %v881 = vpop.f32.mrb[0].mxu0
      %882 = vmatprep.mubr.bf16.mxu0 0
      %883 = vmatmul.mubr.bf16.gmra.mrb[0].mxu0 %v729
      %v884 = vpop.f32.mrb[0].mxu0
      %v885 = vadd.f32 0.0, %v884
      %v886 = vpop.f32.mrb[0].mxu0
      %v887 = vpop.f32.mrb[0].mxu0
      %v888 = vadd.f32 0.0, %v887
      %v889 = vpop.f32.mrb[0].mxu0
      %890 = vmatprep.mubr.bf16.mxu0 0
      %891 = vmatmul.mubr.bf16.gmra.mrb[0].mxu0 %v732
      %v892 = vpop.f32.mrb[0].mxu0
      %v893 = vadd.f32 0.0, %v892
      %v894 = vpop.f32.mrb[0].mxu0
      %v895 = vpop.f32.mrb[0].mxu0
      %v896 = vadd.f32 0.0, %v895
      %v897 = vpop.f32.mrb[0].mxu0
      %898 = vdwg.mxu0
      %v931 = vunpack.c.l.b16 %v199
      %v932 = vunpack.c.l.b16 %v200
      %v933 = vunpack.c.l.b16 %v201
      %v934 = vunpack.c.l.b16 %v202
      %v935 = vunpack.c.l.b16 %v203
      %v936 = vunpack.c.l.b16 %v204
      %v937 = vunpack.c.l.b16 %v205
      %v938 = vunpack.c.l.b16 %v206
      %v939 = vunpack.c.l.b16 %v207
      %v940 = vunpack.c.l.b16 %v208
      %v941 = vunpack.c.l.b16 %v209
      %v942 = vunpack.c.l.b16 %v210
      %v943 = vunpack.c.l.b16 %v211
      %v944 = vunpack.c.l.b16 %v212
      %v945 = vunpack.c.l.b16 %v213
      %v946 = vunpack.c.l.b16 %v214
      %v947 = vunpack.c.l.b16 %v215
      %v948 = vunpack.c.l.b16 %v216
      %v949 = vunpack.c.l.b16 %v217
      %v950 = vunpack.c.l.b16 %v218
      %v951 = vunpack.c.l.b16 %v219
      %v952 = vunpack.c.l.b16 %v220
      %v953 = vunpack.c.l.b16 %v221
      %v954 = vunpack.c.l.b16 %v222
      %v955 = vunpack.c.l.b16 %v223
      %v956 = vunpack.c.l.b16 %v224
      %v957 = vunpack.c.l.b16 %v225
      %v958 = vunpack.c.l.b16 %v226
      %v959 = vunpack.c.l.b16 %v227
      %v960 = vunpack.c.l.b16 %v228
      %v961 = vunpack.c.l.b16 %v229
      %v962 = vunpack.c.l.b16 %v230
      %v963 = vpack.c.b16 %v932, %v931
      %v964 = vpack.c.b16 %v934, %v933
      %v965 = vpack.c.b16 %v936, %v935
      %v966 = vpack.c.b16 %v938, %v937
      %v967 = vpack.c.b16 %v940, %v939
      %v968 = vpack.c.b16 %v942, %v941
      %v969 = vpack.c.b16 %v944, %v943
      %v970 = vpack.c.b16 %v946, %v945
      %v971 = vpack.c.b16 %v948, %v947
      %v972 = vpack.c.b16 %v950, %v949
      %v973 = vpack.c.b16 %v952, %v951
      %v974 = vpack.c.b16 %v954, %v953
      %v975 = vpack.c.b16 %v956, %v955
      %v976 = vpack.c.b16 %v958, %v957
      %v977 = vpack.c.b16 %v960, %v959
      %v978 = vpack.c.b16 %v962, %v961
      %v980 = vsel %vm685, %v963, 0
      %v983 = vsel %vm685, %v964, 0
      %v986 = vsel %vm685, %v965, 0
      %v989 = vsel %vm685, %v966, 0
      %v992 = vsel %vm685, %v967, 0
      %v995 = vsel %vm685, %v968, 0
      %v998 = vsel %vm685, %v969, 0
      %v1001 = vsel %vm685, %v970, 0
      %v1004 = vsel %vm685, %v971, 0
      %v1007 = vsel %vm685, %v972, 0
      %v1010 = vsel %vm685, %v973, 0
      %v1013 = vsel %vm685, %v974, 0
      %v1016 = vsel %vm685, %v975, 0
      %v1019 = vsel %vm685, %v976, 0
      %v1022 = vsel %vm685, %v977, 0
      %v1025 = vsel %vm685, %v978, 0
      %v1028 = vsel %vm734, %v231, 0
      %1030 = vmatprep.subr.bf16.mxu0 0
      %1031 = vmatpush1.bf16.msra.mxu0 %v1028
      %1032 = vmatprep.subr.bf16.mxu0 0
      %1033 = vmatpush1.bf16.msra.mxu0 0
      %1034 = vmatprep.subr.bf16.mxu0 0
      %1035 = vmatpush1.bf16.msra.mxu0 0
      %1036 = vmatprep.subr.bf16.mxu0 0
      %1037 = vmatpush1.bf16.msra.mxu0 0
      %1038 = vmatprep.subr.bf16.mxu0 0
      %1039 = vmatpush1.bf16.msra.mxu0 0
      %1040 = vmatprep.subr.bf16.mxu0 0
      %1041 = vmatpush1.bf16.msra.mxu0 0
      %1042 = vmatprep.subr.bf16.mxu0 0
      %1043 = vmatpush1.bf16.msra.mxu0 0
      %1044 = vmatprep.subr.bf16.mxu0 0
      %1045 = vmatpush1.bf16.msra.mxu0 0
      %1046 = vmatprep.subr.bf16.mxu0 0
      %1047 = vmatpush1.bf16.msra.mxu0 0
      %1048 = vmatprep.subr.bf16.mxu0 0
      %1049 = vmatpush1.bf16.msra.mxu0 0
      %1050 = vmatprep.subr.bf16.mxu0 0
      %1051 = vmatpush1.bf16.msra.mxu0 0
      %1052 = vmatprep.subr.bf16.mxu0 0
      %1053 = vmatpush1.bf16.msra.mxu0 0
      %1054 = vmatprep.subr.bf16.mxu0 0
      %1055 = vmatpush1.bf16.msra.mxu0 0
      %1056 = vmatprep.subr.bf16.mxu0 0
      %1057 = vmatpush1.bf16.msra.mxu0 0
      %1058 = vmatprep.subr.bf16.mxu0 0
      %1059 = vmatpush1.bf16.msra.mxu0 0
      %1060 = vmatprep.subr.bf16.mxu0 0
      %1061 = vmatpush1.bf16.msra.mxu0 0
      %1062 = vmatprep.mubr.bf16.mxu0 0
      %1063 = vmatmul.mubr.bf16.gmra.mrb[0].mxu0 %v980
      %v1064 = vpop.f32.mrb[0].mxu0
      %v1065 = vadd.f32 %v773, %v1064
      %v1066 = vpop.f32.mrb[0].mxu0
      %v1067 = vpop.f32.mrb[0].mxu0
      %v1068 = vadd.f32 %v776, %v1067
      %v1069 = vpop.f32.mrb[0].mxu0
      %1070 = vmatprep.mubr.bf16.mxu0 0
      %1071 = vmatmul.mubr.bf16.gmra.mrb[0].mxu0 %v983
      %v1072 = vpop.f32.mrb[0].mxu0
      %v1073 = vadd.f32 %v781, %v1072
      %v1074 = vpop.f32.mrb[0].mxu0
      %v1075 = vpop.f32.mrb[0].mxu0
      %v1076 = vadd.f32 %v784, %v1075
      %v1077 = vpop.f32.mrb[0].mxu0
      %1078 = vmatprep.mubr.bf16.mxu0 0
      %1079 = vmatmul.mubr.bf16.gmra.mrb[0].mxu0 %v986
      %v1080 = vpop.f32.mrb[0].mxu0
      %v1081 = vadd.f32 %v789, %v1080
      %v1082 = vpop.f32.mrb[0].mxu0
      %v1083 = vpop.f32.mrb[0].mxu0
      %v1084 = vadd.f32 %v792, %v1083
      %v1085 = vpop.f32.mrb[0].mxu0
      %1086 = vmatprep.mubr.bf16.mxu0 0
      %1087 = vmatmul.mubr.bf16.gmra.mrb[0].mxu0 %v989
      %v1088 = vpop.f32.mrb[0].mxu0
      %v1089 = vadd.f32 %v797, %v1088
      %v1090 = vpop.f32.mrb[0].mxu0
      %v1091 = vpop.f32.mrb[0].mxu0
      %v1092 = vadd.f32 %v800, %v1091
      %v1093 = vpop.f32.mrb[0].mxu0
      %1094 = vmatprep.mubr.bf16.mxu0 0
      %1095 = vmatmul.mubr.bf16.gmra.mrb[0].mxu0 %v992
      %v1096 = vpop.f32.mrb[0].mxu0
      %v1097 = vadd.f32 %v805, %v1096
      %v1098 = vpop.f32.mrb[0].mxu0
      %v1099 = vpop.f32.mrb[0].mxu0
      %v1100 = vadd.f32 %v808, %v1099
      %v1101 = vpop.f32.mrb[0].mxu0
      %1102 = vmatprep.mubr.bf16.mxu0 0
      %1103 = vmatmul.mubr.bf16.gmra.mrb[0].mxu0 %v995
      %v1104 = vpop.f32.mrb[0].mxu0
      %v1105 = vadd.f32 %v813, %v1104
      %v1106 = vpop.f32.mrb[0].mxu0
      %v1107 = vpop.f32.mrb[0].mxu0
      %v1108 = vadd.f32 %v816, %v1107
      %v1109 = vpop.f32.mrb[0].mxu0
      %1110 = vmatprep.mubr.bf16.mxu0 0
      %1111 = vmatmul.mubr.bf16.gmra.mrb[0].mxu0 %v998
      %v1112 = vpop.f32.mrb[0].mxu0
      %v1113 = vadd.f32 %v821, %v1112
      %v1114 = vpop.f32.mrb[0].mxu0
      %v1115 = vpop.f32.mrb[0].mxu0
      %v1116 = vadd.f32 %v824, %v1115
      %v1117 = vpop.f32.mrb[0].mxu0
      %1118 = vmatprep.mubr.bf16.mxu0 0
      %1119 = vmatmul.mubr.bf16.gmra.mrb[0].mxu0 %v1001
      %v1120 = vpop.f32.mrb[0].mxu0
      %v1121 = vadd.f32 %v829, %v1120
      %v1122 = vpop.f32.mrb[0].mxu0
      %v1123 = vpop.f32.mrb[0].mxu0
      %v1124 = vadd.f32 %v832, %v1123
      %v1125 = vpop.f32.mrb[0].mxu0
      %1126 = vmatprep.mubr.bf16.mxu0 0
      %1127 = vmatmul.mubr.bf16.gmra.mrb[0].mxu0 %v1004
      %v1128 = vpop.f32.mrb[0].mxu0
      %v1129 = vadd.f32 %v837, %v1128
      %v1130 = vpop.f32.mrb[0].mxu0
      %v1131 = vpop.f32.mrb[0].mxu0
      %v1132 = vadd.f32 %v840, %v1131
      %v1133 = vpop.f32.mrb[0].mxu0
      %1134 = vmatprep.mubr.bf16.mxu0 0
      %1135 = vmatmul.mubr.bf16.gmra.mrb[0].mxu0 %v1007
      %v1136 = vpop.f32.mrb[0].mxu0
      %v1137 = vadd.f32 %v845, %v1136
      %v1138 = vpop.f32.mrb[0].mxu0
      %v1139 = vpop.f32.mrb[0].mxu0
      %v1140 = vadd.f32 %v848, %v1139
      %v1141 = vpop.f32.mrb[0].mxu0
      %1142 = vmatprep.mubr.bf16.mxu0 0
      %1143 = vmatmul.mubr.bf16.gmra.mrb[0].mxu0 %v1010
      %v1144 = vpop.f32.mrb[0].mxu0
      %v1145 = vadd.f32 %v853, %v1144
      %v1146 = vpop.f32.mrb[0].mxu0
      %v1147 = vpop.f32.mrb[0].mxu0
      %v1148 = vadd.f32 %v856, %v1147
      %v1149 = vpop.f32.mrb[0].mxu0
      %1150 = vmatprep.mubr.bf16.mxu0 0
      %1151 = vmatmul.mubr.bf16.gmra.mrb[0].mxu0 %v1013
      %v1152 = vpop.f32.mrb[0].mxu0
      %v1153 = vadd.f32 %v861, %v1152
      %v1154 = vpop.f32.mrb[0].mxu0
      %v1155 = vpop.f32.mrb[0].mxu0
      %v1156 = vadd.f32 %v864, %v1155
      %v1157 = vpop.f32.mrb[0].mxu0
      %1158 = vmatprep.mubr.bf16.mxu0 0
      %1159 = vmatmul.mubr.bf16.gmra.mrb[0].mxu0 %v1016
      %v1160 = vpop.f32.mrb[0].mxu0
      %v1161 = vadd.f32 %v869, %v1160
      %v1162 = vpop.f32.mrb[0].mxu0
      %v1163 = vpop.f32.mrb[0].mxu0
      %v1164 = vadd.f32 %v872, %v1163
      %v1165 = vpop.f32.mrb[0].mxu0
      %1166 = vmatprep.mubr.bf16.mxu0 0
      %1167 = vmatmul.mubr.bf16.gmra.mrb[0].mxu0 %v1019
      %v1168 = vpop.f32.mrb[0].mxu0
      %v1169 = vadd.f32 %v877, %v1168
      %v1170 = vpop.f32.mrb[0].mxu0
      %v1171 = vpop.f32.mrb[0].mxu0
      %v1172 = vadd.f32 %v880, %v1171
      %v1173 = vpop.f32.mrb[0].mxu0
      %1174 = vmatprep.mubr.bf16.mxu0 0
      %1175 = vmatmul.mubr.bf16.gmra.mrb[0].mxu0 %v1022
      %v1176 = vpop.f32.mrb[0].mxu0
      %v1177 = vadd.f32 %v885, %v1176
      %v1178 = vpop.f32.mrb[0].mxu0
      %v1179 = vpop.f32.mrb[0].mxu0
      %v1180 = vadd.f32 %v888, %v1179
      %v1181 = vpop.f32.mrb[0].mxu0
      %1182 = vmatprep.mubr.bf16.mxu0 0
      %1183 = vmatmul.mubr.bf16.gmra.mrb[0].mxu0 %v1025
      %v1184 = vpop.f32.mrb[0].mxu0
      %v1185 = vadd.f32 %v893, %v1184
      %v1186 = vpop.f32.mrb[0].mxu0
      %v1187 = vpop.f32.mrb[0].mxu0
      %v1188 = vadd.f32 %v896, %v1187
      %v1189 = vpop.f32.mrb[0].mxu0
      %1190 = vdwg.mxu0
      %v1191 = vld [vmem:[%s192] sm:$0xe]
      %v1192 = vld [vmem:[%s192 + $0xc] sm:$0xe]
      %v1193 = vld [vmem:[%s192 + $0x18] sm:$0xe]
      %v1194 = vld [vmem:[%s192 + $0x24] sm:$0xe]
      %v1195 = vld [vmem:[%s192 + $0x30] sm:$0xe]
      %v1196 = vld [vmem:[%s192 + $0x3c] sm:$0xe]
      %v1197 = vld [vmem:[%s192 + $0x48] sm:$0xe]
      %v1198 = vld [vmem:[%s192 + $0x54] sm:$0xe]
      %v1199 = vld [vmem:[%s192 + $0x60] sm:$0xe]
      %v1200 = vld [vmem:[%s192 + $0x6c] sm:$0xe]
      %v1201 = vld [vmem:[%s192 + $0x78] sm:$0xe]
      %v1202 = vld [vmem:[%s192 + $0x84] sm:$0xe]
      %v1203 = vld [vmem:[%s192 + $0x90] sm:$0xe]
      %v1204 = vld [vmem:[%s192 + $0x9c] sm:$0xe]
      %v1205 = vld [vmem:[%s192 + $0xa8] sm:$0xe]
      %v1206 = vld [vmem:[%s192 + $0xb4] sm:$0xe]
      %vm1239 = vcmask 1042432
      %vm1240 = vcmask 1046532
      %vm1241 = vmor %vm1239, %vm1240
      %v1242 = vrot.slane %v1191, 5
      %v1243 = vrot.slane %v1242, 4
      %v1244 = vrot.slane %v200, 5
      %v1245 = vsel %vm1241, %v1243, %v1244
      %v1246 = vrot.slane %v1244, 4
      %v1247 = vrot.slane %v232, 5
      %v1248 = vsel %vm1241, %v1246, %v1247
      %v1249 = vrot.slane %v1192, 5
      %v1250 = vrot.slane %v1249, 4
      %v1251 = vrot.slane %v202, 5
      %v1252 = vsel %vm1241, %v1250, %v1251
      %v1253 = vrot.slane %v1251, 4
      %v1254 = vrot.slane %v233, 5
      %v1255 = vsel %vm1241, %v1253, %v1254
      %v1256 = vrot.slane %v1193, 5
      %v1257 = vrot.slane %v1256, 4
      %v1258 = vrot.slane %v204, 5
      %v1259 = vsel %vm1241, %v1257, %v1258
      %v1260 = vrot.slane %v1258, 4
      %v1261 = vrot.slane %v234, 5
      %v1262 = vsel %vm1241, %v1260, %v1261
      %v1263 = vrot.slane %v1194, 5
      %v1264 = vrot.slane %v1263, 4
      %v1265 = vrot.slane %v206, 5
      %v1266 = vsel %vm1241, %v1264, %v1265
      %v1267 = vrot.slane %v1265, 4
      %v1268 = vrot.slane %v235, 5
      %v1269 = vsel %vm1241, %v1267, %v1268
      %v1270 = vrot.slane %v1195, 5
      %v1271 = vrot.slane %v1270, 4
      %v1272 = vrot.slane %v208, 5
      %v1273 = vsel %vm1241, %v1271, %v1272
      %v1274 = vrot.slane %v1272, 4
      %v1275 = vrot.slane %v236, 5
      %v1276 = vsel %vm1241, %v1274, %v1275
      %v1277 = vrot.slane %v1196, 5
      %v1278 = vrot.slane %v1277, 4
      %v1279 = vrot.slane %v210, 5
      %v1280 = vsel %vm1241, %v1278, %v1279
      %v1281 = vrot.slane %v1279, 4
      %v1282 = vrot.slane %v237, 5
      %v1283 = vsel %vm1241, %v1281, %v1282
      %v1284 = vrot.slane %v1197, 5
      %v1285 = vrot.slane %v1284, 4
      %v1286 = vrot.slane %v212, 5
      %v1287 = vsel %vm1241, %v1285, %v1286
      %v1288 = vrot.slane %v1286, 4
      %v1289 = vrot.slane %v238, 5
      %v1290 = vsel %vm1241, %v1288, %v1289
      %v1291 = vrot.slane %v1198, 5
      %v1292 = vrot.slane %v1291, 4
      %v1293 = vrot.slane %v214, 5
      %v1294 = vsel %vm1241, %v1292, %v1293
      %v1295 = vrot.slane %v1293, 4
      %v1296 = vrot.slane %v239, 5
      %v1297 = vsel %vm1241, %v1295, %v1296
      %v1298 = vrot.slane %v1199, 5
      %v1299 = vrot.slane %v1298, 4
      %v1300 = vrot.slane %v216, 5
      %v1301 = vsel %vm1241, %v1299, %v1300
      %v1302 = vrot.slane %v1300, 4
      %v1303 = vrot.slane %v240, 5
      %v1304 = vsel %vm1241, %v1302, %v1303
      %v1305 = vrot.slane %v1200, 5
      %v1306 = vrot.slane %v1305, 4
      %v1307 = vrot.slane %v218, 5
      %v1308 = vsel %vm1241, %v1306, %v1307
      %v1309 = vrot.slane %v1307, 4
      %v1310 = vrot.slane %v241, 5
      %v1311 = vsel %vm1241, %v1309, %v1310
      %v1312 = vrot.slane %v1201, 5
      %v1313 = vrot.slane %v1312, 4
      %v1314 = vrot.slane %v220, 5
      %v1315 = vsel %vm1241, %v1313, %v1314
      %v1316 = vrot.slane %v1314, 4
      %v1317 = vrot.slane %v242, 5
      %v1318 = vsel %vm1241, %v1316, %v1317
      %v1319 = vrot.slane %v1202, 5
      %v1320 = vrot.slane %v1319, 4
      %v1321 = vrot.slane %v222, 5
      %v1322 = vsel %vm1241, %v1320, %v1321
      %v1323 = vrot.slane %v1321, 4
      %v1324 = vrot.slane %v243, 5
      %v1325 = vsel %vm1241, %v1323, %v1324
      %v1326 = vrot.slane %v1203, 5
      %v1327 = vrot.slane %v1326, 4
      %v1328 = vrot.slane %v224, 5
      %v1329 = vsel %vm1241, %v1327, %v1328
      %v1330 = vrot.slane %v1328, 4
      %v1331 = vrot.slane %v244, 5
      %v1332 = vsel %vm1241, %v1330, %v1331
      %v1333 = vrot.slane %v1204, 5
      %v1334 = vrot.slane %v1333, 4
      %v1335 = vrot.slane %v226, 5
      %v1336 = vsel %vm1241, %v1334, %v1335
      %v1337 = vrot.slane %v1335, 4
      %v1338 = vrot.slane %v245, 5
      %v1339 = vsel %vm1241, %v1337, %v1338
      %v1340 = vrot.slane %v1205, 5
      %v1341 = vrot.slane %v1340, 4
      %v1342 = vrot.slane %v228, 5
      %v1343 = vsel %vm1241, %v1341, %v1342
      %v1344 = vrot.slane %v1342, 4
      %v1345 = vrot.slane %v246, 5
      %v1346 = vsel %vm1241, %v1344, %v1345
      %v1347 = vrot.slane %v1206, 5
      %v1348 = vrot.slane %v1347, 4
      %v1349 = vrot.slane %v230, 5
      %v1350 = vsel %vm1241, %v1348, %v1349
      %v1351 = vrot.slane %v1349, 4
      %v1352 = vrot.slane %v247, 5
      %v1353 = vsel %vm1241, %v1351, %v1352
      %s1354 = scalar_lea.vmem %s1, 4
      %v1355 = vld [vmem:[%s1354] sm:$0x3]
      %v1356 = vunpack.c.l.b16 %v1245
      %v1357 = vunpack.c.l.b16 %v1248
      %v1358 = vunpack.c.l.b16 %v1252
      %v1359 = vunpack.c.l.b16 %v1255
      %v1360 = vunpack.c.l.b16 %v1259
      %v1361 = vunpack.c.l.b16 %v1262
      %v1362 = vunpack.c.l.b16 %v1266
      %v1363 = vunpack.c.l.b16 %v1269
      %v1364 = vunpack.c.l.b16 %v1273
      %v1365 = vunpack.c.l.b16 %v1276
      %v1366 = vunpack.c.l.b16 %v1280
      %v1367 = vunpack.c.l.b16 %v1283
      %v1368 = vunpack.c.l.b16 %v1287
      %v1369 = vunpack.c.l.b16 %v1290
      %v1370 = vunpack.c.l.b16 %v1294
      %v1371 = vunpack.c.l.b16 %v1297
      %v1372 = vunpack.c.l.b16 %v1301
      %v1373 = vunpack.c.l.b16 %v1304
      %v1374 = vunpack.c.l.b16 %v1308
      %v1375 = vunpack.c.l.b16 %v1311
      %v1376 = vunpack.c.l.b16 %v1315
      %v1377 = vunpack.c.l.b16 %v1318
      %v1378 = vunpack.c.l.b16 %v1322
      %v1379 = vunpack.c.l.b16 %v1325
      %v1380 = vunpack.c.l.b16 %v1329
      %v1381 = vunpack.c.l.b16 %v1332
      %v1382 = vunpack.c.l.b16 %v1336
      %v1383 = vunpack.c.l.b16 %v1339
      %v1384 = vunpack.c.l.b16 %v1343
      %v1385 = vunpack.c.l.b16 %v1346
      %v1386 = vunpack.c.l.b16 %v1350
      %v1387 = vunpack.c.l.b16 %v1353
      %v1388 = vpack.c.b16 %v1357, %v1356
      %v1389 = vpack.c.b16 %v1359, %v1358
      %v1390 = vpack.c.b16 %v1361, %v1360
      %v1391 = vpack.c.b16 %v1363, %v1362
      %v1392 = vpack.c.b16 %v1365, %v1364
      %v1393 = vpack.c.b16 %v1367, %v1366
      %v1394 = vpack.c.b16 %v1369, %v1368
      %v1395 = vpack.c.b16 %v1371, %v1370
      %v1396 = vpack.c.b16 %v1373, %v1372
      %v1397 = vpack.c.b16 %v1375, %v1374
      %v1398 = vpack.c.b16 %v1377, %v1376
      %v1399 = vpack.c.b16 %v1379, %v1378
      %v1400 = vpack.c.b16 %v1381, %v1380
      %v1401 = vpack.c.b16 %v1383, %v1382
      %v1402 = vpack.c.b16 %v1385, %v1384
      %v1403 = vpack.c.b16 %v1387, %v1386
      %v1405 = vsel %vm685, %v1388, 0
      %v1408 = vsel %vm685, %v1389, 0
      %v1411 = vsel %vm685, %v1390, 0
      %v1414 = vsel %vm685, %v1391, 0
      %v1417 = vsel %vm685, %v1392, 0
      %v1420 = vsel %vm685, %v1393, 0
      %v1423 = vsel %vm685, %v1394, 0
      %v1426 = vsel %vm685, %v1395, 0
      %v1429 = vsel %vm685, %v1396, 0
      %v1432 = vsel %vm685, %v1397, 0
      %v1435 = vsel %vm685, %v1398, 0
      %v1438 = vsel %vm685, %v1399, 0
      %v1441 = vsel %vm685, %v1400, 0
      %v1444 = vsel %vm685, %v1401, 0
      %v1447 = vsel %vm685, %v1402, 0
      %v1450 = vsel %vm685, %v1403, 0
      %v1453 = vsel %vm734, %v1355, 0
      %1455 = vmatprep.subr.bf16.mxu0 0
      %1456 = vmatpush1.bf16.msra.mxu0 %v1453
      %1457 = vmatprep.subr.bf16.mxu0 0
      %1458 = vmatpush1.bf16.msra.mxu0 0
      %1459 = vmatprep.subr.bf16.mxu0 0
      %1460 = vmatpush1.bf16.msra.mxu0 0
      %1461 = vmatprep.subr.bf16.mxu0 0
      %1462 = vmatpush1.bf16.msra.mxu0 0
      %1463 = vmatprep.subr.bf16.mxu0 0
      %1464 = vmatpush1.bf16.msra.mxu0 0
      %1465 = vmatprep.subr.bf16.mxu0 0
      %1466 = vmatpush1.bf16.msra.mxu0 0
      %1467 = vmatprep.subr.bf16.mxu0 0
      %1468 = vmatpush1.bf16.msra.mxu0 0
      %1469 = vmatprep.subr.bf16.mxu0 0
      %1470 = vmatpush1.bf16.msra.mxu0 0
      %1471 = vmatprep.subr.bf16.mxu0 0
      %1472 = vmatpush1.bf16.msra.mxu0 0
      %1473 = vmatprep.subr.bf16.mxu0 0
      %1474 = vmatpush1.bf16.msra.mxu0 0
      %1475 = vmatprep.subr.bf16.mxu0 0
      %1476 = vmatpush1.bf16.msra.mxu0 0
      %1477 = vmatprep.subr.bf16.mxu0 0
      %1478 = vmatpush1.bf16.msra.mxu0 0
      %1479 = vmatprep.subr.bf16.mxu0 0
      %1480 = vmatpush1.bf16.msra.mxu0 0
      %1481 = vmatprep.subr.bf16.mxu0 0
      %1482 = vmatpush1.bf16.msra.mxu0 0
      %1483 = vmatprep.subr.bf16.mxu0 0
      %1484 = vmatpush1.bf16.msra.mxu0 0
      %1485 = vmatprep.subr.bf16.mxu0 0
      %1486 = vmatpush1.bf16.msra.mxu0 0
      %1487 = vmatprep.mubr.bf16.mxu0 0
      %1488 = vmatmul.mubr.bf16.gmra.mrb[0].mxu0 %v1405
      %v1489 = vpop.f32.mrb[0].mxu0
      %v1490 = vadd.f32 0.0, %v1489
      %v1491 = vpop.f32.mrb[0].mxu0
      %v1492 = vpop.f32.mrb[0].mxu0
      %v1493 = vadd.f32 0.0, %v1492
      %v1494 = vpop.f32.mrb[0].mxu0
      %1495 = vmatprep.mubr.bf16.mxu0 0
      %1496 = vmatmul.mubr.bf16.gmra.mrb[0].mxu0 %v1408
      %v1497 = vpop.f32.mrb[0].mxu0
      %v1498 = vadd.f32 0.0, %v1497
      %v1499 = vpop.f32.mrb[0].mxu0
      %v1500 = vpop.f32.mrb[0].mxu0
      %v1501 = vadd.f32 0.0, %v1500
      %v1502 = vpop.f32.mrb[0].mxu0
      %1503 = vmatprep.mubr.bf16.mxu0 0
      %1504 = vmatmul.mubr.bf16.gmra.mrb[0].mxu0 %v1411
      %v1505 = vpop.f32.mrb[0].mxu0
      %v1506 = vadd.f32 0.0, %v1505
      %v1507 = vpop.f32.mrb[0].mxu0
      %v1508 = vpop.f32.mrb[0].mxu0
      %v1509 = vadd.f32 0.0, %v1508
      %v1510 = vpop.f32.mrb[0].mxu0
      %1511 = vmatprep.mubr.bf16.mxu0 0
      %1512 = vmatmul.mubr.bf16.gmra.mrb[0].mxu0 %v1414
      %v1513 = vpop.f32.mrb[0].mxu0
      %v1514 = vadd.f32 0.0, %v1513
      %v1515 = vpop.f32.mrb[0].mxu0
      %v1516 = vpop.f32.mrb[0].mxu0
      %v1517 = vadd.f32 0.0, %v1516
      %v1518 = vpop.f32.mrb[0].mxu0
      %1519 = vmatprep.mubr.bf16.mxu0 0
      %1520 = vmatmul.mubr.bf16.gmra.mrb[0].mxu0 %v1417
      %v1521 = vpop.f32.mrb[0].mxu0
      %v1522 = vadd.f32 0.0, %v1521
      %v1523 = vpop.f32.mrb[0].mxu0
      %v1524 = vpop.f32.mrb[0].mxu0
      %v1525 = vadd.f32 0.0, %v1524
      %v1526 = vpop.f32.mrb[0].mxu0
      %1527 = vmatprep.mubr.bf16.mxu0 0
      %1528 = vmatmul.mubr.bf16.gmra.mrb[0].mxu0 %v1420
      %v1529 = vpop.f32.mrb[0].mxu0
      %v1530 = vadd.f32 0.0, %v1529
      %v1531 = vpop.f32.mrb[0].mxu0
      %v1532 = vpop.f32.mrb[0].mxu0
      %v1533 = vadd.f32 0.0, %v1532
      %v1534 = vpop.f32.mrb[0].mxu0
      %1535 = vmatprep.mubr.bf16.mxu0 0
      %1536 = vmatmul.mubr.bf16.gmra.mrb[0].mxu0 %v1423
      %v1537 = vpop.f32.mrb[0].mxu0
      %v1538 = vadd.f32 0.0, %v1537
      %v1539 = vpop.f32.mrb[0].mxu0
      %v1540 = vpop.f32.mrb[0].mxu0
      %v1541 = vadd.f32 0.0, %v1540
      %v1542 = vpop.f32.mrb[0].mxu0
      %1543 = vmatprep.mubr.bf16.mxu0 0
      %1544 = vmatmul.mubr.bf16.gmra.mrb[0].mxu0 %v1426
      %v1545 = vpop.f32.mrb[0].mxu0
      %v1546 = vadd.f32 0.0, %v1545
      %v1547 = vpop.f32.mrb[0].mxu0
      %v1548 = vpop.f32.mrb[0].mxu0
      %v1549 = vadd.f32 0.0, %v1548
      %v1550 = vpop.f32.mrb[0].mxu0
      %1551 = vmatprep.mubr.bf16.mxu0 0
      %1552 = vmatmul.mubr.bf16.gmra.mrb[0].mxu0 %v1429
      %v1553 = vpop.f32.mrb[0].mxu0
      %v1554 = vadd.f32 0.0, %v1553
      %v1555 = vpop.f32.mrb[0].mxu0
      %v1556 = vpop.f32.mrb[0].mxu0
      %v1557 = vadd.f32 0.0, %v1556
      %v1558 = vpop.f32.mrb[0].mxu0
      %1559 = vmatprep.mubr.bf16.mxu0 0
      %1560 = vmatmul.mubr.bf16.gmra.mrb[0].mxu0 %v1432
      %v1561 = vpop.f32.mrb[0].mxu0
      %v1562 = vadd.f32 0.0, %v1561
      %v1563 = vpop.f32.mrb[0].mxu0
      %v1564 = vpop.f32.mrb[0].mxu0
      %v1565 = vadd.f32 0.0, %v1564
      %v1566 = vpop.f32.mrb[0].mxu0
      %1567 = vmatprep.mubr.bf16.mxu0 0
      %1568 = vmatmul.mubr.bf16.gmra.mrb[0].mxu0 %v1435
      %v1569 = vpop.f32.mrb[0].mxu0
      %v1570 = vadd.f32 0.0, %v1569
      %v1571 = vpop.f32.mrb[0].mxu0
      %v1572 = vpop.f32.mrb[0].mxu0
      %v1573 = vadd.f32 0.0, %v1572
      %v1574 = vpop.f32.mrb[0].mxu0
      %1575 = vmatprep.mubr.bf16.mxu0 0
      %1576 = vmatmul.mubr.bf16.gmra.mrb[0].mxu0 %v1438
      %v1577 = vpop.f32.mrb[0].mxu0
      %v1578 = vadd.f32 0.0, %v1577
      %v1579 = vpop.f32.mrb[0].mxu0
      %v1580 = vpop.f32.mrb[0].mxu0
      %v1581 = vadd.f32 0.0, %v1580
      %v1582 = vpop.f32.mrb[0].mxu0
      %1583 = vmatprep.mubr.bf16.mxu0 0
      %1584 = vmatmul.mubr.bf16.gmra.mrb[0].mxu0 %v1441
      %v1585 = vpop.f32.mrb[0].mxu0
      %v1586 = vadd.f32 0.0, %v1585
      %v1587 = vpop.f32.mrb[0].mxu0
      %v1588 = vpop.f32.mrb[0].mxu0
      %v1589 = vadd.f32 0.0, %v1588
      %v1590 = vpop.f32.mrb[0].mxu0
      %1591 = vmatprep.mubr.bf16.mxu0 0
      %1592 = vmatmul.mubr.bf16.gmra.mrb[0].mxu0 %v1444
      %v1593 = vpop.f32.mrb[0].mxu0
      %v1594 = vadd.f32 0.0, %v1593
      %v1595 = vpop.f32.mrb[0].mxu0
      %v1596 = vpop.f32.mrb[0].mxu0
      %v1597 = vadd.f32 0.0, %v1596
      %v1598 = vpop.f32.mrb[0].mxu0
      %1599 = vmatprep.mubr.bf16.mxu0 0
      %1600 = vmatmul.mubr.bf16.gmra.mrb[0].mxu0 %v1447
      %v1601 = vpop.f32.mrb[0].mxu0
      %v1602 = vadd.f32 0.0, %v1601
      %v1603 = vpop.f32.mrb[0].mxu0
      %v1604 = vpop.f32.mrb[0].mxu0
      %v1605 = vadd.f32 0.0, %v1604
      %v1606 = vpop.f32.mrb[0].mxu0
      %1607 = vmatprep.mubr.bf16.mxu0 0
      %1608 = vmatmul.mubr.bf16.gmra.mrb[0].mxu0 %v1450
      %v1609 = vpop.f32.mrb[0].mxu0
      %v1610 = vadd.f32 0.0, %v1609
      %v1611 = vpop.f32.mrb[0].mxu0
      %v1612 = vpop.f32.mrb[0].mxu0
      %v1613 = vadd.f32 0.0, %v1612
      %v1614 = vpop.f32.mrb[0].mxu0
      %1615 = vdwg.mxu0
      %v1616 = vadd.f32 %v1065, %v1490
      %v1617 = vadd.f32 %v1068, %v1493
      %v1618 = vadd.f32 %v1073, %v1498
      %v1619 = vadd.f32 %v1076, %v1501
      %v1620 = vadd.f32 %v1081, %v1506
      %v1621 = vadd.f32 %v1084, %v1509
      %v1622 = vadd.f32 %v1089, %v1514
      %v1623 = vadd.f32 %v1092, %v1517
      %v1624 = vadd.f32 %v1097, %v1522
      %v1625 = vadd.f32 %v1100, %v1525
      %v1626 = vadd.f32 %v1105, %v1530
      %v1627 = vadd.f32 %v1108, %v1533
      %v1628 = vadd.f32 %v1113, %v1538
      %v1629 = vadd.f32 %v1116, %v1541
      %v1630 = vadd.f32 %v1121, %v1546
      %v1631 = vadd.f32 %v1124, %v1549
      %v1632 = vadd.f32 %v1129, %v1554
      %v1633 = vadd.f32 %v1132, %v1557
      %v1634 = vadd.f32 %v1137, %v1562
      %v1635 = vadd.f32 %v1140, %v1565
      %v1636 = vadd.f32 %v1145, %v1570
      %v1637 = vadd.f32 %v1148, %v1573
      %v1638 = vadd.f32 %v1153, %v1578
      %v1639 = vadd.f32 %v1156, %v1581
      %v1640 = vadd.f32 %v1161, %v1586
      %v1641 = vadd.f32 %v1164, %v1589
      %v1642 = vadd.f32 %v1169, %v1594
      %v1643 = vadd.f32 %v1172, %v1597
      %v1644 = vadd.f32 %v1177, %v1602
      %v1645 = vadd.f32 %v1180, %v1605
      %v1646 = vadd.f32 %v1185, %v1610
      %v1647 = vadd.f32 %v1188, %v1613
      %s1648 = scalar_lea.vmem %s192, 12
      %v1649 = vld [vmem:[%s1648] sm:$0xf]
      %v1650 = vld [vmem:[%s1648 + $0x4] sm:$0xf]
      %v1651 = vld [vmem:[%s1648 + $0xc] sm:$0xf]
      %v1652 = vld [vmem:[%s1648 + $0x10] sm:$0xf]
      %v1653 = vld [vmem:[%s1648 + $0x18] sm:$0xf]
      %v1654 = vld [vmem:[%s1648 + $0x1c] sm:$0xf]
      %v1655 = vld [vmem:[%s1648 + $0x24] sm:$0xf]
      %v1656 = vld [vmem:[%s1648 + $0x28] sm:$0xf]
      %v1657 = vld [vmem:[%s1648 + $0x30] sm:$0xf]
      %v1658 = vld [vmem:[%s1648 + $0x34] sm:$0xf]
      %v1659 = vld [vmem:[%s1648 + $0x3c] sm:$0xf]
      %v1660 = vld [vmem:[%s1648 + $0x40] sm:$0xf]
      %v1661 = vld [vmem:[%s1648 + $0x48] sm:$0xf]
      %v1662 = vld [vmem:[%s1648 + $0x4c] sm:$0xf]
      %v1663 = vld [vmem:[%s1648 + $0x54] sm:$0xf]
      %v1664 = vld [vmem:[%s1648 + $0x58] sm:$0xf]
      %v1665 = vld [vmem:[%s1648 + $0x60] sm:$0xf]
      %v1666 = vld [vmem:[%s1648 + $0x64] sm:$0xf]
      %v1667 = vld [vmem:[%s1648 + $0x6c] sm:$0xf]
      %v1668 = vld [vmem:[%s1648 + $0x70] sm:$0xf]
      %v1669 = vld [vmem:[%s1648 + $0x78] sm:$0xf]
      %v1670 = vld [vmem:[%s1648 + $0x7c] sm:$0xf]
      %v1671 = vld [vmem:[%s1648 + $0x84] sm:$0xf]
      %v1672 = vld [vmem:[%s1648 + $0x88] sm:$0xf]
      %v1673 = vld [vmem:[%s1648 + $0x90] sm:$0xf]
      %v1674 = vld [vmem:[%s1648 + $0x94] sm:$0xf]
      %v1675 = vld [vmem:[%s1648 + $0x9c] sm:$0xf]
      %v1676 = vld [vmem:[%s1648 + $0xa0] sm:$0xf]
      %v1677 = vld [vmem:[%s1648 + $0xa8] sm:$0xf]
      %v1678 = vld [vmem:[%s1648 + $0xac] sm:$0xf]
      %v1679 = vld [vmem:[%s1648 + $0xb4] sm:$0xf]
      %v1680 = vld [vmem:[%s1648 + $0xb8] sm:$0xf]
      %s1681 = scalar_lea.vmem %s1, 6
      %v1682 = vld [vmem:[%s1681] sm:$0x3]
      %v1715 = vunpack.c.l.b16 %v1649
      %v1716 = vunpack.c.l.b16 %v1650
      %v1717 = vunpack.c.l.b16 %v1651
      %v1718 = vunpack.c.l.b16 %v1652
      %v1719 = vunpack.c.l.b16 %v1653
      %v1720 = vunpack.c.l.b16 %v1654
      %v1721 = vunpack.c.l.b16 %v1655
      %v1722 = vunpack.c.l.b16 %v1656
      %v1723 = vunpack.c.l.b16 %v1657
      %v1724 = vunpack.c.l.b16 %v1658
      %v1725 = vunpack.c.l.b16 %v1659
      %v1726 = vunpack.c.l.b16 %v1660
      %v1727 = vunpack.c.l.b16 %v1661
      %v1728 = vunpack.c.l.b16 %v1662
      %v1729 = vunpack.c.l.b16 %v1663
      %v1730 = vunpack.c.l.b16 %v1664
      %v1731 = vunpack.c.l.b16 %v1665
      %v1732 = vunpack.c.l.b16 %v1666
      %v1733 = vunpack.c.l.b16 %v1667
      %v1734 = vunpack.c.l.b16 %v1668
      %v1735 = vunpack.c.l.b16 %v1669
      %v1736 = vunpack.c.l.b16 %v1670
      %v1737 = vunpack.c.l.b16 %v1671
      %v1738 = vunpack.c.l.b16 %v1672
      %v1739 = vunpack.c.l.b16 %v1673
      %v1740 = vunpack.c.l.b16 %v1674
      %v1741 = vunpack.c.l.b16 %v1675
      %v1742 = vunpack.c.l.b16 %v1676
      %v1743 = vunpack.c.l.b16 %v1677
      %v1744 = vunpack.c.l.b16 %v1678
      %v1745 = vunpack.c.l.b16 %v1679
      %v1746 = vunpack.c.l.b16 %v1680
      %v1747 = vpack.c.b16 %v1716, %v1715
      %v1748 = vpack.c.b16 %v1718, %v1717
      %v1749 = vpack.c.b16 %v1720, %v1719
      %v1750 = vpack.c.b16 %v1722, %v1721
      %v1751 = vpack.c.b16 %v1724, %v1723
      %v1752 = vpack.c.b16 %v1726, %v1725
      %v1753 = vpack.c.b16 %v1728, %v1727
      %v1754 = vpack.c.b16 %v1730, %v1729
      %v1755 = vpack.c.b16 %v1732, %v1731
      %v1756 = vpack.c.b16 %v1734, %v1733
      %v1757 = vpack.c.b16 %v1736, %v1735
      %v1758 = vpack.c.b16 %v1738, %v1737
      %v1759 = vpack.c.b16 %v1740, %v1739
      %v1760 = vpack.c.b16 %v1742, %v1741
      %v1761 = vpack.c.b16 %v1744, %v1743
      %v1762 = vpack.c.b16 %v1746, %v1745
      %v1764 = vsel %vm685, %v1747, 0
      %v1767 = vsel %vm685, %v1748, 0
      %v1770 = vsel %vm685, %v1749, 0
      %v1773 = vsel %vm685, %v1750, 0
      %v1776 = vsel %vm685, %v1751, 0
      %v1779 = vsel %vm685, %v1752, 0
      %v1782 = vsel %vm685, %v1753, 0
      %v1785 = vsel %vm685, %v1754, 0
      %v1788 = vsel %vm685, %v1755, 0
      %v1791 = vsel %vm685, %v1756, 0
      %v1794 = vsel %vm685, %v1757, 0
      %v1797 = vsel %vm685, %v1758, 0
      %v1800 = vsel %vm685, %v1759, 0
      %v1803 = vsel %vm685, %v1760, 0
      %v1806 = vsel %vm685, %v1761, 0
      %v1809 = vsel %vm685, %v1762, 0
      %v1812 = vsel %vm734, %v1682, 0
      %1814 = vmatprep.subr.bf16.mxu0 0
      %1815 = vmatpush1.bf16.msra.mxu0 %v1812
      %1816 = vmatprep.subr.bf16.mxu0 0
      %1817 = vmatpush1.bf16.msra.mxu0 0
      %1818 = vmatprep.subr.bf16.mxu0 0
      %1819 = vmatpush1.bf16.msra.mxu0 0
      %1820 = vmatprep.subr.bf16.mxu0 0
      %1821 = vmatpush1.bf16.msra.mxu0 0
      %1822 = vmatprep.subr.bf16.mxu0 0
      %1823 = vmatpush1.bf16.msra.mxu0 0
      %1824 = vmatprep.subr.bf16.mxu0 0
      %1825 = vmatpush1.bf16.msra.mxu0 0
      %1826 = vmatprep.subr.bf16.mxu0 0
      %1827 = vmatpush1.bf16.msra.mxu0 0
      %1828 = vmatprep.subr.bf16.mxu0 0
      %1829 = vmatpush1.bf16.msra.mxu0 0
      %1830 = vmatprep.subr.bf16.mxu0 0
      %1831 = vmatpush1.bf16.msra.mxu0 0
      %1832 = vmatprep.subr.bf16.mxu0 0
      %1833 = vmatpush1.bf16.msra.mxu0 0
      %1834 = vmatprep.subr.bf16.mxu0 0
      %1835 = vmatpush1.bf16.msra.mxu0 0
      %1836 = vmatprep.subr.bf16.mxu0 0
      %1837 = vmatpush1.bf16.msra.mxu0 0
      %1838 = vmatprep.subr.bf16.mxu0 0
      %1839 = vmatpush1.bf16.msra.mxu0 0
      %1840 = vmatprep.subr.bf16.mxu0 0
      %1841 = vmatpush1.bf16.msra.mxu0 0
      %1842 = vmatprep.subr.bf16.mxu0 0
      %1843 = vmatpush1.bf16.msra.mxu0 0
      %1844 = vmatprep.subr.bf16.mxu0 0
      %1845 = vmatpush1.bf16.msra.mxu0 0
      %1846 = vmatprep.mubr.bf16.mxu0 0
      %1847 = vmatmul.mubr.bf16.gmra.mrb[0].mxu0 %v1764
      %v1848 = vpop.f32.mrb[0].mxu0
      %v1849 = vadd.f32 0.0, %v1848
      %v1850 = vpop.f32.mrb[0].mxu0
      %v1851 = vpop.f32.mrb[0].mxu0
      %v1852 = vadd.f32 0.0, %v1851
      %v1853 = vpop.f32.mrb[0].mxu0
      %1854 = vmatprep.mubr.bf16.mxu0 0
      %1855 = vmatmul.mubr.bf16.gmra.mrb[0].mxu0 %v1767
      %v1856 = vpop.f32.mrb[0].mxu0
      %v1857 = vadd.f32 0.0, %v1856
      %v1858 = vpop.f32.mrb[0].mxu0
      %v1859 = vpop.f32.mrb[0].mxu0
      %v1860 = vadd.f32 0.0, %v1859
      %v1861 = vpop.f32.mrb[0].mxu0
      %1862 = vmatprep.mubr.bf16.mxu0 0
      %1863 = vmatmul.mubr.bf16.gmra.mrb[0].mxu0 %v1770
      %v1864 = vpop.f32.mrb[0].mxu0
      %v1865 = vadd.f32 0.0, %v1864
      %v1866 = vpop.f32.mrb[0].mxu0
      %v1867 = vpop.f32.mrb[0].mxu0
      %v1868 = vadd.f32 0.0, %v1867
      %v1869 = vpop.f32.mrb[0].mxu0
      %1870 = vmatprep.mubr.bf16.mxu0 0
      %1871 = vmatmul.mubr.bf16.gmra.mrb[0].mxu0 %v1773
      %v1872 = vpop.f32.mrb[0].mxu0
      %v1873 = vadd.f32 0.0, %v1872
      %v1874 = vpop.f32.mrb[0].mxu0
      %v1875 = vpop.f32.mrb[0].mxu0
      %v1876 = vadd.f32 0.0, %v1875
      %v1877 = vpop.f32.mrb[0].mxu0
      %1878 = vmatprep.mubr.bf16.mxu0 0
      %1879 = vmatmul.mubr.bf16.gmra.mrb[0].mxu0 %v1776
      %v1880 = vpop.f32.mrb[0].mxu0
      %v1881 = vadd.f32 0.0, %v1880
      %v1882 = vpop.f32.mrb[0].mxu0
      %v1883 = vpop.f32.mrb[0].mxu0
      %v1884 = vadd.f32 0.0, %v1883
      %v1885 = vpop.f32.mrb[0].mxu0
      %1886 = vmatprep.mubr.bf16.mxu0 0
      %1887 = vmatmul.mubr.bf16.gmra.mrb[0].mxu0 %v1779
      %v1888 = vpop.f32.mrb[0].mxu0
      %v1889 = vadd.f32 0.0, %v1888
      %v1890 = vpop.f32.mrb[0].mxu0
      %v1891 = vpop.f32.mrb[0].mxu0
      %v1892 = vadd.f32 0.0, %v1891
      %v1893 = vpop.f32.mrb[0].mxu0
      %1894 = vmatprep.mubr.bf16.mxu0 0
      %1895 = vmatmul.mubr.bf16.gmra.mrb[0].mxu0 %v1782
      %v1896 = vpop.f32.mrb[0].mxu0
      %v1897 = vadd.f32 0.0, %v1896
      %v1898 = vpop.f32.mrb[0].mxu0
      %v1899 = vpop.f32.mrb[0].mxu0
      %v1900 = vadd.f32 0.0, %v1899
      %v1901 = vpop.f32.mrb[0].mxu0
      %1902 = vmatprep.mubr.bf16.mxu0 0
      %1903 = vmatmul.mubr.bf16.gmra.mrb[0].mxu0 %v1785
      %v1904 = vpop.f32.mrb[0].mxu0
      %v1905 = vadd.f32 0.0, %v1904
      %v1906 = vpop.f32.mrb[0].mxu0
      %v1907 = vpop.f32.mrb[0].mxu0
      %v1908 = vadd.f32 0.0, %v1907
      %v1909 = vpop.f32.mrb[0].mxu0
      %1910 = vmatprep.mubr.bf16.mxu0 0
      %1911 = vmatmul.mubr.bf16.gmra.mrb[0].mxu0 %v1788
      %v1912 = vpop.f32.mrb[0].mxu0
      %v1913 = vadd.f32 0.0, %v1912
      %v1914 = vpop.f32.mrb[0].mxu0
      %v1915 = vpop.f32.mrb[0].mxu0
      %v1916 = vadd.f32 0.0, %v1915
      %v1917 = vpop.f32.mrb[0].mxu0
      %1918 = vmatprep.mubr.bf16.mxu0 0
      %1919 = vmatmul.mubr.bf16.gmra.mrb[0].mxu0 %v1791
      %v1920 = vpop.f32.mrb[0].mxu0
      %v1921 = vadd.f32 0.0, %v1920
      %v1922 = vpop.f32.mrb[0].mxu0
      %v1923 = vpop.f32.mrb[0].mxu0
      %v1924 = vadd.f32 0.0, %v1923
      %v1925 = vpop.f32.mrb[0].mxu0
      %1926 = vmatprep.mubr.bf16.mxu0 0
      %1927 = vmatmul.mubr.bf16.gmra.mrb[0].mxu0 %v1794
      %v1928 = vpop.f32.mrb[0].mxu0
      %v1929 = vadd.f32 0.0, %v1928
      %v1930 = vpop.f32.mrb[0].mxu0
      %v1931 = vpop.f32.mrb[0].mxu0
      %v1932 = vadd.f32 0.0, %v1931
      %v1933 = vpop.f32.mrb[0].mxu0
      %1934 = vmatprep.mubr.bf16.mxu0 0
      %1935 = vmatmul.mubr.bf16.gmra.mrb[0].mxu0 %v1797
      %v1936 = vpop.f32.mrb[0].mxu0
      %v1937 = vadd.f32 0.0, %v1936
      %v1938 = vpop.f32.mrb[0].mxu0
      %v1939 = vpop.f32.mrb[0].mxu0
      %v1940 = vadd.f32 0.0, %v1939
      %v1941 = vpop.f32.mrb[0].mxu0
      %1942 = vmatprep.mubr.bf16.mxu0 0
      %1943 = vmatmul.mubr.bf16.gmra.mrb[0].mxu0 %v1800
      %v1944 = vpop.f32.mrb[0].mxu0
      %v1945 = vadd.f32 0.0, %v1944
      %v1946 = vpop.f32.mrb[0].mxu0
      %v1947 = vpop.f32.mrb[0].mxu0
      %v1948 = vadd.f32 0.0, %v1947
      %v1949 = vpop.f32.mrb[0].mxu0
      %1950 = vmatprep.mubr.bf16.mxu0 0
      %1951 = vmatmul.mubr.bf16.gmra.mrb[0].mxu0 %v1803
      %v1952 = vpop.f32.mrb[0].mxu0
      %v1953 = vadd.f32 0.0, %v1952
      %v1954 = vpop.f32.mrb[0].mxu0
      %v1955 = vpop.f32.mrb[0].mxu0
      %v1956 = vadd.f32 0.0, %v1955
      %v1957 = vpop.f32.mrb[0].mxu0
      %1958 = vmatprep.mubr.bf16.mxu0 0
      %1959 = vmatmul.mubr.bf16.gmra.mrb[0].mxu0 %v1806
      %v1960 = vpop.f32.mrb[0].mxu0
      %v1961 = vadd.f32 0.0, %v1960
      %v1962 = vpop.f32.mrb[0].mxu0
      %v1963 = vpop.f32.mrb[0].mxu0
      %v1964 = vadd.f32 0.0, %v1963
      %v1965 = vpop.f32.mrb[0].mxu0
      %1966 = vmatprep.mubr.bf16.mxu0 0
      %1967 = vmatmul.mubr.bf16.gmra.mrb[0].mxu0 %v1809
      %v1968 = vpop.f32.mrb[0].mxu0
      %v1969 = vadd.f32 0.0, %v1968
      %v1970 = vpop.f32.mrb[0].mxu0
      %v1971 = vpop.f32.mrb[0].mxu0
      %v1972 = vadd.f32 0.0, %v1971
      %v1973 = vpop.f32.mrb[0].mxu0
      %1974 = vdwg.mxu0
      %v1975 = vadd.f32 %v1616, %v1849
      %v1976 = vadd.f32 %v1617, %v1852
      %v1977 = vadd.f32 %v1618, %v1857
      %v1978 = vadd.f32 %v1619, %v1860
      %v1979 = vadd.f32 %v1620, %v1865
      %v1980 = vadd.f32 %v1621, %v1868
      %v1981 = vadd.f32 %v1622, %v1873
      %v1982 = vadd.f32 %v1623, %v1876
      %v1983 = vadd.f32 %v1624, %v1881
      %v1984 = vadd.f32 %v1625, %v1884
      %v1985 = vadd.f32 %v1626, %v1889
      %v1986 = vadd.f32 %v1627, %v1892
      %v1987 = vadd.f32 %v1628, %v1897
      %v1988 = vadd.f32 %v1629, %v1900
      %v1989 = vadd.f32 %v1630, %v1905
      %v1990 = vadd.f32 %v1631, %v1908
      %v1991 = vadd.f32 %v1632, %v1913
      %v1992 = vadd.f32 %v1633, %v1916
      %v1993 = vadd.f32 %v1634, %v1921
      %v1994 = vadd.f32 %v1635, %v1924
      %v1995 = vadd.f32 %v1636, %v1929
      %v1996 = vadd.f32 %v1637, %v1932
      %v1997 = vadd.f32 %v1638, %v1937
      %v1998 = vadd.f32 %v1639, %v1940
      %v1999 = vadd.f32 %v1640, %v1945
      %v2000 = vadd.f32 %v1641, %v1948
      %v2001 = vadd.f32 %v1642, %v1953
      %v2002 = vadd.f32 %v1643, %v1956
      %v2003 = vadd.f32 %v1644, %v1961
      %v2004 = vadd.f32 %v1645, %v1964
      %v2005 = vadd.f32 %v1646, %v1969
      %v2006 = vadd.f32 %v1647, %v1972
      %v2007 = vld [vmem:[%s1648] sm:$0xf]
      %v2008 = vld [vmem:[%s1648 + $0x4] sm:$0xf]
      %v2009 = vld [vmem:[%s1648 + $0x8] sm:$0x1]
      %v2010 = vld [vmem:[%s1648 + $0xc] sm:$0xf]
      %v2011 = vld [vmem:[%s1648 + $0x10] sm:$0xf]
      %v2012 = vld [vmem:[%s1648 + $0x14] sm:$0x1]
      %v2013 = vld [vmem:[%s1648 + $0x18] sm:$0xf]
      %v2014 = vld [vmem:[%s1648 + $0x1c] sm:$0xf]
      %v2015 = vld [vmem:[%s1648 + $0x20] sm:$0x1]
      %v2016 = vld [vmem:[%s1648 + $0x24] sm:$0xf]
      %v2017 = vld [vmem:[%s1648 + $0x28] sm:$0xf]
      %v2018 = vld [vmem:[%s1648 + $0x2c] sm:$0x1]
      %v2019 = vld [vmem:[%s1648 + $0x30] sm:$0xf]
      %v2020 = vld [vmem:[%s1648 + $0x34] sm:$0xf]
      %v2021 = vld [vmem:[%s1648 + $0x38] sm:$0x1]
      %v2022 = vld [vmem:[%s1648 + $0x3c] sm:$0xf]
      %v2023 = vld [vmem:[%s1648 + $0x40] sm:$0xf]
      %v2024 = vld [vmem:[%s1648 + $0x44] sm:$0x1]
      %v2025 = vld [vmem:[%s1648 + $0x48] sm:$0xf]
      %v2026 = vld [vmem:[%s1648 + $0x4c] sm:$0xf]
      %v2027 = vld [vmem:[%s1648 + $0x50] sm:$0x1]
      %v2028 = vld [vmem:[%s1648 + $0x54] sm:$0xf]
      %v2029 = vld [vmem:[%s1648 + $0x58] sm:$0xf]
      %v2030 = vld [vmem:[%s1648 + $0x5c] sm:$0x1]
      %v2031 = vld [vmem:[%s1648 + $0x60] sm:$0xf]
      %v2032 = vld [vmem:[%s1648 + $0x64] sm:$0xf]
      %v2033 = vld [vmem:[%s1648 + $0x68] sm:$0x1]
      %v2034 = vld [vmem:[%s1648 + $0x6c] sm:$0xf]
      %v2035 = vld [vmem:[%s1648 + $0x70] sm:$0xf]
      %v2036 = vld [vmem:[%s1648 + $0x74] sm:$0x1]
      %v2037 = vld [vmem:[%s1648 + $0x78] sm:$0xf]
      %v2038 = vld [vmem:[%s1648 + $0x7c] sm:$0xf]
      %v2039 = vld [vmem:[%s1648 + $0x80] sm:$0x1]
      %v2040 = vld [vmem:[%s1648 + $0x84] sm:$0xf]
      %v2041 = vld [vmem:[%s1648 + $0x88] sm:$0xf]
      %v2042 = vld [vmem:[%s1648 + $0x8c] sm:$0x1]
      %v2043 = vld [vmem:[%s1648 + $0x90] sm:$0xf]
      %v2044 = vld [vmem:[%s1648 + $0x94] sm:$0xf]
      %v2045 = vld [vmem:[%s1648 + $0x98] sm:$0x1]
      %v2046 = vld [vmem:[%s1648 + $0x9c] sm:$0xf]
      %v2047 = vld [vmem:[%s1648 + $0xa0] sm:$0xf]
      %v2048 = vld [vmem:[%s1648 + $0xa4] sm:$0x1]
      %v2049 = vld [vmem:[%s1648 + $0xa8] sm:$0xf]
      %v2050 = vld [vmem:[%s1648 + $0xac] sm:$0xf]
      %v2051 = vld [vmem:[%s1648 + $0xb0] sm:$0x1]
      %v2052 = vld [vmem:[%s1648 + $0xb4] sm:$0xf]
      %v2053 = vld [vmem:[%s1648 + $0xb8] sm:$0xf]
      %v2054 = vld [vmem:[%s1648 + $0xbc] sm:$0x1]
      %v2056 = vshrl.u32 %v2007, 16
      %v2058 = vrot.slane %v2056, 4
      %v2059 = vshll.u32 %v2007, 16
      %v2061 = vrot.slane %v2059, 5
      %v2062 = vor.u32 %v2058, %v2061
      %v2063 = vrot.slane %v2062, 4
      %v2065 = vshll.u32 %v2008, 16
      %v2067 = vrot.slane %v2065, 5
      %v2068 = vsel %vm250, %v2063, %v2067
      %v2069 = vshrl.u32 %v2008, 16
      %v2071 = vrot.slane %v2069, 4
      %v2072 = vor.u32 %v2071, %v2067
      %v2073 = vrot.slane %v2072, 4
      %v2075 = vshll.u32 %v2009, 16
      %v2077 = vrot.slane %v2075, 5
      %v2078 = vsel %vm250, %v2073, %v2077
      %v2080 = vshrl.u32 %v2010, 16
      %v2082 = vrot.slane %v2080, 4
      %v2083 = vshll.u32 %v2010, 16
      %v2085 = vrot.slane %v2083, 5
      %v2086 = vor.u32 %v2082, %v2085
      %v2087 = vrot.slane %v2086, 4
      %v2089 = vshll.u32 %v2011, 16
      %v2091 = vrot.slane %v2089, 5
      %v2092 = vsel %vm250, %v2087, %v2091
      %v2093 = vshrl.u32 %v2011, 16
      %v2095 = vrot.slane %v2093, 4
      %v2096 = vor.u32 %v2095, %v2091
      %v2097 = vrot.slane %v2096, 4
      %v2099 = vshll.u32 %v2012, 16
      %v2101 = vrot.slane %v2099, 5
      %v2102 = vsel %vm250, %v2097, %v2101
      %v2104 = vshrl.u32 %v2013, 16
      %v2106 = vrot.slane %v2104, 4
      %v2107 = vshll.u32 %v2013, 16
      %v2109 = vrot.slane %v2107, 5
      %v2110 = vor.u32 %v2106, %v2109
      %v2111 = vrot.slane %v2110, 4
      %v2113 = vshll.u32 %v2014, 16
      %v2115 = vrot.slane %v2113, 5
      %v2116 = vsel %vm250, %v2111, %v2115
      %v2117 = vshrl.u32 %v2014, 16
      %v2119 = vrot.slane %v2117, 4
      %v2120 = vor.u32 %v2119, %v2115
      %v2121 = vrot.slane %v2120, 4
      %v2123 = vshll.u32 %v2015, 16
      %v2125 = vrot.slane %v2123, 5
      %v2126 = vsel %vm250, %v2121, %v2125
      %v2128 = vshrl.u32 %v2016, 16
      %v2130 = vrot.slane %v2128, 4
      %v2131 = vshll.u32 %v2016, 16
      %v2133 = vrot.slane %v2131, 5
      %v2134 = vor.u32 %v2130, %v2133
      %v2135 = vrot.slane %v2134, 4
      %v2137 = vshll.u32 %v2017, 16
      %v2139 = vrot.slane %v2137, 5
      %v2140 = vsel %vm250, %v2135, %v2139
      %v2141 = vshrl.u32 %v2017, 16
      %v2143 = vrot.slane %v2141, 4
      %v2144 = vor.u32 %v2143, %v2139
      %v2145 = vrot.slane %v2144, 4
      %v2147 = vshll.u32 %v2018, 16
      %v2149 = vrot.slane %v2147, 5
      %v2150 = vsel %vm250, %v2145, %v2149
      %v2152 = vshrl.u32 %v2019, 16
      %v2154 = vrot.slane %v2152, 4
      %v2155 = vshll.u32 %v2019, 16
      %v2157 = vrot.slane %v2155, 5
      %v2158 = vor.u32 %v2154, %v2157
      %v2159 = vrot.slane %v2158, 4
      %v2161 = vshll.u32 %v2020, 16
      %v2163 = vrot.slane %v2161, 5
      %v2164 = vsel %vm250, %v2159, %v2163
      %v2165 = vshrl.u32 %v2020, 16
      %v2167 = vrot.slane %v2165, 4
      %v2168 = vor.u32 %v2167, %v2163
      %v2169 = vrot.slane %v2168, 4
      %v2171 = vshll.u32 %v2021, 16
      %v2173 = vrot.slane %v2171, 5
      %v2174 = vsel %vm250, %v2169, %v2173
      %v2176 = vshrl.u32 %v2022, 16
      %v2178 = vrot.slane %v2176, 4
      %v2179 = vshll.u32 %v2022, 16
      %v2181 = vrot.slane %v2179, 5
      %v2182 = vor.u32 %v2178, %v2181
      %v2183 = vrot.slane %v2182, 4
      %v2185 = vshll.u32 %v2023, 16
      %v2187 = vrot.slane %v2185, 5
      %v2188 = vsel %vm250, %v2183, %v2187
      %v2189 = vshrl.u32 %v2023, 16
      %v2191 = vrot.slane %v2189, 4
      %v2192 = vor.u32 %v2191, %v2187
      %v2193 = vrot.slane %v2192, 4
      %v2195 = vshll.u32 %v2024, 16
      %v2197 = vrot.slane %v2195, 5
      %v2198 = vsel %vm250, %v2193, %v2197
      %v2200 = vshrl.u32 %v2025, 16
      %v2202 = vrot.slane %v2200, 4
      %v2203 = vshll.u32 %v2025, 16
      %v2205 = vrot.slane %v2203, 5
      %v2206 = vor.u32 %v2202, %v2205
      %v2207 = vrot.slane %v2206, 4
      %v2209 = vshll.u32 %v2026, 16
      %v2211 = vrot.slane %v2209, 5
      %v2212 = vsel %vm250, %v2207, %v2211
      %v2213 = vshrl.u32 %v2026, 16
      %v2215 = vrot.slane %v2213, 4
      %v2216 = vor.u32 %v2215, %v2211
      %v2217 = vrot.slane %v2216, 4
      %v2219 = vshll.u32 %v2027, 16
      %v2221 = vrot.slane %v2219, 5
      %v2222 = vsel %vm250, %v2217, %v2221
      %v2224 = vshrl.u32 %v2028, 16
      %v2226 = vrot.slane %v2224, 4
      %v2227 = vshll.u32 %v2028, 16
      %v2229 = vrot.slane %v2227, 5
      %v2230 = vor.u32 %v2226, %v2229
      %v2231 = vrot.slane %v2230, 4
      %v2233 = vshll.u32 %v2029, 16
      %v2235 = vrot.slane %v2233, 5
      %v2236 = vsel %vm250, %v2231, %v2235
      %v2237 = vshrl.u32 %v2029, 16
      %v2239 = vrot.slane %v2237, 4
      %v2240 = vor.u32 %v2239, %v2235
      %v2241 = vrot.slane %v2240, 4
      %v2243 = vshll.u32 %v2030, 16
      %v2245 = vrot.slane %v2243, 5
      %v2246 = vsel %vm250, %v2241, %v2245
      %v2248 = vshrl.u32 %v2031, 16
      %v2250 = vrot.slane %v2248, 4
      %v2251 = vshll.u32 %v2031, 16
      %v2253 = vrot.slane %v2251, 5
      %v2254 = vor.u32 %v2250, %v2253
      %v2255 = vrot.slane %v2254, 4
      %v2257 = vshll.u32 %v2032, 16
      %v2259 = vrot.slane %v2257, 5
      %v2260 = vsel %vm250, %v2255, %v2259
      %v2261 = vshrl.u32 %v2032, 16
      %v2263 = vrot.slane %v2261, 4
      %v2264 = vor.u32 %v2263, %v2259
      %v2265 = vrot.slane %v2264, 4
      %v2267 = vshll.u32 %v2033, 16
      %v2269 = vrot.slane %v2267, 5
      %v2270 = vsel %vm250, %v2265, %v2269
      %v2272 = vshrl.u32 %v2034, 16
      %v2274 = vrot.slane %v2272, 4
      %v2275 = vshll.u32 %v2034, 16
      %v2277 = vrot.slane %v2275, 5
      %v2278 = vor.u32 %v2274, %v2277
      %v2279 = vrot.slane %v2278, 4
      %v2281 = vshll.u32 %v2035, 16
      %v2283 = vrot.slane %v2281, 5
      %v2284 = vsel %vm250, %v2279, %v2283
      %v2285 = vshrl.u32 %v2035, 16
      %v2287 = vrot.slane %v2285, 4
      %v2288 = vor.u32 %v2287, %v2283
      %v2289 = vrot.slane %v2288, 4
      %v2291 = vshll.u32 %v2036, 16
      %v2293 = vrot.slane %v2291, 5
      %v2294 = vsel %vm250, %v2289, %v2293
      %v2296 = vshrl.u32 %v2037, 16
      %v2298 = vrot.slane %v2296, 4
      %v2299 = vshll.u32 %v2037, 16
      %v2301 = vrot.slane %v2299, 5
      %v2302 = vor.u32 %v2298, %v2301
      %v2303 = vrot.slane %v2302, 4
      %v2305 = vshll.u32 %v2038, 16
      %v2307 = vrot.slane %v2305, 5
      %v2308 = vsel %vm250, %v2303, %v2307
      %v2309 = vshrl.u32 %v2038, 16
      %v2311 = vrot.slane %v2309, 4
      %v2312 = vor.u32 %v2311, %v2307
      %v2313 = vrot.slane %v2312, 4
      %v2315 = vshll.u32 %v2039, 16
      %v2317 = vrot.slane %v2315, 5
      %v2318 = vsel %vm250, %v2313, %v2317
      %v2320 = vshrl.u32 %v2040, 16
      %v2322 = vrot.slane %v2320, 4
      %v2323 = vshll.u32 %v2040, 16
      %v2325 = vrot.slane %v2323, 5
      %v2326 = vor.u32 %v2322, %v2325
      %v2327 = vrot.slane %v2326, 4
      %v2329 = vshll.u32 %v2041, 16
      %v2331 = vrot.slane %v2329, 5
      %v2332 = vsel %vm250, %v2327, %v2331
      %v2333 = vshrl.u32 %v2041, 16
      %v2335 = vrot.slane %v2333, 4
      %v2336 = vor.u32 %v2335, %v2331
      %v2337 = vrot.slane %v2336, 4
      %v2339 = vshll.u32 %v2042, 16
      %v2341 = vrot.slane %v2339, 5
      %v2342 = vsel %vm250, %v2337, %v2341
      %v2344 = vshrl.u32 %v2043, 16
      %v2346 = vrot.slane %v2344, 4
      %v2347 = vshll.u32 %v2043, 16
      %v2349 = vrot.slane %v2347, 5
      %v2350 = vor.u32 %v2346, %v2349
      %v2351 = vrot.slane %v2350, 4
      %v2353 = vshll.u32 %v2044, 16
      %v2355 = vrot.slane %v2353, 5
      %v2356 = vsel %vm250, %v2351, %v2355
      %v2357 = vshrl.u32 %v2044, 16
      %v2359 = vrot.slane %v2357, 4
      %v2360 = vor.u32 %v2359, %v2355
      %v2361 = vrot.slane %v2360, 4
      %v2363 = vshll.u32 %v2045, 16
      %v2365 = vrot.slane %v2363, 5
      %v2366 = vsel %vm250, %v2361, %v2365
      %v2368 = vshrl.u32 %v2046, 16
      %v2370 = vrot.slane %v2368, 4
      %v2371 = vshll.u32 %v2046, 16
      %v2373 = vrot.slane %v2371, 5
      %v2374 = vor.u32 %v2370, %v2373
      %v2375 = vrot.slane %v2374, 4
      %v2377 = vshll.u32 %v2047, 16
      %v2379 = vrot.slane %v2377, 5
      %v2380 = vsel %vm250, %v2375, %v2379
      %v2381 = vshrl.u32 %v2047, 16
      %v2383 = vrot.slane %v2381, 4
      %v2384 = vor.u32 %v2383, %v2379
      %v2385 = vrot.slane %v2384, 4
      %v2387 = vshll.u32 %v2048, 16
      %v2389 = vrot.slane %v2387, 5
      %v2390 = vsel %vm250, %v2385, %v2389
      %v2392 = vshrl.u32 %v2049, 16
      %v2394 = vrot.slane %v2392, 4
      %v2395 = vshll.u32 %v2049, 16
      %v2397 = vrot.slane %v2395, 5
      %v2398 = vor.u32 %v2394, %v2397
      %v2399 = vrot.slane %v2398, 4
      %v2401 = vshll.u32 %v2050, 16
      %v2403 = vrot.slane %v2401, 5
      %v2404 = vsel %vm250, %v2399, %v2403
      %v2405 = vshrl.u32 %v2050, 16
      %v2407 = vrot.slane %v2405, 4
      %v2408 = vor.u32 %v2407, %v2403
      %v2409 = vrot.slane %v2408, 4
      %v2411 = vshll.u32 %v2051, 16
      %v2413 = vrot.slane %v2411, 5
      %v2414 = vsel %vm250, %v2409, %v2413
      %v2416 = vshrl.u32 %v2052, 16
      %v2418 = vrot.slane %v2416, 4
      %v2419 = vshll.u32 %v2052, 16
      %v2421 = vrot.slane %v2419, 5
      %v2422 = vor.u32 %v2418, %v2421
      %v2423 = vrot.slane %v2422, 4
      %v2425 = vshll.u32 %v2053, 16
      %v2427 = vrot.slane %v2425, 5
      %v2428 = vsel %vm250, %v2423, %v2427
      %v2429 = vshrl.u32 %v2053, 16
      %v2431 = vrot.slane %v2429, 4
      %v2432 = vor.u32 %v2431, %v2427
      %v2433 = vrot.slane %v2432, 4
      %v2435 = vshll.u32 %v2054, 16
      %v2437 = vrot.slane %v2435, 5
      %v2438 = vsel %vm250, %v2433, %v2437
      %s2439 = scalar_lea.vmem %s1, 8
      %v2440 = vld [vmem:[%s2439] sm:$0x3]
      %v2441 = vunpack.c.l.b16 %v2068
      %v2442 = vunpack.c.l.b16 %v2078
      %v2443 = vunpack.c.l.b16 %v2092
      %v2444 = vunpack.c.l.b16 %v2102
      %v2445 = vunpack.c.l.b16 %v2116
      %v2446 = vunpack.c.l.b16 %v2126
      %v2447 = vunpack.c.l.b16 %v2140
      %v2448 = vunpack.c.l.b16 %v2150
      %v2449 = vunpack.c.l.b16 %v2164
      %v2450 = vunpack.c.l.b16 %v2174
      %v2451 = vunpack.c.l.b16 %v2188
      %v2452 = vunpack.c.l.b16 %v2198
      %v2453 = vunpack.c.l.b16 %v2212
      %v2454 = vunpack.c.l.b16 %v2222
      %v2455 = vunpack.c.l.b16 %v2236
      %v2456 = vunpack.c.l.b16 %v2246
      %v2457 = vunpack.c.l.b16 %v2260
      %v2458 = vunpack.c.l.b16 %v2270
      %v2459 = vunpack.c.l.b16 %v2284
      %v2460 = vunpack.c.l.b16 %v2294
      %v2461 = vunpack.c.l.b16 %v2308
      %v2462 = vunpack.c.l.b16 %v2318
      %v2463 = vunpack.c.l.b16 %v2332
      %v2464 = vunpack.c.l.b16 %v2342
      %v2465 = vunpack.c.l.b16 %v2356
      %v2466 = vunpack.c.l.b16 %v2366
      %v2467 = vunpack.c.l.b16 %v2380
      %v2468 = vunpack.c.l.b16 %v2390
      %v2469 = vunpack.c.l.b16 %v2404
      %v2470 = vunpack.c.l.b16 %v2414
      %v2471 = vunpack.c.l.b16 %v2428
      %v2472 = vunpack.c.l.b16 %v2438
      %v2473 = vpack.c.b16 %v2442, %v2441
      %v2474 = vpack.c.b16 %v2444, %v2443
      %v2475 = vpack.c.b16 %v2446, %v2445
      %v2476 = vpack.c.b16 %v2448, %v2447
      %v2477 = vpack.c.b16 %v2450, %v2449
      %v2478 = vpack.c.b16 %v2452, %v2451
      %v2479 = vpack.c.b16 %v2454, %v2453
      %v2480 = vpack.c.b16 %v2456, %v2455
      %v2481 = vpack.c.b16 %v2458, %v2457
      %v2482 = vpack.c.b16 %v2460, %v2459
      %v2483 = vpack.c.b16 %v2462, %v2461
      %v2484 = vpack.c.b16 %v2464, %v2463
      %v2485 = vpack.c.b16 %v2466, %v2465
      %v2486 = vpack.c.b16 %v2468, %v2467
      %v2487 = vpack.c.b16 %v2470, %v2469
      %v2488 = vpack.c.b16 %v2472, %v2471
      %v2490 = vsel %vm685, %v2473, 0
      %v2493 = vsel %vm685, %v2474, 0
      %v2496 = vsel %vm685, %v2475, 0
      %v2499 = vsel %vm685, %v2476, 0
      %v2502 = vsel %vm685, %v2477, 0
      %v2505 = vsel %vm685, %v2478, 0
      %v2508 = vsel %vm685, %v2479, 0
      %v2511 = vsel %vm685, %v2480, 0
      %v2514 = vsel %vm685, %v2481, 0
      %v2517 = vsel %vm685, %v2482, 0
      %v2520 = vsel %vm685, %v2483, 0
      %v2523 = vsel %vm685, %v2484, 0
      %v2526 = vsel %vm685, %v2485, 0
      %v2529 = vsel %vm685, %v2486, 0
      %v2532 = vsel %vm685, %v2487, 0
      %v2535 = vsel %vm685, %v2488, 0
      %v2538 = vsel %vm734, %v2440, 0
      %2540 = vmatprep.subr.bf16.mxu0 0
      %2541 = vmatpush1.bf16.msra.mxu0 %v2538
      %2542 = vmatprep.subr.bf16.mxu0 0
      %2543 = vmatpush1.bf16.msra.mxu0 0
      %2544 = vmatprep.subr.bf16.mxu0 0
      %2545 = vmatpush1.bf16.msra.mxu0 0
      %2546 = vmatprep.subr.bf16.mxu0 0
      %2547 = vmatpush1.bf16.msra.mxu0 0
      %2548 = vmatprep.subr.bf16.mxu0 0
      %2549 = vmatpush1.bf16.msra.mxu0 0
      %2550 = vmatprep.subr.bf16.mxu0 0
      %2551 = vmatpush1.bf16.msra.mxu0 0
      %2552 = vmatprep.subr.bf16.mxu0 0
      %2553 = vmatpush1.bf16.msra.mxu0 0
      %2554 = vmatprep.subr.bf16.mxu0 0
      %2555 = vmatpush1.bf16.msra.mxu0 0
      %2556 = vmatprep.subr.bf16.mxu0 0
      %2557 = vmatpush1.bf16.msra.mxu0 0
      %2558 = vmatprep.subr.bf16.mxu0 0
      %2559 = vmatpush1.bf16.msra.mxu0 0
      %2560 = vmatprep.subr.bf16.mxu0 0
      %2561 = vmatpush1.bf16.msra.mxu0 0
      %2562 = vmatprep.subr.bf16.mxu0 0
      %2563 = vmatpush1.bf16.msra.mxu0 0
      %2564 = vmatprep.subr.bf16.mxu0 0
      %2565 = vmatpush1.bf16.msra.mxu0 0
      %2566 = vmatprep.subr.bf16.mxu0 0
      %2567 = vmatpush1.bf16.msra.mxu0 0
      %2568 = vmatprep.subr.bf16.mxu0 0
      %2569 = vmatpush1.bf16.msra.mxu0 0
      %2570 = vmatprep.subr.bf16.mxu0 0
      %2571 = vmatpush1.bf16.msra.mxu0 0
      %2572 = vmatprep.mubr.bf16.mxu0 0
      %2573 = vmatmul.mubr.bf16.gmra.mrb[0].mxu0 %v2490
      %v2574 = vpop.f32.mrb[0].mxu0
      %v2575 = vadd.f32 0.0, %v2574
      %v2576 = vpop.f32.mrb[0].mxu0
      %v2577 = vpop.f32.mrb[0].mxu0
      %v2578 = vadd.f32 0.0, %v2577
      %v2579 = vpop.f32.mrb[0].mxu0
      %2580 = vmatprep.mubr.bf16.mxu0 0
      %2581 = vmatmul.mubr.bf16.gmra.mrb[0].mxu0 %v2493
      %v2582 = vpop.f32.mrb[0].mxu0
      %v2583 = vadd.f32 0.0, %v2582
      %v2584 = vpop.f32.mrb[0].mxu0
      %v2585 = vpop.f32.mrb[0].mxu0
      %v2586 = vadd.f32 0.0, %v2585
      %v2587 = vpop.f32.mrb[0].mxu0
      %2588 = vmatprep.mubr.bf16.mxu0 0
      %2589 = vmatmul.mubr.bf16.gmra.mrb[0].mxu0 %v2496
      %v2590 = vpop.f32.mrb[0].mxu0
      %v2591 = vadd.f32 0.0, %v2590
      %v2592 = vpop.f32.mrb[0].mxu0
      %v2593 = vpop.f32.mrb[0].mxu0
      %v2594 = vadd.f32 0.0, %v2593
      %v2595 = vpop.f32.mrb[0].mxu0
      %2596 = vmatprep.mubr.bf16.mxu0 0
      %2597 = vmatmul.mubr.bf16.gmra.mrb[0].mxu0 %v2499
      %v2598 = vpop.f32.mrb[0].mxu0
      %v2599 = vadd.f32 0.0, %v2598
      %v2600 = vpop.f32.mrb[0].mxu0
      %v2601 = vpop.f32.mrb[0].mxu0
      %v2602 = vadd.f32 0.0, %v2601
      %v2603 = vpop.f32.mrb[0].mxu0
      %2604 = vmatprep.mubr.bf16.mxu0 0
      %2605 = vmatmul.mubr.bf16.gmra.mrb[0].mxu0 %v2502
      %v2606 = vpop.f32.mrb[0].mxu0
      %v2607 = vadd.f32 0.0, %v2606
      %v2608 = vpop.f32.mrb[0].mxu0
      %v2609 = vpop.f32.mrb[0].mxu0
      %v2610 = vadd.f32 0.0, %v2609
      %v2611 = vpop.f32.mrb[0].mxu0
      %2612 = vmatprep.mubr.bf16.mxu0 0
      %2613 = vmatmul.mubr.bf16.gmra.mrb[0].mxu0 %v2505
      %v2614 = vpop.f32.mrb[0].mxu0
      %v2615 = vadd.f32 0.0, %v2614
      %v2616 = vpop.f32.mrb[0].mxu0
      %v2617 = vpop.f32.mrb[0].mxu0
      %v2618 = vadd.f32 0.0, %v2617
      %v2619 = vpop.f32.mrb[0].mxu0
      %2620 = vmatprep.mubr.bf16.mxu0 0
      %2621 = vmatmul.mubr.bf16.gmra.mrb[0].mxu0 %v2508
      %v2622 = vpop.f32.mrb[0].mxu0
      %v2623 = vadd.f32 0.0, %v2622
      %v2624 = vpop.f32.mrb[0].mxu0
      %v2625 = vpop.f32.mrb[0].mxu0
      %v2626 = vadd.f32 0.0, %v2625
      %v2627 = vpop.f32.mrb[0].mxu0
      %2628 = vmatprep.mubr.bf16.mxu0 0
      %2629 = vmatmul.mubr.bf16.gmra.mrb[0].mxu0 %v2511
      %v2630 = vpop.f32.mrb[0].mxu0
      %v2631 = vadd.f32 0.0, %v2630
      %v2632 = vpop.f32.mrb[0].mxu0
      %v2633 = vpop.f32.mrb[0].mxu0
      %v2634 = vadd.f32 0.0, %v2633
      %v2635 = vpop.f32.mrb[0].mxu0
      %2636 = vmatprep.mubr.bf16.mxu0 0
      %2637 = vmatmul.mubr.bf16.gmra.mrb[0].mxu0 %v2514
      %v2638 = vpop.f32.mrb[0].mxu0
      %v2639 = vadd.f32 0.0, %v2638
      %v2640 = vpop.f32.mrb[0].mxu0
      %v2641 = vpop.f32.mrb[0].mxu0
      %v2642 = vadd.f32 0.0, %v2641
      %v2643 = vpop.f32.mrb[0].mxu0
      %2644 = vmatprep.mubr.bf16.mxu0 0
      %2645 = vmatmul.mubr.bf16.gmra.mrb[0].mxu0 %v2517
      %v2646 = vpop.f32.mrb[0].mxu0
      %v2647 = vadd.f32 0.0, %v2646
      %v2648 = vpop.f32.mrb[0].mxu0
      %v2649 = vpop.f32.mrb[0].mxu0
      %v2650 = vadd.f32 0.0, %v2649
      %v2651 = vpop.f32.mrb[0].mxu0
      %2652 = vmatprep.mubr.bf16.mxu0 0
      %2653 = vmatmul.mubr.bf16.gmra.mrb[0].mxu0 %v2520
      %v2654 = vpop.f32.mrb[0].mxu0
      %v2655 = vadd.f32 0.0, %v2654
      %v2656 = vpop.f32.mrb[0].mxu0
      %v2657 = vpop.f32.mrb[0].mxu0
      %v2658 = vadd.f32 0.0, %v2657
      %v2659 = vpop.f32.mrb[0].mxu0
      %2660 = vmatprep.mubr.bf16.mxu0 0
      %2661 = vmatmul.mubr.bf16.gmra.mrb[0].mxu0 %v2523
      %v2662 = vpop.f32.mrb[0].mxu0
      %v2663 = vadd.f32 0.0, %v2662
      %v2664 = vpop.f32.mrb[0].mxu0
      %v2665 = vpop.f32.mrb[0].mxu0
      %v2666 = vadd.f32 0.0, %v2665
      %v2667 = vpop.f32.mrb[0].mxu0
      %2668 = vmatprep.mubr.bf16.mxu0 0
      %2669 = vmatmul.mubr.bf16.gmra.mrb[0].mxu0 %v2526
      %v2670 = vpop.f32.mrb[0].mxu0
      %v2671 = vadd.f32 0.0, %v2670
      %v2672 = vpop.f32.mrb[0].mxu0
      %v2673 = vpop.f32.mrb[0].mxu0
      %v2674 = vadd.f32 0.0, %v2673
      %v2675 = vpop.f32.mrb[0].mxu0
      %2676 = vmatprep.mubr.bf16.mxu0 0
      %2677 = vmatmul.mubr.bf16.gmra.mrb[0].mxu0 %v2529
      %v2678 = vpop.f32.mrb[0].mxu0
      %v2679 = vadd.f32 0.0, %v2678
      %v2680 = vpop.f32.mrb[0].mxu0
      %v2681 = vpop.f32.mrb[0].mxu0
      %v2682 = vadd.f32 0.0, %v2681
      %v2683 = vpop.f32.mrb[0].mxu0
      %2684 = vmatprep.mubr.bf16.mxu0 0
      %2685 = vmatmul.mubr.bf16.gmra.mrb[0].mxu0 %v2532
      %v2686 = vpop.f32.mrb[0].mxu0
      %v2687 = vadd.f32 0.0, %v2686
      %v2688 = vpop.f32.mrb[0].mxu0
      %v2689 = vpop.f32.mrb[0].mxu0
      %v2690 = vadd.f32 0.0, %v2689
      %v2691 = vpop.f32.mrb[0].mxu0
      %2692 = vmatprep.mubr.bf16.mxu0 0
      %2693 = vmatmul.mubr.bf16.gmra.mrb[0].mxu0 %v2535
      %v2694 = vpop.f32.mrb[0].mxu0
      %v2695 = vadd.f32 0.0, %v2694
      %v2696 = vpop.f32.mrb[0].mxu0
      %v2697 = vpop.f32.mrb[0].mxu0
      %v2698 = vadd.f32 0.0, %v2697
      %v2699 = vpop.f32.mrb[0].mxu0
      %2700 = vdwg.mxu0
      %v2701 = vadd.f32 %v1975, %v2575
      %v2702 = vadd.f32 %v1976, %v2578
      %v2703 = vadd.f32 %v1977, %v2583
      %v2704 = vadd.f32 %v1978, %v2586
      %v2705 = vadd.f32 %v1979, %v2591
      %v2706 = vadd.f32 %v1980, %v2594
      %v2707 = vadd.f32 %v1981, %v2599
      %v2708 = vadd.f32 %v1982, %v2602
      %v2709 = vadd.f32 %v1983, %v2607
      %v2710 = vadd.f32 %v1984, %v2610
      %v2711 = vadd.f32 %v1985, %v2615
      %v2712 = vadd.f32 %v1986, %v2618
      %v2713 = vadd.f32 %v1987, %v2623
      %v2714 = vadd.f32 %v1988, %v2626
      %v2715 = vadd.f32 %v1989, %v2631
      %v2716 = vadd.f32 %v1990, %v2634
      %v2717 = vadd.f32 %v1991, %v2639
      %v2718 = vadd.f32 %v1992, %v2642
      %v2719 = vadd.f32 %v1993, %v2647
      %v2720 = vadd.f32 %v1994, %v2650
      %v2721 = vadd.f32 %v1995, %v2655
      %v2722 = vadd.f32 %v1996, %v2658
      %v2723 = vadd.f32 %v1997, %v2663
      %v2724 = vadd.f32 %v1998, %v2666
      %v2725 = vadd.f32 %v1999, %v2671
      %v2726 = vadd.f32 %v2000, %v2674
      %v2727 = vadd.f32 %v2001, %v2679
      %v2728 = vadd.f32 %v2002, %v2682
      %v2729 = vadd.f32 %v2003, %v2687
      %v2730 = vadd.f32 %v2004, %v2690
      %v2731 = vadd.f32 %v2005, %v2695
      %v2732 = vadd.f32 %v2006, %v2698
      %v2733 = vld [vmem:[%s1648] sm:$0xe]
      %v2734 = vld [vmem:[%s1648 + $0xc] sm:$0xe]
      %v2735 = vld [vmem:[%s1648 + $0x18] sm:$0xe]
      %v2736 = vld [vmem:[%s1648 + $0x24] sm:$0xe]
      %v2737 = vld [vmem:[%s1648 + $0x30] sm:$0xe]
      %v2738 = vld [vmem:[%s1648 + $0x3c] sm:$0xe]
      %v2739 = vld [vmem:[%s1648 + $0x48] sm:$0xe]
      %v2740 = vld [vmem:[%s1648 + $0x54] sm:$0xe]
      %v2741 = vld [vmem:[%s1648 + $0x60] sm:$0xe]
      %v2742 = vld [vmem:[%s1648 + $0x6c] sm:$0xe]
      %v2743 = vld [vmem:[%s1648 + $0x78] sm:$0xe]
      %v2744 = vld [vmem:[%s1648 + $0x84] sm:$0xe]
      %v2745 = vld [vmem:[%s1648 + $0x90] sm:$0xe]
      %v2746 = vld [vmem:[%s1648 + $0x9c] sm:$0xe]
      %v2747 = vld [vmem:[%s1648 + $0xa8] sm:$0xe]
      %v2748 = vld [vmem:[%s1648 + $0xb4] sm:$0xe]
      %v2797 = vrot.slane %v2733, 5
      %v2798 = vrot.slane %v2797, 4
      %v2799 = vrot.slane %v2008, 5
      %v2800 = vsel %vm1241, %v2798, %v2799
      %v2801 = vrot.slane %v2799, 4
      %v2802 = vrot.slane %v2009, 5
      %v2803 = vsel %vm1241, %v2801, %v2802
      %v2804 = vrot.slane %v2734, 5
      %v2805 = vrot.slane %v2804, 4
      %v2806 = vrot.slane %v2011, 5
      %v2807 = vsel %vm1241, %v2805, %v2806
      %v2808 = vrot.slane %v2806, 4
      %v2809 = vrot.slane %v2012, 5
      %v2810 = vsel %vm1241, %v2808, %v2809
      %v2811 = vrot.slane %v2735, 5
      %v2812 = vrot.slane %v2811, 4
      %v2813 = vrot.slane %v2014, 5
      %v2814 = vsel %vm1241, %v2812, %v2813
      %v2815 = vrot.slane %v2813, 4
      %v2816 = vrot.slane %v2015, 5
      %v2817 = vsel %vm1241, %v2815, %v2816
      %v2818 = vrot.slane %v2736, 5
      %v2819 = vrot.slane %v2818, 4
      %v2820 = vrot.slane %v2017, 5
      %v2821 = vsel %vm1241, %v2819, %v2820
      %v2822 = vrot.slane %v2820, 4
      %v2823 = vrot.slane %v2018, 5
      %v2824 = vsel %vm1241, %v2822, %v2823
      %v2825 = vrot.slane %v2737, 5
      %v2826 = vrot.slane %v2825, 4
      %v2827 = vrot.slane %v2020, 5
      %v2828 = vsel %vm1241, %v2826, %v2827
      %v2829 = vrot.slane %v2827, 4
      %v2830 = vrot.slane %v2021, 5
      %v2831 = vsel %vm1241, %v2829, %v2830
      %v2832 = vrot.slane %v2738, 5
      %v2833 = vrot.slane %v2832, 4
      %v2834 = vrot.slane %v2023, 5
      %v2835 = vsel %vm1241, %v2833, %v2834
      %v2836 = vrot.slane %v2834, 4
      %v2837 = vrot.slane %v2024, 5
      %v2838 = vsel %vm1241, %v2836, %v2837
      %v2839 = vrot.slane %v2739, 5
      %v2840 = vrot.slane %v2839, 4
      %v2841 = vrot.slane %v2026, 5
      %v2842 = vsel %vm1241, %v2840, %v2841
      %v2843 = vrot.slane %v2841, 4
      %v2844 = vrot.slane %v2027, 5
      %v2845 = vsel %vm1241, %v2843, %v2844
      %v2846 = vrot.slane %v2740, 5
      %v2847 = vrot.slane %v2846, 4
      %v2848 = vrot.slane %v2029, 5
      %v2849 = vsel %vm1241, %v2847, %v2848
      %v2850 = vrot.slane %v2848, 4
      %v2851 = vrot.slane %v2030, 5
      %v2852 = vsel %vm1241, %v2850, %v2851
      %v2853 = vrot.slane %v2741, 5
      %v2854 = vrot.slane %v2853, 4
      %v2855 = vrot.slane %v2032, 5
      %v2856 = vsel %vm1241, %v2854, %v2855
      %v2857 = vrot.slane %v2855, 4
      %v2858 = vrot.slane %v2033, 5
      %v2859 = vsel %vm1241, %v2857, %v2858
      %v2860 = vrot.slane %v2742, 5
      %v2861 = vrot.slane %v2860, 4
      %v2862 = vrot.slane %v2035, 5
      %v2863 = vsel %vm1241, %v2861, %v2862
      %v2864 = vrot.slane %v2862, 4
      %v2865 = vrot.slane %v2036, 5
      %v2866 = vsel %vm1241, %v2864, %v2865
      %v2867 = vrot.slane %v2743, 5
      %v2868 = vrot.slane %v2867, 4
      %v2869 = vrot.slane %v2038, 5
      %v2870 = vsel %vm1241, %v2868, %v2869
      %v2871 = vrot.slane %v2869, 4
      %v2872 = vrot.slane %v2039, 5
      %v2873 = vsel %vm1241, %v2871, %v2872
      %v2874 = vrot.slane %v2744, 5
      %v2875 = vrot.slane %v2874, 4
      %v2876 = vrot.slane %v2041, 5
      %v2877 = vsel %vm1241, %v2875, %v2876
      %v2878 = vrot.slane %v2876, 4
      %v2879 = vrot.slane %v2042, 5
      %v2880 = vsel %vm1241, %v2878, %v2879
      %v2881 = vrot.slane %v2745, 5
      %v2882 = vrot.slane %v2881, 4
      %v2883 = vrot.slane %v2044, 5
      %v2884 = vsel %vm1241, %v2882, %v2883
      %v2885 = vrot.slane %v2883, 4
      %v2886 = vrot.slane %v2045, 5
      %v2887 = vsel %vm1241, %v2885, %v2886
      %v2888 = vrot.slane %v2746, 5
      %v2889 = vrot.slane %v2888, 4
      %v2890 = vrot.slane %v2047, 5
      %v2891 = vsel %vm1241, %v2889, %v2890
      %v2892 = vrot.slane %v2890, 4
      %v2893 = vrot.slane %v2048, 5
      %v2894 = vsel %vm1241, %v2892, %v2893
      %v2895 = vrot.slane %v2747, 5
      %v2896 = vrot.slane %v2895, 4
      %v2897 = vrot.slane %v2050, 5
      %v2898 = vsel %vm1241, %v2896, %v2897
      %v2899 = vrot.slane %v2897, 4
      %v2900 = vrot.slane %v2051, 5
      %v2901 = vsel %vm1241, %v2899, %v2900
      %v2902 = vrot.slane %v2748, 5
      %v2903 = vrot.slane %v2902, 4
      %v2904 = vrot.slane %v2053, 5
      %v2905 = vsel %vm1241, %v2903, %v2904
      %v2906 = vrot.slane %v2904, 4
      %v2907 = vrot.slane %v2054, 5
      %v2908 = vsel %vm1241, %v2906, %v2907
      %s2909 = scalar_lea.vmem %s1, 10
      %v2910 = vld [vmem:[%s2909] sm:$0x3]
      %v2911 = vunpack.c.l.b16 %v2800
      %v2912 = vunpack.c.l.b16 %v2803
      %v2913 = vunpack.c.l.b16 %v2807
      %v2914 = vunpack.c.l.b16 %v2810
      %v2915 = vunpack.c.l.b16 %v2814
      %v2916 = vunpack.c.l.b16 %v2817
      %v2917 = vunpack.c.l.b16 %v2821
      %v2918 = vunpack.c.l.b16 %v2824
      %v2919 = vunpack.c.l.b16 %v2828
      %v2920 = vunpack.c.l.b16 %v2831
      %v2921 = vunpack.c.l.b16 %v2835
      %v2922 = vunpack.c.l.b16 %v2838
      %v2923 = vunpack.c.l.b16 %v2842
      %v2924 = vunpack.c.l.b16 %v2845
      %v2925 = vunpack.c.l.b16 %v2849
      %v2926 = vunpack.c.l.b16 %v2852
      %v2927 = vunpack.c.l.b16 %v2856
      %v2928 = vunpack.c.l.b16 %v2859
      %v2929 = vunpack.c.l.b16 %v2863
      %v2930 = vunpack.c.l.b16 %v2866
      %v2931 = vunpack.c.l.b16 %v2870
      %v2932 = vunpack.c.l.b16 %v2873
      %v2933 = vunpack.c.l.b16 %v2877
      %v2934 = vunpack.c.l.b16 %v2880
      %v2935 = vunpack.c.l.b16 %v2884
      %v2936 = vunpack.c.l.b16 %v2887
      %v2937 = vunpack.c.l.b16 %v2891
      %v2938 = vunpack.c.l.b16 %v2894
      %v2939 = vunpack.c.l.b16 %v2898
      %v2940 = vunpack.c.l.b16 %v2901
      %v2941 = vunpack.c.l.b16 %v2905
      %v2942 = vunpack.c.l.b16 %v2908
      %v2943 = vpack.c.b16 %v2912, %v2911
      %v2944 = vpack.c.b16 %v2914, %v2913
      %v2945 = vpack.c.b16 %v2916, %v2915
      %v2946 = vpack.c.b16 %v2918, %v2917
      %v2947 = vpack.c.b16 %v2920, %v2919
      %v2948 = vpack.c.b16 %v2922, %v2921
      %v2949 = vpack.c.b16 %v2924, %v2923
      %v2950 = vpack.c.b16 %v2926, %v2925
      %v2951 = vpack.c.b16 %v2928, %v2927
      %v2952 = vpack.c.b16 %v2930, %v2929
      %v2953 = vpack.c.b16 %v2932, %v2931
      %v2954 = vpack.c.b16 %v2934, %v2933
      %v2955 = vpack.c.b16 %v2936, %v2935
      %v2956 = vpack.c.b16 %v2938, %v2937
      %v2957 = vpack.c.b16 %v2940, %v2939
      %v2958 = vpack.c.b16 %v2942, %v2941
      %v2960 = vsel %vm685, %v2943, 0
      %v2963 = vsel %vm685, %v2944, 0
      %v2966 = vsel %vm685, %v2945, 0
      %v2969 = vsel %vm685, %v2946, 0
      %v2972 = vsel %vm685, %v2947, 0
      %v2975 = vsel %vm685, %v2948, 0
      %v2978 = vsel %vm685, %v2949, 0
      %v2981 = vsel %vm685, %v2950, 0
      %v2984 = vsel %vm685, %v2951, 0
      %v2987 = vsel %vm685, %v2952, 0
      %v2990 = vsel %vm685, %v2953, 0
      %v2993 = vsel %vm685, %v2954, 0
      %v2996 = vsel %vm685, %v2955, 0
      %v2999 = vsel %vm685, %v2956, 0
      %v3002 = vsel %vm685, %v2957, 0
      %v3005 = vsel %vm685, %v2958, 0
      %v3008 = vsel %vm734, %v2910, 0
      %3010 = vmatprep.subr.bf16.mxu0 0
      %3011 = vmatpush1.bf16.msra.mxu0 %v3008
      %3012 = vmatprep.subr.bf16.mxu0 0
      %3013 = vmatpush1.bf16.msra.mxu0 0
      %3014 = vmatprep.subr.bf16.mxu0 0
      %3015 = vmatpush1.bf16.msra.mxu0 0
      %3016 = vmatprep.subr.bf16.mxu0 0
      %3017 = vmatpush1.bf16.msra.mxu0 0
      %3018 = vmatprep.subr.bf16.mxu0 0
      %3019 = vmatpush1.bf16.msra.mxu0 0
      %3020 = vmatprep.subr.bf16.mxu0 0
      %3021 = vmatpush1.bf16.msra.mxu0 0
      %3022 = vmatprep.subr.bf16.mxu0 0
      %3023 = vmatpush1.bf16.msra.mxu0 0
      %3024 = vmatprep.subr.bf16.mxu0 0
      %3025 = vmatpush1.bf16.msra.mxu0 0
      %3026 = vmatprep.subr.bf16.mxu0 0
      %3027 = vmatpush1.bf16.msra.mxu0 0
      %3028 = vmatprep.subr.bf16.mxu0 0
      %3029 = vmatpush1.bf16.msra.mxu0 0
      %3030 = vmatprep.subr.bf16.mxu0 0
      %3031 = vmatpush1.bf16.msra.mxu0 0
      %3032 = vmatprep.subr.bf16.mxu0 0
      %3033 = vmatpush1.bf16.msra.mxu0 0
      %3034 = vmatprep.subr.bf16.mxu0 0
      %3035 = vmatpush1.bf16.msra.mxu0 0
      %3036 = vmatprep.subr.bf16.mxu0 0
      %3037 = vmatpush1.bf16.msra.mxu0 0
      %3038 = vmatprep.subr.bf16.mxu0 0
      %3039 = vmatpush1.bf16.msra.mxu0 0
      %3040 = vmatprep.subr.bf16.mxu0 0
      %3041 = vmatpush1.bf16.msra.mxu0 0
      %3042 = vmatprep.mubr.bf16.mxu0 0
      %3043 = vmatmul.mubr.bf16.gmra.mrb[0].mxu0 %v2960
      %v3044 = vpop.f32.mrb[0].mxu0
      %v3045 = vadd.f32 0.0, %v3044
      %v3046 = vpop.f32.mrb[0].mxu0
      %v3047 = vpop.f32.mrb[0].mxu0
      %v3048 = vadd.f32 0.0, %v3047
      %v3049 = vpop.f32.mrb[0].mxu0
      %3050 = vmatprep.mubr.bf16.mxu0 0
      %3051 = vmatmul.mubr.bf16.gmra.mrb[0].mxu0 %v2963
      %v3052 = vpop.f32.mrb[0].mxu0
      %v3053 = vadd.f32 0.0, %v3052
      %v3054 = vpop.f32.mrb[0].mxu0
      %v3055 = vpop.f32.mrb[0].mxu0
      %v3056 = vadd.f32 0.0, %v3055
      %v3057 = vpop.f32.mrb[0].mxu0
      %3058 = vmatprep.mubr.bf16.mxu0 0
      %3059 = vmatmul.mubr.bf16.gmra.mrb[0].mxu0 %v2966
      %v3060 = vpop.f32.mrb[0].mxu0
      %v3061 = vadd.f32 0.0, %v3060
      %v3062 = vpop.f32.mrb[0].mxu0
      %v3063 = vpop.f32.mrb[0].mxu0
      %v3064 = vadd.f32 0.0, %v3063
      %v3065 = vpop.f32.mrb[0].mxu0
      %3066 = vmatprep.mubr.bf16.mxu0 0
      %3067 = vmatmul.mubr.bf16.gmra.mrb[0].mxu0 %v2969
      %v3068 = vpop.f32.mrb[0].mxu0
      %v3069 = vadd.f32 0.0, %v3068
      %v3070 = vpop.f32.mrb[0].mxu0
      %v3071 = vpop.f32.mrb[0].mxu0
      %v3072 = vadd.f32 0.0, %v3071
      %v3073 = vpop.f32.mrb[0].mxu0
      %3074 = vmatprep.mubr.bf16.mxu0 0
      %3075 = vmatmul.mubr.bf16.gmra.mrb[0].mxu0 %v2972
      %v3076 = vpop.f32.mrb[0].mxu0
      %v3077 = vadd.f32 0.0, %v3076
      %v3078 = vpop.f32.mrb[0].mxu0
      %v3079 = vpop.f32.mrb[0].mxu0
      %v3080 = vadd.f32 0.0, %v3079
      %v3081 = vpop.f32.mrb[0].mxu0
      %3082 = vmatprep.mubr.bf16.mxu0 0
      %3083 = vmatmul.mubr.bf16.gmra.mrb[0].mxu0 %v2975
      %v3084 = vpop.f32.mrb[0].mxu0
      %v3085 = vadd.f32 0.0, %v3084
      %v3086 = vpop.f32.mrb[0].mxu0
      %v3087 = vpop.f32.mrb[0].mxu0
      %v3088 = vadd.f32 0.0, %v3087
      %v3089 = vpop.f32.mrb[0].mxu0
      %3090 = vmatprep.mubr.bf16.mxu0 0
      %3091 = vmatmul.mubr.bf16.gmra.mrb[0].mxu0 %v2978
      %v3092 = vpop.f32.mrb[0].mxu0
      %v3093 = vadd.f32 0.0, %v3092
      %v3094 = vpop.f32.mrb[0].mxu0
      %v3095 = vpop.f32.mrb[0].mxu0
      %v3096 = vadd.f32 0.0, %v3095
      %v3097 = vpop.f32.mrb[0].mxu0
      %3098 = vmatprep.mubr.bf16.mxu0 0
      %3099 = vmatmul.mubr.bf16.gmra.mrb[0].mxu0 %v2981
      %v3100 = vpop.f32.mrb[0].mxu0
      %v3101 = vadd.f32 0.0, %v3100
      %v3102 = vpop.f32.mrb[0].mxu0
      %v3103 = vpop.f32.mrb[0].mxu0
      %v3104 = vadd.f32 0.0, %v3103
      %v3105 = vpop.f32.mrb[0].mxu0
      %3106 = vmatprep.mubr.bf16.mxu0 0
      %3107 = vmatmul.mubr.bf16.gmra.mrb[0].mxu0 %v2984
      %v3108 = vpop.f32.mrb[0].mxu0
      %v3109 = vadd.f32 0.0, %v3108
      %v3110 = vpop.f32.mrb[0].mxu0
      %v3111 = vpop.f32.mrb[0].mxu0
      %v3112 = vadd.f32 0.0, %v3111
      %v3113 = vpop.f32.mrb[0].mxu0
      %3114 = vmatprep.mubr.bf16.mxu0 0
      %3115 = vmatmul.mubr.bf16.gmra.mrb[0].mxu0 %v2987
      %v3116 = vpop.f32.mrb[0].mxu0
      %v3117 = vadd.f32 0.0, %v3116
      %v3118 = vpop.f32.mrb[0].mxu0
      %v3119 = vpop.f32.mrb[0].mxu0
      %v3120 = vadd.f32 0.0, %v3119
      %v3121 = vpop.f32.mrb[0].mxu0
      %3122 = vmatprep.mubr.bf16.mxu0 0
      %3123 = vmatmul.mubr.bf16.gmra.mrb[0].mxu0 %v2990
      %v3124 = vpop.f32.mrb[0].mxu0
      %v3125 = vadd.f32 0.0, %v3124
      %v3126 = vpop.f32.mrb[0].mxu0
      %v3127 = vpop.f32.mrb[0].mxu0
      %v3128 = vadd.f32 0.0, %v3127
      %v3129 = vpop.f32.mrb[0].mxu0
      %3130 = vmatprep.mubr.bf16.mxu0 0
      %3131 = vmatmul.mubr.bf16.gmra.mrb[0].mxu0 %v2993
      %v3132 = vpop.f32.mrb[0].mxu0
      %v3133 = vadd.f32 0.0, %v3132
      %v3134 = vpop.f32.mrb[0].mxu0
      %v3135 = vpop.f32.mrb[0].mxu0
      %v3136 = vadd.f32 0.0, %v3135
      %v3137 = vpop.f32.mrb[0].mxu0
      %3138 = vmatprep.mubr.bf16.mxu0 0
      %3139 = vmatmul.mubr.bf16.gmra.mrb[0].mxu0 %v2996
      %v3140 = vpop.f32.mrb[0].mxu0
      %v3141 = vadd.f32 0.0, %v3140
      %v3142 = vpop.f32.mrb[0].mxu0
      %v3143 = vpop.f32.mrb[0].mxu0
      %v3144 = vadd.f32 0.0, %v3143
      %v3145 = vpop.f32.mrb[0].mxu0
      %3146 = vmatprep.mubr.bf16.mxu0 0
      %3147 = vmatmul.mubr.bf16.gmra.mrb[0].mxu0 %v2999
      %v3148 = vpop.f32.mrb[0].mxu0
      %v3149 = vadd.f32 0.0, %v3148
      %v3150 = vpop.f32.mrb[0].mxu0
      %v3151 = vpop.f32.mrb[0].mxu0
      %v3152 = vadd.f32 0.0, %v3151
      %v3153 = vpop.f32.mrb[0].mxu0
      %3154 = vmatprep.mubr.bf16.mxu0 0
      %3155 = vmatmul.mubr.bf16.gmra.mrb[0].mxu0 %v3002
      %v3156 = vpop.f32.mrb[0].mxu0
      %v3157 = vadd.f32 0.0, %v3156
      %v3158 = vpop.f32.mrb[0].mxu0
      %v3159 = vpop.f32.mrb[0].mxu0
      %v3160 = vadd.f32 0.0, %v3159
      %v3161 = vpop.f32.mrb[0].mxu0
      %3162 = vmatprep.mubr.bf16.mxu0 0
      %3163 = vmatmul.mubr.bf16.gmra.mrb[0].mxu0 %v3005
      %v3164 = vpop.f32.mrb[0].mxu0
      %v3165 = vadd.f32 0.0, %v3164
      %v3166 = vpop.f32.mrb[0].mxu0
      %v3167 = vpop.f32.mrb[0].mxu0
      %v3168 = vadd.f32 0.0, %v3167
      %v3169 = vpop.f32.mrb[0].mxu0
      %3170 = vdwg.mxu0
      %v3171 = vadd.f32 %v2701, %v3045
      %v3172 = vadd.f32 %v2702, %v3048
      %v3173 = vadd.f32 %v2703, %v3053
      %v3174 = vadd.f32 %v2704, %v3056
      %v3175 = vadd.f32 %v2705, %v3061
      %v3176 = vadd.f32 %v2706, %v3064
      %v3177 = vadd.f32 %v2707, %v3069
      %v3178 = vadd.f32 %v2708, %v3072
      %v3179 = vadd.f32 %v2709, %v3077
      %v3180 = vadd.f32 %v2710, %v3080
      %v3181 = vadd.f32 %v2711, %v3085
      %v3182 = vadd.f32 %v2712, %v3088
      %v3183 = vadd.f32 %v2713, %v3093
      %v3184 = vadd.f32 %v2714, %v3096
      %v3185 = vadd.f32 %v2715, %v3101
      %v3186 = vadd.f32 %v2716, %v3104
      %v3187 = vadd.f32 %v2717, %v3109
      %v3188 = vadd.f32 %v2718, %v3112
      %v3189 = vadd.f32 %v2719, %v3117
      %v3190 = vadd.f32 %v2720, %v3120
      %v3191 = vadd.f32 %v2721, %v3125
      %v3192 = vadd.f32 %v2722, %v3128
      %v3193 = vadd.f32 %v2723, %v3133
      %v3194 = vadd.f32 %v2724, %v3136
      %v3195 = vadd.f32 %v2725, %v3141
      %v3196 = vadd.f32 %v2726, %v3144
      %v3197 = vadd.f32 %v2727, %v3149
      %v3198 = vadd.f32 %v2728, %v3152
      %v3199 = vadd.f32 %v2729, %v3157
      %v3200 = vadd.f32 %v2730, %v3160
      %v3201 = vadd.f32 %v2731, %v3165
      %v3202 = vadd.f32 %v2732, %v3168
      %s3203 = scalar_lea.vmem %s192, 24
      %v3204 = vld [vmem:[%s3203] sm:$0xf]
      %v3205 = vld [vmem:[%s3203 + $0x4] sm:$0xf]
      %v3206 = vld [vmem:[%s3203 + $0xc] sm:$0xf]
      %v3207 = vld [vmem:[%s3203 + $0x10] sm:$0xf]
      %v3208 = vld [vmem:[%s3203 + $0x18] sm:$0xf]
      %v3209 = vld [vmem:[%s3203 + $0x1c] sm:$0xf]
      %v3210 = vld [vmem:[%s3203 + $0x24] sm:$0xf]
      %v3211 = vld [vmem:[%s3203 + $0x28] sm:$0xf]
      %v3212 = vld [vmem:[%s3203 + $0x30] sm:$0xf]
      %v3213 = vld [vmem:[%s3203 + $0x34] sm:$0xf]
      %v3214 = vld [vmem:[%s3203 + $0x3c] sm:$0xf]
      %v3215 = vld [vmem:[%s3203 + $0x40] sm:$0xf]
      %v3216 = vld [vmem:[%s3203 + $0x48] sm:$0xf]
      %v3217 = vld [vmem:[%s3203 + $0x4c] sm:$0xf]
      %v3218 = vld [vmem:[%s3203 + $0x54] sm:$0xf]
      %v3219 = vld [vmem:[%s3203 + $0x58] sm:$0xf]
      %v3220 = vld [vmem:[%s3203 + $0x60] sm:$0xf]
      %v3221 = vld [vmem:[%s3203 + $0x64] sm:$0xf]
      %v3222 = vld [vmem:[%s3203 + $0x6c] sm:$0xf]
      %v3223 = vld [vmem:[%s3203 + $0x70] sm:$0xf]
      %v3224 = vld [vmem:[%s3203 + $0x78] sm:$0xf]
      %v3225 = vld [vmem:[%s3203 + $0x7c] sm:$0xf]
      %v3226 = vld [vmem:[%s3203 + $0x84] sm:$0xf]
      %v3227 = vld [vmem:[%s3203 + $0x88] sm:$0xf]
      %v3228 = vld [vmem:[%s3203 + $0x90] sm:$0xf]
      %v3229 = vld [vmem:[%s3203 + $0x94] sm:$0xf]
      %v3230 = vld [vmem:[%s3203 + $0x9c] sm:$0xf]
      %v3231 = vld [vmem:[%s3203 + $0xa0] sm:$0xf]
      %v3232 = vld [vmem:[%s3203 + $0xa8] sm:$0xf]
      %v3233 = vld [vmem:[%s3203 + $0xac] sm:$0xf]
      %v3234 = vld [vmem:[%s3203 + $0xb4] sm:$0xf]
      %v3235 = vld [vmem:[%s3203 + $0xb8] sm:$0xf]
      %s3236 = scalar_lea.vmem %s1, 12
      %v3237 = vld [vmem:[%s3236] sm:$0x3]
      %v3270 = vunpack.c.l.b16 %v3204
      %v3271 = vunpack.c.l.b16 %v3205
      %v3272 = vunpack.c.l.b16 %v3206
      %v3273 = vunpack.c.l.b16 %v3207
      %v3274 = vunpack.c.l.b16 %v3208
      %v3275 = vunpack.c.l.b16 %v3209
      %v3276 = vunpack.c.l.b16 %v3210
      %v3277 = vunpack.c.l.b16 %v3211
      %v3278 = vunpack.c.l.b16 %v3212
      %v3279 = vunpack.c.l.b16 %v3213
      %v3280 = vunpack.c.l.b16 %v3214
      %v3281 = vunpack.c.l.b16 %v3215
      %v3282 = vunpack.c.l.b16 %v3216
      %v3283 = vunpack.c.l.b16 %v3217
      %v3284 = vunpack.c.l.b16 %v3218
      %v3285 = vunpack.c.l.b16 %v3219
      %v3286 = vunpack.c.l.b16 %v3220
      %v3287 = vunpack.c.l.b16 %v3221
      %v3288 = vunpack.c.l.b16 %v3222
      %v3289 = vunpack.c.l.b16 %v3223
      %v3290 = vunpack.c.l.b16 %v3224
      %v3291 = vunpack.c.l.b16 %v3225
      %v3292 = vunpack.c.l.b16 %v3226
      %v3293 = vunpack.c.l.b16 %v3227
      %v3294 = vunpack.c.l.b16 %v3228
      %v3295 = vunpack.c.l.b16 %v3229
      %v3296 = vunpack.c.l.b16 %v3230
      %v3297 = vunpack.c.l.b16 %v3231
      %v3298 = vunpack.c.l.b16 %v3232
      %v3299 = vunpack.c.l.b16 %v3233
      %v3300 = vunpack.c.l.b16 %v3234
      %v3301 = vunpack.c.l.b16 %v3235
      %v3302 = vpack.c.b16 %v3271, %v3270
      %v3303 = vpack.c.b16 %v3273, %v3272
      %v3304 = vpack.c.b16 %v3275, %v3274
      %v3305 = vpack.c.b16 %v3277, %v3276
      %v3306 = vpack.c.b16 %v3279, %v3278
      %v3307 = vpack.c.b16 %v3281, %v3280
      %v3308 = vpack.c.b16 %v3283, %v3282
      %v3309 = vpack.c.b16 %v3285, %v3284
      %v3310 = vpack.c.b16 %v3287, %v3286
      %v3311 = vpack.c.b16 %v3289, %v3288
      %v3312 = vpack.c.b16 %v3291, %v3290
      %v3313 = vpack.c.b16 %v3293, %v3292
      %v3314 = vpack.c.b16 %v3295, %v3294
      %v3315 = vpack.c.b16 %v3297, %v3296
      %v3316 = vpack.c.b16 %v3299, %v3298
      %v3317 = vpack.c.b16 %v3301, %v3300
      %v3319 = vsel %vm685, %v3302, 0
      %v3322 = vsel %vm685, %v3303, 0
      %v3325 = vsel %vm685, %v3304, 0
      %v3328 = vsel %vm685, %v3305, 0
      %v3331 = vsel %vm685, %v3306, 0
      %v3334 = vsel %vm685, %v3307, 0
      %v3337 = vsel %vm685, %v3308, 0
      %v3340 = vsel %vm685, %v3309, 0
      %v3343 = vsel %vm685, %v3310, 0
      %v3346 = vsel %vm685, %v3311, 0
      %v3349 = vsel %vm685, %v3312, 0
      %v3352 = vsel %vm685, %v3313, 0
      %v3355 = vsel %vm685, %v3314, 0
      %v3358 = vsel %vm685, %v3315, 0
      %v3361 = vsel %vm685, %v3316, 0
      %v3364 = vsel %vm685, %v3317, 0
      %v3367 = vsel %vm734, %v3237, 0
      %3369 = vmatprep.subr.bf16.mxu0 0
      %3370 = vmatpush1.bf16.msra.mxu0 %v3367
      %3371 = vmatprep.subr.bf16.mxu0 0
      %3372 = vmatpush1.bf16.msra.mxu0 0
      %3373 = vmatprep.subr.bf16.mxu0 0
      %3374 = vmatpush1.bf16.msra.mxu0 0
      %3375 = vmatprep.subr.bf16.mxu0 0
      %3376 = vmatpush1.bf16.msra.mxu0 0
      %3377 = vmatprep.subr.bf16.mxu0 0
      %3378 = vmatpush1.bf16.msra.mxu0 0
      %3379 = vmatprep.subr.bf16.mxu0 0
      %3380 = vmatpush1.bf16.msra.mxu0 0
      %3381 = vmatprep.subr.bf16.mxu0 0
      %3382 = vmatpush1.bf16.msra.mxu0 0
      %3383 = vmatprep.subr.bf16.mxu0 0
      %3384 = vmatpush1.bf16.msra.mxu0 0
      %3385 = vmatprep.subr.bf16.mxu0 0
      %3386 = vmatpush1.bf16.msra.mxu0 0
      %3387 = vmatprep.subr.bf16.mxu0 0
      %3388 = vmatpush1.bf16.msra.mxu0 0
      %3389 = vmatprep.subr.bf16.mxu0 0
      %3390 = vmatpush1.bf16.msra.mxu0 0
      %3391 = vmatprep.subr.bf16.mxu0 0
      %3392 = vmatpush1.bf16.msra.mxu0 0
      %3393 = vmatprep.subr.bf16.mxu0 0
      %3394 = vmatpush1.bf16.msra.mxu0 0
      %3395 = vmatprep.subr.bf16.mxu0 0
      %3396 = vmatpush1.bf16.msra.mxu0 0
      %3397 = vmatprep.subr.bf16.mxu0 0
      %3398 = vmatpush1.bf16.msra.mxu0 0
      %3399 = vmatprep.subr.bf16.mxu0 0
      %3400 = vmatpush1.bf16.msra.mxu0 0
      %3401 = vmatprep.mubr.bf16.mxu0 0
      %3402 = vmatmul.mubr.bf16.gmra.mrb[0].mxu0 %v3319
      %v3403 = vpop.f32.mrb[0].mxu0
      %v3404 = vadd.f32 0.0, %v3403
      %v3405 = vpop.f32.mrb[0].mxu0
      %v3406 = vpop.f32.mrb[0].mxu0
      %v3407 = vadd.f32 0.0, %v3406
      %v3408 = vpop.f32.mrb[0].mxu0
      %3409 = vmatprep.mubr.bf16.mxu0 0
      %3410 = vmatmul.mubr.bf16.gmra.mrb[0].mxu0 %v3322
      %v3411 = vpop.f32.mrb[0].mxu0
      %v3412 = vadd.f32 0.0, %v3411
      %v3413 = vpop.f32.mrb[0].mxu0
      %v3414 = vpop.f32.mrb[0].mxu0
      %v3415 = vadd.f32 0.0, %v3414
      %v3416 = vpop.f32.mrb[0].mxu0
      %3417 = vmatprep.mubr.bf16.mxu0 0
      %3418 = vmatmul.mubr.bf16.gmra.mrb[0].mxu0 %v3325
      %v3419 = vpop.f32.mrb[0].mxu0
      %v3420 = vadd.f32 0.0, %v3419
      %v3421 = vpop.f32.mrb[0].mxu0
      %v3422 = vpop.f32.mrb[0].mxu0
      %v3423 = vadd.f32 0.0, %v3422
      %v3424 = vpop.f32.mrb[0].mxu0
      %3425 = vmatprep.mubr.bf16.mxu0 0
      %3426 = vmatmul.mubr.bf16.gmra.mrb[0].mxu0 %v3328
      %v3427 = vpop.f32.mrb[0].mxu0
      %v3428 = vadd.f32 0.0, %v3427
      %v3429 = vpop.f32.mrb[0].mxu0
      %v3430 = vpop.f32.mrb[0].mxu0
      %v3431 = vadd.f32 0.0, %v3430
      %v3432 = vpop.f32.mrb[0].mxu0
      %3433 = vmatprep.mubr.bf16.mxu0 0
      %3434 = vmatmul.mubr.bf16.gmra.mrb[0].mxu0 %v3331
      %v3435 = vpop.f32.mrb[0].mxu0
      %v3436 = vadd.f32 0.0, %v3435
      %v3437 = vpop.f32.mrb[0].mxu0
      %v3438 = vpop.f32.mrb[0].mxu0
      %v3439 = vadd.f32 0.0, %v3438
      %v3440 = vpop.f32.mrb[0].mxu0
      %3441 = vmatprep.mubr.bf16.mxu0 0
      %3442 = vmatmul.mubr.bf16.gmra.mrb[0].mxu0 %v3334
      %v3443 = vpop.f32.mrb[0].mxu0
      %v3444 = vadd.f32 0.0, %v3443
      %v3445 = vpop.f32.mrb[0].mxu0
      %v3446 = vpop.f32.mrb[0].mxu0
      %v3447 = vadd.f32 0.0, %v3446
      %v3448 = vpop.f32.mrb[0].mxu0
      %3449 = vmatprep.mubr.bf16.mxu0 0
      %3450 = vmatmul.mubr.bf16.gmra.mrb[0].mxu0 %v3337
      %v3451 = vpop.f32.mrb[0].mxu0
      %v3452 = vadd.f32 0.0, %v3451
      %v3453 = vpop.f32.mrb[0].mxu0
      %v3454 = vpop.f32.mrb[0].mxu0
      %v3455 = vadd.f32 0.0, %v3454
      %v3456 = vpop.f32.mrb[0].mxu0
      %3457 = vmatprep.mubr.bf16.mxu0 0
      %3458 = vmatmul.mubr.bf16.gmra.mrb[0].mxu0 %v3340
      %v3459 = vpop.f32.mrb[0].mxu0
      %v3460 = vadd.f32 0.0, %v3459
      %v3461 = vpop.f32.mrb[0].mxu0
      %v3462 = vpop.f32.mrb[0].mxu0
      %v3463 = vadd.f32 0.0, %v3462
      %v3464 = vpop.f32.mrb[0].mxu0
      %3465 = vmatprep.mubr.bf16.mxu0 0
      %3466 = vmatmul.mubr.bf16.gmra.mrb[0].mxu0 %v3343
      %v3467 = vpop.f32.mrb[0].mxu0
      %v3468 = vadd.f32 0.0, %v3467
      %v3469 = vpop.f32.mrb[0].mxu0
      %v3470 = vpop.f32.mrb[0].mxu0
      %v3471 = vadd.f32 0.0, %v3470
      %v3472 = vpop.f32.mrb[0].mxu0
      %3473 = vmatprep.mubr.bf16.mxu0 0
      %3474 = vmatmul.mubr.bf16.gmra.mrb[0].mxu0 %v3346
      %v3475 = vpop.f32.mrb[0].mxu0
      %v3476 = vadd.f32 0.0, %v3475
      %v3477 = vpop.f32.mrb[0].mxu0
      %v3478 = vpop.f32.mrb[0].mxu0
      %v3479 = vadd.f32 0.0, %v3478
      %v3480 = vpop.f32.mrb[0].mxu0
      %3481 = vmatprep.mubr.bf16.mxu0 0
      %3482 = vmatmul.mubr.bf16.gmra.mrb[0].mxu0 %v3349
      %v3483 = vpop.f32.mrb[0].mxu0
      %v3484 = vadd.f32 0.0, %v3483
      %v3485 = vpop.f32.mrb[0].mxu0
      %v3486 = vpop.f32.mrb[0].mxu0
      %v3487 = vadd.f32 0.0, %v3486
      %v3488 = vpop.f32.mrb[0].mxu0
      %3489 = vmatprep.mubr.bf16.mxu0 0
      %3490 = vmatmul.mubr.bf16.gmra.mrb[0].mxu0 %v3352
      %v3491 = vpop.f32.mrb[0].mxu0
      %v3492 = vadd.f32 0.0, %v3491
      %v3493 = vpop.f32.mrb[0].mxu0
      %v3494 = vpop.f32.mrb[0].mxu0
      %v3495 = vadd.f32 0.0, %v3494
      %v3496 = vpop.f32.mrb[0].mxu0
      %3497 = vmatprep.mubr.bf16.mxu0 0
      %3498 = vmatmul.mubr.bf16.gmra.mrb[0].mxu0 %v3355
      %v3499 = vpop.f32.mrb[0].mxu0
      %v3500 = vadd.f32 0.0, %v3499
      %v3501 = vpop.f32.mrb[0].mxu0
      %v3502 = vpop.f32.mrb[0].mxu0
      %v3503 = vadd.f32 0.0, %v3502
      %v3504 = vpop.f32.mrb[0].mxu0
      %3505 = vmatprep.mubr.bf16.mxu0 0
      %3506 = vmatmul.mubr.bf16.gmra.mrb[0].mxu0 %v3358
      %v3507 = vpop.f32.mrb[0].mxu0
      %v3508 = vadd.f32 0.0, %v3507
      %v3509 = vpop.f32.mrb[0].mxu0
      %v3510 = vpop.f32.mrb[0].mxu0
      %v3511 = vadd.f32 0.0, %v3510
      %v3512 = vpop.f32.mrb[0].mxu0
      %3513 = vmatprep.mubr.bf16.mxu0 0
      %3514 = vmatmul.mubr.bf16.gmra.mrb[0].mxu0 %v3361
      %v3515 = vpop.f32.mrb[0].mxu0
      %v3516 = vadd.f32 0.0, %v3515
      %v3517 = vpop.f32.mrb[0].mxu0
      %v3518 = vpop.f32.mrb[0].mxu0
      %v3519 = vadd.f32 0.0, %v3518
      %v3520 = vpop.f32.mrb[0].mxu0
      %3521 = vmatprep.mubr.bf16.mxu0 0
      %3522 = vmatmul.mubr.bf16.gmra.mrb[0].mxu0 %v3364
      %v3523 = vpop.f32.mrb[0].mxu0
      %v3524 = vadd.f32 0.0, %v3523
      %v3525 = vpop.f32.mrb[0].mxu0
      %v3526 = vpop.f32.mrb[0].mxu0
      %v3527 = vadd.f32 0.0, %v3526
      %v3528 = vpop.f32.mrb[0].mxu0
      %3529 = vdwg.mxu0
      %v3530 = vadd.f32 %v3171, %v3404
      %v3531 = vadd.f32 %v3172, %v3407
      %v3532 = vadd.f32 %v3173, %v3412
      %v3533 = vadd.f32 %v3174, %v3415
      %v3534 = vadd.f32 %v3175, %v3420
      %v3535 = vadd.f32 %v3176, %v3423
      %v3536 = vadd.f32 %v3177, %v3428
      %v3537 = vadd.f32 %v3178, %v3431
      %v3538 = vadd.f32 %v3179, %v3436
      %v3539 = vadd.f32 %v3180, %v3439
      %v3540 = vadd.f32 %v3181, %v3444
      %v3541 = vadd.f32 %v3182, %v3447
      %v3542 = vadd.f32 %v3183, %v3452
      %v3543 = vadd.f32 %v3184, %v3455
      %v3544 = vadd.f32 %v3185, %v3460
      %v3545 = vadd.f32 %v3186, %v3463
      %v3546 = vadd.f32 %v3187, %v3468
      %v3547 = vadd.f32 %v3188, %v3471
      %v3548 = vadd.f32 %v3189, %v3476
      %v3549 = vadd.f32 %v3190, %v3479
      %v3550 = vadd.f32 %v3191, %v3484
      %v3551 = vadd.f32 %v3192, %v3487
      %v3552 = vadd.f32 %v3193, %v3492
      %v3553 = vadd.f32 %v3194, %v3495
      %v3554 = vadd.f32 %v3195, %v3500
      %v3555 = vadd.f32 %v3196, %v3503
      %v3556 = vadd.f32 %v3197, %v3508
      %v3557 = vadd.f32 %v3198, %v3511
      %v3558 = vadd.f32 %v3199, %v3516
      %v3559 = vadd.f32 %v3200, %v3519
      %v3560 = vadd.f32 %v3201, %v3524
      %v3561 = vadd.f32 %v3202, %v3527
      %v3562 = vld [vmem:[%s3203] sm:$0xf]
      %v3563 = vld [vmem:[%s3203 + $0x4] sm:$0xf]
      %v3564 = vld [vmem:[%s3203 + $0x8] sm:$0x1]
      %v3565 = vld [vmem:[%s3203 + $0xc] sm:$0xf]
      %v3566 = vld [vmem:[%s3203 + $0x10] sm:$0xf]
      %v3567 = vld [vmem:[%s3203 + $0x14] sm:$0x1]
      %v3568 = vld [vmem:[%s3203 + $0x18] sm:$0xf]
      %v3569 = vld [vmem:[%s3203 + $0x1c] sm:$0xf]
      %v3570 = vld [vmem:[%s3203 + $0x20] sm:$0x1]
      %v3571 = vld [vmem:[%s3203 + $0x24] sm:$0xf]
      %v3572 = vld [vmem:[%s3203 + $0x28] sm:$0xf]
      %v3573 = vld [vmem:[%s3203 + $0x2c] sm:$0x1]
      %v3574 = vld [vmem:[%s3203 + $0x30] sm:$0xf]
      %v3575 = vld [vmem:[%s3203 + $0x34] sm:$0xf]
      %v3576 = vld [vmem:[%s3203 + $0x38] sm:$0x1]
      %v3577 = vld [vmem:[%s3203 + $0x3c] sm:$0xf]
      %v3578 = vld [vmem:[%s3203 + $0x40] sm:$0xf]
      %v3579 = vld [vmem:[%s3203 + $0x44] sm:$0x1]
      %v3580 = vld [vmem:[%s3203 + $0x48] sm:$0xf]
      %v3581 = vld [vmem:[%s3203 + $0x4c] sm:$0xf]
      %v3582 = vld [vmem:[%s3203 + $0x50] sm:$0x1]
      %v3583 = vld [vmem:[%s3203 + $0x54] sm:$0xf]
      %v3584 = vld [vmem:[%s3203 + $0x58] sm:$0xf]
      %v3585 = vld [vmem:[%s3203 + $0x5c] sm:$0x1]
      %v3586 = vld [vmem:[%s3203 + $0x60] sm:$0xf]
      %v3587 = vld [vmem:[%s3203 + $0x64] sm:$0xf]
      %v3588 = vld [vmem:[%s3203 + $0x68] sm:$0x1]
      %v3589 = vld [vmem:[%s3203 + $0x6c] sm:$0xf]
      %v3590 = vld [vmem:[%s3203 + $0x70] sm:$0xf]
      %v3591 = vld [vmem:[%s3203 + $0x74] sm:$0x1]
      %v3592 = vld [vmem:[%s3203 + $0x78] sm:$0xf]
      %v3593 = vld [vmem:[%s3203 + $0x7c] sm:$0xf]
      %v3594 = vld [vmem:[%s3203 + $0x80] sm:$0x1]
      %v3595 = vld [vmem:[%s3203 + $0x84] sm:$0xf]
      %v3596 = vld [vmem:[%s3203 + $0x88] sm:$0xf]
      %v3597 = vld [vmem:[%s3203 + $0x8c] sm:$0x1]
      %v3598 = vld [vmem:[%s3203 + $0x90] sm:$0xf]
      %v3599 = vld [vmem:[%s3203 + $0x94] sm:$0xf]
      %v3600 = vld [vmem:[%s3203 + $0x98] sm:$0x1]
      %v3601 = vld [vmem:[%s3203 + $0x9c] sm:$0xf]
      %v3602 = vld [vmem:[%s3203 + $0xa0] sm:$0xf]
      %v3603 = vld [vmem:[%s3203 + $0xa4] sm:$0x1]
      %v3604 = vld [vmem:[%s3203 + $0xa8] sm:$0xf]
      %v3605 = vld [vmem:[%s3203 + $0xac] sm:$0xf]
      %v3606 = vld [vmem:[%s3203 + $0xb0] sm:$0x1]
      %v3607 = vld [vmem:[%s3203 + $0xb4] sm:$0xf]
      %v3608 = vld [vmem:[%s3203 + $0xb8] sm:$0xf]
      %v3609 = vld [vmem:[%s3203 + $0xbc] sm:$0x1]
      %v3611 = vshrl.u32 %v3562, 16
      %v3613 = vrot.slane %v3611, 4
      %v3614 = vshll.u32 %v3562, 16
      %v3616 = vrot.slane %v3614, 5
      %v3617 = vor.u32 %v3613, %v3616
      %v3618 = vrot.slane %v3617, 4
      %v3620 = vshll.u32 %v3563, 16
      %v3622 = vrot.slane %v3620, 5
      %v3623 = vsel %vm250, %v3618, %v3622
      %v3624 = vshrl.u32 %v3563, 16
      %v3626 = vrot.slane %v3624, 4
      %v3627 = vor.u32 %v3626, %v3622
      %v3628 = vrot.slane %v3627, 4
      %v3630 = vshll.u32 %v3564, 16
      %v3632 = vrot.slane %v3630, 5
      %v3633 = vsel %vm250, %v3628, %v3632
      %v3635 = vshrl.u32 %v3565, 16
      %v3637 = vrot.slane %v3635, 4
      %v3638 = vshll.u32 %v3565, 16
      %v3640 = vrot.slane %v3638, 5
      %v3641 = vor.u32 %v3637, %v3640
      %v3642 = vrot.slane %v3641, 4
      %v3644 = vshll.u32 %v3566, 16
      %v3646 = vrot.slane %v3644, 5
      %v3647 = vsel %vm250, %v3642, %v3646
      %v3648 = vshrl.u32 %v3566, 16
      %v3650 = vrot.slane %v3648, 4
      %v3651 = vor.u32 %v3650, %v3646
      %v3652 = vrot.slane %v3651, 4
      %v3654 = vshll.u32 %v3567, 16
      %v3656 = vrot.slane %v3654, 5
      %v3657 = vsel %vm250, %v3652, %v3656
      %v3659 = vshrl.u32 %v3568, 16
      %v3661 = vrot.slane %v3659, 4
      %v3662 = vshll.u32 %v3568, 16
      %v3664 = vrot.slane %v3662, 5
      %v3665 = vor.u32 %v3661, %v3664
      %v3666 = vrot.slane %v3665, 4
      %v3668 = vshll.u32 %v3569, 16
      %v3670 = vrot.slane %v3668, 5
      %v3671 = vsel %vm250, %v3666, %v3670
      %v3672 = vshrl.u32 %v3569, 16
      %v3674 = vrot.slane %v3672, 4
      %v3675 = vor.u32 %v3674, %v3670
      %v3676 = vrot.slane %v3675, 4
      %v3678 = vshll.u32 %v3570, 16
      %v3680 = vrot.slane %v3678, 5
      %v3681 = vsel %vm250, %v3676, %v3680
      %v3683 = vshrl.u32 %v3571, 16
      %v3685 = vrot.slane %v3683, 4
      %v3686 = vshll.u32 %v3571, 16
      %v3688 = vrot.slane %v3686, 5
      %v3689 = vor.u32 %v3685, %v3688
      %v3690 = vrot.slane %v3689, 4
      %v3692 = vshll.u32 %v3572, 16
      %v3694 = vrot.slane %v3692, 5
      %v3695 = vsel %vm250, %v3690, %v3694
      %v3696 = vshrl.u32 %v3572, 16
      %v3698 = vrot.slane %v3696, 4
      %v3699 = vor.u32 %v3698, %v3694
      %v3700 = vrot.slane %v3699, 4
      %v3702 = vshll.u32 %v3573, 16
      %v3704 = vrot.slane %v3702, 5
      %v3705 = vsel %vm250, %v3700, %v3704
      %v3707 = vshrl.u32 %v3574, 16
      %v3709 = vrot.slane %v3707, 4
      %v3710 = vshll.u32 %v3574, 16
      %v3712 = vrot.slane %v3710, 5
      %v3713 = vor.u32 %v3709, %v3712
      %v3714 = vrot.slane %v3713, 4
      %v3716 = vshll.u32 %v3575, 16
      %v3718 = vrot.slane %v3716, 5
      %v3719 = vsel %vm250, %v3714, %v3718
      %v3720 = vshrl.u32 %v3575, 16
      %v3722 = vrot.slane %v3720, 4
      %v3723 = vor.u32 %v3722, %v3718
      %v3724 = vrot.slane %v3723, 4
      %v3726 = vshll.u32 %v3576, 16
      %v3728 = vrot.slane %v3726, 5
      %v3729 = vsel %vm250, %v3724, %v3728
      %v3731 = vshrl.u32 %v3577, 16
      %v3733 = vrot.slane %v3731, 4
      %v3734 = vshll.u32 %v3577, 16
      %v3736 = vrot.slane %v3734, 5
      %v3737 = vor.u32 %v3733, %v3736
      %v3738 = vrot.slane %v3737, 4
      %v3740 = vshll.u32 %v3578, 16
      %v3742 = vrot.slane %v3740, 5
      %v3743 = vsel %vm250, %v3738, %v3742
      %v3744 = vshrl.u32 %v3578, 16
      %v3746 = vrot.slane %v3744, 4
      %v3747 = vor.u32 %v3746, %v3742
      %v3748 = vrot.slane %v3747, 4
      %v3750 = vshll.u32 %v3579, 16
      %v3752 = vrot.slane %v3750, 5
      %v3753 = vsel %vm250, %v3748, %v3752
      %v3755 = vshrl.u32 %v3580, 16
      %v3757 = vrot.slane %v3755, 4
      %v3758 = vshll.u32 %v3580, 16
      %v3760 = vrot.slane %v3758, 5
      %v3761 = vor.u32 %v3757, %v3760
      %v3762 = vrot.slane %v3761, 4
      %v3764 = vshll.u32 %v3581, 16
      %v3766 = vrot.slane %v3764, 5
      %v3767 = vsel %vm250, %v3762, %v3766
      %v3768 = vshrl.u32 %v3581, 16
      %v3770 = vrot.slane %v3768, 4
      %v3771 = vor.u32 %v3770, %v3766
      %v3772 = vrot.slane %v3771, 4
      %v3774 = vshll.u32 %v3582, 16
      %v3776 = vrot.slane %v3774, 5
      %v3777 = vsel %vm250, %v3772, %v3776
      %v3779 = vshrl.u32 %v3583, 16
      %v3781 = vrot.slane %v3779, 4
      %v3782 = vshll.u32 %v3583, 16
      %v3784 = vrot.slane %v3782, 5
      %v3785 = vor.u32 %v3781, %v3784
      %v3786 = vrot.slane %v3785, 4
      %v3788 = vshll.u32 %v3584, 16
      %v3790 = vrot.slane %v3788, 5
      %v3791 = vsel %vm250, %v3786, %v3790
      %v3792 = vshrl.u32 %v3584, 16
      %v3794 = vrot.slane %v3792, 4
      %v3795 = vor.u32 %v3794, %v3790
      %v3796 = vrot.slane %v3795, 4
      %v3798 = vshll.u32 %v3585, 16
      %v3800 = vrot.slane %v3798, 5
      %v3801 = vsel %vm250, %v3796, %v3800
      %v3803 = vshrl.u32 %v3586, 16
      %v3805 = vrot.slane %v3803, 4
      %v3806 = vshll.u32 %v3586, 16
      %v3808 = vrot.slane %v3806, 5
      %v3809 = vor.u32 %v3805, %v3808
      %v3810 = vrot.slane %v3809, 4
      %v3812 = vshll.u32 %v3587, 16
      %v3814 = vrot.slane %v3812, 5
      %v3815 = vsel %vm250, %v3810, %v3814
      %v3816 = vshrl.u32 %v3587, 16
      %v3818 = vrot.slane %v3816, 4
      %v3819 = vor.u32 %v3818, %v3814
      %v3820 = vrot.slane %v3819, 4
      %v3822 = vshll.u32 %v3588, 16
      %v3824 = vrot.slane %v3822, 5
      %v3825 = vsel %vm250, %v3820, %v3824
      %v3827 = vshrl.u32 %v3589, 16
      %v3829 = vrot.slane %v3827, 4
      %v3830 = vshll.u32 %v3589, 16
      %v3832 = vrot.slane %v3830, 5
      %v3833 = vor.u32 %v3829, %v3832
      %v3834 = vrot.slane %v3833, 4
      %v3836 = vshll.u32 %v3590, 16
      %v3838 = vrot.slane %v3836, 5
      %v3839 = vsel %vm250, %v3834, %v3838
      %v3840 = vshrl.u32 %v3590, 16
      %v3842 = vrot.slane %v3840, 4
      %v3843 = vor.u32 %v3842, %v3838
      %v3844 = vrot.slane %v3843, 4
      %v3846 = vshll.u32 %v3591, 16
      %v3848 = vrot.slane %v3846, 5
      %v3849 = vsel %vm250, %v3844, %v3848
      %v3851 = vshrl.u32 %v3592, 16
      %v3853 = vrot.slane %v3851, 4
      %v3854 = vshll.u32 %v3592, 16
      %v3856 = vrot.slane %v3854, 5
      %v3857 = vor.u32 %v3853, %v3856
      %v3858 = vrot.slane %v3857, 4
      %v3860 = vshll.u32 %v3593, 16
      %v3862 = vrot.slane %v3860, 5
      %v3863 = vsel %vm250, %v3858, %v3862
      %v3864 = vshrl.u32 %v3593, 16
      %v3866 = vrot.slane %v3864, 4
      %v3867 = vor.u32 %v3866, %v3862
      %v3868 = vrot.slane %v3867, 4
      %v3870 = vshll.u32 %v3594, 16
      %v3872 = vrot.slane %v3870, 5
      %v3873 = vsel %vm250, %v3868, %v3872
      %v3875 = vshrl.u32 %v3595, 16
      %v3877 = vrot.slane %v3875, 4
      %v3878 = vshll.u32 %v3595, 16
      %v3880 = vrot.slane %v3878, 5
      %v3881 = vor.u32 %v3877, %v3880
      %v3882 = vrot.slane %v3881, 4
      %v3884 = vshll.u32 %v3596, 16
      %v3886 = vrot.slane %v3884, 5
      %v3887 = vsel %vm250, %v3882, %v3886
      %v3888 = vshrl.u32 %v3596, 16
      %v3890 = vrot.slane %v3888, 4
      %v3891 = vor.u32 %v3890, %v3886
      %v3892 = vrot.slane %v3891, 4
      %v3894 = vshll.u32 %v3597, 16
      %v3896 = vrot.slane %v3894, 5
      %v3897 = vsel %vm250, %v3892, %v3896
      %v3899 = vshrl.u32 %v3598, 16
      %v3901 = vrot.slane %v3899, 4
      %v3902 = vshll.u32 %v3598, 16
      %v3904 = vrot.slane %v3902, 5
      %v3905 = vor.u32 %v3901, %v3904
      %v3906 = vrot.slane %v3905, 4
      %v3908 = vshll.u32 %v3599, 16
      %v3910 = vrot.slane %v3908, 5
      %v3911 = vsel %vm250, %v3906, %v3910
      %v3912 = vshrl.u32 %v3599, 16
      %v3914 = vrot.slane %v3912, 4
      %v3915 = vor.u32 %v3914, %v3910
      %v3916 = vrot.slane %v3915, 4
      %v3918 = vshll.u32 %v3600, 16
      %v3920 = vrot.slane %v3918, 5
      %v3921 = vsel %vm250, %v3916, %v3920
      %v3923 = vshrl.u32 %v3601, 16
      %v3925 = vrot.slane %v3923, 4
      %v3926 = vshll.u32 %v3601, 16
      %v3928 = vrot.slane %v3926, 5
      %v3929 = vor.u32 %v3925, %v3928
      %v3930 = vrot.slane %v3929, 4
      %v3932 = vshll.u32 %v3602, 16
      %v3934 = vrot.slane %v3932, 5
      %v3935 = vsel %vm250, %v3930, %v3934
      %v3936 = vshrl.u32 %v3602, 16
      %v3938 = vrot.slane %v3936, 4
      %v3939 = vor.u32 %v3938, %v3934
      %v3940 = vrot.slane %v3939, 4
      %v3942 = vshll.u32 %v3603, 16
      %v3944 = vrot.slane %v3942, 5
      %v3945 = vsel %vm250, %v3940, %v3944
      %v3947 = vshrl.u32 %v3604, 16
      %v3949 = vrot.slane %v3947, 4
      %v3950 = vshll.u32 %v3604, 16
      %v3952 = vrot.slane %v3950, 5
      %v3953 = vor.u32 %v3949, %v3952
      %v3954 = vrot.slane %v3953, 4
      %v3956 = vshll.u32 %v3605, 16
      %v3958 = vrot.slane %v3956, 5
      %v3959 = vsel %vm250, %v3954, %v3958
      %v3960 = vshrl.u32 %v3605, 16
      %v3962 = vrot.slane %v3960, 4
      %v3963 = vor.u32 %v3962, %v3958
      %v3964 = vrot.slane %v3963, 4
      %v3966 = vshll.u32 %v3606, 16
      %v3968 = vrot.slane %v3966, 5
      %v3969 = vsel %vm250, %v3964, %v3968
      %v3971 = vshrl.u32 %v3607, 16
      %v3973 = vrot.slane %v3971, 4
      %v3974 = vshll.u32 %v3607, 16
      %v3976 = vrot.slane %v3974, 5
      %v3977 = vor.u32 %v3973, %v3976
      %v3978 = vrot.slane %v3977, 4
      %v3980 = vshll.u32 %v3608, 16
      %v3982 = vrot.slane %v3980, 5
      %v3983 = vsel %vm250, %v3978, %v3982
      %v3984 = vshrl.u32 %v3608, 16
      %v3986 = vrot.slane %v3984, 4
      %v3987 = vor.u32 %v3986, %v3982
      %v3988 = vrot.slane %v3987, 4
      %v3990 = vshll.u32 %v3609, 16
      %v3992 = vrot.slane %v3990, 5
      %v3993 = vsel %vm250, %v3988, %v3992
      %s3994 = scalar_lea.vmem %s1, 14
      %v3995 = vld [vmem:[%s3994] sm:$0x3]
      %v3996 = vunpack.c.l.b16 %v3623
      %v3997 = vunpack.c.l.b16 %v3633
      %v3998 = vunpack.c.l.b16 %v3647
      %v3999 = vunpack.c.l.b16 %v3657
      %v4000 = vunpack.c.l.b16 %v3671
      %v4001 = vunpack.c.l.b16 %v3681
      %v4002 = vunpack.c.l.b16 %v3695
      %v4003 = vunpack.c.l.b16 %v3705
      %v4004 = vunpack.c.l.b16 %v3719
      %v4005 = vunpack.c.l.b16 %v3729
      %v4006 = vunpack.c.l.b16 %v3743
      %v4007 = vunpack.c.l.b16 %v3753
      %v4008 = vunpack.c.l.b16 %v3767
      %v4009 = vunpack.c.l.b16 %v3777
      %v4010 = vunpack.c.l.b16 %v3791
      %v4011 = vunpack.c.l.b16 %v3801
      %v4012 = vunpack.c.l.b16 %v3815
      %v4013 = vunpack.c.l.b16 %v3825
      %v4014 = vunpack.c.l.b16 %v3839
      %v4015 = vunpack.c.l.b16 %v3849
      %v4016 = vunpack.c.l.b16 %v3863
      %v4017 = vunpack.c.l.b16 %v3873
      %v4018 = vunpack.c.l.b16 %v3887
      %v4019 = vunpack.c.l.b16 %v3897
      %v4020 = vunpack.c.l.b16 %v3911
      %v4021 = vunpack.c.l.b16 %v3921
      %v4022 = vunpack.c.l.b16 %v3935
      %v4023 = vunpack.c.l.b16 %v3945
      %v4024 = vunpack.c.l.b16 %v3959
      %v4025 = vunpack.c.l.b16 %v3969
      %v4026 = vunpack.c.l.b16 %v3983
      %v4027 = vunpack.c.l.b16 %v3993
      %v4028 = vpack.c.b16 %v3997, %v3996
      %v4029 = vpack.c.b16 %v3999, %v3998
      %v4030 = vpack.c.b16 %v4001, %v4000
      %v4031 = vpack.c.b16 %v4003, %v4002
      %v4032 = vpack.c.b16 %v4005, %v4004
      %v4033 = vpack.c.b16 %v4007, %v4006
      %v4034 = vpack.c.b16 %v4009, %v4008
      %v4035 = vpack.c.b16 %v4011, %v4010
      %v4036 = vpack.c.b16 %v4013, %v4012
      %v4037 = vpack.c.b16 %v4015, %v4014
      %v4038 = vpack.c.b16 %v4017, %v4016
      %v4039 = vpack.c.b16 %v4019, %v4018
      %v4040 = vpack.c.b16 %v4021, %v4020
      %v4041 = vpack.c.b16 %v4023, %v4022
      %v4042 = vpack.c.b16 %v4025, %v4024
      %v4043 = vpack.c.b16 %v4027, %v4026
      %v4045 = vsel %vm685, %v4028, 0
      %v4048 = vsel %vm685, %v4029, 0
      %v4051 = vsel %vm685, %v4030, 0
      %v4054 = vsel %vm685, %v4031, 0
      %v4057 = vsel %vm685, %v4032, 0
      %v4060 = vsel %vm685, %v4033, 0
      %v4063 = vsel %vm685, %v4034, 0
      %v4066 = vsel %vm685, %v4035, 0
      %v4069 = vsel %vm685, %v4036, 0
      %v4072 = vsel %vm685, %v4037, 0
      %v4075 = vsel %vm685, %v4038, 0
      %v4078 = vsel %vm685, %v4039, 0
      %v4081 = vsel %vm685, %v4040, 0
      %v4084 = vsel %vm685, %v4041, 0
      %v4087 = vsel %vm685, %v4042, 0
      %v4090 = vsel %vm685, %v4043, 0
      %v4093 = vsel %vm734, %v3995, 0
      %4095 = vmatprep.subr.bf16.mxu0 0
      %4096 = vmatpush1.bf16.msra.mxu0 %v4093
      %4097 = vmatprep.subr.bf16.mxu0 0
      %4098 = vmatpush1.bf16.msra.mxu0 0
      %4099 = vmatprep.subr.bf16.mxu0 0
      %4100 = vmatpush1.bf16.msra.mxu0 0
      %4101 = vmatprep.subr.bf16.mxu0 0
      %4102 = vmatpush1.bf16.msra.mxu0 0
      %4103 = vmatprep.subr.bf16.mxu0 0
      %4104 = vmatpush1.bf16.msra.mxu0 0
      %4105 = vmatprep.subr.bf16.mxu0 0
      %4106 = vmatpush1.bf16.msra.mxu0 0
      %4107 = vmatprep.subr.bf16.mxu0 0
      %4108 = vmatpush1.bf16.msra.mxu0 0
      %4109 = vmatprep.subr.bf16.mxu0 0
      %4110 = vmatpush1.bf16.msra.mxu0 0
      %4111 = vmatprep.subr.bf16.mxu0 0
      %4112 = vmatpush1.bf16.msra.mxu0 0
      %4113 = vmatprep.subr.bf16.mxu0 0
      %4114 = vmatpush1.bf16.msra.mxu0 0
      %4115 = vmatprep.subr.bf16.mxu0 0
      %4116 = vmatpush1.bf16.msra.mxu0 0
      %4117 = vmatprep.subr.bf16.mxu0 0
      %4118 = vmatpush1.bf16.msra.mxu0 0
      %4119 = vmatprep.subr.bf16.mxu0 0
      %4120 = vmatpush1.bf16.msra.mxu0 0
      %4121 = vmatprep.subr.bf16.mxu0 0
      %4122 = vmatpush1.bf16.msra.mxu0 0
      %4123 = vmatprep.subr.bf16.mxu0 0
      %4124 = vmatpush1.bf16.msra.mxu0 0
      %4125 = vmatprep.subr.bf16.mxu0 0
      %4126 = vmatpush1.bf16.msra.mxu0 0
      %4127 = vmatprep.mubr.bf16.mxu0 0
      %4128 = vmatmul.mubr.bf16.gmra.mrb[0].mxu0 %v4045
      %v4129 = vpop.f32.mrb[0].mxu0
      %v4130 = vadd.f32 0.0, %v4129
      %v4131 = vpop.f32.mrb[0].mxu0
      %v4132 = vpop.f32.mrb[0].mxu0
      %v4133 = vadd.f32 0.0, %v4132
      %v4134 = vpop.f32.mrb[0].mxu0
      %4135 = vmatprep.mubr.bf16.mxu0 0
      %4136 = vmatmul.mubr.bf16.gmra.mrb[0].mxu0 %v4048
      %v4137 = vpop.f32.mrb[0].mxu0
      %v4138 = vadd.f32 0.0, %v4137
      %v4139 = vpop.f32.mrb[0].mxu0
      %v4140 = vpop.f32.mrb[0].mxu0
      %v4141 = vadd.f32 0.0, %v4140
      %v4142 = vpop.f32.mrb[0].mxu0
      %4143 = vmatprep.mubr.bf16.mxu0 0
      %4144 = vmatmul.mubr.bf16.gmra.mrb[0].mxu0 %v4051
      %v4145 = vpop.f32.mrb[0].mxu0
      %v4146 = vadd.f32 0.0, %v4145
      %v4147 = vpop.f32.mrb[0].mxu0
      %v4148 = vpop.f32.mrb[0].mxu0
      %v4149 = vadd.f32 0.0, %v4148
      %v4150 = vpop.f32.mrb[0].mxu0
      %4151 = vmatprep.mubr.bf16.mxu0 0
      %4152 = vmatmul.mubr.bf16.gmra.mrb[0].mxu0 %v4054
      %v4153 = vpop.f32.mrb[0].mxu0
      %v4154 = vadd.f32 0.0, %v4153
      %v4155 = vpop.f32.mrb[0].mxu0
      %v4156 = vpop.f32.mrb[0].mxu0
      %v4157 = vadd.f32 0.0, %v4156
      %v4158 = vpop.f32.mrb[0].mxu0
      %4159 = vmatprep.mubr.bf16.mxu0 0
      %4160 = vmatmul.mubr.bf16.gmra.mrb[0].mxu0 %v4057
      %v4161 = vpop.f32.mrb[0].mxu0
      %v4162 = vadd.f32 0.0, %v4161
      %v4163 = vpop.f32.mrb[0].mxu0
      %v4164 = vpop.f32.mrb[0].mxu0
      %v4165 = vadd.f32 0.0, %v4164
      %v4166 = vpop.f32.mrb[0].mxu0
      %4167 = vmatprep.mubr.bf16.mxu0 0
      %4168 = vmatmul.mubr.bf16.gmra.mrb[0].mxu0 %v4060
      %v4169 = vpop.f32.mrb[0].mxu0
      %v4170 = vadd.f32 0.0, %v4169
      %v4171 = vpop.f32.mrb[0].mxu0
      %v4172 = vpop.f32.mrb[0].mxu0
      %v4173 = vadd.f32 0.0, %v4172
      %v4174 = vpop.f32.mrb[0].mxu0
      %4175 = vmatprep.mubr.bf16.mxu0 0
      %4176 = vmatmul.mubr.bf16.gmra.mrb[0].mxu0 %v4063
      %v4177 = vpop.f32.mrb[0].mxu0
      %v4178 = vadd.f32 0.0, %v4177
      %v4179 = vpop.f32.mrb[0].mxu0
      %v4180 = vpop.f32.mrb[0].mxu0
      %v4181 = vadd.f32 0.0, %v4180
      %v4182 = vpop.f32.mrb[0].mxu0
      %4183 = vmatprep.mubr.bf16.mxu0 0
      %4184 = vmatmul.mubr.bf16.gmra.mrb[0].mxu0 %v4066
      %v4185 = vpop.f32.mrb[0].mxu0
      %v4186 = vadd.f32 0.0, %v4185
      %v4187 = vpop.f32.mrb[0].mxu0
      %v4188 = vpop.f32.mrb[0].mxu0
      %v4189 = vadd.f32 0.0, %v4188
      %v4190 = vpop.f32.mrb[0].mxu0
      %4191 = vmatprep.mubr.bf16.mxu0 0
      %4192 = vmatmul.mubr.bf16.gmra.mrb[0].mxu0 %v4069
      %v4193 = vpop.f32.mrb[0].mxu0
      %v4194 = vadd.f32 0.0, %v4193
      %v4195 = vpop.f32.mrb[0].mxu0
      %v4196 = vpop.f32.mrb[0].mxu0
      %v4197 = vadd.f32 0.0, %v4196
      %v4198 = vpop.f32.mrb[0].mxu0
      %4199 = vmatprep.mubr.bf16.mxu0 0
      %4200 = vmatmul.mubr.bf16.gmra.mrb[0].mxu0 %v4072
      %v4201 = vpop.f32.mrb[0].mxu0
      %v4202 = vadd.f32 0.0, %v4201
      %v4203 = vpop.f32.mrb[0].mxu0
      %v4204 = vpop.f32.mrb[0].mxu0
      %v4205 = vadd.f32 0.0, %v4204
      %v4206 = vpop.f32.mrb[0].mxu0
      %4207 = vmatprep.mubr.bf16.mxu0 0
      %4208 = vmatmul.mubr.bf16.gmra.mrb[0].mxu0 %v4075
      %v4209 = vpop.f32.mrb[0].mxu0
      %v4210 = vadd.f32 0.0, %v4209
      %v4211 = vpop.f32.mrb[0].mxu0
      %v4212 = vpop.f32.mrb[0].mxu0
      %v4213 = vadd.f32 0.0, %v4212
      %v4214 = vpop.f32.mrb[0].mxu0
      %4215 = vmatprep.mubr.bf16.mxu0 0
      %4216 = vmatmul.mubr.bf16.gmra.mrb[0].mxu0 %v4078
      %v4217 = vpop.f32.mrb[0].mxu0
      %v4218 = vadd.f32 0.0, %v4217
      %v4219 = vpop.f32.mrb[0].mxu0
      %v4220 = vpop.f32.mrb[0].mxu0
      %v4221 = vadd.f32 0.0, %v4220
      %v4222 = vpop.f32.mrb[0].mxu0
      %4223 = vmatprep.mubr.bf16.mxu0 0
      %4224 = vmatmul.mubr.bf16.gmra.mrb[0].mxu0 %v4081
      %v4225 = vpop.f32.mrb[0].mxu0
      %v4226 = vadd.f32 0.0, %v4225
      %v4227 = vpop.f32.mrb[0].mxu0
      %v4228 = vpop.f32.mrb[0].mxu0
      %v4229 = vadd.f32 0.0, %v4228
      %v4230 = vpop.f32.mrb[0].mxu0
      %4231 = vmatprep.mubr.bf16.mxu0 0
      %4232 = vmatmul.mubr.bf16.gmra.mrb[0].mxu0 %v4084
      %v4233 = vpop.f32.mrb[0].mxu0
      %v4234 = vadd.f32 0.0, %v4233
      %v4235 = vpop.f32.mrb[0].mxu0
      %v4236 = vpop.f32.mrb[0].mxu0
      %v4237 = vadd.f32 0.0, %v4236
      %v4238 = vpop.f32.mrb[0].mxu0
      %4239 = vmatprep.mubr.bf16.mxu0 0
      %4240 = vmatmul.mubr.bf16.gmra.mrb[0].mxu0 %v4087
      %v4241 = vpop.f32.mrb[0].mxu0
      %v4242 = vadd.f32 0.0, %v4241
      %v4243 = vpop.f32.mrb[0].mxu0
      %v4244 = vpop.f32.mrb[0].mxu0
      %v4245 = vadd.f32 0.0, %v4244
      %v4246 = vpop.f32.mrb[0].mxu0
      %4247 = vmatprep.mubr.bf16.mxu0 0
      %4248 = vmatmul.mubr.bf16.gmra.mrb[0].mxu0 %v4090
      %v4249 = vpop.f32.mrb[0].mxu0
      %v4250 = vadd.f32 0.0, %v4249
      %v4251 = vpop.f32.mrb[0].mxu0
      %v4252 = vpop.f32.mrb[0].mxu0
      %v4253 = vadd.f32 0.0, %v4252
      %v4254 = vpop.f32.mrb[0].mxu0
      %4255 = vdwg.mxu0
      %v4256 = vadd.f32 %v3530, %v4130
      %v4257 = vadd.f32 %v3531, %v4133
      %v4258 = vadd.f32 %v3532, %v4138
      %v4259 = vadd.f32 %v3533, %v4141
      %v4260 = vadd.f32 %v3534, %v4146
      %v4261 = vadd.f32 %v3535, %v4149
      %v4262 = vadd.f32 %v3536, %v4154
      %v4263 = vadd.f32 %v3537, %v4157
      %v4264 = vadd.f32 %v3538, %v4162
      %v4265 = vadd.f32 %v3539, %v4165
      %v4266 = vadd.f32 %v3540, %v4170
      %v4267 = vadd.f32 %v3541, %v4173
      %v4268 = vadd.f32 %v3542, %v4178
      %v4269 = vadd.f32 %v3543, %v4181
      %v4270 = vadd.f32 %v3544, %v4186
      %v4271 = vadd.f32 %v3545, %v4189
      %v4272 = vadd.f32 %v3546, %v4194
      %v4273 = vadd.f32 %v3547, %v4197
      %v4274 = vadd.f32 %v3548, %v4202
      %v4275 = vadd.f32 %v3549, %v4205
      %v4276 = vadd.f32 %v3550, %v4210
      %v4277 = vadd.f32 %v3551, %v4213
      %v4278 = vadd.f32 %v3552, %v4218
      %v4279 = vadd.f32 %v3553, %v4221
      %v4280 = vadd.f32 %v3554, %v4226
      %v4281 = vadd.f32 %v3555, %v4229
      %v4282 = vadd.f32 %v3556, %v4234
      %v4283 = vadd.f32 %v3557, %v4237
      %v4284 = vadd.f32 %v3558, %v4242
      %v4285 = vadd.f32 %v3559, %v4245
      %v4286 = vadd.f32 %v3560, %v4250
      %v4287 = vadd.f32 %v3561, %v4253
      %v4288 = vld [vmem:[%s3203] sm:$0xe]
      %v4289 = vld [vmem:[%s3203 + $0xc] sm:$0xe]
      %v4290 = vld [vmem:[%s3203 + $0x18] sm:$0xe]
      %v4291 = vld [vmem:[%s3203 + $0x24] sm:$0xe]
      %v4292 = vld [vmem:[%s3203 + $0x30] sm:$0xe]
      %v4293 = vld [vmem:[%s3203 + $0x3c] sm:$0xe]
      %v4294 = vld [vmem:[%s3203 + $0x48] sm:$0xe]
      %v4295 = vld [vmem:[%s3203 + $0x54] sm:$0xe]
      %v4296 = vld [vmem:[%s3203 + $0x60] sm:$0xe]
      %v4297 = vld [vmem:[%s3203 + $0x6c] sm:$0xe]
      %v4298 = vld [vmem:[%s3203 + $0x78] sm:$0xe]
      %v4299 = vld [vmem:[%s3203 + $0x84] sm:$0xe]
      %v4300 = vld [vmem:[%s3203 + $0x90] sm:$0xe]
      %v4301 = vld [vmem:[%s3203 + $0x9c] sm:$0xe]
      %v4302 = vld [vmem:[%s3203 + $0xa8] sm:$0xe]
      %v4303 = vld [vmem:[%s3203 + $0xb4] sm:$0xe]
      %v4352 = vrot.slane %v4288, 5
      %v4353 = vrot.slane %v4352, 4
      %v4354 = vrot.slane %v3563, 5
      %v4355 = vsel %vm1241, %v4353, %v4354
      %v4356 = vrot.slane %v4354, 4
      %v4357 = vrot.slane %v3564, 5
      %v4358 = vsel %vm1241, %v4356, %v4357
      %v4359 = vrot.slane %v4289, 5
      %v4360 = vrot.slane %v4359, 4
      %v4361 = vrot.slane %v3566, 5
      %v4362 = vsel %vm1241, %v4360, %v4361
      %v4363 = vrot.slane %v4361, 4
      %v4364 = vrot.slane %v3567, 5
      %v4365 = vsel %vm1241, %v4363, %v4364
      %v4366 = vrot.slane %v4290, 5
      %v4367 = vrot.slane %v4366, 4
      %v4368 = vrot.slane %v3569, 5
      %v4369 = vsel %vm1241, %v4367, %v4368
      %v4370 = vrot.slane %v4368, 4
      %v4371 = vrot.slane %v3570, 5
      %v4372 = vsel %vm1241, %v4370, %v4371
      %v4373 = vrot.slane %v4291, 5
      %v4374 = vrot.slane %v4373, 4
      %v4375 = vrot.slane %v3572, 5
      %v4376 = vsel %vm1241, %v4374, %v4375
      %v4377 = vrot.slane %v4375, 4
      %v4378 = vrot.slane %v3573, 5
      %v4379 = vsel %vm1241, %v4377, %v4378
      %v4380 = vrot.slane %v4292, 5
      %v4381 = vrot.slane %v4380, 4
      %v4382 = vrot.slane %v3575, 5
      %v4383 = vsel %vm1241, %v4381, %v4382
      %v4384 = vrot.slane %v4382, 4
      %v4385 = vrot.slane %v3576, 5
      %v4386 = vsel %vm1241, %v4384, %v4385
      %v4387 = vrot.slane %v4293, 5
      %v4388 = vrot.slane %v4387, 4
      %v4389 = vrot.slane %v3578, 5
      %v4390 = vsel %vm1241, %v4388, %v4389
      %v4391 = vrot.slane %v4389, 4
      %v4392 = vrot.slane %v3579, 5
      %v4393 = vsel %vm1241, %v4391, %v4392
      %v4394 = vrot.slane %v4294, 5
      %v4395 = vrot.slane %v4394, 4
      %v4396 = vrot.slane %v3581, 5
      %v4397 = vsel %vm1241, %v4395, %v4396
      %v4398 = vrot.slane %v4396, 4
      %v4399 = vrot.slane %v3582, 5
      %v4400 = vsel %vm1241, %v4398, %v4399
      %v4401 = vrot.slane %v4295, 5
      %v4402 = vrot.slane %v4401, 4
      %v4403 = vrot.slane %v3584, 5
      %v4404 = vsel %vm1241, %v4402, %v4403
      %v4405 = vrot.slane %v4403, 4
      %v4406 = vrot.slane %v3585, 5
      %v4407 = vsel %vm1241, %v4405, %v4406
      %v4408 = vrot.slane %v4296, 5
      %v4409 = vrot.slane %v4408, 4
      %v4410 = vrot.slane %v3587, 5
      %v4411 = vsel %vm1241, %v4409, %v4410
      %v4412 = vrot.slane %v4410, 4
      %v4413 = vrot.slane %v3588, 5
      %v4414 = vsel %vm1241, %v4412, %v4413
      %v4415 = vrot.slane %v4297, 5
      %v4416 = vrot.slane %v4415, 4
      %v4417 = vrot.slane %v3590, 5
      %v4418 = vsel %vm1241, %v4416, %v4417
      %v4419 = vrot.slane %v4417, 4
      %v4420 = vrot.slane %v3591, 5
      %v4421 = vsel %vm1241, %v4419, %v4420
      %v4422 = vrot.slane %v4298, 5
      %v4423 = vrot.slane %v4422, 4
      %v4424 = vrot.slane %v3593, 5
      %v4425 = vsel %vm1241, %v4423, %v4424
      %v4426 = vrot.slane %v4424, 4
      %v4427 = vrot.slane %v3594, 5
      %v4428 = vsel %vm1241, %v4426, %v4427
      %v4429 = vrot.slane %v4299, 5
      %v4430 = vrot.slane %v4429, 4
      %v4431 = vrot.slane %v3596, 5
      %v4432 = vsel %vm1241, %v4430, %v4431
      %v4433 = vrot.slane %v4431, 4
      %v4434 = vrot.slane %v3597, 5
      %v4435 = vsel %vm1241, %v4433, %v4434
      %v4436 = vrot.slane %v4300, 5
      %v4437 = vrot.slane %v4436, 4
      %v4438 = vrot.slane %v3599, 5
      %v4439 = vsel %vm1241, %v4437, %v4438
      %v4440 = vrot.slane %v4438, 4
      %v4441 = vrot.slane %v3600, 5
      %v4442 = vsel %vm1241, %v4440, %v4441
      %v4443 = vrot.slane %v4301, 5
      %v4444 = vrot.slane %v4443, 4
      %v4445 = vrot.slane %v3602, 5
      %v4446 = vsel %vm1241, %v4444, %v4445
      %v4447 = vrot.slane %v4445, 4
      %v4448 = vrot.slane %v3603, 5
      %v4449 = vsel %vm1241, %v4447, %v4448
      %v4450 = vrot.slane %v4302, 5
      %v4451 = vrot.slane %v4450, 4
      %v4452 = vrot.slane %v3605, 5
      %v4453 = vsel %vm1241, %v4451, %v4452
      %v4454 = vrot.slane %v4452, 4
      %v4455 = vrot.slane %v3606, 5
      %v4456 = vsel %vm1241, %v4454, %v4455
      %v4457 = vrot.slane %v4303, 5
      %v4458 = vrot.slane %v4457, 4
      %v4459 = vrot.slane %v3608, 5
      %v4460 = vsel %vm1241, %v4458, %v4459
      %v4461 = vrot.slane %v4459, 4
      %v4462 = vrot.slane %v3609, 5
      %v4463 = vsel %vm1241, %v4461, %v4462
      %s4464 = scalar_lea.vmem %s1, 16
      %v4465 = vld [vmem:[%s4464] sm:$0x3]
      %v4466 = vunpack.c.l.b16 %v4355
      %v4467 = vunpack.c.l.b16 %v4358
      %v4468 = vunpack.c.l.b16 %v4362
      %v4469 = vunpack.c.l.b16 %v4365
      %v4470 = vunpack.c.l.b16 %v4369
      %v4471 = vunpack.c.l.b16 %v4372
      %v4472 = vunpack.c.l.b16 %v4376
      %v4473 = vunpack.c.l.b16 %v4379
      %v4474 = vunpack.c.l.b16 %v4383
      %v4475 = vunpack.c.l.b16 %v4386
      %v4476 = vunpack.c.l.b16 %v4390
      %v4477 = vunpack.c.l.b16 %v4393
      %v4478 = vunpack.c.l.b16 %v4397
      %v4479 = vunpack.c.l.b16 %v4400
      %v4480 = vunpack.c.l.b16 %v4404
      %v4481 = vunpack.c.l.b16 %v4407
      %v4482 = vunpack.c.l.b16 %v4411
      %v4483 = vunpack.c.l.b16 %v4414
      %v4484 = vunpack.c.l.b16 %v4418
      %v4485 = vunpack.c.l.b16 %v4421
      %v4486 = vunpack.c.l.b16 %v4425
      %v4487 = vunpack.c.l.b16 %v4428
      %v4488 = vunpack.c.l.b16 %v4432
      %v4489 = vunpack.c.l.b16 %v4435
      %v4490 = vunpack.c.l.b16 %v4439
      %v4491 = vunpack.c.l.b16 %v4442
      %v4492 = vunpack.c.l.b16 %v4446
      %v4493 = vunpack.c.l.b16 %v4449
      %v4494 = vunpack.c.l.b16 %v4453
      %v4495 = vunpack.c.l.b16 %v4456
      %v4496 = vunpack.c.l.b16 %v4460
      %v4497 = vunpack.c.l.b16 %v4463
      %v4498 = vpack.c.b16 %v4467, %v4466
      %v4499 = vpack.c.b16 %v4469, %v4468
      %v4500 = vpack.c.b16 %v4471, %v4470
      %v4501 = vpack.c.b16 %v4473, %v4472
      %v4502 = vpack.c.b16 %v4475, %v4474
      %v4503 = vpack.c.b16 %v4477, %v4476
      %v4504 = vpack.c.b16 %v4479, %v4478
      %v4505 = vpack.c.b16 %v4481, %v4480
      %v4506 = vpack.c.b16 %v4483, %v4482
      %v4507 = vpack.c.b16 %v4485, %v4484
      %v4508 = vpack.c.b16 %v4487, %v4486
      %v4509 = vpack.c.b16 %v4489, %v4488
      %v4510 = vpack.c.b16 %v4491, %v4490
      %v4511 = vpack.c.b16 %v4493, %v4492
      %v4512 = vpack.c.b16 %v4495, %v4494
      %v4513 = vpack.c.b16 %v4497, %v4496
      %v4515 = vsel %vm685, %v4498, 0
      %v4518 = vsel %vm685, %v4499, 0
      %v4521 = vsel %vm685, %v4500, 0
      %v4524 = vsel %vm685, %v4501, 0
      %v4527 = vsel %vm685, %v4502, 0
      %v4530 = vsel %vm685, %v4503, 0
      %v4533 = vsel %vm685, %v4504, 0
      %v4536 = vsel %vm685, %v4505, 0
      %v4539 = vsel %vm685, %v4506, 0
      %v4542 = vsel %vm685, %v4507, 0
      %v4545 = vsel %vm685, %v4508, 0
      %v4548 = vsel %vm685, %v4509, 0
      %v4551 = vsel %vm685, %v4510, 0
      %v4554 = vsel %vm685, %v4511, 0
      %v4557 = vsel %vm685, %v4512, 0
      %v4560 = vsel %vm685, %v4513, 0
      %v4563 = vsel %vm734, %v4465, 0
      %4565 = vmatprep.subr.bf16.mxu0 0
      %4566 = vmatpush1.bf16.msra.mxu0 %v4563
      %4567 = vmatprep.subr.bf16.mxu0 0
      %4568 = vmatpush1.bf16.msra.mxu0 0
      %4569 = vmatprep.subr.bf16.mxu0 0
      %4570 = vmatpush1.bf16.msra.mxu0 0
      %4571 = vmatprep.subr.bf16.mxu0 0
      %4572 = vmatpush1.bf16.msra.mxu0 0
      %4573 = vmatprep.subr.bf16.mxu0 0
      %4574 = vmatpush1.bf16.msra.mxu0 0
      %4575 = vmatprep.subr.bf16.mxu0 0
      %4576 = vmatpush1.bf16.msra.mxu0 0
      %4577 = vmatprep.subr.bf16.mxu0 0
      %4578 = vmatpush1.bf16.msra.mxu0 0
      %4579 = vmatprep.subr.bf16.mxu0 0
      %4580 = vmatpush1.bf16.msra.mxu0 0
      %4581 = vmatprep.subr.bf16.mxu0 0
      %4582 = vmatpush1.bf16.msra.mxu0 0
      %4583 = vmatprep.subr.bf16.mxu0 0
      %4584 = vmatpush1.bf16.msra.mxu0 0
      %4585 = vmatprep.subr.bf16.mxu0 0
      %4586 = vmatpush1.bf16.msra.mxu0 0
      %4587 = vmatprep.subr.bf16.mxu0 0
      %4588 = vmatpush1.bf16.msra.mxu0 0
      %4589 = vmatprep.subr.bf16.mxu0 0
      %4590 = vmatpush1.bf16.msra.mxu0 0
      %4591 = vmatprep.subr.bf16.mxu0 0
      %4592 = vmatpush1.bf16.msra.mxu0 0
      %4593 = vmatprep.subr.bf16.mxu0 0
      %4594 = vmatpush1.bf16.msra.mxu0 0
      %4595 = vmatprep.subr.bf16.mxu0 0
      %4596 = vmatpush1.bf16.msra.mxu0 0
      %4597 = vmatprep.mubr.bf16.mxu0 0
      %4598 = vmatmul.mubr.bf16.gmra.mrb[0].mxu0 %v4515
      %v4599 = vpop.f32.mrb[0].mxu0
      %v4600 = vadd.f32 0.0, %v4599
      %v4601 = vpop.f32.mrb[0].mxu0
      %v4602 = vpop.f32.mrb[0].mxu0
      %v4603 = vadd.f32 0.0, %v4602
      %v4604 = vpop.f32.mrb[0].mxu0
      %4605 = vmatprep.mubr.bf16.mxu0 0
      %4606 = vmatmul.mubr.bf16.gmra.mrb[0].mxu0 %v4518
      %v4607 = vpop.f32.mrb[0].mxu0
      %v4608 = vadd.f32 0.0, %v4607
      %v4609 = vpop.f32.mrb[0].mxu0
      %v4610 = vpop.f32.mrb[0].mxu0
      %v4611 = vadd.f32 0.0, %v4610
      %v4612 = vpop.f32.mrb[0].mxu0
      %4613 = vmatprep.mubr.bf16.mxu0 0
      %4614 = vmatmul.mubr.bf16.gmra.mrb[0].mxu0 %v4521
      %v4615 = vpop.f32.mrb[0].mxu0
      %v4616 = vadd.f32 0.0, %v4615
      %v4617 = vpop.f32.mrb[0].mxu0
      %v4618 = vpop.f32.mrb[0].mxu0
      %v4619 = vadd.f32 0.0, %v4618
      %v4620 = vpop.f32.mrb[0].mxu0
      %4621 = vmatprep.mubr.bf16.mxu0 0
      %4622 = vmatmul.mubr.bf16.gmra.mrb[0].mxu0 %v4524
      %v4623 = vpop.f32.mrb[0].mxu0
      %v4624 = vadd.f32 0.0, %v4623
      %v4625 = vpop.f32.mrb[0].mxu0
      %v4626 = vpop.f32.mrb[0].mxu0
      %v4627 = vadd.f32 0.0, %v4626
      %v4628 = vpop.f32.mrb[0].mxu0
      %4629 = vmatprep.mubr.bf16.mxu0 0
      %4630 = vmatmul.mubr.bf16.gmra.mrb[0].mxu0 %v4527
      %v4631 = vpop.f32.mrb[0].mxu0
      %v4632 = vadd.f32 0.0, %v4631
      %v4633 = vpop.f32.mrb[0].mxu0
      %v4634 = vpop.f32.mrb[0].mxu0
      %v4635 = vadd.f32 0.0, %v4634
      %v4636 = vpop.f32.mrb[0].mxu0
      %4637 = vmatprep.mubr.bf16.mxu0 0
      %4638 = vmatmul.mubr.bf16.gmra.mrb[0].mxu0 %v4530
      %v4639 = vpop.f32.mrb[0].mxu0
      %v4640 = vadd.f32 0.0, %v4639
      %v4641 = vpop.f32.mrb[0].mxu0
      %v4642 = vpop.f32.mrb[0].mxu0
      %v4643 = vadd.f32 0.0, %v4642
      %v4644 = vpop.f32.mrb[0].mxu0
      %4645 = vmatprep.mubr.bf16.mxu0 0
      %4646 = vmatmul.mubr.bf16.gmra.mrb[0].mxu0 %v4533
      %v4647 = vpop.f32.mrb[0].mxu0
      %v4648 = vadd.f32 0.0, %v4647
      %v4649 = vpop.f32.mrb[0].mxu0
      %v4650 = vpop.f32.mrb[0].mxu0
      %v4651 = vadd.f32 0.0, %v4650
      %v4652 = vpop.f32.mrb[0].mxu0
      %4653 = vmatprep.mubr.bf16.mxu0 0
      %4654 = vmatmul.mubr.bf16.gmra.mrb[0].mxu0 %v4536
      %v4655 = vpop.f32.mrb[0].mxu0
      %v4656 = vadd.f32 0.0, %v4655
      %v4657 = vpop.f32.mrb[0].mxu0
      %v4658 = vpop.f32.mrb[0].mxu0
      %v4659 = vadd.f32 0.0, %v4658
      %v4660 = vpop.f32.mrb[0].mxu0
      %4661 = vmatprep.mubr.bf16.mxu0 0
      %4662 = vmatmul.mubr.bf16.gmra.mrb[0].mxu0 %v4539
      %v4663 = vpop.f32.mrb[0].mxu0
      %v4664 = vadd.f32 0.0, %v4663
      %v4665 = vpop.f32.mrb[0].mxu0
      %v4666 = vpop.f32.mrb[0].mxu0
      %v4667 = vadd.f32 0.0, %v4666
      %v4668 = vpop.f32.mrb[0].mxu0
      %4669 = vmatprep.mubr.bf16.mxu0 0
      %4670 = vmatmul.mubr.bf16.gmra.mrb[0].mxu0 %v4542
      %v4671 = vpop.f32.mrb[0].mxu0
      %v4672 = vadd.f32 0.0, %v4671
      %v4673 = vpop.f32.mrb[0].mxu0
      %v4674 = vpop.f32.mrb[0].mxu0
      %v4675 = vadd.f32 0.0, %v4674
      %v4676 = vpop.f32.mrb[0].mxu0
      %4677 = vmatprep.mubr.bf16.mxu0 0
      %4678 = vmatmul.mubr.bf16.gmra.mrb[0].mxu0 %v4545
      %v4679 = vpop.f32.mrb[0].mxu0
      %v4680 = vadd.f32 0.0, %v4679
      %v4681 = vpop.f32.mrb[0].mxu0
      %v4682 = vpop.f32.mrb[0].mxu0
      %v4683 = vadd.f32 0.0, %v4682
      %v4684 = vpop.f32.mrb[0].mxu0
      %4685 = vmatprep.mubr.bf16.mxu0 0
      %4686 = vmatmul.mubr.bf16.gmra.mrb[0].mxu0 %v4548
      %v4687 = vpop.f32.mrb[0].mxu0
      %v4688 = vadd.f32 0.0, %v4687
      %v4689 = vpop.f32.mrb[0].mxu0
      %v4690 = vpop.f32.mrb[0].mxu0
      %v4691 = vadd.f32 0.0, %v4690
      %v4692 = vpop.f32.mrb[0].mxu0
      %4693 = vmatprep.mubr.bf16.mxu0 0
      %4694 = vmatmul.mubr.bf16.gmra.mrb[0].mxu0 %v4551
      %v4695 = vpop.f32.mrb[0].mxu0
      %v4696 = vadd.f32 0.0, %v4695
      %v4697 = vpop.f32.mrb[0].mxu0
      %v4698 = vpop.f32.mrb[0].mxu0
      %v4699 = vadd.f32 0.0, %v4698
      %v4700 = vpop.f32.mrb[0].mxu0
      %4701 = vmatprep.mubr.bf16.mxu0 0
      %4702 = vmatmul.mubr.bf16.gmra.mrb[0].mxu0 %v4554
      %v4703 = vpop.f32.mrb[0].mxu0
      %v4704 = vadd.f32 0.0, %v4703
      %v4705 = vpop.f32.mrb[0].mxu0
      %v4706 = vpop.f32.mrb[0].mxu0
      %v4707 = vadd.f32 0.0, %v4706
      %v4708 = vpop.f32.mrb[0].mxu0
      %4709 = vmatprep.mubr.bf16.mxu0 0
      %4710 = vmatmul.mubr.bf16.gmra.mrb[0].mxu0 %v4557
      %v4711 = vpop.f32.mrb[0].mxu0
      %v4712 = vadd.f32 0.0, %v4711
      %v4713 = vpop.f32.mrb[0].mxu0
      %v4714 = vpop.f32.mrb[0].mxu0
      %v4715 = vadd.f32 0.0, %v4714
      %v4716 = vpop.f32.mrb[0].mxu0
      %4717 = vmatprep.mubr.bf16.mxu0 0
      %4718 = vmatmul.mubr.bf16.gmra.mrb[0].mxu0 %v4560
      %v4719 = vpop.f32.mrb[0].mxu0
      %v4720 = vadd.f32 0.0, %v4719
      %v4721 = vpop.f32.mrb[0].mxu0
      %v4722 = vpop.f32.mrb[0].mxu0
      %v4723 = vadd.f32 0.0, %v4722
      %v4724 = vpop.f32.mrb[0].mxu0
      %4725 = vdwg.mxu0
      %v4726 = vadd.f32 %v4256, %v4600
      %v4727 = vadd.f32 %v4257, %v4603
      %v4728 = vadd.f32 %v4258, %v4608
      %v4729 = vadd.f32 %v4259, %v4611
      %v4730 = vadd.f32 %v4260, %v4616
      %v4731 = vadd.f32 %v4261, %v4619
      %v4732 = vadd.f32 %v4262, %v4624
      %v4733 = vadd.f32 %v4263, %v4627
      %v4734 = vadd.f32 %v4264, %v4632
      %v4735 = vadd.f32 %v4265, %v4635
      %v4736 = vadd.f32 %v4266, %v4640
      %v4737 = vadd.f32 %v4267, %v4643
      %v4738 = vadd.f32 %v4268, %v4648
      %v4739 = vadd.f32 %v4269, %v4651
      %v4740 = vadd.f32 %v4270, %v4656
      %v4741 = vadd.f32 %v4271, %v4659
      %v4742 = vadd.f32 %v4272, %v4664
      %v4743 = vadd.f32 %v4273, %v4667
      %v4744 = vadd.f32 %v4274, %v4672
      %v4745 = vadd.f32 %v4275, %v4675
      %v4746 = vadd.f32 %v4276, %v4680
      %v4747 = vadd.f32 %v4277, %v4683
      %v4748 = vadd.f32 %v4278, %v4688
      %v4749 = vadd.f32 %v4279, %v4691
      %v4750 = vadd.f32 %v4280, %v4696
      %v4751 = vadd.f32 %v4281, %v4699
      %v4752 = vadd.f32 %v4282, %v4704
      %v4753 = vadd.f32 %v4283, %v4707
      %v4754 = vadd.f32 %v4284, %v4712
      %v4755 = vadd.f32 %v4285, %v4715
      %v4756 = vadd.f32 %v4286, %v4720
      %v4757 = vadd.f32 %v4287, %v4723
      %v4758 = vld [vmem:[%s2] sm:$0x1]
      %v4760 = vlaneseq
      %v4761 = vshrl.u32 %v4760, 7
      %v4762 = vsub.s32 0, %v4761
      %v4763 = vrot.slane %v4758, %v4762
      %v4765 = vmul.f32 %v4726, %v4763
      %v4766 = vmul.f32 %v4727, %v4763
      %v4767 = vmul.f32 %v4728, %v4763
      %v4768 = vmul.f32 %v4729, %v4763
      %v4769 = vmul.f32 %v4730, %v4763
      %v4770 = vmul.f32 %v4731, %v4763
      %v4771 = vmul.f32 %v4732, %v4763
      %v4772 = vmul.f32 %v4733, %v4763
      %v4773 = vmul.f32 %v4734, %v4763
      %v4774 = vmul.f32 %v4735, %v4763
      %v4775 = vmul.f32 %v4736, %v4763
      %v4776 = vmul.f32 %v4737, %v4763
      %v4777 = vmul.f32 %v4738, %v4763
      %v4778 = vmul.f32 %v4739, %v4763
      %v4779 = vmul.f32 %v4740, %v4763
      %v4780 = vmul.f32 %v4741, %v4763
      %v4781 = vmul.f32 %v4742, %v4763
      %v4782 = vmul.f32 %v4743, %v4763
      %v4783 = vmul.f32 %v4744, %v4763
      %v4784 = vmul.f32 %v4745, %v4763
      %v4785 = vmul.f32 %v4746, %v4763
      %v4786 = vmul.f32 %v4747, %v4763
      %v4787 = vmul.f32 %v4748, %v4763
      %v4788 = vmul.f32 %v4749, %v4763
      %v4789 = vmul.f32 %v4750, %v4763
      %v4790 = vmul.f32 %v4751, %v4763
      %v4791 = vmul.f32 %v4752, %v4763
      %v4792 = vmul.f32 %v4753, %v4763
      %v4793 = vmul.f32 %v4754, %v4763
      %v4794 = vmul.f32 %v4755, %v4763
      %v4795 = vmul.f32 %v4756, %v4763
      %v4796 = vmul.f32 %v4757, %v4763
      %v4797 = vld [vmem:[%s3] sm:$0x1]
      %v4799 = vlaneseq
      %v4800 = vshrl.u32 %v4799, 7
      %v4801 = vsub.s32 0, %v4800
      %v4802 = vrot.slane %v4797, %v4801
      %v4804 = vadd.f32 %v4765, %v4802
      %v4805 = vadd.f32 %v4766, %v4802
      %v4806 = vadd.f32 %v4767, %v4802
      %v4807 = vadd.f32 %v4768, %v4802
      %v4808 = vadd.f32 %v4769, %v4802
      %v4809 = vadd.f32 %v4770, %v4802
      %v4810 = vadd.f32 %v4771, %v4802
      %v4811 = vadd.f32 %v4772, %v4802
      %v4812 = vadd.f32 %v4773, %v4802
      %v4813 = vadd.f32 %v4774, %v4802
      %v4814 = vadd.f32 %v4775, %v4802
      %v4815 = vadd.f32 %v4776, %v4802
      %v4816 = vadd.f32 %v4777, %v4802
      %v4817 = vadd.f32 %v4778, %v4802
      %v4818 = vadd.f32 %v4779, %v4802
      %v4819 = vadd.f32 %v4780, %v4802
      %v4820 = vadd.f32 %v4781, %v4802
      %v4821 = vadd.f32 %v4782, %v4802
      %v4822 = vadd.f32 %v4783, %v4802
      %v4823 = vadd.f32 %v4784, %v4802
      %v4824 = vadd.f32 %v4785, %v4802
      %v4825 = vadd.f32 %v4786, %v4802
      %v4826 = vadd.f32 %v4787, %v4802
      %v4827 = vadd.f32 %v4788, %v4802
      %v4828 = vadd.f32 %v4789, %v4802
      %v4829 = vadd.f32 %v4790, %v4802
      %v4830 = vadd.f32 %v4791, %v4802
      %v4831 = vadd.f32 %v4792, %v4802
      %v4832 = vadd.f32 %v4793, %v4802
      %v4833 = vadd.f32 %v4794, %v4802
      %v4834 = vadd.f32 %v4795, %v4802
      %v4835 = vadd.f32 %v4796, %v4802
      %v4836 = vmax.f32 %v4804, 0.0
      %v4837 = vmax.f32 %v4805, 0.0
      %v4838 = vmax.f32 %v4806, 0.0
      %v4839 = vmax.f32 %v4807, 0.0
      %v4840 = vmax.f32 %v4808, 0.0
      %v4841 = vmax.f32 %v4809, 0.0
      %v4842 = vmax.f32 %v4810, 0.0
      %v4843 = vmax.f32 %v4811, 0.0
      %v4844 = vmax.f32 %v4812, 0.0
      %v4845 = vmax.f32 %v4813, 0.0
      %v4846 = vmax.f32 %v4814, 0.0
      %v4847 = vmax.f32 %v4815, 0.0
      %v4848 = vmax.f32 %v4816, 0.0
      %v4849 = vmax.f32 %v4817, 0.0
      %v4850 = vmax.f32 %v4818, 0.0
      %v4851 = vmax.f32 %v4819, 0.0
      %v4852 = vmax.f32 %v4820, 0.0
      %v4853 = vmax.f32 %v4821, 0.0
      %v4854 = vmax.f32 %v4822, 0.0
      %v4855 = vmax.f32 %v4823, 0.0
      %v4856 = vmax.f32 %v4824, 0.0
      %v4857 = vmax.f32 %v4825, 0.0
      %v4858 = vmax.f32 %v4826, 0.0
      %v4859 = vmax.f32 %v4827, 0.0
      %v4860 = vmax.f32 %v4828, 0.0
      %v4861 = vmax.f32 %v4829, 0.0
      %v4862 = vmax.f32 %v4830, 0.0
      %v4863 = vmax.f32 %v4831, 0.0
      %v4864 = vmax.f32 %v4832, 0.0
      %v4865 = vmax.f32 %v4833, 0.0
      %v4866 = vmax.f32 %v4834, 0.0
      %v4867 = vmax.f32 %v4835, 0.0
      %v4868 = vpack.c.bf16 %v4837, %v4836
      %v4869 = vpack.c.bf16 %v4839, %v4838
      %v4870 = vpack.c.bf16 %v4841, %v4840
      %v4871 = vpack.c.bf16 %v4843, %v4842
      %v4872 = vpack.c.bf16 %v4845, %v4844
      %v4873 = vpack.c.bf16 %v4847, %v4846
      %v4874 = vpack.c.bf16 %v4849, %v4848
      %v4875 = vpack.c.bf16 %v4851, %v4850
      %v4876 = vpack.c.bf16 %v4853, %v4852
      %v4877 = vpack.c.bf16 %v4855, %v4854
      %v4878 = vpack.c.bf16 %v4857, %v4856
      %v4879 = vpack.c.bf16 %v4859, %v4858
      %v4880 = vpack.c.bf16 %v4861, %v4860
      %v4881 = vpack.c.bf16 %v4863, %v4862
      %v4882 = vpack.c.bf16 %v4865, %v4864
      %v4883 = vpack.c.bf16 %v4867, %v4866
      %v4900 = vunpack.c.l.b16 %v4868
      %v4901 = vunpack.c.h.b16 %v4868
      %v4902 = vunpack.c.l.b16 %v4869
      %v4903 = vunpack.c.h.b16 %v4869
      %v4904 = vunpack.c.l.b16 %v4870
      %v4905 = vunpack.c.h.b16 %v4870
      %v4906 = vunpack.c.l.b16 %v4871
      %v4907 = vunpack.c.h.b16 %v4871
      %v4908 = vunpack.c.l.b16 %v4872
      %v4909 = vunpack.c.h.b16 %v4872
      %v4910 = vunpack.c.l.b16 %v4873
      %v4911 = vunpack.c.h.b16 %v4873
      %v4912 = vunpack.c.l.b16 %v4874
      %v4913 = vunpack.c.h.b16 %v4874
      %v4914 = vunpack.c.l.b16 %v4875
      %v4915 = vunpack.c.h.b16 %v4875
      %v4916 = vunpack.c.l.b16 %v4876
      %v4917 = vunpack.c.h.b16 %v4876
      %v4918 = vunpack.c.l.b16 %v4877
      %v4919 = vunpack.c.h.b16 %v4877
      %v4920 = vunpack.c.l.b16 %v4878
      %v4921 = vunpack.c.h.b16 %v4878
      %v4922 = vunpack.c.l.b16 %v4879
      %v4923 = vunpack.c.h.b16 %v4879
      %v4924 = vunpack.c.l.b16 %v4880
      %v4925 = vunpack.c.h.b16 %v4880
      %v4926 = vunpack.c.l.b16 %v4881
      %v4927 = vunpack.c.h.b16 %v4881
      %v4928 = vunpack.c.l.b16 %v4882
      %v4929 = vunpack.c.h.b16 %v4882
      %v4930 = vunpack.c.l.b16 %v4883
      %v4931 = vunpack.c.h.b16 %v4883
      %v4932 = vpack.c.b16 %v4900, %v4900
      %v4933 = vpack.c.b16 %v4901, %v4901
      %v4934 = vpack.c.b16 %v4902, %v4902
      %v4935 = vpack.c.b16 %v4903, %v4903
      %v4936 = vpack.c.b16 %v4904, %v4904
      %v4937 = vpack.c.b16 %v4905, %v4905
      %v4938 = vpack.c.b16 %v4906, %v4906
      %v4939 = vpack.c.b16 %v4907, %v4907
      %v4940 = vpack.c.b16 %v4908, %v4908
      %v4941 = vpack.c.b16 %v4909, %v4909
      %v4942 = vpack.c.b16 %v4910, %v4910
      %v4943 = vpack.c.b16 %v4911, %v4911
      %v4944 = vpack.c.b16 %v4912, %v4912
      %v4945 = vpack.c.b16 %v4913, %v4913
      %v4946 = vpack.c.b16 %v4914, %v4914
      %v4947 = vpack.c.b16 %v4915, %v4915
      %v4948 = vpack.c.b16 %v4916, %v4916
      %v4949 = vpack.c.b16 %v4917, %v4917
      %v4950 = vpack.c.b16 %v4918, %v4918
      %v4951 = vpack.c.b16 %v4919, %v4919
      %v4952 = vpack.c.b16 %v4920, %v4920
      %v4953 = vpack.c.b16 %v4921, %v4921
      %v4954 = vpack.c.b16 %v4922, %v4922
      %v4955 = vpack.c.b16 %v4923, %v4923
      %v4956 = vpack.c.b16 %v4924, %v4924
      %v4957 = vpack.c.b16 %v4925, %v4925
      %v4958 = vpack.c.b16 %v4926, %v4926
      %v4959 = vpack.c.b16 %v4927, %v4927
      %v4960 = vpack.c.b16 %v4928, %v4928
      %v4961 = vpack.c.b16 %v4929, %v4929
      %v4962 = vpack.c.b16 %v4930, %v4930
      %v4963 = vpack.c.b16 %v4931, %v4931
      %vm4996 = vcmask 27648
      %4997 = vst.msk [vmem:[%s197] sm:$0xf] %vm4996, %v4932
      %4998 = vst.msk [vmem:[%s197 + $0x4] sm:$0xf] %vm4996, %v4933
      %4999 = vst.msk [vmem:[%s197 + $0x8] sm:$0xf] %vm4996, %v4934
      %5000 = vst.msk [vmem:[%s197 + $0xc] sm:$0xf] %vm4996, %v4935
      %5001 = vst.msk [vmem:[%s197 + $0x10] sm:$0xf] %vm4996, %v4936
      %5002 = vst.msk [vmem:[%s197 + $0x14] sm:$0xf] %vm4996, %v4937
      %5003 = vst.msk [vmem:[%s197 + $0x18] sm:$0xf] %vm4996, %v4938
      %5004 = vst.msk [vmem:[%s197 + $0x1c] sm:$0xf] %vm4996, %v4939
      %5005 = vst.msk [vmem:[%s197 + $0x20] sm:$0xf] %vm4996, %v4940
      %5006 = vst.msk [vmem:[%s197 + $0x24] sm:$0xf] %vm4996, %v4941
      %5007 = vst.msk [vmem:[%s197 + $0x28] sm:$0xf] %vm4996, %v4942
      %5008 = vst.msk [vmem:[%s197 + $0x2c] sm:$0xf] %vm4996, %v4943
      %5009 = vst.msk [vmem:[%s197 + $0x30] sm:$0xf] %vm4996, %v4944
      %5010 = vst.msk [vmem:[%s197 + $0x34] sm:$0xf] %vm4996, %v4945
      %5011 = vst.msk [vmem:[%s197 + $0x38] sm:$0xf] %vm4996, %v4946
      %5012 = vst.msk [vmem:[%s197 + $0x3c] sm:$0xf] %vm4996, %v4947
      %5013 = vst.msk [vmem:[%s197 + $0x40] sm:$0xf] %vm4996, %v4948
      %5014 = vst.msk [vmem:[%s197 + $0x44] sm:$0xf] %vm4996, %v4949
      %5015 = vst.msk [vmem:[%s197 + $0x48] sm:$0xf] %vm4996, %v4950
      %5016 = vst.msk [vmem:[%s197 + $0x4c] sm:$0xf] %vm4996, %v4951
      %5017 = vst.msk [vmem:[%s197 + $0x50] sm:$0xf] %vm4996, %v4952
      %5018 = vst.msk [vmem:[%s197 + $0x54] sm:$0xf] %vm4996, %v4953
      %5019 = vst.msk [vmem:[%s197 + $0x58] sm:$0xf] %vm4996, %v4954
      %5020 = vst.msk [vmem:[%s197 + $0x5c] sm:$0xf] %vm4996, %v4955
      %5021 = vst.msk [vmem:[%s197 + $0x60] sm:$0xf] %vm4996, %v4956
      %5022 = vst.msk [vmem:[%s197 + $0x64] sm:$0xf] %vm4996, %v4957
      %5023 = vst.msk [vmem:[%s197 + $0x68] sm:$0xf] %vm4996, %v4958
      %5024 = vst.msk [vmem:[%s197 + $0x6c] sm:$0xf] %vm4996, %v4959
      %5025 = vst.msk [vmem:[%s197 + $0x70] sm:$0xf] %vm4996, %v4960
      %5026 = vst.msk [vmem:[%s197 + $0x74] sm:$0xf] %vm4996, %v4961
      %5027 = vst.msk [vmem:[%s197 + $0x78] sm:$0xf] %vm4996, %v4962
      %5028 = vst.msk [vmem:[%s197 + $0x7c] sm:$0xf] %vm4996, %v4963
      %p5029 = scmp.lt.s32.totalorder %s15, 1
      %s5030 = scalar_select %p5029, %s15, 1
      %s5031 = smul.addr %s5030, 32
      %s5032 = smul.addr %s5031, 4
      %s5033 = scalar_lea.vmem %s4, %s5032
      // Predicated region
      $region37: #{basic_block_forward.2} parent=35 // pred_check
        %p5034 = pneg %p122
      $region38: #{basic_block_forward.2} parent=35 // pred_check_branch
        %5036 = sbr.rel (%p5034) target = $region40
      $region39: #{basic_block_forward.2} parent=35 // pred_region
        _
      $region40: #{basic_block_forward.2} parent=35 // pred_fallthru
        _
    $region36: #{basic_block_forward.2} parent=5 // pred_fallthru
      _
    %p5037 = scmp.le.s32.totalorder 2, %s10
    // Predicated region
    $region41: #{basic_block_forward.2} parent=5 // pred_check
      %p5038 = pneg %p5037
    $region42: #{basic_block_forward.2} parent=5 // pred_check_branch
      %5040 = sbr.rel (%p5038) target = $region44
    $region43: #{basic_block_forward.2} parent=5 // pred_region
      %s5041 = ssub.s32 %s10, 2
      // Predicated region
      $region45: #{basic_block_forward.2} parent=43 // pred_check
        %p5042 = pneg %p128
      $region46: #{basic_block_forward.2} parent=43 // pred_check_branch
        %5044 = sbr.rel (%p5042) target = $region48
      $region47: #{basic_block_forward.2} parent=43 // pred_region
        %p5045 = scmp.lt.s32.totalorder %s16, 1
        %s5046 = scalar_select %p5045, %s16, 1
        %s5047 = smul.addr %s5046, 32
        %s5048 = smul.addr %s5047, 4
        %s5049 = scalar_lea.vmem %s4, %s5048
      $region48: #{basic_block_forward.2} parent=43 // pred_fallthru
        _
    $region44: #{basic_block_forward.2} parent=5 // pred_fallthru
      _
  $region6: #{basic_block_forward.2} parent=0 // loop_footer
    %s14 = sadd.s32 1, %s10
  $region7: #{basic_block_forward.2} parent=0 // loop_footer_branch
    %9 = sbr.rel target = $region3
  $region8: #{basic_block_forward.2} parent=0 // loop_exit
    _

</llo_original>
